<compile_context>
chip_gen: v7x
topology: tpu7x:2x2x1
jax: 0.10.0
libtpu: 0.0.40
codegen_flags: <defaults>
</compile_context>

<pallas_src>
import functools
import itertools
import math

import jax
import jax.numpy as jnp
from jax import lax
from jax.experimental import pallas as pl
from jax.experimental.pallas import tpu as pltpu

LOG2 = math.log(2.0)
LANE = 128


def _round_up(x, m):
    return ((x + m - 1) // m) * m


def _cdiv(a, b):
    return -(-a // b)


def _ssp(x):
    # shifted_softplus(x) = softplus(x) - log(2), numerically stable.
    return jnp.maximum(x, 0.0) + jnp.log(1.0 + jnp.exp(-jnp.abs(x))) - LOG2


def _vmem_capacity_bytes(default=64 * 1024 * 1024):
    try:
        return int(pltpu.get_tpu_info().vmem_capacity_bytes)
    except Exception:
        return default


def _pick_edge_tile(n_pad, fp, gp, max_edges, vmem_limit):
    # Rough bytes/edge of live per-tile intermediates: two bf16 one-hot orientations (2 rows/cols
    # per edge), their int32 iota temporaries, gathered features + messages, smearing block.
    per_edge = 20 * n_pad + 16 * fp + 8 * gp + 64
    budget = max(vmem_limit // 3, 4 * 1024 * 1024)
    te = int(budget // per_edge)
    te = max(256, min(4096, te))
    te = (te // 128) * 128
    te = min(te, max(128, _round_up(max(max_edges, 1), 128)))
    return max(te, 128)


# ----------------------------------------------------------------------------
# Fused SeqConv kernel: grid = (branch, layer, edge_tile)
# ----------------------------------------------------------------------------
def fused_seqconv_kernel(cache_oh, meta_ref,
                         node_in_ref, nbr_r_ref, nbr_c_ref, e_ref, goff_ref,
                         w1_ref, w2_ref, wn_ref, wu1_ref, wu2_ref, bias_ref,
                         node_out_ref, rf_ref, agg_ref, *oh_refs):
    s = pl.program_id(0)
    l = pl.program_id(1)
    t = pl.program_id(2)

    n_real_tiles = meta_ref[s, 0]
    n_real_layers = meta_ref[s, 1]
    layer_active = l < n_real_layers

    n_atoms, ap = node_in_ref.shape
    te = e_ref.shape[1]
    gp = goff_ref.shape[2]
    fp = rf_ref.shape[1]

    # --- branch start: node state <- atom embeddings -------------------------
    @pl.when((l == 0) & (t == 0))
    def _():
        node_out_ref[0] = node_in_ref[...]

    # --- layer start: node filter rf = Dense_A->F(node), reset accumulator ---
    @pl.when(layer_active & (t == 0))
    def _():
        bias = bias_ref[0, 0]
        node = node_out_ref[0]
        rf = jnp.dot(node.astype(jnp.bfloat16), wn_ref[0, 0],
                     preferred_element_type=jnp.float32) + bias[2:3, :fp]
        rf_ref[...] = rf.astype(jnp.bfloat16)
        agg_ref[...] = jnp.zeros_like(agg_ref)

    # --- edge tile: smear -> edge filter -> fused gather -> messages -> fused scatter
    # Padded tiles of the smaller branch and identity (padded) layers are skipped entirely.
    @pl.when(layer_active & (t < n_real_tiles))
    def _():
        bias = bias_ref[0, 0]
        e_s = e_ref[0]                                                    # [TE, 1] pre-scaled

        def build_onehots():
            nbr_r = nbr_r_ref[0]                                          # [TE, 2] edges on sublanes
            nbr_c = nbr_c_ref[0]                                          # [2, TE] edges on lanes
            idx_g = jnp.concatenate([nbr_r[:, 0:1], nbr_r[:, 1:2]], axis=0)        # [2TE, 1]
            gmat = (lax.broadcasted_iota(jnp.int32, (2 * te, n_atoms), 1)
                    == idx_g).astype(jnp.bfloat16)                                  # [2TE, N]
            idx_s = jnp.concatenate([nbr_c[1:2, :], nbr_c[0:1, :]], axis=1)         # [1, 2TE]
            smat = (lax.broadcasted_iota(jnp.int32, (n_atoms, 2 * te), 0)
                    == idx_s).astype(jnp.bfloat16)                                  # [N, 2TE]
            return gmat, smat

        if cache_oh:
            oh_g_ref, oh_s_ref = oh_refs

            @pl.when(l == 0)
            def _():
                g0, s0 = build_onehots()
                oh_g_ref[t] = g0
                oh_s_ref[t] = s0

            gmat = oh_g_ref[t]
            smat = oh_s_ref[t]
        else:
            gmat, smat = build_onehots()

        # GaussianSmearing (pre-scaled): exp(-((e - mu) * scale)^2)
        diff = e_s - goff_ref[0]
        eg = jnp.exp(-(diff * diff))                                      # [TE, GP]

        # message_edge_filter: Dense(G->G) + ssp -> Dense(G->F)
        h = _ssp(jnp.dot(eg.astype(jnp.bfloat16), w1_ref[0, 0],
                         preferred_element_type=jnp.float32) + bias[0:1, :gp])
        h = jnp.dot(h.astype(jnp.bfloat16), w2_ref[0, 0],
                    preferred_element_type=jnp.float32) + bias[1:2, :fp]  # [TE, FP]

        # fused gather of node filter at both endpoints: rows = [rf[a0]; rf[a1]]
        r_both = jnp.dot(gmat, rf_ref[...],
                         preferred_element_type=jnp.float32)              # [2TE, FP]
        msgs = (r_both * jnp.concatenate([h, h], axis=0)).astype(jnp.bfloat16)

        # fused scatter-add: [rf[a0]*h -> a1 ; rf[a1]*h -> a0], K = 2*TE
        agg_ref[...] += jnp.dot(smat, msgs,
                                preferred_element_type=jnp.float32)        # [N, FP]

    # --- layer end: update_function + residual --------------------------------
    @pl.when(layer_active & (t == pl.num_programs(2) - 1))
    def _():
        bias = bias_ref[0, 0]
        u = _ssp(jnp.dot(agg_ref[...].astype(jnp.bfloat16), wu1_ref[0, 0],
                         preferred_element_type=jnp.float32) + bias[3:4, :ap])
        dr = jnp.dot(u.astype(jnp.bfloat16), wu2_ref[0, 0],
                     preferred_element_type=jnp.float32) + bias[4:5, :ap]  # [N, AP]
        node_out_ref[0] = node_out_ref[0] + dr


def fused_seqconv(node_input, nbr_rows, nbr_cols, e_st, meta, conv, *,
                  edge_tile, cache_onehots, vmem_limit_bytes, real_edges, real_layers):
    n_pad, ap = node_input.shape
    _, e_pad, _ = nbr_rows.shape
    n_layers = conv['w1'].shape[1]
    gp = conv['w1'].shape[2]
    fp = conv['w2'].shape[3]
    maxd = conv['bias'].shape[3]
    te = edge_tile
    assert e_pad % te == 0
    n_tiles = e_pad // te
    grid = (2, n_layers, n_tiles)

    # Index maps clamp to the per-branch real extents so skipped tiles/layers issue no new DMA.
    def per_layer(s, l, t, m):
        return (s, jnp.minimum(l, m[s, 3]), 0, 0)

    def tile_rows(s, l, t, m):
        return (s, jnp.minimum(t, m[s, 2]), 0)

    def tile_cols(s, l, t, m):
        return (s, 0, jnp.minimum(t, m[s, 2]))

    def resident(s, l, t, m):
        return (0, 0)

    def per_branch(s, l, t, m):
        return (s, 0, 0)

    in_specs = [
        pl.BlockSpec((n_pad, ap), resident),           # atom embeddings (loaded once)
        pl.BlockSpec((1, te, 2), tile_rows),           # neighbor list, edges on sublanes
        pl.BlockSpec((1, 2, te), tile_cols),           # neighbor list, edges on lanes
        pl.BlockSpec((1, te, 1), tile_rows),           # pre-scaled distances
        pl.BlockSpec((1, 1, gp), per_branch),          # pre-scaled gaussian offsets
        pl.BlockSpec((1, 1, gp, gp), per_layer),       # w1  (bf16)
        pl.BlockSpec((1, 1, gp, fp), per_layer),       # w2  (bf16)
        pl.BlockSpec((1, 1, ap, fp), per_layer),       # wn  (bf16)
        pl.BlockSpec((1, 1, fp, ap), per_layer),       # wu1 (bf16)
        pl.BlockSpec((1, 1, ap, ap), per_layer),       # wu2 (bf16)
        pl.BlockSpec((1, 1, 8, maxd), per_layer),      # packed biases [b1,b2,bn,bu1,bu2]
    ]
    args = (node_input, nbr_rows, nbr_cols, e_st, conv['goff'],
            conv['w1'], conv['w2'], conv['wn'], conv['wu1'], conv['wu2'], conv['bias'])

    scratch = [pltpu.VMEM((n_pad, fp), jnp.bfloat16),   # node filter rf (per layer)
               pltpu.VMEM((n_pad, fp), jnp.float32)]    # scatter-add accumulator
    if cache_onehots:
        scratch += [pltpu.VMEM((n_tiles, 2 * te, n_pad), jnp.bfloat16),   # gather one-hots
                    pltpu.VMEM((n_tiles, n_pad, 2 * te), jnp.bfloat16)]   # scatter one-hots

    flops = 0
    trans = 0
    for b in range(2):
        nt_b = max(1, _cdiv(max(int(real_edges[b]), 1), te))
        l_b = int(real_layers[b])
        per_tile = 2 * te * (gp * gp + gp * fp) + 8 * te * n_pad * fp
        per_lay = 2 * n_pad * (ap * fp + fp * ap + ap * ap)
        flops += l_b * (nt_b * per_tile + per_lay)
        trans += l_b * (nt_b * te * 2 * gp + n_pad * ap)
    bytes_accessed = (sum(int(a.size) * a.dtype.itemsize for a in args)
                      + 2 * n_pad * ap * 4)
    cost = pl.CostEstimate(flops=int(flops), transcendentals=int(trans),
                           bytes_accessed=int(bytes_accessed))

    return pl.pallas_call(
        functools.partial(fused_seqconv_kernel, cache_onehots),
        out_shape=jax.ShapeDtypeStruct((2, n_pad, ap), jnp.float32),
        grid_spec=pltpu.PrefetchScalarGridSpec(
            num_scalar_prefetch=1,
            grid=grid,
            in_specs=in_specs,
            out_specs=pl.BlockSpec((1, n_pad, ap), per_branch),
            scratch_shapes=scratch),
        compiler_params=pltpu.CompilerParams(
            dimension_semantics=("parallel", "arbitrary", "arbitrary"),
            vmem_limit_bytes=int(vmem_limit_bytes)),
        cost_estimate=cost,
    )(meta, *args)


# ----------------------------------------------------------------------------
# Readout kernel: (r_sys + r_mol) -> Dense -> ssp -> Dense(->1) -> per-molecule sum
# ----------------------------------------------------------------------------
def readout_kernel(r_ref, mol_id_ref, w1_ref, b1_ref, w2row_ref, mb_ref, out_ref):
    r = r_ref[0] + r_ref[1]                                              # [N, AP] f32
    h = _ssp(jnp.dot(r.astype(jnp.bfloat16), w1_ref[...],
                     preferred_element_type=jnp.float32) + b1_ref[...])  # [N, HP]
    n_pad = r.shape[0]
    mp = out_ref.shape[0]
    mol_oh = (lax.broadcasted_iota(jnp.int32, (mp, n_pad), 0)
              == mol_id_ref[...]).astype(jnp.bfloat16)                   # [Mp, N]
    hm = jnp.dot(mol_oh, h.astype(jnp.bfloat16),
                 preferred_element_type=jnp.float32)                     # [Mp, HP]
    # final H->1 projection on the VPU (lane multiply + reduce) instead of a 1-wide matmul
    e = jnp.sum(hm * w2row_ref[...], axis=-1, keepdims=True) + mb_ref[...]   # [Mp, 1]
    out_ref[...] = jnp.broadcast_to(e, out_ref.shape)                    # lane-dense store


def readout(node_out, mol_id_row, w1, b1, w2_row, mol_bias, *, n_mols):
    mp = mol_bias.shape[0]
    args = (node_out, mol_id_row, w1, b1, w2_row, mol_bias)
    out = pl.pallas_call(
        readout_kernel,
        out_shape=jax.ShapeDtypeStruct((mp, LANE), jnp.float32),
        in_specs=[pl.BlockSpec(memory_space=pltpu.MemorySpace.VMEM)] * len(args),
        out_specs=pl.BlockSpec(memory_space=pltpu.MemorySpace.VMEM),
        compiler_params=pltpu.CompilerParams(vmem_limit_bytes=32 * 1024 * 1024),
    )(*args)
    return out[:n_mols, 0:1]


# ----------------------------------------------------------------------------
# Parameter construction (deterministic; mirrors __init__ shapes, zero-padded)
# ----------------------------------------------------------------------------
def _init_dense(key, fan_in, fan_out, pad_in, pad_out):
    limit = math.sqrt(6.0 / (fan_in + fan_out))
    w = jax.random.uniform(key, (fan_in, fan_out), jnp.float32, -limit, limit)
    wp = jnp.zeros((pad_in, pad_out), jnp.float32).at[:fan_in, :fan_out].set(w)
    bp = jnp.zeros((1, pad_out), jnp.float32)
    return wp, bp


def _init_conv_layer(key, a, f, g, ap, fp, gp):
    ks = jax.random.split(key, 5)
    w1, b1 = _init_dense(ks[0], g, g, gp, gp)     # edge filter Dense 1
    w2, b2 = _init_dense(ks[1], g, f, gp, fp)     # edge filter Dense 2
    wn, bn = _init_dense(ks[2], a, f, ap, fp)     # node filter
    wu1, bu1 = _init_dense(ks[3], f, a, fp, ap)   # update Dense 1
    wu2, bu2 = _init_dense(ks[4], a, a, ap, ap)   # update Dense 2
    return dict(w1=w1, b1=b1, w2=w2, b2=b2, wn=wn, bn=bn,
                wu1=wu1, bu1=bu1, wu2=wu2, bu2=bu2)


def _stack_convs(layers_sys, layers_mol, n_layers, gp, fp, ap):
    wnames = ['w1', 'w2', 'wn', 'wu1', 'wu2']
    out = {}
    for name in wnames:
        branches = []
        for layers in (layers_sys, layers_mol):
            zero = jnp.zeros_like(layers[0][name])          # zero layer == identity update
            rows = [layers[i][name] if i < len(layers) else zero for i in range(n_layers)]
            branches.append(jnp.stack(rows))
        out[name] = jnp.stack(branches).astype(jnp.bfloat16)   # [2, L, ...] weights in bf16
    # pack the 5 bias vectors per (branch, layer) into one [2, L, 8, maxd] f32 tensor
    maxd = max(gp, fp, ap)
    bias = jnp.zeros((2, n_layers, 8, maxd), jnp.float32)
    bnames = [('b1', gp), ('b2', fp), ('bn', fp), ('bu1', ap), ('bu2', ap)]
    for bi, layers in enumerate((layers_sys, layers_mol)):
        for li in range(n_layers):
            if li < len(layers):
                for ri, (name, d) in enumerate(bnames):
                    bias = bias.at[bi, li, ri, :d].set(layers[li][name][0])
    out['bias'] = bias
    return out


def _gauss_params(cutoff, g, gp):
    off = jnp.linspace(0.0, cutoff, g).astype(jnp.float32)
    width = float(cutoff) / float(g - 1)
    escale = math.sqrt(0.5) / width                         # exp(coeff*(e-mu)^2) == exp(-((e-mu)*escale)^2)
    goff = jnp.zeros((1, gp), jnp.float32).at[0, :g].set(off * escale)
    return goff, escale


def init_hybrid_graph_conv(key, modelparams):
    a = modelparams['n_atom_basis']
    f = modelparams['n_filters']
    g = modelparams['n_gaussians']
    ap, fp, gp = _round_up(a, LANE), _round_up(f, LANE), _round_up(g, LANE)
    hp = _round_up(max(a // 2, 1), LANE)
    ks = jax.random.split(key, 8)

    embed = jnp.zeros((100, ap), jnp.float32)
    embed = embed.at[:, :a].set(jax.random.normal(ks[0], (100, a), jnp.float32))
    embed = embed.at[0].set(0.0)                            # padding_idx=0

    sys_layers = [_init_conv_layer(k, a, f, g, ap, fp, gp)
                  for k in jax.random.split(ks[1], modelparams['sys_n_convolutions'])]
    mol_layers = [_init_conv_layer(k, a, f, g, ap, fp, gp)
                  for k in jax.random.split(ks[2], modelparams['mol_n_convolutions'])]
    n_layers = max(len(sys_layers), len(mol_layers))
    conv = _stack_convs(sys_layers, mol_layers, n_layers, gp, fp, ap)

    sys_goff, sys_escale = _gauss_params(modelparams['sys_cutoff'], g, gp)
    mol_goff, mol_escale = _gauss_params(modelparams['mol_cutoff'], g, gp)
    conv['goff'] = jnp.stack([sys_goff, mol_goff])          # [2, 1, GP]
    conv['escale'] = (sys_escale, mol_escale)

    # default readout: Linear(A -> A//2) -> shifted_softplus -> Linear(A//2 -> 1)
    rw1, rb1 = _init_dense(ks[3], a, a // 2, ap, hp)
    rw2, _ = _init_dense(ks[4], a // 2, 1, hp, 1)
    readout_p = {'w1': rw1.astype(jnp.bfloat16), 'b1': rb1,
                 'w2_row': rw2[:, 0][None, :],              # [1, HP] f32 (VPU projection)
                 'b2': jnp.zeros((1, 1), jnp.float32)}

    return {
        'embed': embed,
        'conv': conv,
        'readout': readout_p,
        'dims': dict(A=a, F=f, G=g, AP=ap, FP=fp, GP=gp, HP=hp),
        'n_convs': (modelparams['sys_n_convolutions'], modelparams['mol_n_convolutions']),
        # NOTE: self.sigma / V_ex_power exist in __init__ but V_ex is never used in forward().
    }


# ----------------------------------------------------------------------------
# Forward pass (glue in plain JAX, hot path = one fused Pallas kernel + readout)
# ----------------------------------------------------------------------------
def hybrid_graph_conv_forward(batch, params, *, edge_tile=None):
    nxyz = batch['nxyz']
    z = nxyz[:, 0].astype(jnp.int32)
    xyz = nxyz[:, 1:4].astype(jnp.float32)
    num_atoms = list(batch['num_atoms'])                    # static python list
    n_atoms = nxyz.shape[0]
    conv = params['conv']
    dims = params['dims']

    n_pad = _round_up(n_atoms, 8)
    node_input = jnp.zeros((n_pad, dims['AP']), jnp.float32).at[:n_atoms].set(
        params['embed'][z])                                 # atom_embed(r.long()).squeeze()

    # branch 0 = system neighbor list, branch 1 = intra-molecule neighbor list
    nbr_lists = (batch['nbr_list'], batch['atoms_nbr_list'])
    real_edges = [int(n.shape[0]) for n in nbr_lists]
    real_layers = list(params['n_convs'])                   # (sys, mol) conv counts

    vmem_cap = _vmem_capacity_bytes()
    vmem_limit = int(min(vmem_cap * 0.7, vmem_cap - 8 * 1024 * 1024))
    te = edge_tile or _pick_edge_tile(n_pad, dims['FP'], dims['GP'], max(real_edges), vmem_limit)
    e_pad = max(te, _round_up(max(real_edges), te))

    nbr_rows, nbr_cols, e_st = [], [], []
    for s, nbr in enumerate(nbr_lists):
        nbr = nbr.astype(jnp.int32)
        d = xyz[nbr[:, 1]] - xyz[nbr[:, 0]]                 # TODO(synk): pbc offsets assumed 0
        e = jnp.sqrt(jnp.sum(d * d, axis=1, keepdims=True)) * conv['escale'][s]
        pad = e_pad - nbr.shape[0]
        nbr_p = jnp.pad(nbr, ((0, pad), (0, 0)), constant_values=-1)     # -1 => inert edge
        nbr_rows.append(nbr_p)
        nbr_cols.append(nbr_p.T)
        e_st.append(jnp.pad(e, ((0, pad), (0, 0))))
    nbr_rows = jnp.stack(nbr_rows)                          # [2, E_pad, 2] int32 (edges on sublanes)
    nbr_cols = jnp.stack(nbr_cols)                          # [2, 2, E_pad] int32 (edges on lanes)
    e_st = jnp.stack(e_st)                                  # [2, E_pad, 1] f32 pre-scaled

    n_tiles = e_pad // te
    nt = [max(1, _cdiv(max(real_edges[b], 1), te)) for b in range(2)]
    meta = jnp.array([[nt[0], real_layers[0], nt[0] - 1, max(real_layers[0] - 1, 0)],
                      [nt[1], real_layers[1], nt[1] - 1, max(real_layers[1] - 1, 0)]],
                     jnp.int32)

    # cache one-hots across layers when they comfortably fit the VMEM budget
    n_layers = conv['w1'].shape[1]
    cache_bytes = 4 * e_pad * (_round_up(n_pad, LANE) + n_pad)
    cache_onehots = (n_layers > 1) and (cache_bytes <= vmem_limit // 4)

    node_out = fused_seqconv(node_input, nbr_rows, nbr_cols, e_st, meta, conv,
                             edge_tile=te, cache_onehots=cache_onehots,
                             vmem_limit_bytes=vmem_limit,
                             real_edges=real_edges, real_layers=real_layers)
    # node_out[0] == r_sys, node_out[1] == r_mol (rows >= n_atoms are padding)

    n_mols = len(num_atoms)
    mp = _round_up(max(n_mols, 8), 8)
    mol_id = jnp.full((n_pad,), -1, jnp.int32)
    mol_id = mol_id.at[:n_atoms].set(
        jnp.repeat(jnp.arange(n_mols, dtype=jnp.int32), jnp.array(num_atoms),
                   total_repeat_length=n_atoms))
    mol_id = mol_id.reshape(1, n_pad)
    ro = params['readout']
    counts = jnp.zeros((mp, 1), jnp.float32).at[:n_mols, 0].set(
        jnp.array(num_atoms, jnp.float32))
    mol_bias = counts * ro['b2']                            # per-molecule readout bias

    energy = readout(node_out, mol_id, ro['w1'], ro['b1'], ro['w2_row'], mol_bias,
                     n_mols=n_mols)                          # [M, 1]

    # TODO(synk): 'energy_grad' (compute_grad w.r.t. xyz in batch_and_sum) would require
    # custom VJPs for the Pallas kernels; not requested in batch keys.
    return {'energy': energy}


# ----------------------------------------------------------------------------
# Main: deterministic synthetic batch, run once.
# ----------------------------------------------------------------------------
if __name__ == "__main__":
    modelparams = {
        'n_atom_basis': 32,
        'n_filters': 32,
        'n_gaussians': 16,
        'mol_n_convolutions': 2,
        'mol_cutoff': 5.0,
        'sys_n_convolutions': 2,
        'sys_cutoff': 8.0,
        'V_ex_power': 12,
        'V_ex_sigma': 3.0,
        'trainable_gauss': False,
    }

    key = jax.random.PRNGKey(0)
    k_param, k_z, k_xyz = jax.random.split(key, 3)
    params = init_hybrid_graph_conv(k_param, modelparams)

    n_mols, atoms_per_mol = 2, 16
    n_atoms = n_mols * atoms_per_mol

    # atomic numbers in [1, 99], coordinates: two molecules offset in x
    z = jax.random.randint(k_z, (n_atoms,), 1, 100).astype(jnp.float32)
    xyz = jax.random.uniform(k_xyz, (n_atoms, 3), jnp.float32, -2.0, 2.0)
    centers = jnp.repeat(jnp.array([[0.0, 0.0, 0.0], [8.0, 0.0, 0.0]], jnp.float32),
                         atoms_per_mol, axis=0)
    xyz = xyz + centers
    nxyz = jnp.concatenate([z[:, None], xyz], axis=1)       # [N, 4]

    # neighbor lists (i < j): intra-molecular for atoms_nbr_list, all pairs for nbr_list
    mol_pairs = []
    for m in range(n_mols):
        base = m * atoms_per_mol
        mol_pairs.extend((base + i, base + j)
                         for i, j in itertools.combinations(range(atoms_per_mol), 2))
    sys_pairs = list(itertools.combinations(range(n_atoms), 2))

    batch = {
        'nxyz': nxyz,
        'num_atoms': [atoms_per_mol, atoms_per_mol],
        'atoms_nbr_list': jnp.array(mol_pairs, jnp.int32),  # [240, 2]
        'nbr_list': jnp.array(sys_pairs, jnp.int32),        # [496, 2]
        'energy': jnp.zeros((n_mols,), jnp.float32),        # so 'energy' is a predict key
    }

    results = hybrid_graph_conv_forward(batch, params)
    energy = jax.block_until_ready(results['energy'])
    assert energy.shape == (n_mols, 1)
    assert bool(jnp.all(jnp.isfinite(energy)))
    print("KERNEL_OK")
</pallas_src>

<mosaic_0001>
module attributes {stable_mosaic.version = 11 : i64} {
  func.func @fused_seqconv_kernel(%arg0: i32, %arg1: i32, %arg2: i32, %arg3: memref<2x4xi32, #tpu.memory_space<smem>>, %arg4: memref<32x128xf32, #tpu.memory_space<vmem>>, %arg5: memref<1x512x2xi32, #tpu.memory_space<vmem>>, %arg6: memref<1x2x512xi32, #tpu.memory_space<vmem>>, %arg7: memref<1x512x1xf32, #tpu.memory_space<vmem>>, %arg8: memref<1x1x128xf32, #tpu.memory_space<vmem>>, %arg9: memref<1x1x128x128xbf16, #tpu.memory_space<vmem>>, %arg10: memref<1x1x128x128xbf16, #tpu.memory_space<vmem>>, %arg11: memref<1x1x128x128xbf16, #tpu.memory_space<vmem>>, %arg12: memref<1x1x128x128xbf16, #tpu.memory_space<vmem>>, %arg13: memref<1x1x128x128xbf16, #tpu.memory_space<vmem>>, %arg14: memref<1x1x8x128xf32, #tpu.memory_space<vmem>>, %arg15: memref<1x32x128xf32, #tpu.memory_space<vmem>>, %arg16: memref<32x128xbf16, #tpu.memory_space<vmem>>, %arg17: memref<32x128xf32, #tpu.memory_space<vmem>>, %arg18: memref<1x1024x32xbf16, #tpu.memory_space<vmem>>, %arg19: memref<1x32x1024xbf16, #tpu.memory_space<vmem>>) attributes {dimension_semantics = [#tpu.dimension_semantics<parallel>, #tpu.dimension_semantics<arbitrary>, #tpu.dimension_semantics<arbitrary>], iteration_bounds = array<i64: 2, 2, 1>, scalar_prefetch = 1 : i64, scratch_operands = 4 : i64, tpu.core_type = #tpu.core_type<tc>, window_params = [{pipeline_mode = #tpu.pipeline_mode<synchronous>, transform_indices = @transform_0, window_bounds = array<i64: 32, 128>}, {transform_indices = @transform_1, window_bounds = array<i64: 1, 512, 2>}, {transform_indices = @transform_2, window_bounds = array<i64: 1, 2, 512>}, {transform_indices = @transform_3, window_bounds = array<i64: 1, 512, 1>}, {transform_indices = @transform_4, window_bounds = array<i64: 1, 1, 128>}, {transform_indices = @transform_5, window_bounds = array<i64: 1, 1, 128, 128>}, {transform_indices = @transform_6, window_bounds = array<i64: 1, 1, 128, 128>}, {transform_indices = @transform_7, window_bounds = array<i64: 1, 1, 128, 128>}, {transform_indices = @transform_8, window_bounds = array<i64: 1, 1, 128, 128>}, {transform_indices = @transform_9, window_bounds = array<i64: 1, 1, 128, 128>}, {transform_indices = @transform_10, window_bounds = array<i64: 1, 1, 8, 128>}, {transform_indices = @transform_11, window_bounds = array<i64: 1, 32, 128>}]} {
    %0 = arith.index_cast %arg0 : i32 to index
    %c0 = arith.constant 0 : index
    %1 = memref.load %arg3[%0, %c0] : memref<2x4xi32, #tpu.memory_space<smem>>
    %2 = arith.index_cast %arg0 : i32 to index
    %c1 = arith.constant 1 : index
    %3 = memref.load %arg3[%2, %c1] : memref<2x4xi32, #tpu.memory_space<smem>>
    %4 = arith.cmpi slt, %arg1, %3 : i32
    %c0_i32 = arith.constant 0 : i32
    %5 = arith.cmpi eq, %arg1, %c0_i32 : i32
    %c0_i32_0 = arith.constant 0 : i32
    %6 = arith.cmpi eq, %arg2, %c0_i32_0 : i32
    %7 = arith.andi %5, %6 : i1
    %8 = arith.extui %7 : i1 to i32
    %c0_i32_1 = arith.constant 0 : i32
    %9 = arith.cmpi ne, %8, %c0_i32_1 : i32
    scf.if %9 {
      %c0_7 = arith.constant 0 : index
      %c0_8 = arith.constant 0 : index
      %22 = vector.load %arg4[%c0_7, %c0_8] : memref<32x128xf32, #tpu.memory_space<vmem>>, vector<32x128xf32>
      %c0_9 = arith.constant 0 : index
      %c0_10 = arith.constant 0 : index
      %c0_11 = arith.constant 0 : index
      %23 = vector.load %arg15[%c0_9, %c0_10, %c0_11] : memref<1x32x128xf32, #tpu.memory_space<vmem>>, vector<1x32x128xf32>
      %24 = vector.shape_cast %23 : vector<1x32x128xf32> to vector<32x128xf32>
      %25 = vector.shape_cast %22 : vector<32x128xf32> to vector<1x32x128xf32>
      tpu.vector_store %arg15[%c0_9, %c0_10, %c0_11], %25 {strides = array<i32>} : memref<1x32x128xf32, #tpu.memory_space<vmem>>, vector<1x32x128xf32>,
    } else {
    }
    %c0_i32_2 = arith.constant 0 : i32
    %10 = arith.cmpi eq, %arg2, %c0_i32_2 : i32
    %11 = arith.andi %4, %10 : i1
    %12 = arith.extui %11 : i1 to i32
    %c0_i32_3 = arith.constant 0 : i32
    %13 = arith.cmpi ne, %12, %c0_i32_3 : i32
    scf.if %13 {
      %c0_7 = arith.constant 0 : index
      %c0_8 = arith.constant 0 : index
      %c0_9 = arith.constant 0 : index
      %c0_10 = arith.constant 0 : index
      %22 = vector.load %arg14[%c0_7, %c0_8, %c0_9, %c0_10] : memref<1x1x8x128xf32, #tpu.memory_space<vmem>>, vector<1x1x8x128xf32>
      %23 = vector.shape_cast %22 : vector<1x1x8x128xf32> to vector<8x128xf32>
      %c0_11 = arith.constant 0 : index
      %c0_12 = arith.constant 0 : index
      %c0_13 = arith.constant 0 : index
      %24 = vector.load %arg15[%c0_11, %c0_12, %c0_13] : memref<1x32x128xf32, #tpu.memory_space<vmem>>, vector<1x32x128xf32>
      %25 = vector.shape_cast %24 : vector<1x32x128xf32> to vector<32x128xf32>
      %26 = arith.truncf %25 : vector<32x128xf32> to vector<32x128xbf16>
      %c0_14 = arith.constant 0 : index
      %c0_15 = arith.constant 0 : index
      %c0_16 = arith.constant 0 : index
      %c0_17 = arith.constant 0 : index
      %27 = vector.load %arg11[%c0_14, %c0_15, %c0_16, %c0_17] : memref<1x1x128x128xbf16, #tpu.memory_space<vmem>>, vector<1x1x128x128xbf16>
      %28 = vector.shape_cast %27 : vector<1x1x128x128xbf16> to vector<128x128xbf16>
      %cst = arith.constant dense<0.000000e+00> : vector<32x128xf32>
      %29 = tpu.matmul %26, %28, %cst {dimension_numbers = #tpu.dot_dimension_numbers<[1], [0], [0], [1], [0, 0, 1, 1], [], []>} : vector<32x128xbf16>, vector<128x128xbf16>, vector<32x128xf32> -> vector<32x128xf32>
      %30 = vector.extract_strided_slice %23 {offsets = [2, 0], sizes = [1, 128], strides = [1, 1]} : vector<8x128xf32> to vector<1x128xf32>
      %31 = vector.broadcast %30 : vector<1x128xf32> to vector<32x128xf32>
      %32 = arith.addf %29, %31 : vector<32x128xf32>
      %33 = arith.truncf %32 : vector<32x128xf32> to vector<32x128xbf16>
      %c0_18 = arith.constant 0 : index
      %c0_19 = arith.constant 0 : index
      %34 = vector.load %arg16[%c0_18, %c0_19] : memref<32x128xbf16, #tpu.memory_space<vmem>>, vector<32x128xbf16>
      tpu.vector_store %arg16[%c0_18, %c0_19], %33 {strides = array<i32>} : memref<32x128xbf16, #tpu.memory_space<vmem>>, vector<32x128xbf16>,
      %cst_20 = arith.constant 0.000000e+00 : f32
      %35 = vector.broadcast %cst_20 : f32 to vector<32x128xf32>
      %c0_21 = arith.constant 0 : index
      %c0_22 = arith.constant 0 : index
      %36 = vector.load %arg17[%c0_21, %c0_22] : memref<32x128xf32, #tpu.memory_space<vmem>>, vector<32x128xf32>
      tpu.vector_store %arg17[%c0_21, %c0_22], %35 {strides = array<i32>} : memref<32x128xf32, #tpu.memory_space<vmem>>, vector<32x128xf32>,
    } else {
    }
    %14 = arith.cmpi slt, %arg2, %1 : i32
    %15 = arith.andi %4, %14 : i1
    %16 = arith.extui %15 : i1 to i32
    %c0_i32_4 = arith.constant 0 : i32
    %17 = arith.cmpi ne, %16, %c0_i32_4 : i32
    scf.if %17 {
      %c0_7 = arith.constant 0 : index
      %c0_8 = arith.constant 0 : index
      %c0_9 = arith.constant 0 : index
      %c0_10 = arith.constant 0 : index
      %22 = vector.load %arg14[%c0_7, %c0_8, %c0_9, %c0_10] : memref<1x1x8x128xf32, #tpu.memory_space<vmem>>, vector<1x1x8x128xf32>
      %23 = vector.shape_cast %22 : vector<1x1x8x128xf32> to vector<8x128xf32>
      %c0_11 = arith.constant 0 : index
      %c0_12 = arith.constant 0 : index
      %c0_13 = arith.constant 0 : index
      %24 = vector.load %arg7[%c0_11, %c0_12, %c0_13] : memref<1x512x1xf32, #tpu.memory_space<vmem>>, vector<1x512x1xf32>
      %25 = vector.shape_cast %24 : vector<1x512x1xf32> to vector<512x1xf32>
      %c0_i32_14 = arith.constant 0 : i32
      %26 = arith.cmpi eq, %arg1, %c0_i32_14 : i32
      %27 = arith.extui %26 : i1 to i32
      %c0_i32_15 = arith.constant 0 : i32
      %28 = arith.cmpi ne, %27, %c0_i32_15 : i32
      scf.if %28 {
        %c0_45 = arith.constant 0 : index
        %c0_46 = arith.constant 0 : index
        %c0_47 = arith.constant 0 : index
        %79 = vector.load %arg5[%c0_45, %c0_46, %c0_47] : memref<1x512x2xi32, #tpu.memory_space<vmem>>, vector<1x512x2xi32>
        %80 = vector.shape_cast %79 : vector<1x512x2xi32> to vector<512x2xi32>
        %c0_48 = arith.constant 0 : index
        %c0_49 = arith.constant 0 : index
        %c0_50 = arith.constant 0 : index
        %81 = vector.load %arg6[%c0_48, %c0_49, %c0_50] : memref<1x2x512xi32, #tpu.memory_space<vmem>>, vector<1x2x512xi32>
        %82 = vector.shape_cast %81 : vector<1x2x512xi32> to vector<2x512xi32>
        %83 = vector.extract_strided_slice %80 {offsets = [0, 0], sizes = [512, 1], strides = [1, 1]} : vector<512x2xi32> to vector<512x1xi32>
        %84 = vector.extract_strided_slice %80 {offsets = [0, 1], sizes = [512, 1], strides = [1, 1]} : vector<512x2xi32> to vector<512x1xi32>
        %85 = tpu.concatenate %83, %84 in 0 : vector<512x1xi32>, vector<512x1xi32> -> vector<1024x1xi32>
        %86 = tpu.iota {dimensions = array<i32: 1>} : vector<1024x32xi32>
        %87 = vector.broadcast %85 : vector<1024x1xi32> to vector<1024x32xi32>
        %88 = arith.cmpi eq, %86, %87 : vector<1024x32xi32>
        %89 = arith.extui %88 : vector<1024x32xi1> to vector<1024x32xi32>
        %90 = arith.sitofp %89 : vector<1024x32xi32> to vector<1024x32xf32>
        %91 = arith.truncf %90 : vector<1024x32xf32> to vector<1024x32xbf16>
        %92 = vector.extract_strided_slice %82 {offsets = [1, 0], sizes = [1, 512], strides = [1, 1]} : vector<2x512xi32> to vector<1x512xi32>
        %93 = vector.extract_strided_slice %82 {offsets = [0, 0], sizes = [1, 512], strides = [1, 1]} : vector<2x512xi32> to vector<1x512xi32>
        %94 = tpu.concatenate %92, %93 in 1 : vector<1x512xi32>, vector<1x512xi32> -> vector<1x1024xi32>
        %95 = tpu.iota {dimensions = array<i32: 0>} : vector<32x1024xi32>
        %96 = vector.broadcast %94 : vector<1x1024xi32> to vector<32x1024xi32>
        %97 = arith.cmpi eq, %95, %96 : vector<32x1024xi32>
        %98 = arith.extui %97 : vector<32x1024xi1> to vector<32x1024xi32>
        %99 = arith.sitofp %98 : vector<32x1024xi32> to vector<32x1024xf32>
        %100 = arith.truncf %99 : vector<32x1024xf32> to vector<32x1024xbf16>
        %101 = arith.index_cast %arg2 : i32 to index
        %c0_51 = arith.constant 0 : index
        %c0_52 = arith.constant 0 : index
        %102 = vector.load %arg18[%101, %c0_51, %c0_52] : memref<1x1024x32xbf16, #tpu.memory_space<vmem>>, vector<1x1024x32xbf16>
        %103 = vector.shape_cast %102 : vector<1x1024x32xbf16> to vector<1024x32xbf16>
        %104 = vector.shape_cast %91 : vector<1024x32xbf16> to vector<1x1024x32xbf16>
        tpu.vector_store %arg18[%101, %c0_51, %c0_52], %104 {strides = array<i32>} : memref<1x1024x32xbf16, #tpu.memory_space<vmem>>, vector<1x1024x32xbf16>,
        %105 = arith.index_cast %arg2 : i32 to index
        %c0_53 = arith.constant 0 : index
        %c0_54 = arith.constant 0 : index
        %106 = vector.load %arg19[%105, %c0_53, %c0_54] : memref<1x32x1024xbf16, #tpu.memory_space<vmem>>, vector<1x32x1024xbf16>
        %107 = vector.shape_cast %106 : vector<1x32x1024xbf16> to vector<32x1024xbf16>
        %108 = vector.shape_cast %100 : vector<32x1024xbf16> to vector<1x32x1024xbf16>
        tpu.vector_store %arg19[%105, %c0_53, %c0_54], %108 {strides = array<i32>} : memref<1x32x1024xbf16, #tpu.memory_space<vmem>>, vector<1x32x1024xbf16>,
      } else {
      }
      %29 = arith.index_cast %arg2 : i32 to index
      %c0_16 = arith.constant 0 : index
      %c0_17 = arith.constant 0 : index
      %30 = vector.load %arg18[%29, %c0_16, %c0_17] : memref<1x1024x32xbf16, #tpu.memory_space<vmem>>, vector<1x1024x32xbf16>
      %31 = vector.shape_cast %30 : vector<1x1024x32xbf16> to vector<1024x32xbf16>
      %32 = arith.index_cast %arg2 : i32 to index
      %c0_18 = arith.constant 0 : index
      %c0_19 = arith.constant 0 : index
      %33 = vector.load %arg19[%32, %c0_18, %c0_19] : memref<1x32x1024xbf16, #tpu.memory_space<vmem>>, vector<1x32x1024xbf16>
      %34 = vector.shape_cast %33 : vector<1x32x1024xbf16> to vector<32x1024xbf16>
      %c0_20 = arith.constant 0 : index
      %c0_21 = arith.constant 0 : index
      %c0_22 = arith.constant 0 : index
      %35 = vector.load %arg8[%c0_20, %c0_21, %c0_22] : memref<1x1x128xf32, #tpu.memory_space<vmem>>, vector<1x1x128xf32>
      %36 = vector.shape_cast %35 : vector<1x1x128xf32> to vector<1x128xf32>
      %37 = vector.broadcast %25 : vector<512x1xf32> to vector<512x128xf32>
      %38 = vector.broadcast %36 : vector<1x128xf32> to vector<512x128xf32>
      %39 = arith.subf %37, %38 : vector<512x128xf32>
      %40 = arith.mulf %39, %39 : vector<512x128xf32>
      %cst = arith.constant 0.000000e+00 : f32
      %41 = vector.broadcast %cst : f32 to vector<512x128xf32>
      %42 = arith.subf %41, %40 : vector<512x128xf32>
      %43 = math.exp %42 : vector<512x128xf32>
      %44 = arith.truncf %43 : vector<512x128xf32> to vector<512x128xbf16>
      %c0_23 = arith.constant 0 : index
      %c0_24 = arith.constant 0 : index
      %c0_25 = arith.constant 0 : index
      %c0_26 = arith.constant 0 : index
      %45 = vector.load %arg9[%c0_23, %c0_24, %c0_25, %c0_26] : memref<1x1x128x128xbf16, #tpu.memory_space<vmem>>, vector<1x1x128x128xbf16>
      %46 = vector.shape_cast %45 : vector<1x1x128x128xbf16> to vector<128x128xbf16>
      %cst_27 = arith.constant dense<0.000000e+00> : vector<512x128xf32>
      %47 = tpu.matmul %44, %46, %cst_27 {dimension_numbers = #tpu.dot_dimension_numbers<[1], [0], [0], [1], [0, 0, 1, 1], [], []>} : vector<512x128xbf16>, vector<128x128xbf16>, vector<512x128xf32> -> vector<512x128xf32>
      %48 = vector.extract_strided_slice %23 {offsets = [0, 0], sizes = [1, 128], strides = [1, 1]} : vector<8x128xf32> to vector<1x128xf32>
      %49 = vector.broadcast %48 : vector<1x128xf32> to vector<512x128xf32>
      %50 = arith.addf %47, %49 : vector<512x128xf32>
      %cst_28 = arith.constant 0.000000e+00 : f32
      %51 = vector.broadcast %cst_28 : f32 to vector<512x128xf32>
      %52 = arith.maximumf %50, %51 : vector<512x128xf32>
      %53 = math.absf %50 : vector<512x128xf32>
      %cst_29 = arith.constant 0.000000e+00 : f32
      %54 = vector.broadcast %cst_29 : f32 to vector<512x128xf32>
      %55 = arith.subf %54, %53 : vector<512x128xf32>
      %56 = math.exp %55 : vector<512x128xf32>
      %cst_30 = arith.constant 1.000000e+00 : f32
      %57 = vector.broadcast %cst_30 : f32 to vector<512x128xf32>
      %58 = arith.addf %57, %56 : vector<512x128xf32>
      %59 = math.log %58 : vector<512x128xf32>
      %60 = arith.addf %52, %59 : vector<512x128xf32>
      %cst_31 = arith.constant 0.693147182 : f32
      %61 = vector.broadcast %cst_31 : f32 to vector<512x128xf32>
      %62 = arith.subf %60, %61 : vector<512x128xf32>
      %63 = arith.truncf %62 : vector<512x128xf32> to vector<512x128xbf16>
      %c0_32 = arith.constant 0 : index
      %c0_33 = arith.constant 0 : index
      %c0_34 = arith.constant 0 : index
      %c0_35 = arith.constant 0 : index
      %64 = vector.load %arg10[%c0_32, %c0_33, %c0_34, %c0_35] : memref<1x1x128x128xbf16, #tpu.memory_space<vmem>>, vector<1x1x128x128xbf16>
      %65 = vector.shape_cast %64 : vector<1x1x128x128xbf16> to vector<128x128xbf16>
      %cst_36 = arith.constant dense<0.000000e+00> : vector<512x128xf32>
      %66 = tpu.matmul %63, %65, %cst_36 {dimension_numbers = #tpu.dot_dimension_numbers<[1], [0], [0], [1], [0, 0, 1, 1], [], []>} : vector<512x128xbf16>, vector<128x128xbf16>, vector<512x128xf32> -> vector<512x128xf32>
      %67 = vector.extract_strided_slice %23 {offsets = [1, 0], sizes = [1, 128], strides = [1, 1]} : vector<8x128xf32> to vector<1x128xf32>
      %68 = vector.broadcast %67 : vector<1x128xf32> to vector<512x128xf32>
      %69 = arith.addf %66, %68 : vector<512x128xf32>
      %c0_37 = arith.constant 0 : index
      %c0_38 = arith.constant 0 : index
      %70 = vector.load %arg16[%c0_37, %c0_38] : memref<32x128xbf16, #tpu.memory_space<vmem>>, vector<32x128xbf16>
      %cst_39 = arith.constant dense<0.000000e+00> : vector<1024x128xf32>
      %71 = tpu.matmul %31, %70, %cst_39 {dimension_numbers = #tpu.dot_dimension_numbers<[1], [0], [0], [1], [0, 0, 1, 1], [], []>} : vector<1024x32xbf16>, vector<32x128xbf16>, vector<1024x128xf32> -> vector<1024x128xf32>
      %72 = tpu.concatenate %69, %69 in 0 : vector<512x128xf32>, vector<512x128xf32> -> vector<1024x128xf32>
      %73 = arith.mulf %71, %72 : vector<1024x128xf32>
      %74 = arith.truncf %73 : vector<1024x128xf32> to vector<1024x128xbf16>
      %c0_40 = arith.constant 0 : index
      %c0_41 = arith.constant 0 : index
      %75 = vector.load %arg17[%c0_40, %c0_41] : memref<32x128xf32, #tpu.memory_space<vmem>>, vector<32x128xf32>
      %cst_42 = arith.constant dense<0.000000e+00> : vector<32x128xf32>
      %76 = tpu.matmul %34, %74, %cst_42 {dimension_numbers = #tpu.dot_dimension_numbers<[1], [0], [0], [1], [0, 0, 1, 1], [], []>} : vector<32x1024xbf16>, vector<1024x128xbf16>, vector<32x128xf32> -> vector<32x128xf32>
      %77 = arith.addf %75, %76 : vector<32x128xf32>
      %c0_43 = arith.constant 0 : index
      %c0_44 = arith.constant 0 : index
      %78 = vector.load %arg17[%c0_43, %c0_44] : memref<32x128xf32, #tpu.memory_space<vmem>>, vector<32x128xf32>
      tpu.vector_store %arg17[%c0_43, %c0_44], %77 {strides = array<i32>} : memref<32x128xf32, #tpu.memory_space<vmem>>, vector<32x128xf32>,
    } else {
    }
    %c0_i32_5 = arith.constant 0 : i32
    %18 = arith.cmpi eq, %arg2, %c0_i32_5 : i32
    %19 = arith.andi %4, %18 : i1
    %20 = arith.extui %19 : i1 to i32
    %c0_i32_6 = arith.constant 0 : i32
    %21 = arith.cmpi ne, %20, %c0_i32_6 : i32
    scf.if %21 {
      %c0_7 = arith.constant 0 : index
      %c0_8 = arith.constant 0 : index
      %c0_9 = arith.constant 0 : index
      %c0_10 = arith.constant 0 : index
      %22 = vector.load %arg14[%c0_7, %c0_8, %c0_9, %c0_10] : memref<1x1x8x128xf32, #tpu.memory_space<vmem>>, vector<1x1x8x128xf32>
      %23 = vector.shape_cast %22 : vector<1x1x8x128xf32> to vector<8x128xf32>
      %c0_11 = arith.constant 0 : index
      %c0_12 = arith.constant 0 : index
      %24 = vector.load %arg17[%c0_11, %c0_12] : memref<32x128xf32, #tpu.memory_space<vmem>>, vector<32x128xf32>
      %25 = arith.truncf %24 : vector<32x128xf32> to vector<32x128xbf16>
      %c0_13 = arith.constant 0 : index
      %c0_14 = arith.constant 0 : index
      %c0_15 = arith.constant 0 : index
      %c0_16 = arith.constant 0 : index
      %26 = vector.load %arg12[%c0_13, %c0_14, %c0_15, %c0_16] : memref<1x1x128x128xbf16, #tpu.memory_space<vmem>>, vector<1x1x128x128xbf16>
      %27 = vector.shape_cast %26 : vector<1x1x128x128xbf16> to vector<128x128xbf16>
      %cst = arith.constant dense<0.000000e+00> : vector<32x128xf32>
      %28 = tpu.matmul %25, %27, %cst {dimension_numbers = #tpu.dot_dimension_numbers<[1], [0], [0], [1], [0, 0, 1, 1], [], []>} : vector<32x128xbf16>, vector<128x128xbf16>, vector<32x128xf32> -> vector<32x128xf32>
      %29 = vector.extract_strided_slice %23 {offsets = [3, 0], sizes = [1, 128], strides = [1, 1]} : vector<8x128xf32> to vector<1x128xf32>
      %30 = vector.broadcast %29 : vector<1x128xf32> to vector<32x128xf32>
      %31 = arith.addf %28, %30 : vector<32x128xf32>
      %cst_17 = arith.constant 0.000000e+00 : f32
      %32 = vector.broadcast %cst_17 : f32 to vector<32x128xf32>
      %33 = arith.maximumf %31, %32 : vector<32x128xf32>
      %34 = math.absf %31 : vector<32x128xf32>
      %cst_18 = arith.constant 0.000000e+00 : f32
      %35 = vector.broadcast %cst_18 : f32 to vector<32x128xf32>
      %36 = arith.subf %35, %34 : vector<32x128xf32>
      %37 = math.exp %36 : vector<32x128xf32>
      %cst_19 = arith.constant 1.000000e+00 : f32
      %38 = vector.broadcast %cst_19 : f32 to vector<32x128xf32>
      %39 = arith.addf %38, %37 : vector<32x128xf32>
      %40 = math.log %39 : vector<32x128xf32>
      %41 = arith.addf %33, %40 : vector<32x128xf32>
      %cst_20 = arith.constant 0.693147182 : f32
      %42 = vector.broadcast %cst_20 : f32 to vector<32x128xf32>
      %43 = arith.subf %41, %42 : vector<32x128xf32>
      %44 = arith.truncf %43 : vector<32x128xf32> to vector<32x128xbf16>
      %c0_21 = arith.constant 0 : index
      %c0_22 = arith.constant 0 : index
      %c0_23 = arith.constant 0 : index
      %c0_24 = arith.constant 0 : index
      %45 = vector.load %arg13[%c0_21, %c0_22, %c0_23, %c0_24] : memref<1x1x128x128xbf16, #tpu.memory_space<vmem>>, vector<1x1x128x128xbf16>
      %46 = vector.shape_cast %45 : vector<1x1x128x128xbf16> to vector<128x128xbf16>
      %cst_25 = arith.constant dense<0.000000e+00> : vector<32x128xf32>
      %47 = tpu.matmul %44, %46, %cst_25 {dimension_numbers = #tpu.dot_dimension_numbers<[1], [0], [0], [1], [0, 0, 1, 1], [], []>} : vector<32x128xbf16>, vector<128x128xbf16>, vector<32x128xf32> -> vector<32x128xf32>
      %48 = vector.extract_strided_slice %23 {offsets = [4, 0], sizes = [1, 128], strides = [1, 1]} : vector<8x128xf32> to vector<1x128xf32>
      %49 = vector.broadcast %48 : vector<1x128xf32> to vector<32x128xf32>
      %50 = arith.addf %47, %49 : vector<32x128xf32>
      %c0_26 = arith.constant 0 : index
      %c0_27 = arith.constant 0 : index
      %c0_28 = arith.constant 0 : index
      %51 = vector.load %arg15[%c0_26, %c0_27, %c0_28] : memref<1x32x128xf32, #tpu.memory_space<vmem>>, vector<1x32x128xf32>
      %52 = vector.shape_cast %51 : vector<1x32x128xf32> to vector<32x128xf32>
      %53 = arith.addf %52, %50 : vector<32x128xf32>
      %c0_29 = arith.constant 0 : index
      %c0_30 = arith.constant 0 : index
      %c0_31 = arith.constant 0 : index
      %54 = vector.load %arg15[%c0_29, %c0_30, %c0_31] : memref<1x32x128xf32, #tpu.memory_space<vmem>>, vector<1x32x128xf32>
      %55 = vector.shape_cast %54 : vector<1x32x128xf32> to vector<32x128xf32>
      %56 = vector.shape_cast %53 : vector<32x128xf32> to vector<1x32x128xf32>
      tpu.vector_store %arg15[%c0_29, %c0_30, %c0_31], %56 {strides = array<i32>} : memref<1x32x128xf32, #tpu.memory_space<vmem>>, vector<1x32x128xf32>,
    } else {
    }
    return
  }
  func.func @transform_0(%arg0: i32, %arg1: i32, %arg2: i32, %arg3: memref<2x4xi32, #tpu.memory_space<smem>>) -> (i32, i32) {
    %c0_i32 = arith.constant 0 : i32
    %c0_i32_0 = arith.constant 0 : i32
    %c0_i32_1 = arith.constant 0 : i32
    return %c0_i32, %c0_i32_0 : i32, i32
  }
  func.func @transform_1(%arg0: i32, %arg1: i32, %arg2: i32, %arg3: memref<2x4xi32, #tpu.memory_space<smem>>) -> (i32, i32, i32) {
    %0 = arith.index_cast %arg0 : i32 to index
    %c2 = arith.constant 2 : index
    %1 = memref.load %arg3[%0, %c2] : memref<2x4xi32, #tpu.memory_space<smem>>
    %2 = arith.minsi %arg2, %1 : i32
    %c0_i32 = arith.constant 0 : i32
    %c0_i32_0 = arith.constant 0 : i32
    return %arg0, %2, %c0_i32 : i32, i32, i32
  }
  func.func @transform_2(%arg0: i32, %arg1: i32, %arg2: i32, %arg3: memref<2x4xi32, #tpu.memory_space<smem>>) -> (i32, i32, i32) {
    %0 = arith.index_cast %arg0 : i32 to index
    %c2 = arith.constant 2 : index
    %1 = memref.load %arg3[%0, %c2] : memref<2x4xi32, #tpu.memory_space<smem>>
    %2 = arith.minsi %arg2, %1 : i32
    %c0_i32 = arith.constant 0 : i32
    %c0_i32_0 = arith.constant 0 : i32
    return %arg0, %c0_i32, %2 : i32, i32, i32
  }
  func.func @transform_3(%arg0: i32, %arg1: i32, %arg2: i32, %arg3: memref<2x4xi32, #tpu.memory_space<smem>>) -> (i32, i32, i32) {
    %0 = arith.index_cast %arg0 : i32 to index
    %c2 = arith.constant 2 : index
    %1 = memref.load %arg3[%0, %c2] : memref<2x4xi32, #tpu.memory_space<smem>>
    %2 = arith.minsi %arg2, %1 : i32
    %c0_i32 = arith.constant 0 : i32
    %c0_i32_0 = arith.constant 0 : i32
    return %arg0, %2, %c0_i32 : i32, i32, i32
  }
  func.func @transform_4(%arg0: i32, %arg1: i32, %arg2: i32, %arg3: memref<2x4xi32, #tpu.memory_space<smem>>) -> (i32, i32, i32) {
    %c0_i32 = arith.constant 0 : i32
    %c0_i32_0 = arith.constant 0 : i32
    %c0_i32_1 = arith.constant 0 : i32
    return %arg0, %c0_i32, %c0_i32_0 : i32, i32, i32
  }
  func.func @transform_5(%arg0: i32, %arg1: i32, %arg2: i32, %arg3: memref<2x4xi32, #tpu.memory_space<smem>>) -> (i32, i32, i32, i32) {
    %0 = arith.index_cast %arg0 : i32 to index
    %c3 = arith.constant 3 : index
    %1 = memref.load %arg3[%0, %c3] : memref<2x4xi32, #tpu.memory_space<smem>>
    %2 = arith.minsi %arg1, %1 : i32
    %c0_i32 = arith.constant 0 : i32
    %c0_i32_0 = arith.constant 0 : i32
    %c0_i32_1 = arith.constant 0 : i32
    return %arg0, %2, %c0_i32, %c0_i32_0 : i32, i32, i32, i32
  }
  func.func @transform_6(%arg0: i32, %arg1: i32, %arg2: i32, %arg3: memref<2x4xi32, #tpu.memory_space<smem>>) -> (i32, i32, i32, i32) {
    %0 = arith.index_cast %arg0 : i32 to index
    %c3 = arith.constant 3 : index
    %1 = memref.load %arg3[%0, %c3] : memref<2x4xi32, #tpu.memory_space<smem>>
    %2 = arith.minsi %arg1, %1 : i32
    %c0_i32 = arith.constant 0 : i32
    %c0_i32_0 = arith.constant 0 : i32
    %c0_i32_1 = arith.constant 0 : i32
    return %arg0, %2, %c0_i32, %c0_i32_0 : i32, i32, i32, i32
  }
  func.func @transform_7(%arg0: i32, %arg1: i32, %arg2: i32, %arg3: memref<2x4xi32, #tpu.memory_space<smem>>) -> (i32, i32, i32, i32) {
    %0 = arith.index_cast %arg0 : i32 to index
    %c3 = arith.constant 3 : index
    %1 = memref.load %arg3[%0, %c3] : memref<2x4xi32, #tpu.memory_space<smem>>
    %2 = arith.minsi %arg1, %1 : i32
    %c0_i32 = arith.constant 0 : i32
    %c0_i32_0 = arith.constant 0 : i32
    %c0_i32_1 = arith.constant 0 : i32
    return %arg0, %2, %c0_i32, %c0_i32_0 : i32, i32, i32, i32
  }
  func.func @transform_8(%arg0: i32, %arg1: i32, %arg2: i32, %arg3: memref<2x4xi32, #tpu.memory_space<smem>>) -> (i32, i32, i32, i32) {
    %0 = arith.index_cast %arg0 : i32 to index
    %c3 = arith.constant 3 : index
    %1 = memref.load %arg3[%0, %c3] : memref<2x4xi32, #tpu.memory_space<smem>>
    %2 = arith.minsi %arg1, %1 : i32
    %c0_i32 = arith.constant 0 : i32
    %c0_i32_0 = arith.constant 0 : i32
    %c0_i32_1 = arith.constant 0 : i32
    return %arg0, %2, %c0_i32, %c0_i32_0 : i32, i32, i32, i32
  }
  func.func @transform_9(%arg0: i32, %arg1: i32, %arg2: i32, %arg3: memref<2x4xi32, #tpu.memory_space<smem>>) -> (i32, i32, i32, i32) {
    %0 = arith.index_cast %arg0 : i32 to index
    %c3 = arith.constant 3 : index
    %1 = memref.load %arg3[%0, %c3] : memref<2x4xi32, #tpu.memory_space<smem>>
    %2 = arith.minsi %arg1, %1 : i32
    %c0_i32 = arith.constant 0 : i32
    %c0_i32_0 = arith.constant 0 : i32
    %c0_i32_1 = arith.constant 0 : i32
    return %arg0, %2, %c0_i32, %c0_i32_0 : i32, i32, i32, i32
  }
  func.func @transform_10(%arg0: i32, %arg1: i32, %arg2: i32, %arg3: memref<2x4xi32, #tpu.memory_space<smem>>) -> (i32, i32, i32, i32) {
    %0 = arith.index_cast %arg0 : i32 to index
    %c3 = arith.constant 3 : index
    %1 = memref.load %arg3[%0, %c3] : memref<2x4xi32, #tpu.memory_space<smem>>
    %2 = arith.minsi %arg1, %1 : i32
    %c0_i32 = arith.constant 0 : i32
    %c0_i32_0 = arith.constant 0 : i32
    %c0_i32_1 = arith.constant 0 : i32
    return %arg0, %2, %c0_i32, %c0_i32_0 : i32, i32, i32, i32
  }
  func.func @transform_11(%arg0: i32, %arg1: i32, %arg2: i32, %arg3: memref<2x4xi32, #tpu.memory_space<smem>>) -> (i32, i32, i32) {
    %c0_i32 = arith.constant 0 : i32
    %c0_i32_0 = arith.constant 0 : i32
    %c0_i32_1 = arith.constant 0 : i32
    return %arg0, %c0_i32, %c0_i32_0 : i32, i32, i32
  }
}

</mosaic_0001>

<llo_original>
// kernel: tpu_custom_call.1
$region0: #{tpu_custom_call.1}
  #allocation0 [shape = 'u32[]', space=smem, size = 0x4, offset = 0x4, fixed_abs, tag = 'smem constant byte address 0x4 - core index']
  #allocation1 [shape = 'u32[144,128]{1,0:T(1,128)}', space=vmem, size = 0x12000, scoped, tag = 'internal scratch']
  #allocation2 [shape = 'bf16[32,128]{1,0:T(16,128)(2,1)}', space=vmem, size = 0x2000, scoped, tag = 'scratch operand']
  #allocation3 [shape = 'f32[32,128]{1,0:T(8,128)}', space=vmem, size = 0x4000, scoped, tag = 'scratch operand']
  #allocation4 [shape = 'bf16[1,1024,32]{2,1,0:T(16,128)(2,1)}', space=vmem, size = 0x40000, scoped, tag = 'scratch operand']
  #allocation5 [shape = 'bf16[1,32,1024]{2,1,0:T(16,128)(2,1)}', space=vmem, size = 0x10000, scoped, tag = 'scratch operand']
  #allocation6 [shape = 's32[1]{0}', space=sflag, size = 0x4, scoped, tag = 'scoped memory for tpu_custom_call.1']
  #allocation7 [shape = 'u8[1024]{0}', space=smem, size = 0x400, scoped, tag = 'prefetched SMEM operand 0']
  %s0 = inlined_call_operand.vmem [shape: s32[2,4], index: 0, kind: input, shape index: {}]
  %s1 = inlined_call_operand.vmem [shape: f32[32,128], index: 1, kind: input, shape index: {}]
  %s2 = inlined_call_operand.vmem [shape: s32[2,512,2], index: 2, kind: input, shape index: {}]
  %s3 = inlined_call_operand.vmem [shape: s32[2,2,512], index: 3, kind: input, shape index: {}]
  %s4 = inlined_call_operand.vmem [shape: f32[2,512,1], index: 4, kind: input, shape index: {}]
  %s5 = inlined_call_operand.vmem [shape: f32[2,1,128], index: 5, kind: input, shape index: {}]
  %s6 = inlined_call_operand.vmem [shape: bf16[2,2,128,128], index: 6, kind: input, shape index: {}]
  %s7 = inlined_call_operand.vmem [shape: bf16[2,2,128,128], index: 7, kind: input, shape index: {}]
  %s8 = inlined_call_operand.vmem [shape: bf16[2,2,128,128], index: 8, kind: input, shape index: {}]
  %s9 = inlined_call_operand.vmem [shape: bf16[2,2,128,128], index: 9, kind: input, shape index: {}]
  %s10 = inlined_call_operand.vmem [shape: bf16[2,2,128,128], index: 10, kind: input, shape index: {}]
  %s11 = inlined_call_operand.vmem [shape: f32[2,2,8,128], index: 11, kind: input, shape index: {}]
  %s12 = inlined_call_operand.hbm [shape: f32[2,32,128], index: 12, kind: output, shape index: {}]
  %s13 = sld [smem:[#allocation0]]
  $region97: #{tpu_custom_call.1} parent=0
    _
  %s15 = ssub.s32 1, %s13
  %s16 = scalar_select 0, %s15, %s13
  %s17 = sshll.u32 %s0, 4
  %s18 = int_to_ptr.vmem [resolvable:$true] %s17
  %20 = dma.vmem_to_smem %s18, 32, [#allocation7], [#allocation6]
  %21 = dma.done [#allocation6], 32
  %22 = sfence
  $region1: #{tpu_custom_call.1} parent=0
    #allocation8 [shape = 'u8[32768]{0}', space=vmem, size = 0x8000, scoped, tag = 'output window, operand 0']
    #allocation9 [shape = 's32[2]{0}', space=sflag, size = 0x8, scoped, tag = 'scoped memory for tpu_custom_call.1']
    %23 = vsyncpa [#allocation9], 0
    %s24 = scalar_lea.sflag [#allocation9], 1
    %25 = vsyncpa %s24, 0
    loop: start=0, step=1, limit=6
    $region2: #{tpu_custom_call.1} parent=1 // loop_pre_header
      _
    $region3: #{tpu_custom_call.1} parent=1 // loop_header
      %s27 = sphi 0, %s31
      %p28 = scmp.ge.s32.totalorder %s27, 6
      %s34 = sphi 0, %s53
      %s35 = sphi 0, %s49
      %s36 = sphi 0, %s45
      %s37 = sphi 0, %s34
      %s38 = sphi 0, %s35
      %s39 = sphi 0, %s36
      %s40 = sphi 0, %s37
      %s41 = sphi 0, %s38
      %s42 = sphi 0, %s39
      %s54 = sphi 0, %s54
      %s56 = sphi 0, %s54
      %s57 = sphi 0, %s56
      %s71 = sphi 0, %s57
      %s89 = sphi 0, %s91
      %s92 = sphi 0, %s89
      %s93 = sphi 0, %s92
      %s109 = sphi 0, %s93
      %s127 = sphi 0, %s129
      %s130 = sphi 0, %s127
      %s131 = sphi 0, %s130
      %s147 = sphi 0, %s131
      %s165 = sphi 0, %s167
      %s168 = sphi 0, %s165
      %s169 = sphi 0, %s168
      %s185 = sphi 0, %s169
      %s191 = sphi 0, %s193
      %s194 = sphi 0, %s191
      %s195 = sphi 0, %s194
      %s211 = sphi 0, %s195
      %s229 = sphi 0, %s231
      %s232 = sphi 0, %s229
      %s233 = sphi 0, %s232
      %s249 = sphi 0, %s233
      %s267 = sphi 0, %s269
      %s270 = sphi 0, %s267
      %s271 = sphi 0, %s270
      %s287 = sphi 0, %s271
      %s305 = sphi 0, %s307
      %s308 = sphi 0, %s305
      %s309 = sphi 0, %s308
      %s325 = sphi 0, %s309
      %s343 = sphi 0, %s345
      %s346 = sphi 0, %s343
      %s347 = sphi 0, %s346
      %s363 = sphi 0, %s347
      %s381 = sphi 0, %s383
      %s384 = sphi 0, %s381
      %s385 = sphi 0, %s384
      %s401 = sphi 0, %s385
      %s419 = sphi 0, %s421
      %s422 = sphi 0, %s419
      %s423 = sphi 0, %s422
      %s439 = sphi 0, %s423
      %s445 = sphi 0, %s447
      %s448 = sphi 0, %s445
      %s449 = sphi 0, %s448
      %s465 = sphi 0, %s449
    $region4: #{tpu_custom_call.1} parent=1 // loop_header_branch
      %30 = sbr.rel (%p28) target = $region8
    $region5: #{tpu_custom_call.1} parent=1 // loop_body
      %s32 = ssub.s32 %s27, 1
      %s33 = ssub.s32 %s27, 2
      %s43 = sadd.s32 1, %s36
      %p44 = scmp.ge.s32.totalorder %s43, 1
      %s45 = scalar_select %p44, 0, %s43
      %s46 = sadd.s32 1, %s35
      %s47 = scalar_select %p44, %s46, %s35
      %p48 = scmp.ge.s32.totalorder %s47, 2
      %s49 = scalar_select %p48, 0, %s47
      %s50 = sadd.s32 1, %s34
      %s51 = scalar_select %p48, %s50, %s34
      %p52 = scmp.ge.s32.totalorder %s51, 2
      %s53 = scalar_select %p52, 0, %s51
      %s55 = sadd.s32 %s54, 1
      %p58 = scmp.eq.s32.totalorder %s27, 3
      %p59 = scmp.ne.s32.totalorder %s54, %s56
      %p60 = scmp.eq.s32.totalorder %s27, 0
      %p61 = por %p59, %p60
      %p62 = scmp.ne.s32.totalorder %s54, %s56
      %p63 = scmp.eq.s32.totalorder %s32, 3
      %p64 = por %p62, %p63
      %p65 = scmp.ne.s32.totalorder %s56, %s57
      %p66 = scmp.eq.s32.totalorder %s32, 0
      %p67 = por %p65, %p66
      %p68 = scmp.ne.s32.totalorder %s56, %s57
      %p69 = scmp.eq.s32.totalorder %s33, 3
      %p70 = por %p68, %p69
      %p72 = scmp.ne.s32.totalorder %s57, %s71
      %p73 = scmp.eq.s32.totalorder %s33, 0
      %p74 = por %p72, %p73
      %s75 = smul.u32 %s34, 128
      %s76 = sadd.s32 %s75, 2
      %s77 = sld [smem:[#allocation7 + %s76]]
      %p78 = scmp.lt.s32.totalorder %s36, %s77
      %s79 = scalar_select %p78, %s36, %s77
      %s80 = smul.u32 %s53, 128
      %s81 = sadd.s32 %s80, 2
      %s82 = sld [smem:[#allocation7 + %s81]]
      %p83 = scmp.lt.s32.totalorder %s45, %s82
      %s84 = scalar_select %p83, %s45, %s82
      %s85 = ssub.s32 %s34, %s53
      %s86 = ssub.s32 %s79, %s84
      %s87 = sor.u32 %s85, %s86
      %p88 = scmp.eq.s32.totalorder %s87, 0
      %s90 = sadd.s32 %s89, 1
      %s91 = scalar_select %p88, %s89, %s90
      %p94 = pneg %p88
      %p95 = scmp.eq.s32.totalorder %s27, 3
      %p96 = por %p94, %p95
      %p97 = scmp.ne.s32.totalorder %s89, %s92
      %p98 = scmp.eq.s32.totalorder %s27, 0
      %p99 = por %p97, %p98
      %p100 = scmp.ne.s32.totalorder %s89, %s92
      %p101 = scmp.eq.s32.totalorder %s32, 3
      %p102 = por %p100, %p101
      %p103 = scmp.ne.s32.totalorder %s92, %s93
      %p104 = scmp.eq.s32.totalorder %s32, 0
      %p105 = por %p103, %p104
      %p106 = scmp.ne.s32.totalorder %s92, %s93
      %p107 = scmp.eq.s32.totalorder %s33, 3
      %p108 = por %p106, %p107
      %p110 = scmp.ne.s32.totalorder %s93, %s109
      %p111 = scmp.eq.s32.totalorder %s33, 0
      %p112 = por %p110, %p111
      %s113 = smul.u32 %s34, 128
      %s114 = sadd.s32 %s113, 2
      %s115 = sld [smem:[#allocation7 + %s114]]
      %p116 = scmp.lt.s32.totalorder %s36, %s115
      %s117 = scalar_select %p116, %s36, %s115
      %s118 = smul.u32 %s53, 128
      %s119 = sadd.s32 %s118, 2
      %s120 = sld [smem:[#allocation7 + %s119]]
      %p121 = scmp.lt.s32.totalorder %s45, %s120
      %s122 = scalar_select %p121, %s45, %s120
      %s123 = ssub.s32 %s34, %s53
      %s124 = ssub.s32 %s117, %s122
      %s125 = sor.u32 %s123, %s124
      %p126 = scmp.eq.s32.totalorder %s125, 0
      %s128 = sadd.s32 %s127, 1
      %s129 = scalar_select %p126, %s127, %s128
      %p132 = pneg %p126
      %p133 = scmp.eq.s32.totalorder %s27, 3
      %p134 = por %p132, %p133
      %p135 = scmp.ne.s32.totalorder %s127, %s130
      %p136 = scmp.eq.s32.totalorder %s27, 0
      %p137 = por %p135, %p136
      %p138 = scmp.ne.s32.totalorder %s127, %s130
      %p139 = scmp.eq.s32.totalorder %s32, 3
      %p140 = por %p138, %p139
      %p141 = scmp.ne.s32.totalorder %s130, %s131
      %p142 = scmp.eq.s32.totalorder %s32, 0
      %p143 = por %p141, %p142
      %p144 = scmp.ne.s32.totalorder %s130, %s131
      %p145 = scmp.eq.s32.totalorder %s33, 3
      %p146 = por %p144, %p145
      %p148 = scmp.ne.s32.totalorder %s131, %s147
      %p149 = scmp.eq.s32.totalorder %s33, 0
      %p150 = por %p148, %p149
      %s151 = smul.u32 %s34, 128
      %s152 = sadd.s32 %s151, 2
      %s153 = sld [smem:[#allocation7 + %s152]]
      %p154 = scmp.lt.s32.totalorder %s36, %s153
      %s155 = scalar_select %p154, %s36, %s153
      %s156 = smul.u32 %s53, 128
      %s157 = sadd.s32 %s156, 2
      %s158 = sld [smem:[#allocation7 + %s157]]
      %p159 = scmp.lt.s32.totalorder %s45, %s158
      %s160 = scalar_select %p159, %s45, %s158
      %s161 = ssub.s32 %s34, %s53
      %s162 = ssub.s32 %s155, %s160
      %s163 = sor.u32 %s161, %s162
      %p164 = scmp.eq.s32.totalorder %s163, 0
      %s166 = sadd.s32 %s165, 1
      %s167 = scalar_select %p164, %s165, %s166
      %p170 = pneg %p164
      %p171 = scmp.eq.s32.totalorder %s27, 3
      %p172 = por %p170, %p171
      %p173 = scmp.ne.s32.totalorder %s165, %s168
      %p174 = scmp.eq.s32.totalorder %s27, 0
      %p175 = por %p173, %p174
      %p176 = scmp.ne.s32.totalorder %s165, %s168
      %p177 = scmp.eq.s32.totalorder %s32, 3
      %p178 = por %p176, %p177
      %p179 = scmp.ne.s32.totalorder %s168, %s169
      %p180 = scmp.eq.s32.totalorder %s32, 0
      %p181 = por %p179, %p180
      %p182 = scmp.ne.s32.totalorder %s168, %s169
      %p183 = scmp.eq.s32.totalorder %s33, 3
      %p184 = por %p182, %p183
      %p186 = scmp.ne.s32.totalorder %s169, %s185
      %p187 = scmp.eq.s32.totalorder %s33, 0
      %p188 = por %p186, %p187
      %s189 = ssub.s32 %s34, %s53
      %p190 = scmp.eq.s32.totalorder %s189, 0
      %s192 = sadd.s32 %s191, 1
      %s193 = scalar_select %p190, %s191, %s192
      %p196 = pneg %p190
      %p197 = scmp.eq.s32.totalorder %s27, 3
      %p198 = por %p196, %p197
      %p199 = scmp.ne.s32.totalorder %s191, %s194
      %p200 = scmp.eq.s32.totalorder %s27, 0
      %p201 = por %p199, %p200
      %p202 = scmp.ne.s32.totalorder %s191, %s194
      %p203 = scmp.eq.s32.totalorder %s32, 3
      %p204 = por %p202, %p203
      %p205 = scmp.ne.s32.totalorder %s194, %s195
      %p206 = scmp.eq.s32.totalorder %s32, 0
      %p207 = por %p205, %p206
      %p208 = scmp.ne.s32.totalorder %s194, %s195
      %p209 = scmp.eq.s32.totalorder %s33, 3
      %p210 = por %p208, %p209
      %p212 = scmp.ne.s32.totalorder %s195, %s211
      %p213 = scmp.eq.s32.totalorder %s33, 0
      %p214 = por %p212, %p213
      %s215 = smul.u32 %s34, 128
      %s216 = sadd.s32 %s215, 3
      %s217 = sld [smem:[#allocation7 + %s216]]
      %p218 = scmp.lt.s32.totalorder %s35, %s217
      %s219 = scalar_select %p218, %s35, %s217
      %s220 = smul.u32 %s53, 128
      %s221 = sadd.s32 %s220, 3
      %s222 = sld [smem:[#allocation7 + %s221]]
      %p223 = scmp.lt.s32.totalorder %s49, %s222
      %s224 = scalar_select %p223, %s49, %s222
      %s225 = ssub.s32 %s34, %s53
      %s226 = ssub.s32 %s219, %s224
      %s227 = sor.u32 %s225, %s226
      %p228 = scmp.eq.s32.totalorder %s227, 0
      %s230 = sadd.s32 %s229, 1
      %s231 = scalar_select %p228, %s229, %s230
      %p234 = pneg %p228
      %p235 = scmp.eq.s32.totalorder %s27, 3
      %p236 = por %p234, %p235
      %p237 = scmp.ne.s32.totalorder %s229, %s232
      %p238 = scmp.eq.s32.totalorder %s27, 0
      %p239 = por %p237, %p238
      %p240 = scmp.ne.s32.totalorder %s229, %s232
      %p241 = scmp.eq.s32.totalorder %s32, 3
      %p242 = por %p240, %p241
      %p243 = scmp.ne.s32.totalorder %s232, %s233
      %p244 = scmp.eq.s32.totalorder %s32, 0
      %p245 = por %p243, %p244
      %p246 = scmp.ne.s32.totalorder %s232, %s233
      %p247 = scmp.eq.s32.totalorder %s33, 3
      %p248 = por %p246, %p247
      %p250 = scmp.ne.s32.totalorder %s233, %s249
      %p251 = scmp.eq.s32.totalorder %s33, 0
      %p252 = por %p250, %p251
      %s253 = smul.u32 %s34, 128
      %s254 = sadd.s32 %s253, 3
      %s255 = sld [smem:[#allocation7 + %s254]]
      %p256 = scmp.lt.s32.totalorder %s35, %s255
      %s257 = scalar_select %p256, %s35, %s255
      %s258 = smul.u32 %s53, 128
      %s259 = sadd.s32 %s258, 3
      %s260 = sld [smem:[#allocation7 + %s259]]
      %p261 = scmp.lt.s32.totalorder %s49, %s260
      %s262 = scalar_select %p261, %s49, %s260
      %s263 = ssub.s32 %s34, %s53
      %s264 = ssub.s32 %s257, %s262
      %s265 = sor.u32 %s263, %s264
      %p266 = scmp.eq.s32.totalorder %s265, 0
      %s268 = sadd.s32 %s267, 1
      %s269 = scalar_select %p266, %s267, %s268
      %p272 = pneg %p266
      %p273 = scmp.eq.s32.totalorder %s27, 3
      %p274 = por %p272, %p273
      %p275 = scmp.ne.s32.totalorder %s267, %s270
      %p276 = scmp.eq.s32.totalorder %s27, 0
      %p277 = por %p275, %p276
      %p278 = scmp.ne.s32.totalorder %s267, %s270
      %p279 = scmp.eq.s32.totalorder %s32, 3
      %p280 = por %p278, %p279
      %p281 = scmp.ne.s32.totalorder %s270, %s271
      %p282 = scmp.eq.s32.totalorder %s32, 0
      %p283 = por %p281, %p282
      %p284 = scmp.ne.s32.totalorder %s270, %s271
      %p285 = scmp.eq.s32.totalorder %s33, 3
      %p286 = por %p284, %p285
      %p288 = scmp.ne.s32.totalorder %s271, %s287
      %p289 = scmp.eq.s32.totalorder %s33, 0
      %p290 = por %p288, %p289
      %s291 = smul.u32 %s34, 128
      %s292 = sadd.s32 %s291, 3
      %s293 = sld [smem:[#allocation7 + %s292]]
      %p294 = scmp.lt.s32.totalorder %s35, %s293
      %s295 = scalar_select %p294, %s35, %s293
      %s296 = smul.u32 %s53, 128
      %s297 = sadd.s32 %s296, 3
      %s298 = sld [smem:[#allocation7 + %s297]]
      %p299 = scmp.lt.s32.totalorder %s49, %s298
      %s300 = scalar_select %p299, %s49, %s298
      %s301 = ssub.s32 %s34, %s53
      %s302 = ssub.s32 %s295, %s300
      %s303 = sor.u32 %s301, %s302
      %p304 = scmp.eq.s32.totalorder %s303, 0
      %s306 = sadd.s32 %s305, 1
      %s307 = scalar_select %p304, %s305, %s306
      %p310 = pneg %p304
      %p311 = scmp.eq.s32.totalorder %s27, 3
      %p312 = por %p310, %p311
      %p313 = scmp.ne.s32.totalorder %s305, %s308
      %p314 = scmp.eq.s32.totalorder %s27, 0
      %p315 = por %p313, %p314
      %p316 = scmp.ne.s32.totalorder %s305, %s308
      %p317 = scmp.eq.s32.totalorder %s32, 3
      %p318 = por %p316, %p317
      %p319 = scmp.ne.s32.totalorder %s308, %s309
      %p320 = scmp.eq.s32.totalorder %s32, 0
      %p321 = por %p319, %p320
      %p322 = scmp.ne.s32.totalorder %s308, %s309
      %p323 = scmp.eq.s32.totalorder %s33, 3
      %p324 = por %p322, %p323
      %p326 = scmp.ne.s32.totalorder %s309, %s325
      %p327 = scmp.eq.s32.totalorder %s33, 0
      %p328 = por %p326, %p327
      %s329 = smul.u32 %s34, 128
      %s330 = sadd.s32 %s329, 3
      %s331 = sld [smem:[#allocation7 + %s330]]
      %p332 = scmp.lt.s32.totalorder %s35, %s331
      %s333 = scalar_select %p332, %s35, %s331
      %s334 = smul.u32 %s53, 128
      %s335 = sadd.s32 %s334, 3
      %s336 = sld [smem:[#allocation7 + %s335]]
      %p337 = scmp.lt.s32.totalorder %s49, %s336
      %s338 = scalar_select %p337, %s49, %s336
      %s339 = ssub.s32 %s34, %s53
      %s340 = ssub.s32 %s333, %s338
      %s341 = sor.u32 %s339, %s340
      %p342 = scmp.eq.s32.totalorder %s341, 0
      %s344 = sadd.s32 %s343, 1
      %s345 = scalar_select %p342, %s343, %s344
      %p348 = pneg %p342
      %p349 = scmp.eq.s32.totalorder %s27, 3
      %p350 = por %p348, %p349
      %p351 = scmp.ne.s32.totalorder %s343, %s346
      %p352 = scmp.eq.s32.totalorder %s27, 0
      %p353 = por %p351, %p352
      %p354 = scmp.ne.s32.totalorder %s343, %s346
      %p355 = scmp.eq.s32.totalorder %s32, 3
      %p356 = por %p354, %p355
      %p357 = scmp.ne.s32.totalorder %s346, %s347
      %p358 = scmp.eq.s32.totalorder %s32, 0
      %p359 = por %p357, %p358
      %p360 = scmp.ne.s32.totalorder %s346, %s347
      %p361 = scmp.eq.s32.totalorder %s33, 3
      %p362 = por %p360, %p361
      %p364 = scmp.ne.s32.totalorder %s347, %s363
      %p365 = scmp.eq.s32.totalorder %s33, 0
      %p366 = por %p364, %p365
      %s367 = smul.u32 %s34, 128
      %s368 = sadd.s32 %s367, 3
      %s369 = sld [smem:[#allocation7 + %s368]]
      %p370 = scmp.lt.s32.totalorder %s35, %s369
      %s371 = scalar_select %p370, %s35, %s369
      %s372 = smul.u32 %s53, 128
      %s373 = sadd.s32 %s372, 3
      %s374 = sld [smem:[#allocation7 + %s373]]
      %p375 = scmp.lt.s32.totalorder %s49, %s374
      %s376 = scalar_select %p375, %s49, %s374
      %s377 = ssub.s32 %s34, %s53
      %s378 = ssub.s32 %s371, %s376
      %s379 = sor.u32 %s377, %s378
      %p380 = scmp.eq.s32.totalorder %s379, 0
      %s382 = sadd.s32 %s381, 1
      %s383 = scalar_select %p380, %s381, %s382
      %p386 = pneg %p380
      %p387 = scmp.eq.s32.totalorder %s27, 3
      %p388 = por %p386, %p387
      %p389 = scmp.ne.s32.totalorder %s381, %s384
      %p390 = scmp.eq.s32.totalorder %s27, 0
      %p391 = por %p389, %p390
      %p392 = scmp.ne.s32.totalorder %s381, %s384
      %p393 = scmp.eq.s32.totalorder %s32, 3
      %p394 = por %p392, %p393
      %p395 = scmp.ne.s32.totalorder %s384, %s385
      %p396 = scmp.eq.s32.totalorder %s32, 0
      %p397 = por %p395, %p396
      %p398 = scmp.ne.s32.totalorder %s384, %s385
      %p399 = scmp.eq.s32.totalorder %s33, 3
      %p400 = por %p398, %p399
      %p402 = scmp.ne.s32.totalorder %s385, %s401
      %p403 = scmp.eq.s32.totalorder %s33, 0
      %p404 = por %p402, %p403
      %s405 = smul.u32 %s34, 128
      %s406 = sadd.s32 %s405, 3
      %s407 = sld [smem:[#allocation7 + %s406]]
      %p408 = scmp.lt.s32.totalorder %s35, %s407
      %s409 = scalar_select %p408, %s35, %s407
      %s410 = smul.u32 %s53, 128
      %s411 = sadd.s32 %s410, 3
      %s412 = sld [smem:[#allocation7 + %s411]]
      %p413 = scmp.lt.s32.totalorder %s49, %s412
      %s414 = scalar_select %p413, %s49, %s412
      %s415 = ssub.s32 %s34, %s53
      %s416 = ssub.s32 %s409, %s414
      %s417 = sor.u32 %s415, %s416
      %p418 = scmp.eq.s32.totalorder %s417, 0
      %s420 = sadd.s32 %s419, 1
      %s421 = scalar_select %p418, %s419, %s420
      %p424 = pneg %p418
      %p425 = scmp.eq.s32.totalorder %s27, 3
      %p426 = por %p424, %p425
      %p427 = scmp.ne.s32.totalorder %s419, %s422
      %p428 = scmp.eq.s32.totalorder %s27, 0
      %p429 = por %p427, %p428
      %p430 = scmp.ne.s32.totalorder %s419, %s422
      %p431 = scmp.eq.s32.totalorder %s32, 3
      %p432 = por %p430, %p431
      %p433 = scmp.ne.s32.totalorder %s422, %s423
      %p434 = scmp.eq.s32.totalorder %s32, 0
      %p435 = por %p433, %p434
      %p436 = scmp.ne.s32.totalorder %s422, %s423
      %p437 = scmp.eq.s32.totalorder %s33, 3
      %p438 = por %p436, %p437
      %p440 = scmp.ne.s32.totalorder %s423, %s439
      %p441 = scmp.eq.s32.totalorder %s33, 0
      %p442 = por %p440, %p441
      %s443 = ssub.s32 %s34, %s53
      %p444 = scmp.eq.s32.totalorder %s443, 0
      %s446 = sadd.s32 %s445, 1
      %s447 = scalar_select %p444, %s445, %s446
      %p450 = pneg %p444
      %p451 = scmp.eq.s32.totalorder %s27, 3
      %p452 = por %p450, %p451
      %p453 = scmp.ne.s32.totalorder %s445, %s448
      %p454 = scmp.eq.s32.totalorder %s27, 0
      %p455 = por %p453, %p454
      %p456 = scmp.ne.s32.totalorder %s445, %s448
      %p457 = scmp.eq.s32.totalorder %s32, 3
      %p458 = por %p456, %p457
      %p459 = scmp.ne.s32.totalorder %s448, %s449
      %p460 = scmp.eq.s32.totalorder %s32, 0
      %p461 = por %p459, %p460
      %p462 = scmp.ne.s32.totalorder %s448, %s449
      %p463 = scmp.eq.s32.totalorder %s33, 3
      %p464 = por %p462, %p463
      %p466 = scmp.ne.s32.totalorder %s449, %s465
      %p467 = scmp.eq.s32.totalorder %s33, 0
      %p468 = por %p466, %p467
      %p469 = scmp.le.s32.totalorder 1, %s27
      %p470 = scmp.lt.s32.totalorder %s27, 5
      %p471 = pnand %p469, %p470
      %p472 = pneg %p471
      // Predicated region
      $region9: #{tpu_custom_call.1} parent=5 // pred_check
        _
      $region10: #{tpu_custom_call.1} parent=5 // pred_check_branch
        %474 = sbr.rel (%p471) target = $region12
      $region11: #{tpu_custom_call.1} parent=5 // pred_region
        %s475 = ssub.s32 %s27, 1
        // Predicated region
        $region13: #{tpu_custom_call.1} parent=11 // pred_check
          %p476 = pneg %p67
        $region14: #{tpu_custom_call.1} parent=11 // pred_check_branch
          %478 = sbr.rel (%p476) target = $region16
        $region15: #{tpu_custom_call.1} parent=11 // pred_region
          _
        $region16: #{tpu_custom_call.1} parent=11 // pred_fallthru
          _
      $region12: #{tpu_custom_call.1} parent=5 // pred_fallthru
        _
      %p479 = scmp.lt.s32.totalorder %s27, 4
      // Predicated region
      $region17: #{tpu_custom_call.1} parent=5 // pred_check
        %p480 = pneg %p479
      $region18: #{tpu_custom_call.1} parent=5 // pred_check_branch
        %482 = sbr.rel (%p480) target = $region20
      $region19: #{tpu_custom_call.1} parent=5 // pred_region
        // Predicated region
        $region21: #{tpu_custom_call.1} parent=19 // pred_check
          %p483 = pneg %p99
        $region22: #{tpu_custom_call.1} parent=19 // pred_check_branch
          %485 = sbr.rel (%p483) target = $region24
        $region23: #{tpu_custom_call.1} parent=19 // pred_region
          %s486 = smul.u32 %s34, 128
          %s487 = sadd.s32 %s486, 2
          %s488 = sld [smem:[#allocation7 + %s487]]
          %p489 = scmp.lt.s32.totalorder %s36, %s488
          %s490 = scalar_select %p489, %s36, %s488
          %s491 = smul.u32 64, %s490
          %p492 = scmp.lt.s32.totalorder %s34, 1
          %s493 = scalar_select %p492, %s34, 1
          %p494 = scmp.lt.s32.totalorder %s491, 63
          %s495 = scalar_select %p494, %s491, 63
          %s496 = smul.addr %s493, 64
          %s497 = sadd.s32 %s495, %s496
          %s498 = smul.addr %s497, 8
          %s499 = scalar_lea.vmem %s2, %s498
          %s500 = smul.u32 %s34, 128
          %s501 = sadd.s32 %s500, 2
          %s502 = sld [smem:[#allocation7 + %s501]]
          %p503 = scmp.lt.s32.totalorder %s36, %s502
          %s504 = scalar_select %p503, %s36, %s502
          %s505 = smul.u32 64, %s504
        $region24: #{tpu_custom_call.1} parent=19 // pred_fallthru
          _
        // Predicated region
        $region25: #{tpu_custom_call.1} parent=19 // pred_check
          %p506 = pneg %p137
        $region26: #{tpu_custom_call.1} parent=19 // pred_check_branch
          %508 = sbr.rel (%p506) target = $region28
        $region27: #{tpu_custom_call.1} parent=19 // pred_region
          %s509 = smul.u32 %s34, 128
          %s510 = sadd.s32 %s509, 2
          %s511 = sld [smem:[#allocation7 + %s510]]
          %p512 = scmp.lt.s32.totalorder %s36, %s511
          %s513 = scalar_select %p512, %s36, %s511
          %s514 = smul.u32 4, %s513
          %p515 = scmp.lt.s32.totalorder %s34, 1
          %s516 = scalar_select %p515, %s34, 1
          %p517 = scmp.lt.s32.totalorder %s514, 3
          %s518 = scalar_select %p517, %s514, 3
          %s519 = smul.addr %s516, 4
          %s520 = sadd.s32 %s518, %s519
          %s521 = smul.addr %s520, 2
          %s522 = scalar_lea.vmem %s3, %s521
          %s523 = smul.u32 %s34, 128
          %s524 = sadd.s32 %s523, 2
          %s525 = sld [smem:[#allocation7 + %s524]]
          %p526 = scmp.lt.s32.totalorder %s36, %s525
          %s527 = scalar_select %p526, %s36, %s525
          %s528 = smul.u32 4, %s527
        $region28: #{tpu_custom_call.1} parent=19 // pred_fallthru
          _
        // Predicated region
        $region29: #{tpu_custom_call.1} parent=19 // pred_check
          %p529 = pneg %p175
        $region30: #{tpu_custom_call.1} parent=19 // pred_check_branch
          %531 = sbr.rel (%p529) target = $region32
        $region31: #{tpu_custom_call.1} parent=19 // pred_region
          %s532 = smul.u32 %s34, 128
          %s533 = sadd.s32 %s532, 2
          %s534 = sld [smem:[#allocation7 + %s533]]
          %p535 = scmp.lt.s32.totalorder %s36, %s534
          %s536 = scalar_select %p535, %s36, %s534
          %s537 = smul.u32 64, %s536
          %p538 = scmp.lt.s32.totalorder %s34, 1
          %s539 = scalar_select %p538, %s34, 1
          %p540 = scmp.lt.s32.totalorder %s537, 63
          %s541 = scalar_select %p540, %s537, 63
          %s542 = smul.addr %s539, 64
          %s543 = sadd.s32 %s541, %s542
          %s544 = smul.addr %s543, 8
          %s545 = scalar_lea.vmem %s4, %s544
          %s546 = smul.u32 %s34, 128
          %s547 = sadd.s32 %s546, 2
          %s548 = sld [smem:[#allocation7 + %s547]]
          %p549 = scmp.lt.s32.totalorder %s36, %s548
          %s550 = scalar_select %p549, %s36, %s548
          %s551 = smul.u32 64, %s550
        $region32: #{tpu_custom_call.1} parent=19 // pred_fallthru
          _
        // Predicated region
        $region33: #{tpu_custom_call.1} parent=19 // pred_check
          %p552 = pneg %p201
        $region34: #{tpu_custom_call.1} parent=19 // pred_check_branch
          %554 = sbr.rel (%p552) target = $region36
        $region35: #{tpu_custom_call.1} parent=19 // pred_region
          %p555 = scmp.lt.s32.totalorder %s34, 1
          %s556 = scalar_select %p555, %s34, 1
          %s557 = scalar_lea.vmem %s5, %s556
        $region36: #{tpu_custom_call.1} parent=19 // pred_fallthru
          _
        // Predicated region
        $region37: #{tpu_custom_call.1} parent=19 // pred_check
          %p558 = pneg %p239
        $region38: #{tpu_custom_call.1} parent=19 // pred_check_branch
          %560 = sbr.rel (%p558) target = $region40
        $region39: #{tpu_custom_call.1} parent=19 // pred_region
          %s561 = smul.u32 %s34, 128
          %s562 = sadd.s32 %s561, 3
          %s563 = sld [smem:[#allocation7 + %s562]]
          %p564 = scmp.lt.s32.totalorder %s35, %s563
          %s565 = scalar_select %p564, %s35, %s563
          %p566 = scmp.lt.s32.totalorder %s34, 1
          %s567 = scalar_select %p566, %s34, 1
          %p568 = scmp.lt.s32.totalorder %s565, 1
          %s569 = scalar_select %p568, %s565, 1
          %s570 = smul.addr %s569, 16
          %s571 = smul.addr %s567, 32
          %s572 = sadd.s32 %s570, %s571
          %s573 = smul.addr %s572, 4
          %s574 = scalar_lea.vmem %s6, %s573
          %s575 = smul.u32 %s34, 128
          %s576 = sadd.s32 %s575, 3
          %s577 = sld [smem:[#allocation7 + %s576]]
          %p578 = scmp.lt.s32.totalorder %s35, %s577
          %s579 = scalar_select %p578, %s35, %s577
        $region40: #{tpu_custom_call.1} parent=19 // pred_fallthru
          _
        // Predicated region
        $region41: #{tpu_custom_call.1} parent=19 // pred_check
          %p580 = pneg %p277
        $region42: #{tpu_custom_call.1} parent=19 // pred_check_branch
          %582 = sbr.rel (%p580) target = $region44
        $region43: #{tpu_custom_call.1} parent=19 // pred_region
          %s583 = smul.u32 %s34, 128
          %s584 = sadd.s32 %s583, 3
          %s585 = sld [smem:[#allocation7 + %s584]]
          %p586 = scmp.lt.s32.totalorder %s35, %s585
          %s587 = scalar_select %p586, %s35, %s585
          %p588 = scmp.lt.s32.totalorder %s34, 1
          %s589 = scalar_select %p588, %s34, 1
          %p590 = scmp.lt.s32.totalorder %s587, 1
          %s591 = scalar_select %p590, %s587, 1
          %s592 = smul.addr %s591, 16
          %s593 = smul.addr %s589, 32
          %s594 = sadd.s32 %s592, %s593
          %s595 = smul.addr %s594, 4
          %s596 = scalar_lea.vmem %s7, %s595
          %s597 = smul.u32 %s34, 128
          %s598 = sadd.s32 %s597, 3
          %s599 = sld [smem:[#allocation7 + %s598]]
          %p600 = scmp.lt.s32.totalorder %s35, %s599
          %s601 = scalar_select %p600, %s35, %s599
        $region44: #{tpu_custom_call.1} parent=19 // pred_fallthru
          _
        // Predicated region
        $region45: #{tpu_custom_call.1} parent=19 // pred_check
          %p602 = pneg %p315
        $region46: #{tpu_custom_call.1} parent=19 // pred_check_branch
          %604 = sbr.rel (%p602) target = $region48
        $region47: #{tpu_custom_call.1} parent=19 // pred_region
          %s605 = smul.u32 %s34, 128
          %s606 = sadd.s32 %s605, 3
          %s607 = sld [smem:[#allocation7 + %s606]]
          %p608 = scmp.lt.s32.totalorder %s35, %s607
          %s609 = scalar_select %p608, %s35, %s607
          %p610 = scmp.lt.s32.totalorder %s34, 1
          %s611 = scalar_select %p610, %s34, 1
          %p612 = scmp.lt.s32.totalorder %s609, 1
          %s613 = scalar_select %p612, %s609, 1
          %s614 = smul.addr %s613, 16
          %s615 = smul.addr %s611, 32
          %s616 = sadd.s32 %s614, %s615
          %s617 = smul.addr %s616, 4
          %s618 = scalar_lea.vmem %s8, %s617
          %s619 = smul.u32 %s34, 128
          %s620 = sadd.s32 %s619, 3
          %s621 = sld [smem:[#allocation7 + %s620]]
          %p622 = scmp.lt.s32.totalorder %s35, %s621
          %s623 = scalar_select %p622, %s35, %s621
        $region48: #{tpu_custom_call.1} parent=19 // pred_fallthru
          _
        // Predicated region
        $region49: #{tpu_custom_call.1} parent=19 // pred_check
          %p624 = pneg %p353
        $region50: #{tpu_custom_call.1} parent=19 // pred_check_branch
          %626 = sbr.rel (%p624) target = $region52
        $region51: #{tpu_custom_call.1} parent=19 // pred_region
          %s627 = smul.u32 %s34, 128
          %s628 = sadd.s32 %s627, 3
          %s629 = sld [smem:[#allocation7 + %s628]]
          %p630 = scmp.lt.s32.totalorder %s35, %s629
          %s631 = scalar_select %p630, %s35, %s629
          %p632 = scmp.lt.s32.totalorder %s34, 1
          %s633 = scalar_select %p632, %s34, 1
          %p634 = scmp.lt.s32.totalorder %s631, 1
          %s635 = scalar_select %p634, %s631, 1
          %s636 = smul.addr %s635, 16
          %s637 = smul.addr %s633, 32
          %s638 = sadd.s32 %s636, %s637
          %s639 = smul.addr %s638, 4
          %s640 = scalar_lea.vmem %s9, %s639
          %s641 = smul.u32 %s34, 128
          %s642 = sadd.s32 %s641, 3
          %s643 = sld [smem:[#allocation7 + %s642]]
          %p644 = scmp.lt.s32.totalorder %s35, %s643
          %s645 = scalar_select %p644, %s35, %s643
        $region52: #{tpu_custom_call.1} parent=19 // pred_fallthru
          _
        // Predicated region
        $region53: #{tpu_custom_call.1} parent=19 // pred_check
          %p646 = pneg %p391
        $region54: #{tpu_custom_call.1} parent=19 // pred_check_branch
          %648 = sbr.rel (%p646) target = $region56
        $region55: #{tpu_custom_call.1} parent=19 // pred_region
          %s649 = smul.u32 %s34, 128
          %s650 = sadd.s32 %s649, 3
          %s651 = sld [smem:[#allocation7 + %s650]]
          %p652 = scmp.lt.s32.totalorder %s35, %s651
          %s653 = scalar_select %p652, %s35, %s651
          %p654 = scmp.lt.s32.totalorder %s34, 1
          %s655 = scalar_select %p654, %s34, 1
          %p656 = scmp.lt.s32.totalorder %s653, 1
          %s657 = scalar_select %p656, %s653, 1
          %s658 = smul.addr %s657, 16
          %s659 = smul.addr %s655, 32
          %s660 = sadd.s32 %s658, %s659
          %s661 = smul.addr %s660, 4
          %s662 = scalar_lea.vmem %s10, %s661
          %s663 = smul.u32 %s34, 128
          %s664 = sadd.s32 %s663, 3
          %s665 = sld [smem:[#allocation7 + %s664]]
          %p666 = scmp.lt.s32.totalorder %s35, %s665
          %s667 = scalar_select %p666, %s35, %s665
        $region56: #{tpu_custom_call.1} parent=19 // pred_fallthru
          _
        // Predicated region
        $region57: #{tpu_custom_call.1} parent=19 // pred_check
          %p668 = pneg %p429
        $region58: #{tpu_custom_call.1} parent=19 // pred_check_branch
          %670 = sbr.rel (%p668) target = $region60
        $region59: #{tpu_custom_call.1} parent=19 // pred_region
          %s671 = smul.u32 %s34, 128
          %s672 = sadd.s32 %s671, 3
          %s673 = sld [smem:[#allocation7 + %s672]]
          %p674 = scmp.lt.s32.totalorder %s35, %s673
          %s675 = scalar_select %p674, %s35, %s673
          %p676 = scmp.lt.s32.totalorder %s34, 1
          %s677 = scalar_select %p676, %s34, 1
          %p678 = scmp.lt.s32.totalorder %s675, 1
          %s679 = scalar_select %p678, %s675, 1
          %s680 = smul.addr %s677, 2
          %s681 = sadd.s32 %s679, %s680
          %s682 = smul.addr %s681, 8
          %s683 = scalar_lea.vmem %s11, %s682
          %s684 = smul.u32 %s34, 128
          %s685 = sadd.s32 %s684, 3
          %s686 = sld [smem:[#allocation7 + %s685]]
          %p687 = scmp.lt.s32.totalorder %s35, %s686
          %s688 = scalar_select %p687, %s35, %s686
        $region60: #{tpu_custom_call.1} parent=19 // pred_fallthru
          _
      $region20: #{tpu_custom_call.1} parent=5 // pred_fallthru
        _
      %p689 = scmp.le.s32.totalorder 1, %s27
      %p690 = scmp.lt.s32.totalorder %s27, 5
      %p691 = pnand %p689, %p690
      %p692 = pneg %p691
      // Predicated region
      $region61: #{tpu_custom_call.1} parent=5 // pred_check
        _
      $region62: #{tpu_custom_call.1} parent=5 // pred_check_branch
        %694 = sbr.rel (%p691) target = $region64
      $region63: #{tpu_custom_call.1} parent=5 // pred_region
        %s695 = ssub.s32 %s27, 1
        %p696 = pneg %p67
        %p697 = pneg %p64
        %s698 = smul.u32 %s37, 128
        %s699 = sadd.s32 %s698, 2
        %s700 = sld [smem:[#allocation7 + %s699]]
        %p701 = scmp.lt.s32.totalorder %s39, %s700
        %s702 = scalar_select %p701, %s39, %s700
        %s703 = smul.u32 64, %s702
        %p704 = scmp.lt.s32.totalorder %s37, 1
        %s705 = scalar_select %p704, %s37, 1
        %p706 = scmp.lt.s32.totalorder %s703, 63
        %s707 = scalar_select %p706, %s703, 63
        %s708 = smul.addr %s705, 64
        %s709 = sadd.s32 %s707, %s708
        %s710 = smul.addr %s709, 8
        %s711 = scalar_lea.vmem %s2, %s710
        %p712 = pneg %p105
        %p713 = pneg %p102
        %s714 = smul.u32 %s37, 128
        %s715 = sadd.s32 %s714, 2
        %s716 = sld [smem:[#allocation7 + %s715]]
        %p717 = scmp.lt.s32.totalorder %s39, %s716
        %s718 = scalar_select %p717, %s39, %s716
        %s719 = smul.u32 4, %s718
        %p720 = scmp.lt.s32.totalorder %s37, 1
        %s721 = scalar_select %p720, %s37, 1
        %p722 = scmp.lt.s32.totalorder %s719, 3
        %s723 = scalar_select %p722, %s719, 3
        %s724 = smul.addr %s721, 4
        %s725 = sadd.s32 %s723, %s724
        %s726 = smul.addr %s725, 2
        %s727 = scalar_lea.vmem %s3, %s726
        %p728 = pneg %p143
        %p729 = pneg %p140
        %s730 = smul.u32 %s37, 128
        %s731 = sadd.s32 %s730, 2
        %s732 = sld [smem:[#allocation7 + %s731]]
        %p733 = scmp.lt.s32.totalorder %s39, %s732
        %s734 = scalar_select %p733, %s39, %s732
        %s735 = smul.u32 64, %s734
        %p736 = scmp.lt.s32.totalorder %s37, 1
        %s737 = scalar_select %p736, %s37, 1
        %p738 = scmp.lt.s32.totalorder %s735, 63
        %s739 = scalar_select %p738, %s735, 63
        %s740 = smul.addr %s737, 64
        %s741 = sadd.s32 %s739, %s740
        %s742 = smul.addr %s741, 8
        %s743 = scalar_lea.vmem %s4, %s742
        %p744 = pneg %p181
        %p745 = pneg %p178
        %p746 = scmp.lt.s32.totalorder %s37, 1
        %s747 = scalar_select %p746, %s37, 1
        %s748 = scalar_lea.vmem %s5, %s747
        %p749 = pneg %p207
        %p750 = pneg %p204
        %s751 = smul.u32 %s37, 128
        %s752 = sadd.s32 %s751, 3
        %s753 = sld [smem:[#allocation7 + %s752]]
        %p754 = scmp.lt.s32.totalorder %s38, %s753
        %s755 = scalar_select %p754, %s38, %s753
        %p756 = scmp.lt.s32.totalorder %s37, 1
        %s757 = scalar_select %p756, %s37, 1
        %p758 = scmp.lt.s32.totalorder %s755, 1
        %s759 = scalar_select %p758, %s755, 1
        %s760 = smul.addr %s759, 16
        %s761 = smul.addr %s757, 32
        %s762 = sadd.s32 %s760, %s761
        %s763 = smul.addr %s762, 4
        %s764 = scalar_lea.vmem %s6, %s763
        %p765 = pneg %p245
        %p766 = pneg %p242
        %s767 = smul.u32 %s37, 128
        %s768 = sadd.s32 %s767, 3
        %s769 = sld [smem:[#allocation7 + %s768]]
        %p770 = scmp.lt.s32.totalorder %s38, %s769
        %s771 = scalar_select %p770, %s38, %s769
        %p772 = scmp.lt.s32.totalorder %s37, 1
        %s773 = scalar_select %p772, %s37, 1
        %p774 = scmp.lt.s32.totalorder %s771, 1
        %s775 = scalar_select %p774, %s771, 1
        %s776 = smul.addr %s775, 16
        %s777 = smul.addr %s773, 32
        %s778 = sadd.s32 %s776, %s777
        %s779 = smul.addr %s778, 4
        %s780 = scalar_lea.vmem %s7, %s779
        %p781 = pneg %p283
        %p782 = pneg %p280
        %s783 = smul.u32 %s37, 128
        %s784 = sadd.s32 %s783, 3
        %s785 = sld [smem:[#allocation7 + %s784]]
        %p786 = scmp.lt.s32.totalorder %s38, %s785
        %s787 = scalar_select %p786, %s38, %s785
        %p788 = scmp.lt.s32.totalorder %s37, 1
        %s789 = scalar_select %p788, %s37, 1
        %p790 = scmp.lt.s32.totalorder %s787, 1
        %s791 = scalar_select %p790, %s787, 1
        %s792 = smul.addr %s791, 16
        %s793 = smul.addr %s789, 32
        %s794 = sadd.s32 %s792, %s793
        %s795 = smul.addr %s794, 4
        %s796 = scalar_lea.vmem %s8, %s795
        %p797 = pneg %p321
        %p798 = pneg %p318
        %s799 = smul.u32 %s37, 128
        %s800 = sadd.s32 %s799, 3
        %s801 = sld [smem:[#allocation7 + %s800]]
        %p802 = scmp.lt.s32.totalorder %s38, %s801
        %s803 = scalar_select %p802, %s38, %s801
        %p804 = scmp.lt.s32.totalorder %s37, 1
        %s805 = scalar_select %p804, %s37, 1
        %p806 = scmp.lt.s32.totalorder %s803, 1
        %s807 = scalar_select %p806, %s803, 1
        %s808 = smul.addr %s807, 16
        %s809 = smul.addr %s805, 32
        %s810 = sadd.s32 %s808, %s809
        %s811 = smul.addr %s810, 4
        %s812 = scalar_lea.vmem %s9, %s811
        %p813 = pneg %p359
        %p814 = pneg %p356
        %s815 = smul.u32 %s37, 128
        %s816 = sadd.s32 %s815, 3
        %s817 = sld [smem:[#allocation7 + %s816]]
        %p818 = scmp.lt.s32.totalorder %s38, %s817
        %s819 = scalar_select %p818, %s38, %s817
        %p820 = scmp.lt.s32.totalorder %s37, 1
        %s821 = scalar_select %p820, %s37, 1
        %p822 = scmp.lt.s32.totalorder %s819, 1
        %s823 = scalar_select %p822, %s819, 1
        %s824 = smul.addr %s823, 16
        %s825 = smul.addr %s821, 32
        %s826 = sadd.s32 %s824, %s825
        %s827 = smul.addr %s826, 4
        %s828 = scalar_lea.vmem %s10, %s827
        %p829 = pneg %p397
        %p830 = pneg %p394
        %s831 = smul.u32 %s37, 128
        %s832 = sadd.s32 %s831, 3
        %s833 = sld [smem:[#allocation7 + %s832]]
        %p834 = scmp.lt.s32.totalorder %s38, %s833
        %s835 = scalar_select %p834, %s38, %s833
        %p836 = scmp.lt.s32.totalorder %s37, 1
        %s837 = scalar_select %p836, %s37, 1
        %p838 = scmp.lt.s32.totalorder %s835, 1
        %s839 = scalar_select %p838, %s835, 1
        %s840 = smul.addr %s837, 2
        %s841 = sadd.s32 %s839, %s840
        %s842 = smul.addr %s841, 8
        %s843 = scalar_lea.vmem %s11, %s842
        %p844 = pneg %p435
        %p845 = pneg %p432
        %p846 = pneg %p461
        %p847 = pneg %p458
        %s848 = sand.u32 %s448, 1
        %s849 = scalar_lea.sflag [#allocation9], %s848
        %s850 = sand.u32 %s448, 1
        %s851 = smul.addr %s850, 32
        %s852 = scalar_lea.vmem [#allocation8], %s851
        %s853 = smul.u32 %s37, 128
        %s854 = sadd.s32 %s853, 2
        %s855 = sld [smem:[#allocation7 + %s854]]
        %p856 = scmp.lt.s32.totalorder %s39, %s855
        %s857 = scalar_select %p856, %s39, %s855
        %s858 = smul.u32 64, %s857
        %p859 = scmp.lt.s32.totalorder %s37, 1
        %s860 = scalar_select %p859, %s37, 1
        %p861 = scmp.lt.s32.totalorder %s858, 63
        %s862 = scalar_select %p861, %s858, 63
        %s863 = smul.addr %s860, 64
        %s864 = sadd.s32 %s862, %s863
        %s865 = smul.addr %s864, 8
        %s866 = scalar_lea.vmem %s2, %s865
        %s867 = smul.u32 %s37, 128
        %s868 = sadd.s32 %s867, 2
        %s869 = sld [smem:[#allocation7 + %s868]]
        %p870 = scmp.lt.s32.totalorder %s39, %s869
        %s871 = scalar_select %p870, %s39, %s869
        %s872 = smul.u32 64, %s871
        %s873 = smul.u32 %s37, 128
        %s874 = sadd.s32 %s873, 2
        %s875 = sld [smem:[#allocation7 + %s874]]
        %p876 = scmp.lt.s32.totalorder %s39, %s875
        %s877 = scalar_select %p876, %s39, %s875
        %s878 = smul.u32 4, %s877
        %p879 = scmp.lt.s32.totalorder %s37, 1
        %s880 = scalar_select %p879, %s37, 1
        %p881 = scmp.lt.s32.totalorder %s878, 3
        %s882 = scalar_select %p881, %s878, 3
        %s883 = smul.addr %s880, 4
        %s884 = sadd.s32 %s882, %s883
        %s885 = smul.addr %s884, 2
        %s886 = scalar_lea.vmem %s3, %s885
        %s887 = smul.u32 %s37, 128
        %s888 = sadd.s32 %s887, 2
        %s889 = sld [smem:[#allocation7 + %s888]]
        %p890 = scmp.lt.s32.totalorder %s39, %s889
        %s891 = scalar_select %p890, %s39, %s889
        %s892 = smul.u32 4, %s891
        %s893 = smul.u32 %s37, 128
        %s894 = sadd.s32 %s893, 2
        %s895 = sld [smem:[#allocation7 + %s894]]
        %p896 = scmp.lt.s32.totalorder %s39, %s895
        %s897 = scalar_select %p896, %s39, %s895
        %s898 = smul.u32 64, %s897
        %p899 = scmp.lt.s32.totalorder %s37, 1
        %s900 = scalar_select %p899, %s37, 1
        %p901 = scmp.lt.s32.totalorder %s898, 63
        %s902 = scalar_select %p901, %s898, 63
        %s903 = smul.addr %s900, 64
        %s904 = sadd.s32 %s902, %s903
        %s905 = smul.addr %s904, 8
        %s906 = scalar_lea.vmem %s4, %s905
        %s907 = smul.u32 %s37, 128
        %s908 = sadd.s32 %s907, 2
        %s909 = sld [smem:[#allocation7 + %s908]]
        %p910 = scmp.lt.s32.totalorder %s39, %s909
        %s911 = scalar_select %p910, %s39, %s909
        %s912 = smul.u32 64, %s911
        %p913 = scmp.lt.s32.totalorder %s37, 1
        %s914 = scalar_select %p913, %s37, 1
        %s915 = scalar_lea.vmem %s5, %s914
        %s916 = smul.u32 %s37, 128
        %s917 = sadd.s32 %s916, 3
        %s918 = sld [smem:[#allocation7 + %s917]]
        %p919 = scmp.lt.s32.totalorder %s38, %s918
        %s920 = scalar_select %p919, %s38, %s918
        %p921 = scmp.lt.s32.totalorder %s37, 1
        %s922 = scalar_select %p921, %s37, 1
        %p923 = scmp.lt.s32.totalorder %s920, 1
        %s924 = scalar_select %p923, %s920, 1
        %s925 = smul.addr %s924, 16
        %s926 = smul.addr %s922, 32
        %s927 = sadd.s32 %s925, %s926
        %s928 = smul.addr %s927, 4
        %s929 = scalar_lea.vmem %s6, %s928
        %s930 = smul.u32 %s37, 128
        %s931 = sadd.s32 %s930, 3
        %s932 = sld [smem:[#allocation7 + %s931]]
        %p933 = scmp.lt.s32.totalorder %s38, %s932
        %s934 = scalar_select %p933, %s38, %s932
        %s935 = smul.u32 %s37, 128
        %s936 = sadd.s32 %s935, 3
        %s937 = sld [smem:[#allocation7 + %s936]]
        %p938 = scmp.lt.s32.totalorder %s38, %s937
        %s939 = scalar_select %p938, %s38, %s937
        %p940 = scmp.lt.s32.totalorder %s37, 1
        %s941 = scalar_select %p940, %s37, 1
        %p942 = scmp.lt.s32.totalorder %s939, 1
        %s943 = scalar_select %p942, %s939, 1
        %s944 = smul.addr %s943, 16
        %s945 = smul.addr %s941, 32
        %s946 = sadd.s32 %s944, %s945
        %s947 = smul.addr %s946, 4
        %s948 = scalar_lea.vmem %s7, %s947
        %s949 = smul.u32 %s37, 128
        %s950 = sadd.s32 %s949, 3
        %s951 = sld [smem:[#allocation7 + %s950]]
        %p952 = scmp.lt.s32.totalorder %s38, %s951
        %s953 = scalar_select %p952, %s38, %s951
        %s954 = smul.u32 %s37, 128
        %s955 = sadd.s32 %s954, 3
        %s956 = sld [smem:[#allocation7 + %s955]]
        %p957 = scmp.lt.s32.totalorder %s38, %s956
        %s958 = scalar_select %p957, %s38, %s956
        %p959 = scmp.lt.s32.totalorder %s37, 1
        %s960 = scalar_select %p959, %s37, 1
        %p961 = scmp.lt.s32.totalorder %s958, 1
        %s962 = scalar_select %p961, %s958, 1
        %s963 = smul.addr %s962, 16
        %s964 = smul.addr %s960, 32
        %s965 = sadd.s32 %s963, %s964
        %s966 = smul.addr %s965, 4
        %s967 = scalar_lea.vmem %s8, %s966
        %s968 = smul.u32 %s37, 128
        %s969 = sadd.s32 %s968, 3
        %s970 = sld [smem:[#allocation7 + %s969]]
        %p971 = scmp.lt.s32.totalorder %s38, %s970
        %s972 = scalar_select %p971, %s38, %s970
        %s973 = smul.u32 %s37, 128
        %s974 = sadd.s32 %s973, 3
        %s975 = sld [smem:[#allocation7 + %s974]]
        %p976 = scmp.lt.s32.totalorder %s38, %s975
        %s977 = scalar_select %p976, %s38, %s975
        %p978 = scmp.lt.s32.totalorder %s37, 1
        %s979 = scalar_select %p978, %s37, 1
        %p980 = scmp.lt.s32.totalorder %s977, 1
        %s981 = scalar_select %p980, %s977, 1
        %s982 = smul.addr %s981, 16
        %s983 = smul.addr %s979, 32
        %s984 = sadd.s32 %s982, %s983
        %s985 = smul.addr %s984, 4
        %s986 = scalar_lea.vmem %s9, %s985
        %s987 = smul.u32 %s37, 128
        %s988 = sadd.s32 %s987, 3
        %s989 = sld [smem:[#allocation7 + %s988]]
        %p990 = scmp.lt.s32.totalorder %s38, %s989
        %s991 = scalar_select %p990, %s38, %s989
        %s992 = smul.u32 %s37, 128
        %s993 = sadd.s32 %s992, 3
        %s994 = sld [smem:[#allocation7 + %s993]]
        %p995 = scmp.lt.s32.totalorder %s38, %s994
        %s996 = scalar_select %p995, %s38, %s994
        %p997 = scmp.lt.s32.totalorder %s37, 1
        %s998 = scalar_select %p997, %s37, 1
        %p999 = scmp.lt.s32.totalorder %s996, 1
        %s1000 = scalar_select %p999, %s996, 1
        %s1001 = smul.addr %s1000, 16
        %s1002 = smul.addr %s998, 32
        %s1003 = sadd.s32 %s1001, %s1002
        %s1004 = smul.addr %s1003, 4
        %s1005 = scalar_lea.vmem %s10, %s1004
        %s1006 = smul.u32 %s37, 128
        %s1007 = sadd.s32 %s1006, 3
        %s1008 = sld [smem:[#allocation7 + %s1007]]
        %p1009 = scmp.lt.s32.totalorder %s38, %s1008
        %s1010 = scalar_select %p1009, %s38, %s1008
        %s1011 = smul.u32 %s37, 128
        %s1012 = sadd.s32 %s1011, 3
        %s1013 = sld [smem:[#allocation7 + %s1012]]
        %p1014 = scmp.lt.s32.totalorder %s38, %s1013
        %s1015 = scalar_select %p1014, %s38, %s1013
        %p1016 = scmp.lt.s32.totalorder %s37, 1
        %s1017 = scalar_select %p1016, %s37, 1
        %p1018 = scmp.lt.s32.totalorder %s1015, 1
        %s1019 = scalar_select %p1018, %s1015, 1
        %s1020 = smul.addr %s1017, 2
        %s1021 = sadd.s32 %s1019, %s1020
        %s1022 = smul.addr %s1021, 8
        %s1023 = scalar_lea.vmem %s11, %s1022
        %s1024 = smul.u32 %s37, 128
        %s1025 = sadd.s32 %s1024, 3
        %s1026 = sld [smem:[#allocation7 + %s1025]]
        %p1027 = scmp.lt.s32.totalorder %s38, %s1026
        %s1028 = scalar_select %p1027, %s38, %s1026
        %s1030 = smul.u32 %s37, 128
        %s1031 = sld [smem:[#allocation7 + %s1030]]
        %s1032 = sadd.s32 %s1030, 1
        %s1033 = sld [smem:[#allocation7 + %s1032]]
        %p1034 = scmp.lt.s32.totalorder %s38, %s1033
        %p1035 = scmp.eq.s32.totalorder %s38, 0
        %p1036 = scmp.eq.s32.totalorder %s39, 0
        %p1037 = pnand %p1035, %p1036
        %p1038 = pneg %p1037
        // Predicated region
        $region65: #{tpu_custom_call.1} parent=63 // pred_check
          _
        $region66: #{tpu_custom_call.1} parent=63 // pred_check_branch
          %1040 = sbr.rel (%p1037) target = $region68
        $region67: #{tpu_custom_call.1} parent=63 // pred_region
          %v1041 = vld [vmem:[%s1] sm:$0xff]
          %v1042 = vld [vmem:[%s1 + $0x8] sm:$0xff]
          %v1043 = vld [vmem:[%s1 + $0x10] sm:$0xff]
          %v1044 = vld [vmem:[%s1 + $0x18] sm:$0xff]
          %1045 = vst [vmem:[%s852] sm:$0xff] %v1041
          %1046 = vst [vmem:[%s852 + $0x8] sm:$0xff] %v1042
          %1047 = vst [vmem:[%s852 + $0x10] sm:$0xff] %v1043
          %1048 = vst [vmem:[%s852 + $0x18] sm:$0xff] %v1044
        $region68: #{tpu_custom_call.1} parent=63 // pred_fallthru
          _
        %p1049 = pnand %p1034, %p1036
        %p1050 = pneg %p1049
        // Predicated region
        $region69: #{tpu_custom_call.1} parent=63 // pred_check
          _
        $region70: #{tpu_custom_call.1} parent=63 // pred_check_branch
          %1052 = sbr.rel (%p1049) target = $region72
        $region71: #{tpu_custom_call.1} parent=63 // pred_region
          %v1053 = vld [vmem:[%s1023] sm:$0xff]
          %v1054 = vld [vmem:[%s852] sm:$0xff]
          %v1055 = vld [vmem:[%s852 + $0x8] sm:$0xff]
          %v1056 = vld [vmem:[%s852 + $0x10] sm:$0xff]
          %v1057 = vld [vmem:[%s852 + $0x18] sm:$0xff]
          %v1058 = vpack.c.bf16 %v1055, %v1054
          %v1059 = vpack.c.bf16 %v1057, %v1056
          %v1060 = vld [vmem:[%s967] sm:$0xf]
          %v1061 = vld [vmem:[%s967 + $0x4] sm:$0xf]
          %v1062 = vld [vmem:[%s967 + $0x8] sm:$0xf]
          %v1063 = vld [vmem:[%s967 + $0xc] sm:$0xf]
          %v1064 = vld [vmem:[%s967 + $0x10] sm:$0xf]
          %v1065 = vld [vmem:[%s967 + $0x14] sm:$0xf]
          %v1066 = vld [vmem:[%s967 + $0x18] sm:$0xf]
          %v1067 = vld [vmem:[%s967 + $0x1c] sm:$0xf]
          %v1068 = vld [vmem:[%s967 + $0x20] sm:$0xf]
          %v1069 = vld [vmem:[%s967 + $0x24] sm:$0xf]
          %v1070 = vld [vmem:[%s967 + $0x28] sm:$0xf]
          %v1071 = vld [vmem:[%s967 + $0x2c] sm:$0xf]
          %v1072 = vld [vmem:[%s967 + $0x30] sm:$0xf]
          %v1073 = vld [vmem:[%s967 + $0x34] sm:$0xf]
          %v1074 = vld [vmem:[%s967 + $0x38] sm:$0xf]
          %v1075 = vld [vmem:[%s967 + $0x3c] sm:$0xf]
          %v1076 = vlaneseq
          %v1077 = vshrl.u32 %v1076, 7
          %v1078 = vsub.s32 2, %v1077
          %v1079 = vrot.slane %v1053, %v1078
          %v1096 = vunpack.c.l.b16 %v1060
          %v1097 = vunpack.c.l.b16 %v1061
          %v1098 = vunpack.c.l.b16 %v1062
          %v1099 = vunpack.c.l.b16 %v1063
          %v1100 = vunpack.c.l.b16 %v1064
          %v1101 = vunpack.c.l.b16 %v1065
          %v1102 = vunpack.c.l.b16 %v1066
          %v1103 = vunpack.c.l.b16 %v1067
          %v1104 = vunpack.c.l.b16 %v1068
          %v1105 = vunpack.c.l.b16 %v1069
          %v1106 = vunpack.c.l.b16 %v1070
          %v1107 = vunpack.c.l.b16 %v1071
          %v1108 = vunpack.c.l.b16 %v1072
          %v1109 = vunpack.c.l.b16 %v1073
          %v1110 = vunpack.c.l.b16 %v1074
          %v1111 = vunpack.c.l.b16 %v1075
          %v1112 = vpack.c.b16 %v1097, %v1096
          %v1113 = vpack.c.b16 %v1099, %v1098
          %v1114 = vpack.c.b16 %v1101, %v1100
          %v1115 = vpack.c.b16 %v1103, %v1102
          %v1116 = vpack.c.b16 %v1105, %v1104
          %v1117 = vpack.c.b16 %v1107, %v1106
          %v1118 = vpack.c.b16 %v1109, %v1108
          %v1119 = vpack.c.b16 %v1111, %v1110
          %1128 = vmatprep.subr.bf16.mxu0 0
          %1129 = vmatpush1.bf16.msra.mxu0 %v1112
          %1130 = vmatprep.subr.bf16.mxu0 0
          %1131 = vmatpush1.bf16.msra.mxu0 %v1113
          %1132 = vmatprep.subr.bf16.mxu0 0
          %1133 = vmatpush1.bf16.msra.mxu0 %v1114
          %1134 = vmatprep.subr.bf16.mxu0 0
          %1135 = vmatpush1.bf16.msra.mxu0 %v1115
          %1136 = vmatprep.subr.bf16.mxu0 0
          %1137 = vmatpush1.bf16.msra.mxu0 %v1116
          %1138 = vmatprep.subr.bf16.mxu0 0
          %1139 = vmatpush1.bf16.msra.mxu0 %v1117
          %1140 = vmatprep.subr.bf16.mxu0 0
          %1141 = vmatpush1.bf16.msra.mxu0 %v1118
          %1142 = vmatprep.subr.bf16.mxu0 0
          %1143 = vmatpush1.bf16.msra.mxu0 %v1119
          %1144 = vmatprep.subr.bf16.mxu0 0
          %1145 = vmatpush1.bf16.msra.mxu0 0
          %1146 = vmatprep.subr.bf16.mxu0 0
          %1147 = vmatpush1.bf16.msra.mxu0 0
          %1148 = vmatprep.subr.bf16.mxu0 0
          %1149 = vmatpush1.bf16.msra.mxu0 0
          %1150 = vmatprep.subr.bf16.mxu0 0
          %1151 = vmatpush1.bf16.msra.mxu0 0
          %1152 = vmatprep.subr.bf16.mxu0 0
          %1153 = vmatpush1.bf16.msra.mxu0 0
          %1154 = vmatprep.subr.bf16.mxu0 0
          %1155 = vmatpush1.bf16.msra.mxu0 0
          %1156 = vmatprep.subr.bf16.mxu0 0
          %1157 = vmatpush1.bf16.msra.mxu0 0
          %1158 = vmatprep.subr.bf16.mxu0 0
          %1159 = vmatpush1.bf16.msra.mxu0 0
          %1160 = vmatprep.mubr.bf16.mxu0 0
          %1161 = vmatmul.mubr.bf16.gmra.mrb[0].mxu0 %v1058
          %v1162 = vpop.f32.mrb[0].mxu0
          %v1163 = vadd.f32 %v1079, %v1162
          %v1164 = vpop.f32.mrb[0].mxu0
          %v1165 = vpop.f32.mrb[0].mxu0
          %v1166 = vadd.f32 %v1079, %v1165
          %v1167 = vpop.f32.mrb[0].mxu0
          %1168 = vmatprep.mubr.bf16.mxu0 0
          %1169 = vmatmul.mubr.bf16.gmra.mrb[0].mxu0 %v1059
          %v1170 = vpop.f32.mrb[0].mxu0
          %v1171 = vadd.f32 %v1079, %v1170
          %v1172 = vpop.f32.mrb[0].mxu0
          %v1173 = vpop.f32.mrb[0].mxu0
          %v1174 = vadd.f32 %v1079, %v1173
          %v1175 = vpop.f32.mrb[0].mxu0
          %1176 = vdwg.mxu0
          %v1177 = vpack.c.bf16 %v1166, %v1163
          %v1178 = vpack.c.bf16 %v1174, %v1171
          %1179 = vst [vmem:[#allocation2] sm:$0xff] %v1177
          %1180 = vst [vmem:[#allocation2 + $0x8] sm:$0xff] %v1178
          %1181 = vst [vmem:[#allocation3] sm:$0xff] 0.0
          %1182 = vst [vmem:[#allocation3 + $0x8] sm:$0xff] 0.0
          %1183 = vst [vmem:[#allocation3 + $0x10] sm:$0xff] 0.0
          %1184 = vst [vmem:[#allocation3 + $0x18] sm:$0xff] 0.0
        $region72: #{tpu_custom_call.1} parent=63 // pred_fallthru
          _
        %p1185 = scmp.lt.s32.totalorder %s39, %s1031
        %p1186 = pnand %p1034, %p1185
        %p1187 = pneg %p1186
        // Predicated region
        $region73: #{tpu_custom_call.1} parent=63 // pred_check
          _
        $region74: #{tpu_custom_call.1} parent=63 // pred_check_branch
          %1189 = sbr.rel (%p1186) target = $region76
        $region75: #{tpu_custom_call.1} parent=63 // pred_region
          %v1190 = vld [vmem:[%s1023] sm:$0xff]
          %v1191 = vld [vmem:[%s906] sm:$0xff]
          %v1192 = vld [vmem:[%s906 + $0x8] sm:$0xff]
          %v1193 = vld [vmem:[%s906 + $0x10] sm:$0xff]
          %v1194 = vld [vmem:[%s906 + $0x18] sm:$0xff]
          %v1195 = vld [vmem:[%s906 + $0x20] sm:$0xff]
          %v1196 = vld [vmem:[%s906 + $0x28] sm:$0xff]
          %v1197 = vld [vmem:[%s906 + $0x30] sm:$0xff]
          %v1198 = vld [vmem:[%s906 + $0x38] sm:$0xff]
          %v1199 = vld [vmem:[%s906 + $0x40] sm:$0xff]
          %v1200 = vld [vmem:[%s906 + $0x48] sm:$0xff]
          %v1201 = vld [vmem:[%s906 + $0x50] sm:$0xff]
          %v1202 = vld [vmem:[%s906 + $0x58] sm:$0xff]
          %v1203 = vld [vmem:[%s906 + $0x60] sm:$0xff]
          %v1204 = vld [vmem:[%s906 + $0x68] sm:$0xff]
          %v1205 = vld [vmem:[%s906 + $0x70] sm:$0xff]
          %v1206 = vld [vmem:[%s906 + $0x78] sm:$0xff]
          %v1207 = vld [vmem:[%s906 + $0x80] sm:$0xff]
          %v1208 = vld [vmem:[%s906 + $0x88] sm:$0xff]
          %v1209 = vld [vmem:[%s906 + $0x90] sm:$0xff]
          %v1210 = vld [vmem:[%s906 + $0x98] sm:$0xff]
          %v1211 = vld [vmem:[%s906 + $0xa0] sm:$0xff]
          %v1212 = vld [vmem:[%s906 + $0xa8] sm:$0xff]
          %v1213 = vld [vmem:[%s906 + $0xb0] sm:$0xff]
          %v1214 = vld [vmem:[%s906 + $0xb8] sm:$0xff]
          %v1215 = vld [vmem:[%s906 + $0xc0] sm:$0xff]
          %v1216 = vld [vmem:[%s906 + $0xc8] sm:$0xff]
          %v1217 = vld [vmem:[%s906 + $0xd0] sm:$0xff]
          %v1218 = vld [vmem:[%s906 + $0xd8] sm:$0xff]
          %v1219 = vld [vmem:[%s906 + $0xe0] sm:$0xff]
          %v1220 = vld [vmem:[%s906 + $0xe8] sm:$0xff]
          %v1221 = vld [vmem:[%s906 + $0xf0] sm:$0xff]
          %v1222 = vld [vmem:[%s906 + $0xf8] sm:$0xff]
          %v1223 = vld [vmem:[%s906 + $0x100] sm:$0xff]
          %v1224 = vld [vmem:[%s906 + $0x108] sm:$0xff]
          %v1225 = vld [vmem:[%s906 + $0x110] sm:$0xff]
          %v1226 = vld [vmem:[%s906 + $0x118] sm:$0xff]
          %v1227 = vld [vmem:[%s906 + $0x120] sm:$0xff]
          %v1228 = vld [vmem:[%s906 + $0x128] sm:$0xff]
          %v1229 = vld [vmem:[%s906 + $0x130] sm:$0xff]
          %v1230 = vld [vmem:[%s906 + $0x138] sm:$0xff]
          %v1231 = vld [vmem:[%s906 + $0x140] sm:$0xff]
          %v1232 = vld [vmem:[%s906 + $0x148] sm:$0xff]
          %v1233 = vld [vmem:[%s906 + $0x150] sm:$0xff]
          %v1234 = vld [vmem:[%s906 + $0x158] sm:$0xff]
          %v1235 = vld [vmem:[%s906 + $0x160] sm:$0xff]
          %v1236 = vld [vmem:[%s906 + $0x168] sm:$0xff]
          %v1237 = vld [vmem:[%s906 + $0x170] sm:$0xff]
          %v1238 = vld [vmem:[%s906 + $0x178] sm:$0xff]
          %v1239 = vld [vmem:[%s906 + $0x180] sm:$0xff]
          %v1240 = vld [vmem:[%s906 + $0x188] sm:$0xff]
          %v1241 = vld [vmem:[%s906 + $0x190] sm:$0xff]
          %v1242 = vld [vmem:[%s906 + $0x198] sm:$0xff]
          %v1243 = vld [vmem:[%s906 + $0x1a0] sm:$0xff]
          %v1244 = vld [vmem:[%s906 + $0x1a8] sm:$0xff]
          %v1245 = vld [vmem:[%s906 + $0x1b0] sm:$0xff]
          %v1246 = vld [vmem:[%s906 + $0x1b8] sm:$0xff]
          %v1247 = vld [vmem:[%s906 + $0x1c0] sm:$0xff]
          %v1248 = vld [vmem:[%s906 + $0x1c8] sm:$0xff]
          %v1249 = vld [vmem:[%s906 + $0x1d0] sm:$0xff]
          %v1250 = vld [vmem:[%s906 + $0x1d8] sm:$0xff]
          %v1251 = vld [vmem:[%s906 + $0x1e0] sm:$0xff]
          %v1252 = vld [vmem:[%s906 + $0x1e8] sm:$0xff]
          %v1253 = vld [vmem:[%s906 + $0x1f0] sm:$0xff]
          %v1254 = vld [vmem:[%s906 + $0x1f8] sm:$0xff]
          // Predicated region
          $region77: #{tpu_custom_call.1} parent=75 // pred_check
            %p1255 = pneg %p1035
          $region78: #{tpu_custom_call.1} parent=75 // pred_check_branch
            %1257 = sbr.rel (%p1255) target = $region80
          $region79: #{tpu_custom_call.1} parent=75 // pred_region
            %v1258 = vld [vmem:[%s866] sm:$0xff]
            %v1259 = vld [vmem:[%s866 + $0x8] sm:$0xff]
            %v1260 = vld [vmem:[%s866 + $0x10] sm:$0xff]
            %v1261 = vld [vmem:[%s866 + $0x18] sm:$0xff]
            %v1262 = vld [vmem:[%s866 + $0x20] sm:$0xff]
            %v1263 = vld [vmem:[%s866 + $0x28] sm:$0xff]
            %v1264 = vld [vmem:[%s866 + $0x30] sm:$0xff]
            %v1265 = vld [vmem:[%s866 + $0x38] sm:$0xff]
            %v1266 = vld [vmem:[%s866 + $0x40] sm:$0xff]
            %v1267 = vld [vmem:[%s866 + $0x48] sm:$0xff]
            %v1268 = vld [vmem:[%s866 + $0x50] sm:$0xff]
            %v1269 = vld [vmem:[%s866 + $0x58] sm:$0xff]
            %v1270 = vld [vmem:[%s866 + $0x60] sm:$0xff]
            %v1271 = vld [vmem:[%s866 + $0x68] sm:$0xff]
            %v1272 = vld [vmem:[%s866 + $0x70] sm:$0xff]
            %v1273 = vld [vmem:[%s866 + $0x78] sm:$0xff]
            %v1274 = vld [vmem:[%s866 + $0x80] sm:$0xff]
            %v1275 = vld [vmem:[%s866 + $0x88] sm:$0xff]
            %v1276 = vld [vmem:[%s866 + $0x90] sm:$0xff]
            %v1277 = vld [vmem:[%s866 + $0x98] sm:$0xff]
            %v1278 = vld [vmem:[%s866 + $0xa0] sm:$0xff]
            %v1279 = vld [vmem:[%s866 + $0xa8] sm:$0xff]
            %v1280 = vld [vmem:[%s866 + $0xb0] sm:$0xff]
            %v1281 = vld [vmem:[%s866 + $0xb8] sm:$0xff]
            %v1282 = vld [vmem:[%s866 + $0xc0] sm:$0xff]
            %v1283 = vld [vmem:[%s866 + $0xc8] sm:$0xff]
            %v1284 = vld [vmem:[%s866 + $0xd0] sm:$0xff]
            %v1285 = vld [vmem:[%s866 + $0xd8] sm:$0xff]
            %v1286 = vld [vmem:[%s866 + $0xe0] sm:$0xff]
            %v1287 = vld [vmem:[%s866 + $0xe8] sm:$0xff]
            %v1288 = vld [vmem:[%s866 + $0xf0] sm:$0xff]
            %v1289 = vld [vmem:[%s866 + $0xf8] sm:$0xff]
            %v1290 = vld [vmem:[%s866 + $0x100] sm:$0xff]
            %v1291 = vld [vmem:[%s866 + $0x108] sm:$0xff]
            %v1292 = vld [vmem:[%s866 + $0x110] sm:$0xff]
            %v1293 = vld [vmem:[%s866 + $0x118] sm:$0xff]
            %v1294 = vld [vmem:[%s866 + $0x120] sm:$0xff]
            %v1295 = vld [vmem:[%s866 + $0x128] sm:$0xff]
            %v1296 = vld [vmem:[%s866 + $0x130] sm:$0xff]
            %v1297 = vld [vmem:[%s866 + $0x138] sm:$0xff]
            %v1298 = vld [vmem:[%s866 + $0x140] sm:$0xff]
            %v1299 = vld [vmem:[%s866 + $0x148] sm:$0xff]
            %v1300 = vld [vmem:[%s866 + $0x150] sm:$0xff]
            %v1301 = vld [vmem:[%s866 + $0x158] sm:$0xff]
            %v1302 = vld [vmem:[%s866 + $0x160] sm:$0xff]
            %v1303 = vld [vmem:[%s866 + $0x168] sm:$0xff]
            %v1304 = vld [vmem:[%s866 + $0x170] sm:$0xff]
            %v1305 = vld [vmem:[%s866 + $0x178] sm:$0xff]
            %v1306 = vld [vmem:[%s866 + $0x180] sm:$0xff]
            %v1307 = vld [vmem:[%s866 + $0x188] sm:$0xff]
            %v1308 = vld [vmem:[%s866 + $0x190] sm:$0xff]
            %v1309 = vld [vmem:[%s866 + $0x198] sm:$0xff]
            %v1310 = vld [vmem:[%s866 + $0x1a0] sm:$0xff]
            %v1311 = vld [vmem:[%s866 + $0x1a8] sm:$0xff]
            %v1312 = vld [vmem:[%s866 + $0x1b0] sm:$0xff]
            %v1313 = vld [vmem:[%s866 + $0x1b8] sm:$0xff]
            %v1314 = vld [vmem:[%s866 + $0x1c0] sm:$0xff]
            %v1315 = vld [vmem:[%s866 + $0x1c8] sm:$0xff]
            %v1316 = vld [vmem:[%s866 + $0x1d0] sm:$0xff]
            %v1317 = vld [vmem:[%s866 + $0x1d8] sm:$0xff]
            %v1318 = vld [vmem:[%s866 + $0x1e0] sm:$0xff]
            %v1319 = vld [vmem:[%s866 + $0x1e8] sm:$0xff]
            %v1320 = vld [vmem:[%s866 + $0x1f0] sm:$0xff]
            %v1321 = vld [vmem:[%s866 + $0x1f8] sm:$0xff]
            %v1322 = vld [vmem:[%s886] sm:$0xff]
            %1323 = vrot.lane.b32.xlu0 %v1258, 127
            %v1324 = vpop.permute.xlu0 %1323
            %1325 = vrot.lane.b32.xlu0 %v1259, 127
            %v1326 = vpop.permute.xlu0 %1325
            %1327 = vrot.lane.b32.xlu0 %v1260, 127
            %v1328 = vpop.permute.xlu0 %1327
            %1329 = vrot.lane.b32.xlu0 %v1261, 127
            %v1330 = vpop.permute.xlu0 %1329
            %1331 = vrot.lane.b32.xlu0 %v1262, 127
            %v1332 = vpop.permute.xlu0 %1331
            %1333 = vrot.lane.b32.xlu0 %v1263, 127
            %v1334 = vpop.permute.xlu0 %1333
            %1335 = vrot.lane.b32.xlu0 %v1264, 127
            %v1336 = vpop.permute.xlu0 %1335
            %1337 = vrot.lane.b32.xlu0 %v1265, 127
            %v1338 = vpop.permute.xlu0 %1337
            %1339 = vrot.lane.b32.xlu0 %v1266, 127
            %v1340 = vpop.permute.xlu0 %1339
            %1341 = vrot.lane.b32.xlu0 %v1267, 127
            %v1342 = vpop.permute.xlu0 %1341
            %1343 = vrot.lane.b32.xlu0 %v1268, 127
            %v1344 = vpop.permute.xlu0 %1343
            %1345 = vrot.lane.b32.xlu0 %v1269, 127
            %v1346 = vpop.permute.xlu0 %1345
            %1347 = vrot.lane.b32.xlu0 %v1270, 127
            %v1348 = vpop.permute.xlu0 %1347
            %1349 = vrot.lane.b32.xlu0 %v1271, 127
            %v1350 = vpop.permute.xlu0 %1349
            %1351 = vrot.lane.b32.xlu0 %v1272, 127
            %v1352 = vpop.permute.xlu0 %1351
            %1353 = vrot.lane.b32.xlu0 %v1273, 127
            %v1354 = vpop.permute.xlu0 %1353
            %1355 = vrot.lane.b32.xlu0 %v1274, 127
            %v1356 = vpop.permute.xlu0 %1355
            %1357 = vrot.lane.b32.xlu0 %v1275, 127
            %v1358 = vpop.permute.xlu0 %1357
            %1359 = vrot.lane.b32.xlu0 %v1276, 127
            %v1360 = vpop.permute.xlu0 %1359
            %1361 = vrot.lane.b32.xlu0 %v1277, 127
            %v1362 = vpop.permute.xlu0 %1361
            %1363 = vrot.lane.b32.xlu0 %v1278, 127
            %v1364 = vpop.permute.xlu0 %1363
            %1365 = vrot.lane.b32.xlu0 %v1279, 127
            %v1366 = vpop.permute.xlu0 %1365
            %1367 = vrot.lane.b32.xlu0 %v1280, 127
            %v1368 = vpop.permute.xlu0 %1367
            %1369 = vrot.lane.b32.xlu0 %v1281, 127
            %v1370 = vpop.permute.xlu0 %1369
            %1371 = vrot.lane.b32.xlu0 %v1282, 127
            %v1372 = vpop.permute.xlu0 %1371
            %1373 = vrot.lane.b32.xlu0 %v1283, 127
            %v1374 = vpop.permute.xlu0 %1373
            %1375 = vrot.lane.b32.xlu0 %v1284, 127
            %v1376 = vpop.permute.xlu0 %1375
            %1377 = vrot.lane.b32.xlu0 %v1285, 127
            %v1378 = vpop.permute.xlu0 %1377
            %1379 = vrot.lane.b32.xlu0 %v1286, 127
            %v1380 = vpop.permute.xlu0 %1379
            %1381 = vrot.lane.b32.xlu0 %v1287, 127
            %v1382 = vpop.permute.xlu0 %1381
            %1383 = vrot.lane.b32.xlu0 %v1288, 127
            %v1384 = vpop.permute.xlu0 %1383
            %1385 = vrot.lane.b32.xlu0 %v1289, 127
            %v1386 = vpop.permute.xlu0 %1385
            %1387 = vrot.lane.b32.xlu0 %v1290, 127
            %v1388 = vpop.permute.xlu0 %1387
            %1389 = vrot.lane.b32.xlu0 %v1291, 127
            %v1390 = vpop.permute.xlu0 %1389
            %1391 = vrot.lane.b32.xlu0 %v1292, 127
            %v1392 = vpop.permute.xlu0 %1391
            %1393 = vrot.lane.b32.xlu0 %v1293, 127
            %v1394 = vpop.permute.xlu0 %1393
            %1395 = vrot.lane.b32.xlu0 %v1294, 127
            %v1396 = vpop.permute.xlu0 %1395
            %1397 = vrot.lane.b32.xlu0 %v1295, 127
            %v1398 = vpop.permute.xlu0 %1397
            %1399 = vrot.lane.b32.xlu0 %v1296, 127
            %v1400 = vpop.permute.xlu0 %1399
            %1401 = vrot.lane.b32.xlu0 %v1297, 127
            %v1402 = vpop.permute.xlu0 %1401
            %1403 = vrot.lane.b32.xlu0 %v1298, 127
            %v1404 = vpop.permute.xlu0 %1403
            %1405 = vrot.lane.b32.xlu0 %v1299, 127
            %v1406 = vpop.permute.xlu0 %1405
            %1407 = vrot.lane.b32.xlu0 %v1300, 127
            %v1408 = vpop.permute.xlu0 %1407
            %1409 = vrot.lane.b32.xlu0 %v1301, 127
            %v1410 = vpop.permute.xlu0 %1409
            %1411 = vrot.lane.b32.xlu0 %v1302, 127
            %v1412 = vpop.permute.xlu0 %1411
            %1413 = vrot.lane.b32.xlu0 %v1303, 127
            %v1414 = vpop.permute.xlu0 %1413
            %1415 = vrot.lane.b32.xlu0 %v1304, 127
            %v1416 = vpop.permute.xlu0 %1415
            %1417 = vrot.lane.b32.xlu0 %v1305, 127
            %v1418 = vpop.permute.xlu0 %1417
            %1419 = vrot.lane.b32.xlu0 %v1306, 127
            %v1420 = vpop.permute.xlu0 %1419
            %1421 = vrot.lane.b32.xlu0 %v1307, 127
            %v1422 = vpop.permute.xlu0 %1421
            %1423 = vrot.lane.b32.xlu0 %v1308, 127
            %v1424 = vpop.permute.xlu0 %1423
            %1425 = vrot.lane.b32.xlu0 %v1309, 127
            %v1426 = vpop.permute.xlu0 %1425
            %1427 = vrot.lane.b32.xlu0 %v1310, 127
            %v1428 = vpop.permute.xlu0 %1427
            %1429 = vrot.lane.b32.xlu0 %v1311, 127
            %v1430 = vpop.permute.xlu0 %1429
            %1431 = vrot.lane.b32.xlu0 %v1312, 127
            %v1432 = vpop.permute.xlu0 %1431
            %1433 = vrot.lane.b32.xlu0 %v1313, 127
            %v1434 = vpop.permute.xlu0 %1433
            %1435 = vrot.lane.b32.xlu0 %v1314, 127
            %v1436 = vpop.permute.xlu0 %1435
            %1437 = vrot.lane.b32.xlu0 %v1315, 127
            %v1438 = vpop.permute.xlu0 %1437
            %1439 = vrot.lane.b32.xlu0 %v1316, 127
            %v1440 = vpop.permute.xlu0 %1439
            %1441 = vrot.lane.b32.xlu0 %v1317, 127
            %v1442 = vpop.permute.xlu0 %1441
            %1443 = vrot.lane.b32.xlu0 %v1318, 127
            %v1444 = vpop.permute.xlu0 %1443
            %1445 = vrot.lane.b32.xlu0 %v1319, 127
            %v1446 = vpop.permute.xlu0 %1445
            %1447 = vrot.lane.b32.xlu0 %v1320, 127
            %v1448 = vpop.permute.xlu0 %1447
            %1449 = vrot.lane.b32.xlu0 %v1321, 127
            %v1450 = vpop.permute.xlu0 %1449
            %v1451 = vlaneseq
            %v1452 = vand.u32 %v1451, 127
            %1453 = vset.pattern.permute.xlu0 0
            %1454 = vperm.xlu0 %1453, %v1258
            %v1455 = vpop.permute.xlu0 %1454
            %1456 = vset.pattern.permute.xlu0 0
            %1457 = vperm.xlu0 %1456, %v1259
            %v1458 = vpop.permute.xlu0 %1457
            %1459 = vset.pattern.permute.xlu0 0
            %1460 = vperm.xlu0 %1459, %v1260
            %v1461 = vpop.permute.xlu0 %1460
            %1462 = vset.pattern.permute.xlu0 0
            %1463 = vperm.xlu0 %1462, %v1261
            %v1464 = vpop.permute.xlu0 %1463
            %1465 = vset.pattern.permute.xlu0 0
            %1466 = vperm.xlu0 %1465, %v1262
            %v1467 = vpop.permute.xlu0 %1466
            %1468 = vset.pattern.permute.xlu0 0
            %1469 = vperm.xlu0 %1468, %v1263
            %v1470 = vpop.permute.xlu0 %1469
            %1471 = vset.pattern.permute.xlu0 0
            %1472 = vperm.xlu0 %1471, %v1264
            %v1473 = vpop.permute.xlu0 %1472
            %1474 = vset.pattern.permute.xlu0 0
            %1475 = vperm.xlu0 %1474, %v1265
            %v1476 = vpop.permute.xlu0 %1475
            %1477 = vset.pattern.permute.xlu0 0
            %1478 = vperm.xlu0 %1477, %v1266
            %v1479 = vpop.permute.xlu0 %1478
            %1480 = vset.pattern.permute.xlu0 0
            %1481 = vperm.xlu0 %1480, %v1267
            %v1482 = vpop.permute.xlu0 %1481
            %1483 = vset.pattern.permute.xlu0 0
            %1484 = vperm.xlu0 %1483, %v1268
            %v1485 = vpop.permute.xlu0 %1484
            %1486 = vset.pattern.permute.xlu0 0
            %1487 = vperm.xlu0 %1486, %v1269
            %v1488 = vpop.permute.xlu0 %1487
            %1489 = vset.pattern.permute.xlu0 0
            %1490 = vperm.xlu0 %1489, %v1270
            %v1491 = vpop.permute.xlu0 %1490
            %1492 = vset.pattern.permute.xlu0 0
            %1493 = vperm.xlu0 %1492, %v1271
            %v1494 = vpop.permute.xlu0 %1493
            %1495 = vset.pattern.permute.xlu0 0
            %1496 = vperm.xlu0 %1495, %v1272
            %v1497 = vpop.permute.xlu0 %1496
            %1498 = vset.pattern.permute.xlu0 0
            %1499 = vperm.xlu0 %1498, %v1273
            %v1500 = vpop.permute.xlu0 %1499
            %1501 = vset.pattern.permute.xlu0 0
            %1502 = vperm.xlu0 %1501, %v1274
            %v1503 = vpop.permute.xlu0 %1502
            %1504 = vset.pattern.permute.xlu0 0
            %1505 = vperm.xlu0 %1504, %v1275
            %v1506 = vpop.permute.xlu0 %1505
            %1507 = vset.pattern.permute.xlu0 0
            %1508 = vperm.xlu0 %1507, %v1276
            %v1509 = vpop.permute.xlu0 %1508
            %1510 = vset.pattern.permute.xlu0 0
            %1511 = vperm.xlu0 %1510, %v1277
            %v1512 = vpop.permute.xlu0 %1511
            %1513 = vset.pattern.permute.xlu0 0
            %1514 = vperm.xlu0 %1513, %v1278
            %v1515 = vpop.permute.xlu0 %1514
            %1516 = vset.pattern.permute.xlu0 0
            %1517 = vperm.xlu0 %1516, %v1279
            %v1518 = vpop.permute.xlu0 %1517
            %1519 = vset.pattern.permute.xlu0 0
            %1520 = vperm.xlu0 %1519, %v1280
            %v1521 = vpop.permute.xlu0 %1520
            %1522 = vset.pattern.permute.xlu0 0
            %1523 = vperm.xlu0 %1522, %v1281
            %v1524 = vpop.permute.xlu0 %1523
            %1525 = vset.pattern.permute.xlu0 0
            %1526 = vperm.xlu0 %1525, %v1282
            %v1527 = vpop.permute.xlu0 %1526
            %1528 = vset.pattern.permute.xlu0 0
            %1529 = vperm.xlu0 %1528, %v1283
            %v1530 = vpop.permute.xlu0 %1529
            %1531 = vset.pattern.permute.xlu0 0
            %1532 = vperm.xlu0 %1531, %v1284
            %v1533 = vpop.permute.xlu0 %1532
            %1534 = vset.pattern.permute.xlu0 0
            %1535 = vperm.xlu0 %1534, %v1285
            %v1536 = vpop.permute.xlu0 %1535
            %1537 = vset.pattern.permute.xlu0 0
            %1538 = vperm.xlu0 %1537, %v1286
            %v1539 = vpop.permute.xlu0 %1538
            %1540 = vset.pattern.permute.xlu0 0
            %1541 = vperm.xlu0 %1540, %v1287
            %v1542 = vpop.permute.xlu0 %1541
            %1543 = vset.pattern.permute.xlu0 0
            %1544 = vperm.xlu0 %1543, %v1288
            %v1545 = vpop.permute.xlu0 %1544
            %1546 = vset.pattern.permute.xlu0 0
            %1547 = vperm.xlu0 %1546, %v1289
            %v1548 = vpop.permute.xlu0 %1547
            %1549 = vset.pattern.permute.xlu0 0
            %1550 = vperm.xlu0 %1549, %v1290
            %v1551 = vpop.permute.xlu0 %1550
            %1552 = vset.pattern.permute.xlu0 0
            %1553 = vperm.xlu0 %1552, %v1291
            %v1554 = vpop.permute.xlu0 %1553
            %1555 = vset.pattern.permute.xlu0 0
            %1556 = vperm.xlu0 %1555, %v1292
            %v1557 = vpop.permute.xlu0 %1556
            %1558 = vset.pattern.permute.xlu0 0
            %1559 = vperm.xlu0 %1558, %v1293
            %v1560 = vpop.permute.xlu0 %1559
            %1561 = vset.pattern.permute.xlu0 0
            %1562 = vperm.xlu0 %1561, %v1294
            %v1563 = vpop.permute.xlu0 %1562
            %1564 = vset.pattern.permute.xlu0 0
            %1565 = vperm.xlu0 %1564, %v1295
            %v1566 = vpop.permute.xlu0 %1565
            %1567 = vset.pattern.permute.xlu0 0
            %1568 = vperm.xlu0 %1567, %v1296
            %v1569 = vpop.permute.xlu0 %1568
            %1570 = vset.pattern.permute.xlu0 0
            %1571 = vperm.xlu0 %1570, %v1297
            %v1572 = vpop.permute.xlu0 %1571
            %1573 = vset.pattern.permute.xlu0 0
            %1574 = vperm.xlu0 %1573, %v1298
            %v1575 = vpop.permute.xlu0 %1574
            %1576 = vset.pattern.permute.xlu0 0
            %1577 = vperm.xlu0 %1576, %v1299
            %v1578 = vpop.permute.xlu0 %1577
            %1579 = vset.pattern.permute.xlu0 0
            %1580 = vperm.xlu0 %1579, %v1300
            %v1581 = vpop.permute.xlu0 %1580
            %1582 = vset.pattern.permute.xlu0 0
            %1583 = vperm.xlu0 %1582, %v1301
            %v1584 = vpop.permute.xlu0 %1583
            %1585 = vset.pattern.permute.xlu0 0
            %1586 = vperm.xlu0 %1585, %v1302
            %v1587 = vpop.permute.xlu0 %1586
            %1588 = vset.pattern.permute.xlu0 0
            %1589 = vperm.xlu0 %1588, %v1303
            %v1590 = vpop.permute.xlu0 %1589
            %1591 = vset.pattern.permute.xlu0 0
            %1592 = vperm.xlu0 %1591, %v1304
            %v1593 = vpop.permute.xlu0 %1592
            %1594 = vset.pattern.permute.xlu0 0
            %1595 = vperm.xlu0 %1594, %v1305
            %v1596 = vpop.permute.xlu0 %1595
            %1597 = vset.pattern.permute.xlu0 0
            %1598 = vperm.xlu0 %1597, %v1306
            %v1599 = vpop.permute.xlu0 %1598
            %1600 = vset.pattern.permute.xlu0 0
            %1601 = vperm.xlu0 %1600, %v1307
            %v1602 = vpop.permute.xlu0 %1601
            %1603 = vset.pattern.permute.xlu0 0
            %1604 = vperm.xlu0 %1603, %v1308
            %v1605 = vpop.permute.xlu0 %1604
            %1606 = vset.pattern.permute.xlu0 0
            %1607 = vperm.xlu0 %1606, %v1309
            %v1608 = vpop.permute.xlu0 %1607
            %1609 = vset.pattern.permute.xlu0 0
            %1610 = vperm.xlu0 %1609, %v1310
            %v1611 = vpop.permute.xlu0 %1610
            %1612 = vset.pattern.permute.xlu0 0
            %1613 = vperm.xlu0 %1612, %v1311
            %v1614 = vpop.permute.xlu0 %1613
            %1615 = vset.pattern.permute.xlu0 0
            %1616 = vperm.xlu0 %1615, %v1312
            %v1617 = vpop.permute.xlu0 %1616
            %1618 = vset.pattern.permute.xlu0 0
            %1619 = vperm.xlu0 %1618, %v1313
            %v1620 = vpop.permute.xlu0 %1619
            %1621 = vset.pattern.permute.xlu0 0
            %1622 = vperm.xlu0 %1621, %v1314
            %v1623 = vpop.permute.xlu0 %1622
            %1624 = vset.pattern.permute.xlu0 0
            %1625 = vperm.xlu0 %1624, %v1315
            %v1626 = vpop.permute.xlu0 %1625
            %1627 = vset.pattern.permute.xlu0 0
            %1628 = vperm.xlu0 %1627, %v1316
            %v1629 = vpop.permute.xlu0 %1628
            %1630 = vset.pattern.permute.xlu0 0
            %1631 = vperm.xlu0 %1630, %v1317
            %v1632 = vpop.permute.xlu0 %1631
            %1633 = vset.pattern.permute.xlu0 0
            %1634 = vperm.xlu0 %1633, %v1318
            %v1635 = vpop.permute.xlu0 %1634
            %1636 = vset.pattern.permute.xlu0 0
            %1637 = vperm.xlu0 %1636, %v1319
            %v1638 = vpop.permute.xlu0 %1637
            %1639 = vset.pattern.permute.xlu0 0
            %1640 = vperm.xlu0 %1639, %v1320
            %v1641 = vpop.permute.xlu0 %1640
            %1642 = vset.pattern.permute.xlu0 0
            %1643 = vperm.xlu0 %1642, %v1321
            %v1644 = vpop.permute.xlu0 %1643
            %1645 = vset.pattern.permute.xlu0 0
            %1646 = vperm.xlu0 %1645, %v1324
            %v1647 = vpop.permute.xlu0 %1646
            %1648 = vset.pattern.permute.xlu0 0
            %1649 = vperm.xlu0 %1648, %v1326
            %v1650 = vpop.permute.xlu0 %1649
            %1651 = vset.pattern.permute.xlu0 0
            %1652 = vperm.xlu0 %1651, %v1328
            %v1653 = vpop.permute.xlu0 %1652
            %1654 = vset.pattern.permute.xlu0 0
            %1655 = vperm.xlu0 %1654, %v1330
            %v1656 = vpop.permute.xlu0 %1655
            %1657 = vset.pattern.permute.xlu0 0
            %1658 = vperm.xlu0 %1657, %v1332
            %v1659 = vpop.permute.xlu0 %1658
            %1660 = vset.pattern.permute.xlu0 0
            %1661 = vperm.xlu0 %1660, %v1334
            %v1662 = vpop.permute.xlu0 %1661
            %1663 = vset.pattern.permute.xlu0 0
            %1664 = vperm.xlu0 %1663, %v1336
            %v1665 = vpop.permute.xlu0 %1664
            %1666 = vset.pattern.permute.xlu0 0
            %1667 = vperm.xlu0 %1666, %v1338
            %v1668 = vpop.permute.xlu0 %1667
            %1669 = vset.pattern.permute.xlu0 0
            %1670 = vperm.xlu0 %1669, %v1340
            %v1671 = vpop.permute.xlu0 %1670
            %1672 = vset.pattern.permute.xlu0 0
            %1673 = vperm.xlu0 %1672, %v1342
            %v1674 = vpop.permute.xlu0 %1673
            %1675 = vset.pattern.permute.xlu0 0
            %1676 = vperm.xlu0 %1675, %v1344
            %v1677 = vpop.permute.xlu0 %1676
            %1678 = vset.pattern.permute.xlu0 0
            %1679 = vperm.xlu0 %1678, %v1346
            %v1680 = vpop.permute.xlu0 %1679
            %1681 = vset.pattern.permute.xlu0 0
            %1682 = vperm.xlu0 %1681, %v1348
            %v1683 = vpop.permute.xlu0 %1682
            %1684 = vset.pattern.permute.xlu0 0
            %1685 = vperm.xlu0 %1684, %v1350
            %v1686 = vpop.permute.xlu0 %1685
            %1687 = vset.pattern.permute.xlu0 0
            %1688 = vperm.xlu0 %1687, %v1352
            %v1689 = vpop.permute.xlu0 %1688
            %1690 = vset.pattern.permute.xlu0 0
            %1691 = vperm.xlu0 %1690, %v1354
            %v1692 = vpop.permute.xlu0 %1691
            %1693 = vset.pattern.permute.xlu0 0
            %1694 = vperm.xlu0 %1693, %v1356
            %v1695 = vpop.permute.xlu0 %1694
            %1696 = vset.pattern.permute.xlu0 0
            %1697 = vperm.xlu0 %1696, %v1358
            %v1698 = vpop.permute.xlu0 %1697
            %1699 = vset.pattern.permute.xlu0 0
            %1700 = vperm.xlu0 %1699, %v1360
            %v1701 = vpop.permute.xlu0 %1700
            %1702 = vset.pattern.permute.xlu0 0
            %1703 = vperm.xlu0 %1702, %v1362
            %v1704 = vpop.permute.xlu0 %1703
            %1705 = vset.pattern.permute.xlu0 0
            %1706 = vperm.xlu0 %1705, %v1364
            %v1707 = vpop.permute.xlu0 %1706
            %1708 = vset.pattern.permute.xlu0 0
            %1709 = vperm.xlu0 %1708, %v1366
            %v1710 = vpop.permute.xlu0 %1709
            %1711 = vset.pattern.permute.xlu0 0
            %1712 = vperm.xlu0 %1711, %v1368
            %v1713 = vpop.permute.xlu0 %1712
            %1714 = vset.pattern.permute.xlu0 0
            %1715 = vperm.xlu0 %1714, %v1370
            %v1716 = vpop.permute.xlu0 %1715
            %1717 = vset.pattern.permute.xlu0 0
            %1718 = vperm.xlu0 %1717, %v1372
            %v1719 = vpop.permute.xlu0 %1718
            %1720 = vset.pattern.permute.xlu0 0
            %1721 = vperm.xlu0 %1720, %v1374
            %v1722 = vpop.permute.xlu0 %1721
            %1723 = vset.pattern.permute.xlu0 0
            %1724 = vperm.xlu0 %1723, %v1376
            %v1725 = vpop.permute.xlu0 %1724
            %1726 = vset.pattern.permute.xlu0 0
            %1727 = vperm.xlu0 %1726, %v1378
            %v1728 = vpop.permute.xlu0 %1727
            %1729 = vset.pattern.permute.xlu0 0
            %1730 = vperm.xlu0 %1729, %v1380
            %v1731 = vpop.permute.xlu0 %1730
            %1732 = vset.pattern.permute.xlu0 0
            %1733 = vperm.xlu0 %1732, %v1382
            %v1734 = vpop.permute.xlu0 %1733
            %1735 = vset.pattern.permute.xlu0 0
            %1736 = vperm.xlu0 %1735, %v1384
            %v1737 = vpop.permute.xlu0 %1736
            %1738 = vset.pattern.permute.xlu0 0
            %1739 = vperm.xlu0 %1738, %v1386
            %v1740 = vpop.permute.xlu0 %1739
            %1741 = vset.pattern.permute.xlu0 0
            %1742 = vperm.xlu0 %1741, %v1388
            %v1743 = vpop.permute.xlu0 %1742
            %1744 = vset.pattern.permute.xlu0 0
            %1745 = vperm.xlu0 %1744, %v1390
            %v1746 = vpop.permute.xlu0 %1745
            %1747 = vset.pattern.permute.xlu0 0
            %1748 = vperm.xlu0 %1747, %v1392
            %v1749 = vpop.permute.xlu0 %1748
            %1750 = vset.pattern.permute.xlu0 0
            %1751 = vperm.xlu0 %1750, %v1394
            %v1752 = vpop.permute.xlu0 %1751
            %1753 = vset.pattern.permute.xlu0 0
            %1754 = vperm.xlu0 %1753, %v1396
            %v1755 = vpop.permute.xlu0 %1754
            %1756 = vset.pattern.permute.xlu0 0
            %1757 = vperm.xlu0 %1756, %v1398
            %v1758 = vpop.permute.xlu0 %1757
            %1759 = vset.pattern.permute.xlu0 0
            %1760 = vperm.xlu0 %1759, %v1400
            %v1761 = vpop.permute.xlu0 %1760
            %1762 = vset.pattern.permute.xlu0 0
            %1763 = vperm.xlu0 %1762, %v1402
            %v1764 = vpop.permute.xlu0 %1763
            %1765 = vset.pattern.permute.xlu0 0
            %1766 = vperm.xlu0 %1765, %v1404
            %v1767 = vpop.permute.xlu0 %1766
            %1768 = vset.pattern.permute.xlu0 0
            %1769 = vperm.xlu0 %1768, %v1406
            %v1770 = vpop.permute.xlu0 %1769
            %1771 = vset.pattern.permute.xlu0 0
            %1772 = vperm.xlu0 %1771, %v1408
            %v1773 = vpop.permute.xlu0 %1772
            %1774 = vset.pattern.permute.xlu0 0
            %1775 = vperm.xlu0 %1774, %v1410
            %v1776 = vpop.permute.xlu0 %1775
            %1777 = vset.pattern.permute.xlu0 0
            %1778 = vperm.xlu0 %1777, %v1412
            %v1779 = vpop.permute.xlu0 %1778
            %1780 = vset.pattern.permute.xlu0 0
            %1781 = vperm.xlu0 %1780, %v1414
            %v1782 = vpop.permute.xlu0 %1781
            %1783 = vset.pattern.permute.xlu0 0
            %1784 = vperm.xlu0 %1783, %v1416
            %v1785 = vpop.permute.xlu0 %1784
            %1786 = vset.pattern.permute.xlu0 0
            %1787 = vperm.xlu0 %1786, %v1418
            %v1788 = vpop.permute.xlu0 %1787
            %1789 = vset.pattern.permute.xlu0 0
            %1790 = vperm.xlu0 %1789, %v1420
            %v1791 = vpop.permute.xlu0 %1790
            %1792 = vset.pattern.permute.xlu0 0
            %1793 = vperm.xlu0 %1792, %v1422
            %v1794 = vpop.permute.xlu0 %1793
            %1795 = vset.pattern.permute.xlu0 0
            %1796 = vperm.xlu0 %1795, %v1424
            %v1797 = vpop.permute.xlu0 %1796
            %1798 = vset.pattern.permute.xlu0 0
            %1799 = vperm.xlu0 %1798, %v1426
            %v1800 = vpop.permute.xlu0 %1799
            %1801 = vset.pattern.permute.xlu0 0
            %1802 = vperm.xlu0 %1801, %v1428
            %v1803 = vpop.permute.xlu0 %1802
            %1804 = vset.pattern.permute.xlu0 0
            %1805 = vperm.xlu0 %1804, %v1430
            %v1806 = vpop.permute.xlu0 %1805
            %1807 = vset.pattern.permute.xlu0 0
            %1808 = vperm.xlu0 %1807, %v1432
            %v1809 = vpop.permute.xlu0 %1808
            %1810 = vset.pattern.permute.xlu0 0
            %1811 = vperm.xlu0 %1810, %v1434
            %v1812 = vpop.permute.xlu0 %1811
            %1813 = vset.pattern.permute.xlu0 0
            %1814 = vperm.xlu0 %1813, %v1436
            %v1815 = vpop.permute.xlu0 %1814
            %1816 = vset.pattern.permute.xlu0 0
            %1817 = vperm.xlu0 %1816, %v1438
            %v1818 = vpop.permute.xlu0 %1817
            %1819 = vset.pattern.permute.xlu0 0
            %1820 = vperm.xlu0 %1819, %v1440
            %v1821 = vpop.permute.xlu0 %1820
            %1822 = vset.pattern.permute.xlu0 0
            %1823 = vperm.xlu0 %1822, %v1442
            %v1824 = vpop.permute.xlu0 %1823
            %1825 = vset.pattern.permute.xlu0 0
            %1826 = vperm.xlu0 %1825, %v1444
            %v1827 = vpop.permute.xlu0 %1826
            %1828 = vset.pattern.permute.xlu0 0
            %1829 = vperm.xlu0 %1828, %v1446
            %v1830 = vpop.permute.xlu0 %1829
            %1831 = vset.pattern.permute.xlu0 0
            %1832 = vperm.xlu0 %1831, %v1448
            %v1833 = vpop.permute.xlu0 %1832
            %1834 = vset.pattern.permute.xlu0 0
            %1835 = vperm.xlu0 %1834, %v1450
            %v1836 = vpop.permute.xlu0 %1835
            %vm1837 = vcmp.eq.s32.totalorder %v1452, %v1455
            %vm1838 = vcmp.eq.s32.totalorder %v1452, %v1458
            %vm1839 = vcmp.eq.s32.totalorder %v1452, %v1461
            %vm1840 = vcmp.eq.s32.totalorder %v1452, %v1464
            %vm1841 = vcmp.eq.s32.totalorder %v1452, %v1467
            %vm1842 = vcmp.eq.s32.totalorder %v1452, %v1470
            %vm1843 = vcmp.eq.s32.totalorder %v1452, %v1473
            %vm1844 = vcmp.eq.s32.totalorder %v1452, %v1476
            %vm1845 = vcmp.eq.s32.totalorder %v1452, %v1479
            %vm1846 = vcmp.eq.s32.totalorder %v1452, %v1482
            %vm1847 = vcmp.eq.s32.totalorder %v1452, %v1485
            %vm1848 = vcmp.eq.s32.totalorder %v1452, %v1488
            %vm1849 = vcmp.eq.s32.totalorder %v1452, %v1491
            %vm1850 = vcmp.eq.s32.totalorder %v1452, %v1494
            %vm1851 = vcmp.eq.s32.totalorder %v1452, %v1497
            %vm1852 = vcmp.eq.s32.totalorder %v1452, %v1500
            %vm1853 = vcmp.eq.s32.totalorder %v1452, %v1503
            %vm1854 = vcmp.eq.s32.totalorder %v1452, %v1506
            %vm1855 = vcmp.eq.s32.totalorder %v1452, %v1509
            %vm1856 = vcmp.eq.s32.totalorder %v1452, %v1512
            %vm1857 = vcmp.eq.s32.totalorder %v1452, %v1515
            %vm1858 = vcmp.eq.s32.totalorder %v1452, %v1518
            %vm1859 = vcmp.eq.s32.totalorder %v1452, %v1521
            %vm1860 = vcmp.eq.s32.totalorder %v1452, %v1524
            %vm1861 = vcmp.eq.s32.totalorder %v1452, %v1527
            %vm1862 = vcmp.eq.s32.totalorder %v1452, %v1530
            %vm1863 = vcmp.eq.s32.totalorder %v1452, %v1533
            %vm1864 = vcmp.eq.s32.totalorder %v1452, %v1536
            %vm1865 = vcmp.eq.s32.totalorder %v1452, %v1539
            %vm1866 = vcmp.eq.s32.totalorder %v1452, %v1542
            %vm1867 = vcmp.eq.s32.totalorder %v1452, %v1545
            %vm1868 = vcmp.eq.s32.totalorder %v1452, %v1548
            %vm1869 = vcmp.eq.s32.totalorder %v1452, %v1551
            %vm1870 = vcmp.eq.s32.totalorder %v1452, %v1554
            %vm1871 = vcmp.eq.s32.totalorder %v1452, %v1557
            %vm1872 = vcmp.eq.s32.totalorder %v1452, %v1560
            %vm1873 = vcmp.eq.s32.totalorder %v1452, %v1563
            %vm1874 = vcmp.eq.s32.totalorder %v1452, %v1566
            %vm1875 = vcmp.eq.s32.totalorder %v1452, %v1569
            %vm1876 = vcmp.eq.s32.totalorder %v1452, %v1572
            %vm1877 = vcmp.eq.s32.totalorder %v1452, %v1575
            %vm1878 = vcmp.eq.s32.totalorder %v1452, %v1578
            %vm1879 = vcmp.eq.s32.totalorder %v1452, %v1581
            %vm1880 = vcmp.eq.s32.totalorder %v1452, %v1584
            %vm1881 = vcmp.eq.s32.totalorder %v1452, %v1587
            %vm1882 = vcmp.eq.s32.totalorder %v1452, %v1590
            %vm1883 = vcmp.eq.s32.totalorder %v1452, %v1593
            %vm1884 = vcmp.eq.s32.totalorder %v1452, %v1596
            %vm1885 = vcmp.eq.s32.totalorder %v1452, %v1599
            %vm1886 = vcmp.eq.s32.totalorder %v1452, %v1602
            %vm1887 = vcmp.eq.s32.totalorder %v1452, %v1605
            %vm1888 = vcmp.eq.s32.totalorder %v1452, %v1608
            %vm1889 = vcmp.eq.s32.totalorder %v1452, %v1611
            %vm1890 = vcmp.eq.s32.totalorder %v1452, %v1614
            %vm1891 = vcmp.eq.s32.totalorder %v1452, %v1617
            %vm1892 = vcmp.eq.s32.totalorder %v1452, %v1620
            %vm1893 = vcmp.eq.s32.totalorder %v1452, %v1623
            %vm1894 = vcmp.eq.s32.totalorder %v1452, %v1626
            %vm1895 = vcmp.eq.s32.totalorder %v1452, %v1629
            %vm1896 = vcmp.eq.s32.totalorder %v1452, %v1632
            %vm1897 = vcmp.eq.s32.totalorder %v1452, %v1635
            %vm1898 = vcmp.eq.s32.totalorder %v1452, %v1638
            %vm1899 = vcmp.eq.s32.totalorder %v1452, %v1641
            %vm1900 = vcmp.eq.s32.totalorder %v1452, %v1644
            %vm1901 = vcmp.eq.s32.totalorder %v1452, %v1647
            %vm1902 = vcmp.eq.s32.totalorder %v1452, %v1650
            %vm1903 = vcmp.eq.s32.totalorder %v1452, %v1653
            %vm1904 = vcmp.eq.s32.totalorder %v1452, %v1656
            %vm1905 = vcmp.eq.s32.totalorder %v1452, %v1659
            %vm1906 = vcmp.eq.s32.totalorder %v1452, %v1662
            %vm1907 = vcmp.eq.s32.totalorder %v1452, %v1665
            %vm1908 = vcmp.eq.s32.totalorder %v1452, %v1668
            %vm1909 = vcmp.eq.s32.totalorder %v1452, %v1671
            %vm1910 = vcmp.eq.s32.totalorder %v1452, %v1674
            %vm1911 = vcmp.eq.s32.totalorder %v1452, %v1677
            %vm1912 = vcmp.eq.s32.totalorder %v1452, %v1680
            %vm1913 = vcmp.eq.s32.totalorder %v1452, %v1683
            %vm1914 = vcmp.eq.s32.totalorder %v1452, %v1686
            %vm1915 = vcmp.eq.s32.totalorder %v1452, %v1689
            %vm1916 = vcmp.eq.s32.totalorder %v1452, %v1692
            %vm1917 = vcmp.eq.s32.totalorder %v1452, %v1695
            %vm1918 = vcmp.eq.s32.totalorder %v1452, %v1698
            %vm1919 = vcmp.eq.s32.totalorder %v1452, %v1701
            %vm1920 = vcmp.eq.s32.totalorder %v1452, %v1704
            %vm1921 = vcmp.eq.s32.totalorder %v1452, %v1707
            %vm1922 = vcmp.eq.s32.totalorder %v1452, %v1710
            %vm1923 = vcmp.eq.s32.totalorder %v1452, %v1713
            %vm1924 = vcmp.eq.s32.totalorder %v1452, %v1716
            %vm1925 = vcmp.eq.s32.totalorder %v1452, %v1719
            %vm1926 = vcmp.eq.s32.totalorder %v1452, %v1722
            %vm1927 = vcmp.eq.s32.totalorder %v1452, %v1725
            %vm1928 = vcmp.eq.s32.totalorder %v1452, %v1728
            %vm1929 = vcmp.eq.s32.totalorder %v1452, %v1731
            %vm1930 = vcmp.eq.s32.totalorder %v1452, %v1734
            %vm1931 = vcmp.eq.s32.totalorder %v1452, %v1737
            %vm1932 = vcmp.eq.s32.totalorder %v1452, %v1740
            %vm1933 = vcmp.eq.s32.totalorder %v1452, %v1743
            %vm1934 = vcmp.eq.s32.totalorder %v1452, %v1746
            %vm1935 = vcmp.eq.s32.totalorder %v1452, %v1749
            %vm1936 = vcmp.eq.s32.totalorder %v1452, %v1752
            %vm1937 = vcmp.eq.s32.totalorder %v1452, %v1755
            %vm1938 = vcmp.eq.s32.totalorder %v1452, %v1758
            %vm1939 = vcmp.eq.s32.totalorder %v1452, %v1761
            %vm1940 = vcmp.eq.s32.totalorder %v1452, %v1764
            %vm1941 = vcmp.eq.s32.totalorder %v1452, %v1767
            %vm1942 = vcmp.eq.s32.totalorder %v1452, %v1770
            %vm1943 = vcmp.eq.s32.totalorder %v1452, %v1773
            %vm1944 = vcmp.eq.s32.totalorder %v1452, %v1776
            %vm1945 = vcmp.eq.s32.totalorder %v1452, %v1779
            %vm1946 = vcmp.eq.s32.totalorder %v1452, %v1782
            %vm1947 = vcmp.eq.s32.totalorder %v1452, %v1785
            %vm1948 = vcmp.eq.s32.totalorder %v1452, %v1788
            %vm1949 = vcmp.eq.s32.totalorder %v1452, %v1791
            %vm1950 = vcmp.eq.s32.totalorder %v1452, %v1794
            %vm1951 = vcmp.eq.s32.totalorder %v1452, %v1797
            %vm1952 = vcmp.eq.s32.totalorder %v1452, %v1800
            %vm1953 = vcmp.eq.s32.totalorder %v1452, %v1803
            %vm1954 = vcmp.eq.s32.totalorder %v1452, %v1806
            %vm1955 = vcmp.eq.s32.totalorder %v1452, %v1809
            %vm1956 = vcmp.eq.s32.totalorder %v1452, %v1812
            %vm1957 = vcmp.eq.s32.totalorder %v1452, %v1815
            %vm1958 = vcmp.eq.s32.totalorder %v1452, %v1818
            %vm1959 = vcmp.eq.s32.totalorder %v1452, %v1821
            %vm1960 = vcmp.eq.s32.totalorder %v1452, %v1824
            %vm1961 = vcmp.eq.s32.totalorder %v1452, %v1827
            %vm1962 = vcmp.eq.s32.totalorder %v1452, %v1830
            %vm1963 = vcmp.eq.s32.totalorder %v1452, %v1833
            %vm1964 = vcmp.eq.s32.totalorder %v1452, %v1836
            %v1965 = vsel %vm1837, 1, 0
            %v1966 = vsel %vm1838, 1, 0
            %v1967 = vsel %vm1839, 1, 0
            %v1968 = vsel %vm1840, 1, 0
            %v1969 = vsel %vm1841, 1, 0
            %v1970 = vsel %vm1842, 1, 0
            %v1971 = vsel %vm1843, 1, 0
            %v1972 = vsel %vm1844, 1, 0
            %v1973 = vsel %vm1845, 1, 0
            %v1974 = vsel %vm1846, 1, 0
            %v1975 = vsel %vm1847, 1, 0
            %v1976 = vsel %vm1848, 1, 0
            %v1977 = vsel %vm1849, 1, 0
            %v1978 = vsel %vm1850, 1, 0
            %v1979 = vsel %vm1851, 1, 0
            %v1980 = vsel %vm1852, 1, 0
            %v1981 = vsel %vm1853, 1, 0
            %v1982 = vsel %vm1854, 1, 0
            %v1983 = vsel %vm1855, 1, 0
            %v1984 = vsel %vm1856, 1, 0
            %v1985 = vsel %vm1857, 1, 0
            %v1986 = vsel %vm1858, 1, 0
            %v1987 = vsel %vm1859, 1, 0
            %v1988 = vsel %vm1860, 1, 0
            %v1989 = vsel %vm1861, 1, 0
            %v1990 = vsel %vm1862, 1, 0
            %v1991 = vsel %vm1863, 1, 0
            %v1992 = vsel %vm1864, 1, 0
            %v1993 = vsel %vm1865, 1, 0
            %v1994 = vsel %vm1866, 1, 0
            %v1995 = vsel %vm1867, 1, 0
            %v1996 = vsel %vm1868, 1, 0
            %v1997 = vsel %vm1869, 1, 0
            %v1998 = vsel %vm1870, 1, 0
            %v1999 = vsel %vm1871, 1, 0
            %v2000 = vsel %vm1872, 1, 0
            %v2001 = vsel %vm1873, 1, 0
            %v2002 = vsel %vm1874, 1, 0
            %v2003 = vsel %vm1875, 1, 0
            %v2004 = vsel %vm1876, 1, 0
            %v2005 = vsel %vm1877, 1, 0
            %v2006 = vsel %vm1878, 1, 0
            %v2007 = vsel %vm1879, 1, 0
            %v2008 = vsel %vm1880, 1, 0
            %v2009 = vsel %vm1881, 1, 0
            %v2010 = vsel %vm1882, 1, 0
            %v2011 = vsel %vm1883, 1, 0
            %v2012 = vsel %vm1884, 1, 0
            %v2013 = vsel %vm1885, 1, 0
            %v2014 = vsel %vm1886, 1, 0
            %v2015 = vsel %vm1887, 1, 0
            %v2016 = vsel %vm1888, 1, 0
            %v2017 = vsel %vm1889, 1, 0
            %v2018 = vsel %vm1890, 1, 0
            %v2019 = vsel %vm1891, 1, 0
            %v2020 = vsel %vm1892, 1, 0
            %v2021 = vsel %vm1893, 1, 0
            %v2022 = vsel %vm1894, 1, 0
            %v2023 = vsel %vm1895, 1, 0
            %v2024 = vsel %vm1896, 1, 0
            %v2025 = vsel %vm1897, 1, 0
            %v2026 = vsel %vm1898, 1, 0
            %v2027 = vsel %vm1899, 1, 0
            %v2028 = vsel %vm1900, 1, 0
            %v2029 = vsel %vm1901, 1, 0
            %v2030 = vsel %vm1902, 1, 0
            %v2031 = vsel %vm1903, 1, 0
            %v2032 = vsel %vm1904, 1, 0
            %v2033 = vsel %vm1905, 1, 0
            %v2034 = vsel %vm1906, 1, 0
            %v2035 = vsel %vm1907, 1, 0
            %v2036 = vsel %vm1908, 1, 0
            %v2037 = vsel %vm1909, 1, 0
            %v2038 = vsel %vm1910, 1, 0
            %v2039 = vsel %vm1911, 1, 0
            %v2040 = vsel %vm1912, 1, 0
            %v2041 = vsel %vm1913, 1, 0
            %v2042 = vsel %vm1914, 1, 0
            %v2043 = vsel %vm1915, 1, 0
            %v2044 = vsel %vm1916, 1, 0
            %v2045 = vsel %vm1917, 1, 0
            %v2046 = vsel %vm1918, 1, 0
            %v2047 = vsel %vm1919, 1, 0
            %v2048 = vsel %vm1920, 1, 0
            %v2049 = vsel %vm1921, 1, 0
            %v2050 = vsel %vm1922, 1, 0
            %v2051 = vsel %vm1923, 1, 0
            %v2052 = vsel %vm1924, 1, 0
            %v2053 = vsel %vm1925, 1, 0
            %v2054 = vsel %vm1926, 1, 0
            %v2055 = vsel %vm1927, 1, 0
            %v2056 = vsel %vm1928, 1, 0
            %v2057 = vsel %vm1929, 1, 0
            %v2058 = vsel %vm1930, 1, 0
            %v2059 = vsel %vm1931, 1, 0
            %v2060 = vsel %vm1932, 1, 0
            %v2061 = vsel %vm1933, 1, 0
            %v2062 = vsel %vm1934, 1, 0
            %v2063 = vsel %vm1935, 1, 0
            %v2064 = vsel %vm1936, 1, 0
            %v2065 = vsel %vm1937, 1, 0
            %v2066 = vsel %vm1938, 1, 0
            %v2067 = vsel %vm1939, 1, 0
            %v2068 = vsel %vm1940, 1, 0
            %v2069 = vsel %vm1941, 1, 0
            %v2070 = vsel %vm1942, 1, 0
            %v2071 = vsel %vm1943, 1, 0
            %v2072 = vsel %vm1944, 1, 0
            %v2073 = vsel %vm1945, 1, 0
            %v2074 = vsel %vm1946, 1, 0
            %v2075 = vsel %vm1947, 1, 0
            %v2076 = vsel %vm1948, 1, 0
            %v2077 = vsel %vm1949, 1, 0
            %v2078 = vsel %vm1950, 1, 0
            %v2079 = vsel %vm1951, 1, 0
            %v2080 = vsel %vm1952, 1, 0
            %v2081 = vsel %vm1953, 1, 0
            %v2082 = vsel %vm1954, 1, 0
            %v2083 = vsel %vm1955, 1, 0
            %v2084 = vsel %vm1956, 1, 0
            %v2085 = vsel %vm1957, 1, 0
            %v2086 = vsel %vm1958, 1, 0
            %v2087 = vsel %vm1959, 1, 0
            %v2088 = vsel %vm1960, 1, 0
            %v2089 = vsel %vm1961, 1, 0
            %v2090 = vsel %vm1962, 1, 0
            %v2091 = vsel %vm1963, 1, 0
            %v2092 = vsel %vm1964, 1, 0
            %v2093 = vcvt.s32.f32 %v1965
            %v2094 = vcvt.s32.f32 %v1966
            %v2095 = vcvt.s32.f32 %v1967
            %v2096 = vcvt.s32.f32 %v1968
            %v2097 = vcvt.s32.f32 %v1969
            %v2098 = vcvt.s32.f32 %v1970
            %v2099 = vcvt.s32.f32 %v1971
            %v2100 = vcvt.s32.f32 %v1972
            %v2101 = vcvt.s32.f32 %v1973
            %v2102 = vcvt.s32.f32 %v1974
            %v2103 = vcvt.s32.f32 %v1975
            %v2104 = vcvt.s32.f32 %v1976
            %v2105 = vcvt.s32.f32 %v1977
            %v2106 = vcvt.s32.f32 %v1978
            %v2107 = vcvt.s32.f32 %v1979
            %v2108 = vcvt.s32.f32 %v1980
            %v2109 = vcvt.s32.f32 %v1981
            %v2110 = vcvt.s32.f32 %v1982
            %v2111 = vcvt.s32.f32 %v1983
            %v2112 = vcvt.s32.f32 %v1984
            %v2113 = vcvt.s32.f32 %v1985
            %v2114 = vcvt.s32.f32 %v1986
            %v2115 = vcvt.s32.f32 %v1987
            %v2116 = vcvt.s32.f32 %v1988
            %v2117 = vcvt.s32.f32 %v1989
            %v2118 = vcvt.s32.f32 %v1990
            %v2119 = vcvt.s32.f32 %v1991
            %v2120 = vcvt.s32.f32 %v1992
            %v2121 = vcvt.s32.f32 %v1993
            %v2122 = vcvt.s32.f32 %v1994
            %v2123 = vcvt.s32.f32 %v1995
            %v2124 = vcvt.s32.f32 %v1996
            %v2125 = vcvt.s32.f32 %v1997
            %v2126 = vcvt.s32.f32 %v1998
            %v2127 = vcvt.s32.f32 %v1999
            %v2128 = vcvt.s32.f32 %v2000
            %v2129 = vcvt.s32.f32 %v2001
            %v2130 = vcvt.s32.f32 %v2002
            %v2131 = vcvt.s32.f32 %v2003
            %v2132 = vcvt.s32.f32 %v2004
            %v2133 = vcvt.s32.f32 %v2005
            %v2134 = vcvt.s32.f32 %v2006
            %v2135 = vcvt.s32.f32 %v2007
            %v2136 = vcvt.s32.f32 %v2008
            %v2137 = vcvt.s32.f32 %v2009
            %v2138 = vcvt.s32.f32 %v2010
            %v2139 = vcvt.s32.f32 %v2011
            %v2140 = vcvt.s32.f32 %v2012
            %v2141 = vcvt.s32.f32 %v2013
            %v2142 = vcvt.s32.f32 %v2014
            %v2143 = vcvt.s32.f32 %v2015
            %v2144 = vcvt.s32.f32 %v2016
            %v2145 = vcvt.s32.f32 %v2017
            %v2146 = vcvt.s32.f32 %v2018
            %v2147 = vcvt.s32.f32 %v2019
            %v2148 = vcvt.s32.f32 %v2020
            %v2149 = vcvt.s32.f32 %v2021
            %v2150 = vcvt.s32.f32 %v2022
            %v2151 = vcvt.s32.f32 %v2023
            %v2152 = vcvt.s32.f32 %v2024
            %v2153 = vcvt.s32.f32 %v2025
            %v2154 = vcvt.s32.f32 %v2026
            %v2155 = vcvt.s32.f32 %v2027
            %v2156 = vcvt.s32.f32 %v2028
            %v2157 = vcvt.s32.f32 %v2029
            %v2158 = vcvt.s32.f32 %v2030
            %v2159 = vcvt.s32.f32 %v2031
            %v2160 = vcvt.s32.f32 %v2032
            %v2161 = vcvt.s32.f32 %v2033
            %v2162 = vcvt.s32.f32 %v2034
            %v2163 = vcvt.s32.f32 %v2035
            %v2164 = vcvt.s32.f32 %v2036
            %v2165 = vcvt.s32.f32 %v2037
            %v2166 = vcvt.s32.f32 %v2038
            %v2167 = vcvt.s32.f32 %v2039
            %v2168 = vcvt.s32.f32 %v2040
            %v2169 = vcvt.s32.f32 %v2041
            %v2170 = vcvt.s32.f32 %v2042
            %v2171 = vcvt.s32.f32 %v2043
            %v2172 = vcvt.s32.f32 %v2044
            %v2173 = vcvt.s32.f32 %v2045
            %v2174 = vcvt.s32.f32 %v2046
            %v2175 = vcvt.s32.f32 %v2047
            %v2176 = vcvt.s32.f32 %v2048
            %v2177 = vcvt.s32.f32 %v2049
            %v2178 = vcvt.s32.f32 %v2050
            %v2179 = vcvt.s32.f32 %v2051
            %v2180 = vcvt.s32.f32 %v2052
            %v2181 = vcvt.s32.f32 %v2053
            %v2182 = vcvt.s32.f32 %v2054
            %v2183 = vcvt.s32.f32 %v2055
            %v2184 = vcvt.s32.f32 %v2056
            %v2185 = vcvt.s32.f32 %v2057
            %v2186 = vcvt.s32.f32 %v2058
            %v2187 = vcvt.s32.f32 %v2059
            %v2188 = vcvt.s32.f32 %v2060
            %v2189 = vcvt.s32.f32 %v2061
            %v2190 = vcvt.s32.f32 %v2062
            %v2191 = vcvt.s32.f32 %v2063
            %v2192 = vcvt.s32.f32 %v2064
            %v2193 = vcvt.s32.f32 %v2065
            %v2194 = vcvt.s32.f32 %v2066
            %v2195 = vcvt.s32.f32 %v2067
            %v2196 = vcvt.s32.f32 %v2068
            %v2197 = vcvt.s32.f32 %v2069
            %v2198 = vcvt.s32.f32 %v2070
            %v2199 = vcvt.s32.f32 %v2071
            %v2200 = vcvt.s32.f32 %v2072
            %v2201 = vcvt.s32.f32 %v2073
            %v2202 = vcvt.s32.f32 %v2074
            %v2203 = vcvt.s32.f32 %v2075
            %v2204 = vcvt.s32.f32 %v2076
            %v2205 = vcvt.s32.f32 %v2077
            %v2206 = vcvt.s32.f32 %v2078
            %v2207 = vcvt.s32.f32 %v2079
            %v2208 = vcvt.s32.f32 %v2080
            %v2209 = vcvt.s32.f32 %v2081
            %v2210 = vcvt.s32.f32 %v2082
            %v2211 = vcvt.s32.f32 %v2083
            %v2212 = vcvt.s32.f32 %v2084
            %v2213 = vcvt.s32.f32 %v2085
            %v2214 = vcvt.s32.f32 %v2086
            %v2215 = vcvt.s32.f32 %v2087
            %v2216 = vcvt.s32.f32 %v2088
            %v2217 = vcvt.s32.f32 %v2089
            %v2218 = vcvt.s32.f32 %v2090
            %v2219 = vcvt.s32.f32 %v2091
            %v2220 = vcvt.s32.f32 %v2092
            %v2221 = vpack.c.bf16 %v2094, %v2093
            %v2222 = vpack.c.bf16 %v2096, %v2095
            %v2223 = vpack.c.bf16 %v2098, %v2097
            %v2224 = vpack.c.bf16 %v2100, %v2099
            %v2225 = vpack.c.bf16 %v2102, %v2101
            %v2226 = vpack.c.bf16 %v2104, %v2103
            %v2227 = vpack.c.bf16 %v2106, %v2105
            %v2228 = vpack.c.bf16 %v2108, %v2107
            %v2229 = vpack.c.bf16 %v2110, %v2109
            %v2230 = vpack.c.bf16 %v2112, %v2111
            %v2231 = vpack.c.bf16 %v2114, %v2113
            %v2232 = vpack.c.bf16 %v2116, %v2115
            %v2233 = vpack.c.bf16 %v2118, %v2117
            %v2234 = vpack.c.bf16 %v2120, %v2119
            %v2235 = vpack.c.bf16 %v2122, %v2121
            %v2236 = vpack.c.bf16 %v2124, %v2123
            %v2237 = vpack.c.bf16 %v2126, %v2125
            %v2238 = vpack.c.bf16 %v2128, %v2127
            %v2239 = vpack.c.bf16 %v2130, %v2129
            %v2240 = vpack.c.bf16 %v2132, %v2131
            %v2241 = vpack.c.bf16 %v2134, %v2133
            %v2242 = vpack.c.bf16 %v2136, %v2135
            %v2243 = vpack.c.bf16 %v2138, %v2137
            %v2244 = vpack.c.bf16 %v2140, %v2139
            %v2245 = vpack.c.bf16 %v2142, %v2141
            %v2246 = vpack.c.bf16 %v2144, %v2143
            %v2247 = vpack.c.bf16 %v2146, %v2145
            %v2248 = vpack.c.bf16 %v2148, %v2147
            %v2249 = vpack.c.bf16 %v2150, %v2149
            %v2250 = vpack.c.bf16 %v2152, %v2151
            %v2251 = vpack.c.bf16 %v2154, %v2153
            %v2252 = vpack.c.bf16 %v2156, %v2155
            %v2253 = vpack.c.bf16 %v2158, %v2157
            %v2254 = vpack.c.bf16 %v2160, %v2159
            %v2255 = vpack.c.bf16 %v2162, %v2161
            %v2256 = vpack.c.bf16 %v2164, %v2163
            %v2257 = vpack.c.bf16 %v2166, %v2165
            %v2258 = vpack.c.bf16 %v2168, %v2167
            %v2259 = vpack.c.bf16 %v2170, %v2169
            %v2260 = vpack.c.bf16 %v2172, %v2171
            %v2261 = vpack.c.bf16 %v2174, %v2173
            %v2262 = vpack.c.bf16 %v2176, %v2175
            %v2263 = vpack.c.bf16 %v2178, %v2177
            %v2264 = vpack.c.bf16 %v2180, %v2179
            %v2265 = vpack.c.bf16 %v2182, %v2181
            %v2266 = vpack.c.bf16 %v2184, %v2183
            %v2267 = vpack.c.bf16 %v2186, %v2185
            %v2268 = vpack.c.bf16 %v2188, %v2187
            %v2269 = vpack.c.bf16 %v2190, %v2189
            %v2270 = vpack.c.bf16 %v2192, %v2191
            %v2271 = vpack.c.bf16 %v2194, %v2193
            %v2272 = vpack.c.bf16 %v2196, %v2195
            %v2273 = vpack.c.bf16 %v2198, %v2197
            %v2274 = vpack.c.bf16 %v2200, %v2199
            %v2275 = vpack.c.bf16 %v2202, %v2201
            %v2276 = vpack.c.bf16 %v2204, %v2203
            %v2277 = vpack.c.bf16 %v2206, %v2205
            %v2278 = vpack.c.bf16 %v2208, %v2207
            %v2279 = vpack.c.bf16 %v2210, %v2209
            %v2280 = vpack.c.bf16 %v2212, %v2211
            %v2281 = vpack.c.bf16 %v2214, %v2213
            %v2282 = vpack.c.bf16 %v2216, %v2215
            %v2283 = vpack.c.bf16 %v2218, %v2217
            %v2284 = vpack.c.bf16 %v2220, %v2219
            %v2285 = vlaneseq
            %v2286 = vshrl.u32 %v2285, 7
            %v2287 = vsub.s32 1, %v2286
            %v2288 = vrot.slane %v1322, %v2287
            %v2289 = vlaneseq
            %v2290 = vshrl.u32 %v2289, 7
            %v2291 = vsub.s32 3, %v2290
            %v2292 = vrot.slane %v1322, %v2291
            %v2293 = vlaneseq
            %v2294 = vshrl.u32 %v2293, 7
            %v2295 = vsub.s32 5, %v2294
            %v2296 = vrot.slane %v1322, %v2295
            %v2297 = vlaneseq
            %v2298 = vshrl.u32 %v2297, 7
            %v2299 = vsub.s32 7, %v2298
            %v2300 = vrot.slane %v1322, %v2299
            %v2301 = vlaneseq
            %v2302 = vshrl.u32 %v2301, 7
            %v2303 = vsub.s32 0, %v2302
            %v2304 = vrot.slane %v1322, %v2303
            %v2305 = vlaneseq
            %v2306 = vshrl.u32 %v2305, 7
            %v2307 = vsub.s32 2, %v2306
            %v2308 = vrot.slane %v1322, %v2307
            %v2309 = vlaneseq
            %v2310 = vshrl.u32 %v2309, 7
            %v2311 = vsub.s32 4, %v2310
            %v2312 = vrot.slane %v1322, %v2311
            %v2313 = vlaneseq
            %v2314 = vshrl.u32 %v2313, 7
            %v2315 = vsub.s32 6, %v2314
            %v2316 = vrot.slane %v1322, %v2315
            %v2317 = vlaneseq
            %v2318 = vshrl.u32 %v2317, 7
            %v2319 = vadd.s32 %v2318, 8
            %v2320 = vadd.s32 %v2318, 16
            %v2321 = vadd.s32 %v2318, 24
            %v2322 = vlaneseq
            %v2323 = vshrl.u32 %v2322, 7
            %v2324 = vsub.s32 1, %v2323
            %v2325 = vrot.slane %v2288, %v2324
            %v2326 = vlaneseq
            %v2327 = vshrl.u32 %v2326, 7
            %v2328 = vsub.s32 1, %v2327
            %v2329 = vrot.slane %v2292, %v2328
            %v2330 = vlaneseq
            %v2331 = vshrl.u32 %v2330, 7
            %v2332 = vsub.s32 1, %v2331
            %v2333 = vrot.slane %v2296, %v2332
            %v2334 = vlaneseq
            %v2335 = vshrl.u32 %v2334, 7
            %v2336 = vsub.s32 1, %v2335
            %v2337 = vrot.slane %v2300, %v2336
            %v2338 = vlaneseq
            %v2339 = vshrl.u32 %v2338, 7
            %v2340 = vsub.s32 1, %v2339
            %v2341 = vrot.slane %v2304, %v2340
            %v2342 = vlaneseq
            %v2343 = vshrl.u32 %v2342, 7
            %v2344 = vsub.s32 1, %v2343
            %v2345 = vrot.slane %v2308, %v2344
            %v2346 = vlaneseq
            %v2347 = vshrl.u32 %v2346, 7
            %v2348 = vsub.s32 1, %v2347
            %v2349 = vrot.slane %v2312, %v2348
            %v2350 = vlaneseq
            %v2351 = vshrl.u32 %v2350, 7
            %v2352 = vsub.s32 1, %v2351
            %v2353 = vrot.slane %v2316, %v2352
            %vm2354 = vcmp.eq.s32.totalorder %v2318, %v2325
            %vm2355 = vcmp.eq.s32.totalorder %v2318, %v2329
            %vm2356 = vcmp.eq.s32.totalorder %v2318, %v2333
            %vm2357 = vcmp.eq.s32.totalorder %v2318, %v2337
            %vm2358 = vcmp.eq.s32.totalorder %v2318, %v2341
            %vm2359 = vcmp.eq.s32.totalorder %v2318, %v2345
            %vm2360 = vcmp.eq.s32.totalorder %v2318, %v2349
            %vm2361 = vcmp.eq.s32.totalorder %v2318, %v2353
            %vm2362 = vcmp.eq.s32.totalorder %v2319, %v2325
            %vm2363 = vcmp.eq.s32.totalorder %v2319, %v2329
            %vm2364 = vcmp.eq.s32.totalorder %v2319, %v2333
            %vm2365 = vcmp.eq.s32.totalorder %v2319, %v2337
            %vm2366 = vcmp.eq.s32.totalorder %v2319, %v2341
            %vm2367 = vcmp.eq.s32.totalorder %v2319, %v2345
            %vm2368 = vcmp.eq.s32.totalorder %v2319, %v2349
            %vm2369 = vcmp.eq.s32.totalorder %v2319, %v2353
            %vm2370 = vcmp.eq.s32.totalorder %v2320, %v2325
            %vm2371 = vcmp.eq.s32.totalorder %v2320, %v2329
            %vm2372 = vcmp.eq.s32.totalorder %v2320, %v2333
            %vm2373 = vcmp.eq.s32.totalorder %v2320, %v2337
            %vm2374 = vcmp.eq.s32.totalorder %v2320, %v2341
            %vm2375 = vcmp.eq.s32.totalorder %v2320, %v2345
            %vm2376 = vcmp.eq.s32.totalorder %v2320, %v2349
            %vm2377 = vcmp.eq.s32.totalorder %v2320, %v2353
            %vm2378 = vcmp.eq.s32.totalorder %v2321, %v2325
            %vm2379 = vcmp.eq.s32.totalorder %v2321, %v2329
            %vm2380 = vcmp.eq.s32.totalorder %v2321, %v2333
            %vm2381 = vcmp.eq.s32.totalorder %v2321, %v2337
            %vm2382 = vcmp.eq.s32.totalorder %v2321, %v2341
            %vm2383 = vcmp.eq.s32.totalorder %v2321, %v2345
            %vm2384 = vcmp.eq.s32.totalorder %v2321, %v2349
            %vm2385 = vcmp.eq.s32.totalorder %v2321, %v2353
            %v2386 = vsel %vm2354, 1, 0
            %v2387 = vsel %vm2355, 1, 0
            %v2388 = vsel %vm2356, 1, 0
            %v2389 = vsel %vm2357, 1, 0
            %v2390 = vsel %vm2358, 1, 0
            %v2391 = vsel %vm2359, 1, 0
            %v2392 = vsel %vm2360, 1, 0
            %v2393 = vsel %vm2361, 1, 0
            %v2394 = vsel %vm2362, 1, 0
            %v2395 = vsel %vm2363, 1, 0
            %v2396 = vsel %vm2364, 1, 0
            %v2397 = vsel %vm2365, 1, 0
            %v2398 = vsel %vm2366, 1, 0
            %v2399 = vsel %vm2367, 1, 0
            %v2400 = vsel %vm2368, 1, 0
            %v2401 = vsel %vm2369, 1, 0
            %v2402 = vsel %vm2370, 1, 0
            %v2403 = vsel %vm2371, 1, 0
            %v2404 = vsel %vm2372, 1, 0
            %v2405 = vsel %vm2373, 1, 0
            %v2406 = vsel %vm2374, 1, 0
            %v2407 = vsel %vm2375, 1, 0
            %v2408 = vsel %vm2376, 1, 0
            %v2409 = vsel %vm2377, 1, 0
            %v2410 = vsel %vm2378, 1, 0
            %v2411 = vsel %vm2379, 1, 0
            %v2412 = vsel %vm2380, 1, 0
            %v2413 = vsel %vm2381, 1, 0
            %v2414 = vsel %vm2382, 1, 0
            %v2415 = vsel %vm2383, 1, 0
            %v2416 = vsel %vm2384, 1, 0
            %v2417 = vsel %vm2385, 1, 0
            %v2418 = vcvt.s32.f32 %v2386
            %v2419 = vcvt.s32.f32 %v2387
            %v2420 = vcvt.s32.f32 %v2388
            %v2421 = vcvt.s32.f32 %v2389
            %v2422 = vcvt.s32.f32 %v2390
            %v2423 = vcvt.s32.f32 %v2391
            %v2424 = vcvt.s32.f32 %v2392
            %v2425 = vcvt.s32.f32 %v2393
            %v2426 = vcvt.s32.f32 %v2394
            %v2427 = vcvt.s32.f32 %v2395
            %v2428 = vcvt.s32.f32 %v2396
            %v2429 = vcvt.s32.f32 %v2397
            %v2430 = vcvt.s32.f32 %v2398
            %v2431 = vcvt.s32.f32 %v2399
            %v2432 = vcvt.s32.f32 %v2400
            %v2433 = vcvt.s32.f32 %v2401
            %v2434 = vcvt.s32.f32 %v2402
            %v2435 = vcvt.s32.f32 %v2403
            %v2436 = vcvt.s32.f32 %v2404
            %v2437 = vcvt.s32.f32 %v2405
            %v2438 = vcvt.s32.f32 %v2406
            %v2439 = vcvt.s32.f32 %v2407
            %v2440 = vcvt.s32.f32 %v2408
            %v2441 = vcvt.s32.f32 %v2409
            %v2442 = vcvt.s32.f32 %v2410
            %v2443 = vcvt.s32.f32 %v2411
            %v2444 = vcvt.s32.f32 %v2412
            %v2445 = vcvt.s32.f32 %v2413
            %v2446 = vcvt.s32.f32 %v2414
            %v2447 = vcvt.s32.f32 %v2415
            %v2448 = vcvt.s32.f32 %v2416
            %v2449 = vcvt.s32.f32 %v2417
            %v2450 = vpack.c.bf16 %v2426, %v2418
            %v2451 = vpack.c.bf16 %v2427, %v2419
            %v2452 = vpack.c.bf16 %v2428, %v2420
            %v2453 = vpack.c.bf16 %v2429, %v2421
            %v2454 = vpack.c.bf16 %v2430, %v2422
            %v2455 = vpack.c.bf16 %v2431, %v2423
            %v2456 = vpack.c.bf16 %v2432, %v2424
            %v2457 = vpack.c.bf16 %v2433, %v2425
            %v2458 = vpack.c.bf16 %v2442, %v2434
            %v2459 = vpack.c.bf16 %v2443, %v2435
            %v2460 = vpack.c.bf16 %v2444, %v2436
            %v2461 = vpack.c.bf16 %v2445, %v2437
            %v2462 = vpack.c.bf16 %v2446, %v2438
            %v2463 = vpack.c.bf16 %v2447, %v2439
            %v2464 = vpack.c.bf16 %v2448, %v2440
            %v2465 = vpack.c.bf16 %v2449, %v2441
            %s2466 = smul.u32 %s39, 64
            %s2467 = smul.addr %s2466, 8
            %s2468 = scalar_lea.vmem [#allocation4], %s2467
            %vm2469 = vcmask 261120
            %2470 = vst.msk [vmem:[%s2468] sm:$0xff] %vm2469, %v2221
            %2471 = vst.msk [vmem:[%s2468 + $0x8] sm:$0xff] %vm2469, %v2222
            %2472 = vst.msk [vmem:[%s2468 + $0x10] sm:$0xff] %vm2469, %v2223
            %2473 = vst.msk [vmem:[%s2468 + $0x18] sm:$0xff] %vm2469, %v2224
            %2474 = vst.msk [vmem:[%s2468 + $0x20] sm:$0xff] %vm2469, %v2225
            %2475 = vst.msk [vmem:[%s2468 + $0x28] sm:$0xff] %vm2469, %v2226
            %2476 = vst.msk [vmem:[%s2468 + $0x30] sm:$0xff] %vm2469, %v2227
            %2477 = vst.msk [vmem:[%s2468 + $0x38] sm:$0xff] %vm2469, %v2228
            %2478 = vst.msk [vmem:[%s2468 + $0x40] sm:$0xff] %vm2469, %v2229
            %2479 = vst.msk [vmem:[%s2468 + $0x48] sm:$0xff] %vm2469, %v2230
            %2480 = vst.msk [vmem:[%s2468 + $0x50] sm:$0xff] %vm2469, %v2231
            %2481 = vst.msk [vmem:[%s2468 + $0x58] sm:$0xff] %vm2469, %v2232
            %2482 = vst.msk [vmem:[%s2468 + $0x60] sm:$0xff] %vm2469, %v2233
            %2483 = vst.msk [vmem:[%s2468 + $0x68] sm:$0xff] %vm2469, %v2234
            %2484 = vst.msk [vmem:[%s2468 + $0x70] sm:$0xff] %vm2469, %v2235
            %2485 = vst.msk [vmem:[%s2468 + $0x78] sm:$0xff] %vm2469, %v2236
            %2486 = vst.msk [vmem:[%s2468 + $0x80] sm:$0xff] %vm2469, %v2237
            %2487 = vst.msk [vmem:[%s2468 + $0x88] sm:$0xff] %vm2469, %v2238
            %2488 = vst.msk [vmem:[%s2468 + $0x90] sm:$0xff] %vm2469, %v2239
            %2489 = vst.msk [vmem:[%s2468 + $0x98] sm:$0xff] %vm2469, %v2240
            %2490 = vst.msk [vmem:[%s2468 + $0xa0] sm:$0xff] %vm2469, %v2241
            %2491 = vst.msk [vmem:[%s2468 + $0xa8] sm:$0xff] %vm2469, %v2242
            %2492 = vst.msk [vmem:[%s2468 + $0xb0] sm:$0xff] %vm2469, %v2243
            %2493 = vst.msk [vmem:[%s2468 + $0xb8] sm:$0xff] %vm2469, %v2244
            %2494 = vst.msk [vmem:[%s2468 + $0xc0] sm:$0xff] %vm2469, %v2245
            %2495 = vst.msk [vmem:[%s2468 + $0xc8] sm:$0xff] %vm2469, %v2246
            %2496 = vst.msk [vmem:[%s2468 + $0xd0] sm:$0xff] %vm2469, %v2247
            %2497 = vst.msk [vmem:[%s2468 + $0xd8] sm:$0xff] %vm2469, %v2248
            %2498 = vst.msk [vmem:[%s2468 + $0xe0] sm:$0xff] %vm2469, %v2249
            %2499 = vst.msk [vmem:[%s2468 + $0xe8] sm:$0xff] %vm2469, %v2250
            %2500 = vst.msk [vmem:[%s2468 + $0xf0] sm:$0xff] %vm2469, %v2251
            %2501 = vst.msk [vmem:[%s2468 + $0xf8] sm:$0xff] %vm2469, %v2252
            %2502 = vst.msk [vmem:[%s2468 + $0x100] sm:$0xff] %vm2469, %v2253
            %2503 = vst.msk [vmem:[%s2468 + $0x108] sm:$0xff] %vm2469, %v2254
            %2504 = vst.msk [vmem:[%s2468 + $0x110] sm:$0xff] %vm2469, %v2255
            %2505 = vst.msk [vmem:[%s2468 + $0x118] sm:$0xff] %vm2469, %v2256
            %2506 = vst.msk [vmem:[%s2468 + $0x120] sm:$0xff] %vm2469, %v2257
            %2507 = vst.msk [vmem:[%s2468 + $0x128] sm:$0xff] %vm2469, %v2258
            %2508 = vst.msk [vmem:[%s2468 + $0x130] sm:$0xff] %vm2469, %v2259
            %2509 = vst.msk [vmem:[%s2468 + $0x138] sm:$0xff] %vm2469, %v2260
            %2510 = vst.msk [vmem:[%s2468 + $0x140] sm:$0xff] %vm2469, %v2261
            %2511 = vst.msk [vmem:[%s2468 + $0x148] sm:$0xff] %vm2469, %v2262
            %2512 = vst.msk [vmem:[%s2468 + $0x150] sm:$0xff] %vm2469, %v2263
            %2513 = vst.msk [vmem:[%s2468 + $0x158] sm:$0xff] %vm2469, %v2264
            %2514 = vst.msk [vmem:[%s2468 + $0x160] sm:$0xff] %vm2469, %v2265
            %2515 = vst.msk [vmem:[%s2468 + $0x168] sm:$0xff] %vm2469, %v2266
            %2516 = vst.msk [vmem:[%s2468 + $0x170] sm:$0xff] %vm2469, %v2267
            %2517 = vst.msk [vmem:[%s2468 + $0x178] sm:$0xff] %vm2469, %v2268
            %2518 = vst.msk [vmem:[%s2468 + $0x180] sm:$0xff] %vm2469, %v2269
            %2519 = vst.msk [vmem:[%s2468 + $0x188] sm:$0xff] %vm2469, %v2270
            %2520 = vst.msk [vmem:[%s2468 + $0x190] sm:$0xff] %vm2469, %v2271
            %2521 = vst.msk [vmem:[%s2468 + $0x198] sm:$0xff] %vm2469, %v2272
            %2522 = vst.msk [vmem:[%s2468 + $0x1a0] sm:$0xff] %vm2469, %v2273
            %2523 = vst.msk [vmem:[%s2468 + $0x1a8] sm:$0xff] %vm2469, %v2274
            %2524 = vst.msk [vmem:[%s2468 + $0x1b0] sm:$0xff] %vm2469, %v2275
            %2525 = vst.msk [vmem:[%s2468 + $0x1b8] sm:$0xff] %vm2469, %v2276
            %2526 = vst.msk [vmem:[%s2468 + $0x1c0] sm:$0xff] %vm2469, %v2277
            %2527 = vst.msk [vmem:[%s2468 + $0x1c8] sm:$0xff] %vm2469, %v2278
            %2528 = vst.msk [vmem:[%s2468 + $0x1d0] sm:$0xff] %vm2469, %v2279
            %2529 = vst.msk [vmem:[%s2468 + $0x1d8] sm:$0xff] %vm2469, %v2280
            %2530 = vst.msk [vmem:[%s2468 + $0x1e0] sm:$0xff] %vm2469, %v2281
            %2531 = vst.msk [vmem:[%s2468 + $0x1e8] sm:$0xff] %vm2469, %v2282
            %2532 = vst.msk [vmem:[%s2468 + $0x1f0] sm:$0xff] %vm2469, %v2283
            %2533 = vst.msk [vmem:[%s2468 + $0x1f8] sm:$0xff] %vm2469, %v2284
            %s2534 = smul.u32 %s39, 16
            %s2535 = smul.addr %s2534, 8
            %s2536 = scalar_lea.vmem [#allocation5], %s2535
            %2537 = vst [vmem:[%s2536] sm:$0xff] %v2450
            %2538 = vst [vmem:[%s2536 + $0x8] sm:$0xff] %v2451
            %2539 = vst [vmem:[%s2536 + $0x10] sm:$0xff] %v2452
            %2540 = vst [vmem:[%s2536 + $0x18] sm:$0xff] %v2453
            %2541 = vst [vmem:[%s2536 + $0x20] sm:$0xff] %v2454
            %2542 = vst [vmem:[%s2536 + $0x28] sm:$0xff] %v2455
            %2543 = vst [vmem:[%s2536 + $0x30] sm:$0xff] %v2456
            %2544 = vst [vmem:[%s2536 + $0x38] sm:$0xff] %v2457
            %2545 = vst [vmem:[%s2536 + $0x40] sm:$0xff] %v2458
            %2546 = vst [vmem:[%s2536 + $0x48] sm:$0xff] %v2459
            %2547 = vst [vmem:[%s2536 + $0x50] sm:$0xff] %v2460
            %2548 = vst [vmem:[%s2536 + $0x58] sm:$0xff] %v2461
            %2549 = vst [vmem:[%s2536 + $0x60] sm:$0xff] %v2462
            %2550 = vst [vmem:[%s2536 + $0x68] sm:$0xff] %v2463
            %2551 = vst [vmem:[%s2536 + $0x70] sm:$0xff] %v2464
            %2552 = vst [vmem:[%s2536 + $0x78] sm:$0xff] %v2465
          $region80: #{tpu_custom_call.1} parent=75 // pred_fallthru
            _
          %s2553 = smul.u32 %s39, 64
          %s2554 = smul.addr %s2553, 8
          %s2555 = scalar_lea.vmem [#allocation4], %s2554
          %v2556 = vld [vmem:[%s2555] sm:$0xff]
          %v2557 = vld [vmem:[%s2555 + $0x8] sm:$0xff]
          %v2558 = vld [vmem:[%s2555 + $0x10] sm:$0xff]
          %v2559 = vld [vmem:[%s2555 + $0x18] sm:$0xff]
          %v2560 = vld [vmem:[%s2555 + $0x20] sm:$0xff]
          %v2561 = vld [vmem:[%s2555 + $0x28] sm:$0xff]
          %v2562 = vld [vmem:[%s2555 + $0x30] sm:$0xff]
          %v2563 = vld [vmem:[%s2555 + $0x38] sm:$0xff]
          %v2564 = vld [vmem:[%s2555 + $0x40] sm:$0xff]
          %v2565 = vld [vmem:[%s2555 + $0x48] sm:$0xff]
          %v2566 = vld [vmem:[%s2555 + $0x50] sm:$0xff]
          %v2567 = vld [vmem:[%s2555 + $0x58] sm:$0xff]
          %v2568 = vld [vmem:[%s2555 + $0x60] sm:$0xff]
          %v2569 = vld [vmem:[%s2555 + $0x68] sm:$0xff]
          %v2570 = vld [vmem:[%s2555 + $0x70] sm:$0xff]
          %v2571 = vld [vmem:[%s2555 + $0x78] sm:$0xff]
          %v2572 = vld [vmem:[%s2555 + $0x80] sm:$0xff]
          %v2573 = vld [vmem:[%s2555 + $0x88] sm:$0xff]
          %v2574 = vld [vmem:[%s2555 + $0x90] sm:$0xff]
          %v2575 = vld [vmem:[%s2555 + $0x98] sm:$0xff]
          %v2576 = vld [vmem:[%s2555 + $0xa0] sm:$0xff]
          %v2577 = vld [vmem:[%s2555 + $0xa8] sm:$0xff]
          %v2578 = vld [vmem:[%s2555 + $0xb0] sm:$0xff]
          %v2579 = vld [vmem:[%s2555 + $0xb8] sm:$0xff]
          %v2580 = vld [vmem:[%s2555 + $0xc0] sm:$0xff]
          %v2581 = vld [vmem:[%s2555 + $0xc8] sm:$0xff]
          %v2582 = vld [vmem:[%s2555 + $0xd0] sm:$0xff]
          %v2583 = vld [vmem:[%s2555 + $0xd8] sm:$0xff]
          %v2584 = vld [vmem:[%s2555 + $0xe0] sm:$0xff]
          %v2585 = vld [vmem:[%s2555 + $0xe8] sm:$0xff]
          %v2586 = vld [vmem:[%s2555 + $0xf0] sm:$0xff]
          %v2587 = vld [vmem:[%s2555 + $0xf8] sm:$0xff]
          %v2588 = vld [vmem:[%s2555 + $0x100] sm:$0xff]
          %v2589 = vld [vmem:[%s2555 + $0x108] sm:$0xff]
          %v2590 = vld [vmem:[%s2555 + $0x110] sm:$0xff]
          %v2591 = vld [vmem:[%s2555 + $0x118] sm:$0xff]
          %v2592 = vld [vmem:[%s2555 + $0x120] sm:$0xff]
          %v2593 = vld [vmem:[%s2555 + $0x128] sm:$0xff]
          %v2594 = vld [vmem:[%s2555 + $0x130] sm:$0xff]
          %v2595 = vld [vmem:[%s2555 + $0x138] sm:$0xff]
          %v2596 = vld [vmem:[%s2555 + $0x140] sm:$0xff]
          %v2597 = vld [vmem:[%s2555 + $0x148] sm:$0xff]
          %v2598 = vld [vmem:[%s2555 + $0x150] sm:$0xff]
          %v2599 = vld [vmem:[%s2555 + $0x158] sm:$0xff]
          %v2600 = vld [vmem:[%s2555 + $0x160] sm:$0xff]
          %v2601 = vld [vmem:[%s2555 + $0x168] sm:$0xff]
          %v2602 = vld [vmem:[%s2555 + $0x170] sm:$0xff]
          %v2603 = vld [vmem:[%s2555 + $0x178] sm:$0xff]
          %v2604 = vld [vmem:[%s2555 + $0x180] sm:$0xff]
          %v2605 = vld [vmem:[%s2555 + $0x188] sm:$0xff]
          %v2606 = vld [vmem:[%s2555 + $0x190] sm:$0xff]
          %v2607 = vld [vmem:[%s2555 + $0x198] sm:$0xff]
          %v2608 = vld [vmem:[%s2555 + $0x1a0] sm:$0xff]
          %v2609 = vld [vmem:[%s2555 + $0x1a8] sm:$0xff]
          %v2610 = vld [vmem:[%s2555 + $0x1b0] sm:$0xff]
          %v2611 = vld [vmem:[%s2555 + $0x1b8] sm:$0xff]
          %v2612 = vld [vmem:[%s2555 + $0x1c0] sm:$0xff]
          %v2613 = vld [vmem:[%s2555 + $0x1c8] sm:$0xff]
          %v2614 = vld [vmem:[%s2555 + $0x1d0] sm:$0xff]
          %v2615 = vld [vmem:[%s2555 + $0x1d8] sm:$0xff]
          %v2616 = vld [vmem:[%s2555 + $0x1e0] sm:$0xff]
          %v2617 = vld [vmem:[%s2555 + $0x1e8] sm:$0xff]
          %v2618 = vld [vmem:[%s2555 + $0x1f0] sm:$0xff]
          %v2619 = vld [vmem:[%s2555 + $0x1f8] sm:$0xff]
          %s2620 = smul.u32 %s39, 16
          %s2621 = smul.addr %s2620, 8
          %s2622 = scalar_lea.vmem [#allocation5], %s2621
          %v2623 = vld [vmem:[%s2622] sm:$0xff]
          %v2624 = vld [vmem:[%s2622 + $0x8] sm:$0xff]
          %v2625 = vld [vmem:[%s2622 + $0x10] sm:$0xff]
          %v2626 = vld [vmem:[%s2622 + $0x18] sm:$0xff]
          %v2627 = vld [vmem:[%s2622 + $0x20] sm:$0xff]
          %v2628 = vld [vmem:[%s2622 + $0x28] sm:$0xff]
          %v2629 = vld [vmem:[%s2622 + $0x30] sm:$0xff]
          %v2630 = vld [vmem:[%s2622 + $0x38] sm:$0xff]
          %v2631 = vld [vmem:[%s2622 + $0x40] sm:$0xff]
          %v2632 = vld [vmem:[%s2622 + $0x48] sm:$0xff]
          %v2633 = vld [vmem:[%s2622 + $0x50] sm:$0xff]
          %v2634 = vld [vmem:[%s2622 + $0x58] sm:$0xff]
          %v2635 = vld [vmem:[%s2622 + $0x60] sm:$0xff]
          %v2636 = vld [vmem:[%s2622 + $0x68] sm:$0xff]
          %v2637 = vld [vmem:[%s2622 + $0x70] sm:$0xff]
          %v2638 = vld [vmem:[%s2622 + $0x78] sm:$0xff]
          %v2639 = vld [vmem:[%s915] sm:$0x1]
          %2641 = vset.pattern.permute.xlu0 0
          %2642 = vperm.xlu0 %2641, %v1191
          %v2643 = vpop.permute.xlu0 %2642
          %2646 = vset.pattern.permute.xlu0 0
          %2647 = vperm.xlu0 %2646, %v1192
          %v2648 = vpop.permute.xlu0 %2647
          %2651 = vset.pattern.permute.xlu0 0
          %2652 = vperm.xlu0 %2651, %v1193
          %v2653 = vpop.permute.xlu0 %2652
          %2656 = vset.pattern.permute.xlu0 0
          %2657 = vperm.xlu0 %2656, %v1194
          %v2658 = vpop.permute.xlu0 %2657
          %2661 = vset.pattern.permute.xlu0 0
          %2662 = vperm.xlu0 %2661, %v1195
          %v2663 = vpop.permute.xlu0 %2662
          %2666 = vset.pattern.permute.xlu0 0
          %2667 = vperm.xlu0 %2666, %v1196
          %v2668 = vpop.permute.xlu0 %2667
          %2671 = vset.pattern.permute.xlu0 0
          %2672 = vperm.xlu0 %2671, %v1197
          %v2673 = vpop.permute.xlu0 %2672
          %2676 = vset.pattern.permute.xlu0 0
          %2677 = vperm.xlu0 %2676, %v1198
          %v2678 = vpop.permute.xlu0 %2677
          %2681 = vset.pattern.permute.xlu0 0
          %2682 = vperm.xlu0 %2681, %v1199
          %v2683 = vpop.permute.xlu0 %2682
          %2686 = vset.pattern.permute.xlu0 0
          %2687 = vperm.xlu0 %2686, %v1200
          %v2688 = vpop.permute.xlu0 %2687
          %2691 = vset.pattern.permute.xlu0 0
          %2692 = vperm.xlu0 %2691, %v1201
          %v2693 = vpop.permute.xlu0 %2692
          %2696 = vset.pattern.permute.xlu0 0
          %2697 = vperm.xlu0 %2696, %v1202
          %v2698 = vpop.permute.xlu0 %2697
          %2701 = vset.pattern.permute.xlu0 0
          %2702 = vperm.xlu0 %2701, %v1203
          %v2703 = vpop.permute.xlu0 %2702
          %2706 = vset.pattern.permute.xlu0 0
          %2707 = vperm.xlu0 %2706, %v1204
          %v2708 = vpop.permute.xlu0 %2707
          %2711 = vset.pattern.permute.xlu0 0
          %2712 = vperm.xlu0 %2711, %v1205
          %v2713 = vpop.permute.xlu0 %2712
          %2716 = vset.pattern.permute.xlu0 0
          %2717 = vperm.xlu0 %2716, %v1206
          %v2718 = vpop.permute.xlu0 %2717
          %2721 = vset.pattern.permute.xlu0 0
          %2722 = vperm.xlu0 %2721, %v1207
          %v2723 = vpop.permute.xlu0 %2722
          %2726 = vset.pattern.permute.xlu0 0
          %2727 = vperm.xlu0 %2726, %v1208
          %v2728 = vpop.permute.xlu0 %2727
          %2731 = vset.pattern.permute.xlu0 0
          %2732 = vperm.xlu0 %2731, %v1209
          %v2733 = vpop.permute.xlu0 %2732
          %2736 = vset.pattern.permute.xlu0 0
          %2737 = vperm.xlu0 %2736, %v1210
          %v2738 = vpop.permute.xlu0 %2737
          %2741 = vset.pattern.permute.xlu0 0
          %2742 = vperm.xlu0 %2741, %v1211
          %v2743 = vpop.permute.xlu0 %2742
          %2746 = vset.pattern.permute.xlu0 0
          %2747 = vperm.xlu0 %2746, %v1212
          %v2748 = vpop.permute.xlu0 %2747
          %2751 = vset.pattern.permute.xlu0 0
          %2752 = vperm.xlu0 %2751, %v1213
          %v2753 = vpop.permute.xlu0 %2752
          %2756 = vset.pattern.permute.xlu0 0
          %2757 = vperm.xlu0 %2756, %v1214
          %v2758 = vpop.permute.xlu0 %2757
          %2761 = vset.pattern.permute.xlu0 0
          %2762 = vperm.xlu0 %2761, %v1215
          %v2763 = vpop.permute.xlu0 %2762
          %2766 = vset.pattern.permute.xlu0 0
          %2767 = vperm.xlu0 %2766, %v1216
          %v2768 = vpop.permute.xlu0 %2767
          %2771 = vset.pattern.permute.xlu0 0
          %2772 = vperm.xlu0 %2771, %v1217
          %v2773 = vpop.permute.xlu0 %2772
          %2776 = vset.pattern.permute.xlu0 0
          %2777 = vperm.xlu0 %2776, %v1218
          %v2778 = vpop.permute.xlu0 %2777
          %2781 = vset.pattern.permute.xlu0 0
          %2782 = vperm.xlu0 %2781, %v1219
          %v2783 = vpop.permute.xlu0 %2782
          %2786 = vset.pattern.permute.xlu0 0
          %2787 = vperm.xlu0 %2786, %v1220
          %v2788 = vpop.permute.xlu0 %2787
          %2791 = vset.pattern.permute.xlu0 0
          %2792 = vperm.xlu0 %2791, %v1221
          %v2793 = vpop.permute.xlu0 %2792
          %2796 = vset.pattern.permute.xlu0 0
          %2797 = vperm.xlu0 %2796, %v1222
          %v2798 = vpop.permute.xlu0 %2797
          %2801 = vset.pattern.permute.xlu0 0
          %2802 = vperm.xlu0 %2801, %v1223
          %v2803 = vpop.permute.xlu0 %2802
          %2806 = vset.pattern.permute.xlu0 0
          %2807 = vperm.xlu0 %2806, %v1224
          %v2808 = vpop.permute.xlu0 %2807
          %2811 = vset.pattern.permute.xlu0 0
          %2812 = vperm.xlu0 %2811, %v1225
          %v2813 = vpop.permute.xlu0 %2812
          %2816 = vset.pattern.permute.xlu0 0
          %2817 = vperm.xlu0 %2816, %v1226
          %v2818 = vpop.permute.xlu0 %2817
          %2821 = vset.pattern.permute.xlu0 0
          %2822 = vperm.xlu0 %2821, %v1227
          %v2823 = vpop.permute.xlu0 %2822
          %2826 = vset.pattern.permute.xlu0 0
          %2827 = vperm.xlu0 %2826, %v1228
          %v2828 = vpop.permute.xlu0 %2827
          %2831 = vset.pattern.permute.xlu0 0
          %2832 = vperm.xlu0 %2831, %v1229
          %v2833 = vpop.permute.xlu0 %2832
          %2836 = vset.pattern.permute.xlu0 0
          %2837 = vperm.xlu0 %2836, %v1230
          %v2838 = vpop.permute.xlu0 %2837
          %2841 = vset.pattern.permute.xlu0 0
          %2842 = vperm.xlu0 %2841, %v1231
          %v2843 = vpop.permute.xlu0 %2842
          %2846 = vset.pattern.permute.xlu0 0
          %2847 = vperm.xlu0 %2846, %v1232
          %v2848 = vpop.permute.xlu0 %2847
          %2851 = vset.pattern.permute.xlu0 0
          %2852 = vperm.xlu0 %2851, %v1233
          %v2853 = vpop.permute.xlu0 %2852
          %2856 = vset.pattern.permute.xlu0 0
          %2857 = vperm.xlu0 %2856, %v1234
          %v2858 = vpop.permute.xlu0 %2857
          %2861 = vset.pattern.permute.xlu0 0
          %2862 = vperm.xlu0 %2861, %v1235
          %v2863 = vpop.permute.xlu0 %2862
          %2866 = vset.pattern.permute.xlu0 0
          %2867 = vperm.xlu0 %2866, %v1236
          %v2868 = vpop.permute.xlu0 %2867
          %2871 = vset.pattern.permute.xlu0 0
          %2872 = vperm.xlu0 %2871, %v1237
          %v2873 = vpop.permute.xlu0 %2872
          %2876 = vset.pattern.permute.xlu0 0
          %2877 = vperm.xlu0 %2876, %v1238
          %v2878 = vpop.permute.xlu0 %2877
          %2881 = vset.pattern.permute.xlu0 0
          %2882 = vperm.xlu0 %2881, %v1239
          %v2883 = vpop.permute.xlu0 %2882
          %2886 = vset.pattern.permute.xlu0 0
          %2887 = vperm.xlu0 %2886, %v1240
          %v2888 = vpop.permute.xlu0 %2887
          %2891 = vset.pattern.permute.xlu0 0
          %2892 = vperm.xlu0 %2891, %v1241
          %v2893 = vpop.permute.xlu0 %2892
          %2896 = vset.pattern.permute.xlu0 0
          %2897 = vperm.xlu0 %2896, %v1242
          %v2898 = vpop.permute.xlu0 %2897
          %2901 = vset.pattern.permute.xlu0 0
          %2902 = vperm.xlu0 %2901, %v1243
          %v2903 = vpop.permute.xlu0 %2902
          %2906 = vset.pattern.permute.xlu0 0
          %2907 = vperm.xlu0 %2906, %v1244
          %v2908 = vpop.permute.xlu0 %2907
          %2911 = vset.pattern.permute.xlu0 0
          %2912 = vperm.xlu0 %2911, %v1245
          %v2913 = vpop.permute.xlu0 %2912
          %2916 = vset.pattern.permute.xlu0 0
          %2917 = vperm.xlu0 %2916, %v1246
          %v2918 = vpop.permute.xlu0 %2917
          %2921 = vset.pattern.permute.xlu0 0
          %2922 = vperm.xlu0 %2921, %v1247
          %v2923 = vpop.permute.xlu0 %2922
          %2926 = vset.pattern.permute.xlu0 0
          %2927 = vperm.xlu0 %2926, %v1248
          %v2928 = vpop.permute.xlu0 %2927
          %2931 = vset.pattern.permute.xlu0 0
          %2932 = vperm.xlu0 %2931, %v1249
          %v2933 = vpop.permute.xlu0 %2932
          %2936 = vset.pattern.permute.xlu0 0
          %2937 = vperm.xlu0 %2936, %v1250
          %v2938 = vpop.permute.xlu0 %2937
          %2941 = vset.pattern.permute.xlu0 0
          %2942 = vperm.xlu0 %2941, %v1251
          %v2943 = vpop.permute.xlu0 %2942
          %2946 = vset.pattern.permute.xlu0 0
          %2947 = vperm.xlu0 %2946, %v1252
          %v2948 = vpop.permute.xlu0 %2947
          %2951 = vset.pattern.permute.xlu0 0
          %2952 = vperm.xlu0 %2951, %v1253
          %v2953 = vpop.permute.xlu0 %2952
          %2956 = vset.pattern.permute.xlu0 0
          %2957 = vperm.xlu0 %2956, %v1254
          %v2958 = vpop.permute.xlu0 %2957
          %v2961 = vlaneseq
          %v2962 = vshrl.u32 %v2961, 7
          %v2963 = vsub.s32 0, %v2962
          %v2964 = vrot.slane %v2639, %v2963
          %v2966 = vsub.f32 %v2643, %v2964
          %v2967 = vsub.f32 %v2648, %v2964
          %v2968 = vsub.f32 %v2653, %v2964
          %v2969 = vsub.f32 %v2658, %v2964
          %v2970 = vsub.f32 %v2663, %v2964
          %v2971 = vsub.f32 %v2668, %v2964
          %v2972 = vsub.f32 %v2673, %v2964
          %v2973 = vsub.f32 %v2678, %v2964
          %v2974 = vsub.f32 %v2683, %v2964
          %v2975 = vsub.f32 %v2688, %v2964
          %v2976 = vsub.f32 %v2693, %v2964
          %v2977 = vsub.f32 %v2698, %v2964
          %v2978 = vsub.f32 %v2703, %v2964
          %v2979 = vsub.f32 %v2708, %v2964
          %v2980 = vsub.f32 %v2713, %v2964
          %v2981 = vsub.f32 %v2718, %v2964
          %v2982 = vsub.f32 %v2723, %v2964
          %v2983 = vsub.f32 %v2728, %v2964
          %v2984 = vsub.f32 %v2733, %v2964
          %v2985 = vsub.f32 %v2738, %v2964
          %v2986 = vsub.f32 %v2743, %v2964
          %v2987 = vsub.f32 %v2748, %v2964
          %v2988 = vsub.f32 %v2753, %v2964
          %v2989 = vsub.f32 %v2758, %v2964
          %v2990 = vsub.f32 %v2763, %v2964
          %v2991 = vsub.f32 %v2768, %v2964
          %v2992 = vsub.f32 %v2773, %v2964
          %v2993 = vsub.f32 %v2778, %v2964
          %v2994 = vsub.f32 %v2783, %v2964
          %v2995 = vsub.f32 %v2788, %v2964
          %v2996 = vsub.f32 %v2793, %v2964
          %v2997 = vsub.f32 %v2798, %v2964
          %v2998 = vsub.f32 %v2803, %v2964
          %v2999 = vsub.f32 %v2808, %v2964
          %v3000 = vsub.f32 %v2813, %v2964
          %v3001 = vsub.f32 %v2818, %v2964
          %v3002 = vsub.f32 %v2823, %v2964
          %v3003 = vsub.f32 %v2828, %v2964
          %v3004 = vsub.f32 %v2833, %v2964
          %v3005 = vsub.f32 %v2838, %v2964
          %v3006 = vsub.f32 %v2843, %v2964
          %v3007 = vsub.f32 %v2848, %v2964
          %v3008 = vsub.f32 %v2853, %v2964
          %v3009 = vsub.f32 %v2858, %v2964
          %v3010 = vsub.f32 %v2863, %v2964
          %v3011 = vsub.f32 %v2868, %v2964
          %v3012 = vsub.f32 %v2873, %v2964
          %v3013 = vsub.f32 %v2878, %v2964
          %v3014 = vsub.f32 %v2883, %v2964
          %v3015 = vsub.f32 %v2888, %v2964
          %v3016 = vsub.f32 %v2893, %v2964
          %v3017 = vsub.f32 %v2898, %v2964
          %v3018 = vsub.f32 %v2903, %v2964
          %v3019 = vsub.f32 %v2908, %v2964
          %v3020 = vsub.f32 %v2913, %v2964
          %v3021 = vsub.f32 %v2918, %v2964
          %v3022 = vsub.f32 %v2923, %v2964
          %v3023 = vsub.f32 %v2928, %v2964
          %v3024 = vsub.f32 %v2933, %v2964
          %v3025 = vsub.f32 %v2938, %v2964
          %v3026 = vsub.f32 %v2943, %v2964
          %v3027 = vsub.f32 %v2948, %v2964
          %v3028 = vsub.f32 %v2953, %v2964
          %v3029 = vsub.f32 %v2958, %v2964
          %v3030 = vmul.f32 %v2966, %v2966
          %v3031 = vmul.f32 %v2967, %v2967
          %v3032 = vmul.f32 %v2968, %v2968
          %v3033 = vmul.f32 %v2969, %v2969
          %v3034 = vmul.f32 %v2970, %v2970
          %v3035 = vmul.f32 %v2971, %v2971
          %v3036 = vmul.f32 %v2972, %v2972
          %v3037 = vmul.f32 %v2973, %v2973
          %v3038 = vmul.f32 %v2974, %v2974
          %v3039 = vmul.f32 %v2975, %v2975
          %v3040 = vmul.f32 %v2976, %v2976
          %v3041 = vmul.f32 %v2977, %v2977
          %v3042 = vmul.f32 %v2978, %v2978
          %v3043 = vmul.f32 %v2979, %v2979
          %v3044 = vmul.f32 %v2980, %v2980
          %v3045 = vmul.f32 %v2981, %v2981
          %v3046 = vmul.f32 %v2982, %v2982
          %v3047 = vmul.f32 %v2983, %v2983
          %v3048 = vmul.f32 %v2984, %v2984
          %v3049 = vmul.f32 %v2985, %v2985
          %v3050 = vmul.f32 %v2986, %v2986
          %v3051 = vmul.f32 %v2987, %v2987
          %v3052 = vmul.f32 %v2988, %v2988
          %v3053 = vmul.f32 %v2989, %v2989
          %v3054 = vmul.f32 %v2990, %v2990
          %v3055 = vmul.f32 %v2991, %v2991
          %v3056 = vmul.f32 %v2992, %v2992
          %v3057 = vmul.f32 %v2993, %v2993
          %v3058 = vmul.f32 %v2994, %v2994
          %v3059 = vmul.f32 %v2995, %v2995
          %v3060 = vmul.f32 %v2996, %v2996
          %v3061 = vmul.f32 %v2997, %v2997
          %v3062 = vmul.f32 %v2998, %v2998
          %v3063 = vmul.f32 %v2999, %v2999
          %v3064 = vmul.f32 %v3000, %v3000
          %v3065 = vmul.f32 %v3001, %v3001
          %v3066 = vmul.f32 %v3002, %v3002
          %v3067 = vmul.f32 %v3003, %v3003
          %v3068 = vmul.f32 %v3004, %v3004
          %v3069 = vmul.f32 %v3005, %v3005
          %v3070 = vmul.f32 %v3006, %v3006
          %v3071 = vmul.f32 %v3007, %v3007
          %v3072 = vmul.f32 %v3008, %v3008
          %v3073 = vmul.f32 %v3009, %v3009
          %v3074 = vmul.f32 %v3010, %v3010
          %v3075 = vmul.f32 %v3011, %v3011
          %v3076 = vmul.f32 %v3012, %v3012
          %v3077 = vmul.f32 %v3013, %v3013
          %v3078 = vmul.f32 %v3014, %v3014
          %v3079 = vmul.f32 %v3015, %v3015
          %v3080 = vmul.f32 %v3016, %v3016
          %v3081 = vmul.f32 %v3017, %v3017
          %v3082 = vmul.f32 %v3018, %v3018
          %v3083 = vmul.f32 %v3019, %v3019
          %v3084 = vmul.f32 %v3020, %v3020
          %v3085 = vmul.f32 %v3021, %v3021
          %v3086 = vmul.f32 %v3022, %v3022
          %v3087 = vmul.f32 %v3023, %v3023
          %v3088 = vmul.f32 %v3024, %v3024
          %v3089 = vmul.f32 %v3025, %v3025
          %v3090 = vmul.f32 %v3026, %v3026
          %v3091 = vmul.f32 %v3027, %v3027
          %v3092 = vmul.f32 %v3028, %v3028
          %v3093 = vmul.f32 %v3029, %v3029
          %v3094 = vsub.f32 0.0, %v3030
          %v3095 = vsub.f32 0.0, %v3031
          %v3096 = vsub.f32 0.0, %v3032
          %v3097 = vsub.f32 0.0, %v3033
          %v3098 = vsub.f32 0.0, %v3034
          %v3099 = vsub.f32 0.0, %v3035
          %v3100 = vsub.f32 0.0, %v3036
          %v3101 = vsub.f32 0.0, %v3037
          %v3102 = vsub.f32 0.0, %v3038
          %v3103 = vsub.f32 0.0, %v3039
          %v3104 = vsub.f32 0.0, %v3040
          %v3105 = vsub.f32 0.0, %v3041
          %v3106 = vsub.f32 0.0, %v3042
          %v3107 = vsub.f32 0.0, %v3043
          %v3108 = vsub.f32 0.0, %v3044
          %v3109 = vsub.f32 0.0, %v3045
          %v3110 = vsub.f32 0.0, %v3046
          %v3111 = vsub.f32 0.0, %v3047
          %v3112 = vsub.f32 0.0, %v3048
          %v3113 = vsub.f32 0.0, %v3049
          %v3114 = vsub.f32 0.0, %v3050
          %v3115 = vsub.f32 0.0, %v3051
          %v3116 = vsub.f32 0.0, %v3052
          %v3117 = vsub.f32 0.0, %v3053
          %v3118 = vsub.f32 0.0, %v3054
          %v3119 = vsub.f32 0.0, %v3055
          %v3120 = vsub.f32 0.0, %v3056
          %v3121 = vsub.f32 0.0, %v3057
          %v3122 = vsub.f32 0.0, %v3058
          %v3123 = vsub.f32 0.0, %v3059
          %v3124 = vsub.f32 0.0, %v3060
          %v3125 = vsub.f32 0.0, %v3061
          %v3126 = vsub.f32 0.0, %v3062
          %v3127 = vsub.f32 0.0, %v3063
          %v3128 = vsub.f32 0.0, %v3064
          %v3129 = vsub.f32 0.0, %v3065
          %v3130 = vsub.f32 0.0, %v3066
          %v3131 = vsub.f32 0.0, %v3067
          %v3132 = vsub.f32 0.0, %v3068
          %v3133 = vsub.f32 0.0, %v3069
          %v3134 = vsub.f32 0.0, %v3070
          %v3135 = vsub.f32 0.0, %v3071
          %v3136 = vsub.f32 0.0, %v3072
          %v3137 = vsub.f32 0.0, %v3073
          %v3138 = vsub.f32 0.0, %v3074
          %v3139 = vsub.f32 0.0, %v3075
          %v3140 = vsub.f32 0.0, %v3076
          %v3141 = vsub.f32 0.0, %v3077
          %v3142 = vsub.f32 0.0, %v3078
          %v3143 = vsub.f32 0.0, %v3079
          %v3144 = vsub.f32 0.0, %v3080
          %v3145 = vsub.f32 0.0, %v3081
          %v3146 = vsub.f32 0.0, %v3082
          %v3147 = vsub.f32 0.0, %v3083
          %v3148 = vsub.f32 0.0, %v3084
          %v3149 = vsub.f32 0.0, %v3085
          %v3150 = vsub.f32 0.0, %v3086
          %v3151 = vsub.f32 0.0, %v3087
          %v3152 = vsub.f32 0.0, %v3088
          %v3153 = vsub.f32 0.0, %v3089
          %v3154 = vsub.f32 0.0, %v3090
          %v3155 = vsub.f32 0.0, %v3091
          %v3156 = vsub.f32 0.0, %v3092
          %v3157 = vsub.f32 0.0, %v3093
          %v3158 = vmul.f32 %v3094, 1.442695
          %v3159 = vpow.pop %v3158
          %v3160 = vmul.f32 %v3095, 1.442695
          %v3161 = vpow.pop %v3160
          %v3162 = vmul.f32 %v3096, 1.442695
          %v3163 = vpow.pop %v3162
          %v3164 = vmul.f32 %v3097, 1.442695
          %v3165 = vpow.pop %v3164
          %v3166 = vmul.f32 %v3098, 1.442695
          %v3167 = vpow.pop %v3166
          %v3168 = vmul.f32 %v3099, 1.442695
          %v3169 = vpow.pop %v3168
          %v3170 = vmul.f32 %v3100, 1.442695
          %v3171 = vpow.pop %v3170
          %v3172 = vmul.f32 %v3101, 1.442695
          %v3173 = vpow.pop %v3172
          %v3174 = vmul.f32 %v3102, 1.442695
          %v3175 = vpow.pop %v3174
          %v3176 = vmul.f32 %v3103, 1.442695
          %v3177 = vpow.pop %v3176
          %v3178 = vmul.f32 %v3104, 1.442695
          %v3179 = vpow.pop %v3178
          %v3180 = vmul.f32 %v3105, 1.442695
          %v3181 = vpow.pop %v3180
          %v3182 = vmul.f32 %v3106, 1.442695
          %v3183 = vpow.pop %v3182
          %v3184 = vmul.f32 %v3107, 1.442695
          %v3185 = vpow.pop %v3184
          %v3186 = vmul.f32 %v3108, 1.442695
          %v3187 = vpow.pop %v3186
          %v3188 = vmul.f32 %v3109, 1.442695
          %v3189 = vpow.pop %v3188
          %v3190 = vmul.f32 %v3110, 1.442695
          %v3191 = vpow.pop %v3190
          %v3192 = vmul.f32 %v3111, 1.442695
          %v3193 = vpow.pop %v3192
          %v3194 = vmul.f32 %v3112, 1.442695
          %v3195 = vpow.pop %v3194
          %v3196 = vmul.f32 %v3113, 1.442695
          %v3197 = vpow.pop %v3196
          %v3198 = vmul.f32 %v3114, 1.442695
          %v3199 = vpow.pop %v3198
          %v3200 = vmul.f32 %v3115, 1.442695
          %v3201 = vpow.pop %v3200
          %v3202 = vmul.f32 %v3116, 1.442695
          %v3203 = vpow.pop %v3202
          %v3204 = vmul.f32 %v3117, 1.442695
          %v3205 = vpow.pop %v3204
          %v3206 = vmul.f32 %v3118, 1.442695
          %v3207 = vpow.pop %v3206
          %v3208 = vmul.f32 %v3119, 1.442695
          %v3209 = vpow.pop %v3208
          %v3210 = vmul.f32 %v3120, 1.442695
          %v3211 = vpow.pop %v3210
          %v3212 = vmul.f32 %v3121, 1.442695
          %v3213 = vpow.pop %v3212
          %v3214 = vmul.f32 %v3122, 1.442695
          %v3215 = vpow.pop %v3214
          %v3216 = vmul.f32 %v3123, 1.442695
          %v3217 = vpow.pop %v3216
          %v3218 = vmul.f32 %v3124, 1.442695
          %v3219 = vpow.pop %v3218
          %v3220 = vmul.f32 %v3125, 1.442695
          %v3221 = vpow.pop %v3220
          %v3222 = vmul.f32 %v3126, 1.442695
          %v3223 = vpow.pop %v3222
          %v3224 = vmul.f32 %v3127, 1.442695
          %v3225 = vpow.pop %v3224
          %v3226 = vmul.f32 %v3128, 1.442695
          %v3227 = vpow.pop %v3226
          %v3228 = vmul.f32 %v3129, 1.442695
          %v3229 = vpow.pop %v3228
          %v3230 = vmul.f32 %v3130, 1.442695
          %v3231 = vpow.pop %v3230
          %v3232 = vmul.f32 %v3131, 1.442695
          %v3233 = vpow.pop %v3232
          %v3234 = vmul.f32 %v3132, 1.442695
          %v3235 = vpow.pop %v3234
          %v3236 = vmul.f32 %v3133, 1.442695
          %v3237 = vpow.pop %v3236
          %v3238 = vmul.f32 %v3134, 1.442695
          %v3239 = vpow.pop %v3238
          %v3240 = vmul.f32 %v3135, 1.442695
          %v3241 = vpow.pop %v3240
          %v3242 = vmul.f32 %v3136, 1.442695
          %v3243 = vpow.pop %v3242
          %v3244 = vmul.f32 %v3137, 1.442695
          %v3245 = vpow.pop %v3244
          %v3246 = vmul.f32 %v3138, 1.442695
          %v3247 = vpow.pop %v3246
          %v3248 = vmul.f32 %v3139, 1.442695
          %v3249 = vpow.pop %v3248
          %v3250 = vmul.f32 %v3140, 1.442695
          %v3251 = vpow.pop %v3250
          %v3252 = vmul.f32 %v3141, 1.442695
          %v3253 = vpow.pop %v3252
          %v3254 = vmul.f32 %v3142, 1.442695
          %v3255 = vpow.pop %v3254
          %v3256 = vmul.f32 %v3143, 1.442695
          %v3257 = vpow.pop %v3256
          %v3258 = vmul.f32 %v3144, 1.442695
          %v3259 = vpow.pop %v3258
          %v3260 = vmul.f32 %v3145, 1.442695
          %v3261 = vpow.pop %v3260
          %v3262 = vmul.f32 %v3146, 1.442695
          %v3263 = vpow.pop %v3262
          %v3264 = vmul.f32 %v3147, 1.442695
          %v3265 = vpow.pop %v3264
          %v3266 = vmul.f32 %v3148, 1.442695
          %v3267 = vpow.pop %v3266
          %v3268 = vmul.f32 %v3149, 1.442695
          %v3269 = vpow.pop %v3268
          %v3270 = vmul.f32 %v3150, 1.442695
          %v3271 = vpow.pop %v3270
          %v3272 = vmul.f32 %v3151, 1.442695
          %v3273 = vpow.pop %v3272
          %v3274 = vmul.f32 %v3152, 1.442695
          %v3275 = vpow.pop %v3274
          %v3276 = vmul.f32 %v3153, 1.442695
          %v3277 = vpow.pop %v3276
          %v3278 = vmul.f32 %v3154, 1.442695
          %v3279 = vpow.pop %v3278
          %v3280 = vmul.f32 %v3155, 1.442695
          %v3281 = vpow.pop %v3280
          %v3282 = vmul.f32 %v3156, 1.442695
          %v3283 = vpow.pop %v3282
          %v3284 = vmul.f32 %v3157, 1.442695
          %v3285 = vpow.pop %v3284
          %v3286 = vpack.c.bf16 %v3161, %v3159
          %v3287 = vpack.c.bf16 %v3165, %v3163
          %v3288 = vpack.c.bf16 %v3169, %v3167
          %v3289 = vpack.c.bf16 %v3173, %v3171
          %v3290 = vpack.c.bf16 %v3177, %v3175
          %v3291 = vpack.c.bf16 %v3181, %v3179
          %v3292 = vpack.c.bf16 %v3185, %v3183
          %v3293 = vpack.c.bf16 %v3189, %v3187
          %v3294 = vpack.c.bf16 %v3193, %v3191
          %v3295 = vpack.c.bf16 %v3197, %v3195
          %v3296 = vpack.c.bf16 %v3201, %v3199
          %v3297 = vpack.c.bf16 %v3205, %v3203
          %v3298 = vpack.c.bf16 %v3209, %v3207
          %v3299 = vpack.c.bf16 %v3213, %v3211
          %v3300 = vpack.c.bf16 %v3217, %v3215
          %v3301 = vpack.c.bf16 %v3221, %v3219
          %v3302 = vpack.c.bf16 %v3225, %v3223
          %v3303 = vpack.c.bf16 %v3229, %v3227
          %v3304 = vpack.c.bf16 %v3233, %v3231
          %v3305 = vpack.c.bf16 %v3237, %v3235
          %v3306 = vpack.c.bf16 %v3241, %v3239
          %v3307 = vpack.c.bf16 %v3245, %v3243
          %v3308 = vpack.c.bf16 %v3249, %v3247
          %v3309 = vpack.c.bf16 %v3253, %v3251
          %v3310 = vpack.c.bf16 %v3257, %v3255
          %v3311 = vpack.c.bf16 %v3261, %v3259
          %v3312 = vpack.c.bf16 %v3265, %v3263
          %v3313 = vpack.c.bf16 %v3269, %v3267
          %v3314 = vpack.c.bf16 %v3273, %v3271
          %v3315 = vpack.c.bf16 %v3277, %v3275
          %v3316 = vpack.c.bf16 %v3281, %v3279
          %v3317 = vpack.c.bf16 %v3285, %v3283
          %v3318 = vld [vmem:[%s929] sm:$0xf]
          %v3319 = vld [vmem:[%s929 + $0x4] sm:$0xf]
          %v3320 = vld [vmem:[%s929 + $0x8] sm:$0xf]
          %v3321 = vld [vmem:[%s929 + $0xc] sm:$0xf]
          %v3322 = vld [vmem:[%s929 + $0x10] sm:$0xf]
          %v3323 = vld [vmem:[%s929 + $0x14] sm:$0xf]
          %v3324 = vld [vmem:[%s929 + $0x18] sm:$0xf]
          %v3325 = vld [vmem:[%s929 + $0x1c] sm:$0xf]
          %v3326 = vld [vmem:[%s929 + $0x20] sm:$0xf]
          %v3327 = vld [vmem:[%s929 + $0x24] sm:$0xf]
          %v3328 = vld [vmem:[%s929 + $0x28] sm:$0xf]
          %v3329 = vld [vmem:[%s929 + $0x2c] sm:$0xf]
          %v3330 = vld [vmem:[%s929 + $0x30] sm:$0xf]
          %v3331 = vld [vmem:[%s929 + $0x34] sm:$0xf]
          %v3332 = vld [vmem:[%s929 + $0x38] sm:$0xf]
          %v3333 = vld [vmem:[%s929 + $0x3c] sm:$0xf]
          %v3334 = vlaneseq
          %v3335 = vshrl.u32 %v3334, 7
          %v3336 = vsub.s32 0, %v3335
          %v3337 = vrot.slane %v1190, %v3336
          %v3354 = vunpack.c.l.b16 %v3318
          %v3355 = vunpack.c.l.b16 %v3319
          %v3356 = vunpack.c.l.b16 %v3320
          %v3357 = vunpack.c.l.b16 %v3321
          %v3358 = vunpack.c.l.b16 %v3322
          %v3359 = vunpack.c.l.b16 %v3323
          %v3360 = vunpack.c.l.b16 %v3324
          %v3361 = vunpack.c.l.b16 %v3325
          %v3362 = vunpack.c.l.b16 %v3326
          %v3363 = vunpack.c.l.b16 %v3327
          %v3364 = vunpack.c.l.b16 %v3328
          %v3365 = vunpack.c.l.b16 %v3329
          %v3366 = vunpack.c.l.b16 %v3330
          %v3367 = vunpack.c.l.b16 %v3331
          %v3368 = vunpack.c.l.b16 %v3332
          %v3369 = vunpack.c.l.b16 %v3333
          %v3370 = vpack.c.b16 %v3355, %v3354
          %v3371 = vpack.c.b16 %v3357, %v3356
          %v3372 = vpack.c.b16 %v3359, %v3358
          %v3373 = vpack.c.b16 %v3361, %v3360
          %v3374 = vpack.c.b16 %v3363, %v3362
          %v3375 = vpack.c.b16 %v3365, %v3364
          %v3376 = vpack.c.b16 %v3367, %v3366
          %v3377 = vpack.c.b16 %v3369, %v3368
          %3386 = vmatprep.subr.bf16.mxu0 0
          %3387 = vmatpush1.bf16.msra.mxu0 %v3370
          %3388 = vmatprep.subr.bf16.mxu0 0
          %3389 = vmatpush1.bf16.msra.mxu0 %v3371
          %3390 = vmatprep.subr.bf16.mxu0 0
          %3391 = vmatpush1.bf16.msra.mxu0 %v3372
          %3392 = vmatprep.subr.bf16.mxu0 0
          %3393 = vmatpush1.bf16.msra.mxu0 %v3373
          %3394 = vmatprep.subr.bf16.mxu0 0
          %3395 = vmatpush1.bf16.msra.mxu0 %v3374
          %3396 = vmatprep.subr.bf16.mxu0 0
          %3397 = vmatpush1.bf16.msra.mxu0 %v3375
          %3398 = vmatprep.subr.bf16.mxu0 0
          %3399 = vmatpush1.bf16.msra.mxu0 %v3376
          %3400 = vmatprep.subr.bf16.mxu0 0
          %3401 = vmatpush1.bf16.msra.mxu0 %v3377
          %3402 = vmatprep.subr.bf16.mxu0 0
          %3403 = vmatpush1.bf16.msra.mxu0 0
          %3404 = vmatprep.subr.bf16.mxu0 0
          %3405 = vmatpush1.bf16.msra.mxu0 0
          %3406 = vmatprep.subr.bf16.mxu0 0
          %3407 = vmatpush1.bf16.msra.mxu0 0
          %3408 = vmatprep.subr.bf16.mxu0 0
          %3409 = vmatpush1.bf16.msra.mxu0 0
          %3410 = vmatprep.subr.bf16.mxu0 0
          %3411 = vmatpush1.bf16.msra.mxu0 0
          %3412 = vmatprep.subr.bf16.mxu0 0
          %3413 = vmatpush1.bf16.msra.mxu0 0
          %3414 = vmatprep.subr.bf16.mxu0 0
          %3415 = vmatpush1.bf16.msra.mxu0 0
          %3416 = vmatprep.subr.bf16.mxu0 0
          %3417 = vmatpush1.bf16.msra.mxu0 0
          %3418 = vmatprep.mubr.bf16.mxu0 0
          %3419 = vmatmul.mubr.bf16.gmra.mrb[0].mxu0 %v3286
          %v3420 = vpop.f32.mrb[0].mxu0
          %v3421 = vadd.f32 %v3337, %v3420
          %v3422 = vpop.f32.mrb[0].mxu0
          %v3423 = vpop.f32.mrb[0].mxu0
          %v3424 = vadd.f32 %v3337, %v3423
          %v3425 = vpop.f32.mrb[0].mxu0
          %3426 = vmatprep.mubr.bf16.mxu0 0
          %3427 = vmatmul.mubr.bf16.gmra.mrb[0].mxu0 %v3287
          %v3428 = vpop.f32.mrb[0].mxu0
          %v3429 = vadd.f32 %v3337, %v3428
          %v3430 = vpop.f32.mrb[0].mxu0
          %v3431 = vpop.f32.mrb[0].mxu0
          %v3432 = vadd.f32 %v3337, %v3431
          %v3433 = vpop.f32.mrb[0].mxu0
          %3434 = vmatprep.mubr.bf16.mxu0 0
          %3435 = vmatmul.mubr.bf16.gmra.mrb[0].mxu0 %v3288
          %v3436 = vpop.f32.mrb[0].mxu0
          %v3437 = vadd.f32 %v3337, %v3436
          %v3438 = vpop.f32.mrb[0].mxu0
          %v3439 = vpop.f32.mrb[0].mxu0
          %v3440 = vadd.f32 %v3337, %v3439
          %v3441 = vpop.f32.mrb[0].mxu0
          %3442 = vmatprep.mubr.bf16.mxu0 0
          %3443 = vmatmul.mubr.bf16.gmra.mrb[0].mxu0 %v3289
          %v3444 = vpop.f32.mrb[0].mxu0
          %v3445 = vadd.f32 %v3337, %v3444
          %v3446 = vpop.f32.mrb[0].mxu0
          %v3447 = vpop.f32.mrb[0].mxu0
          %v3448 = vadd.f32 %v3337, %v3447
          %v3449 = vpop.f32.mrb[0].mxu0
          %3450 = vmatprep.mubr.bf16.mxu0 0
          %3451 = vmatmul.mubr.bf16.gmra.mrb[0].mxu0 %v3290
          %v3452 = vpop.f32.mrb[0].mxu0
          %v3453 = vadd.f32 %v3337, %v3452
          %v3454 = vpop.f32.mrb[0].mxu0
          %v3455 = vpop.f32.mrb[0].mxu0
          %v3456 = vadd.f32 %v3337, %v3455
          %v3457 = vpop.f32.mrb[0].mxu0
          %3458 = vmatprep.mubr.bf16.mxu0 0
          %3459 = vmatmul.mubr.bf16.gmra.mrb[0].mxu0 %v3291
          %v3460 = vpop.f32.mrb[0].mxu0
          %v3461 = vadd.f32 %v3337, %v3460
          %v3462 = vpop.f32.mrb[0].mxu0
          %v3463 = vpop.f32.mrb[0].mxu0
          %v3464 = vadd.f32 %v3337, %v3463
          %v3465 = vpop.f32.mrb[0].mxu0
          %3466 = vmatprep.mubr.bf16.mxu0 0
          %3467 = vmatmul.mubr.bf16.gmra.mrb[0].mxu0 %v3292
          %v3468 = vpop.f32.mrb[0].mxu0
          %v3469 = vadd.f32 %v3337, %v3468
          %v3470 = vpop.f32.mrb[0].mxu0
          %v3471 = vpop.f32.mrb[0].mxu0
          %v3472 = vadd.f32 %v3337, %v3471
          %v3473 = vpop.f32.mrb[0].mxu0
          %3474 = vmatprep.mubr.bf16.mxu0 0
          %3475 = vmatmul.mubr.bf16.gmra.mrb[0].mxu0 %v3293
          %v3476 = vpop.f32.mrb[0].mxu0
          %v3477 = vadd.f32 %v3337, %v3476
          %v3478 = vpop.f32.mrb[0].mxu0
          %v3479 = vpop.f32.mrb[0].mxu0
          %v3480 = vadd.f32 %v3337, %v3479
          %v3481 = vpop.f32.mrb[0].mxu0
          %3482 = vmatprep.mubr.bf16.mxu0 0
          %3483 = vmatmul.mubr.bf16.gmra.mrb[0].mxu0 %v3294
          %v3484 = vpop.f32.mrb[0].mxu0
          %v3485 = vadd.f32 %v3337, %v3484
          %v3486 = vpop.f32.mrb[0].mxu0
          %v3487 = vpop.f32.mrb[0].mxu0
          %v3488 = vadd.f32 %v3337, %v3487
          %v3489 = vpop.f32.mrb[0].mxu0
          %3490 = vmatprep.mubr.bf16.mxu0 0
          %3491 = vmatmul.mubr.bf16.gmra.mrb[0].mxu0 %v3295
          %v3492 = vpop.f32.mrb[0].mxu0
          %v3493 = vadd.f32 %v3337, %v3492
          %v3494 = vpop.f32.mrb[0].mxu0
          %v3495 = vpop.f32.mrb[0].mxu0
          %v3496 = vadd.f32 %v3337, %v3495
          %v3497 = vpop.f32.mrb[0].mxu0
          %3498 = vmatprep.mubr.bf16.mxu0 0
          %3499 = vmatmul.mubr.bf16.gmra.mrb[0].mxu0 %v3296
          %v3500 = vpop.f32.mrb[0].mxu0
          %v3501 = vadd.f32 %v3337, %v3500
          %v3502 = vpop.f32.mrb[0].mxu0
          %v3503 = vpop.f32.mrb[0].mxu0
          %v3504 = vadd.f32 %v3337, %v3503
          %v3505 = vpop.f32.mrb[0].mxu0
          %3506 = vmatprep.mubr.bf16.mxu0 0
          %3507 = vmatmul.mubr.bf16.gmra.mrb[0].mxu0 %v3297
          %v3508 = vpop.f32.mrb[0].mxu0
          %v3509 = vadd.f32 %v3337, %v3508
          %v3510 = vpop.f32.mrb[0].mxu0
          %v3511 = vpop.f32.mrb[0].mxu0
          %v3512 = vadd.f32 %v3337, %v3511
          %v3513 = vpop.f32.mrb[0].mxu0
          %3514 = vmatprep.mubr.bf16.mxu0 0
          %3515 = vmatmul.mubr.bf16.gmra.mrb[0].mxu0 %v3298
          %v3516 = vpop.f32.mrb[0].mxu0
          %v3517 = vadd.f32 %v3337, %v3516
          %v3518 = vpop.f32.mrb[0].mxu0
          %v3519 = vpop.f32.mrb[0].mxu0
          %v3520 = vadd.f32 %v3337, %v3519
          %v3521 = vpop.f32.mrb[0].mxu0
          %3522 = vmatprep.mubr.bf16.mxu0 0
          %3523 = vmatmul.mubr.bf16.gmra.mrb[0].mxu0 %v3299
          %v3524 = vpop.f32.mrb[0].mxu0
          %v3525 = vadd.f32 %v3337, %v3524
          %v3526 = vpop.f32.mrb[0].mxu0
          %v3527 = vpop.f32.mrb[0].mxu0
          %v3528 = vadd.f32 %v3337, %v3527
          %v3529 = vpop.f32.mrb[0].mxu0
          %3530 = vmatprep.mubr.bf16.mxu0 0
          %3531 = vmatmul.mubr.bf16.gmra.mrb[0].mxu0 %v3300
          %v3532 = vpop.f32.mrb[0].mxu0
          %v3533 = vadd.f32 %v3337, %v3532
          %v3534 = vpop.f32.mrb[0].mxu0
          %v3535 = vpop.f32.mrb[0].mxu0
          %v3536 = vadd.f32 %v3337, %v3535
          %v3537 = vpop.f32.mrb[0].mxu0
          %3538 = vmatprep.mubr.bf16.mxu0 0
          %3539 = vmatmul.mubr.bf16.gmra.mrb[0].mxu0 %v3301
          %v3540 = vpop.f32.mrb[0].mxu0
          %v3541 = vadd.f32 %v3337, %v3540
          %v3542 = vpop.f32.mrb[0].mxu0
          %v3543 = vpop.f32.mrb[0].mxu0
          %v3544 = vadd.f32 %v3337, %v3543
          %v3545 = vpop.f32.mrb[0].mxu0
          %3546 = vmatprep.mubr.bf16.mxu0 0
          %3547 = vmatmul.mubr.bf16.gmra.mrb[0].mxu0 %v3302
          %v3548 = vpop.f32.mrb[0].mxu0
          %v3549 = vadd.f32 %v3337, %v3548
          %v3550 = vpop.f32.mrb[0].mxu0
          %v3551 = vpop.f32.mrb[0].mxu0
          %v3552 = vadd.f32 %v3337, %v3551
          %v3553 = vpop.f32.mrb[0].mxu0
          %3554 = vmatprep.mubr.bf16.mxu0 0
          %3555 = vmatmul.mubr.bf16.gmra.mrb[0].mxu0 %v3303
          %v3556 = vpop.f32.mrb[0].mxu0
          %v3557 = vadd.f32 %v3337, %v3556
          %v3558 = vpop.f32.mrb[0].mxu0
          %v3559 = vpop.f32.mrb[0].mxu0
          %v3560 = vadd.f32 %v3337, %v3559
          %v3561 = vpop.f32.mrb[0].mxu0
          %3562 = vmatprep.mubr.bf16.mxu0 0
          %3563 = vmatmul.mubr.bf16.gmra.mrb[0].mxu0 %v3304
          %v3564 = vpop.f32.mrb[0].mxu0
          %v3565 = vadd.f32 %v3337, %v3564
          %v3566 = vpop.f32.mrb[0].mxu0
          %v3567 = vpop.f32.mrb[0].mxu0
          %v3568 = vadd.f32 %v3337, %v3567
          %v3569 = vpop.f32.mrb[0].mxu0
          %3570 = vmatprep.mubr.bf16.mxu0 0
          %3571 = vmatmul.mubr.bf16.gmra.mrb[0].mxu0 %v3305
          %v3572 = vpop.f32.mrb[0].mxu0
          %v3573 = vadd.f32 %v3337, %v3572
          %v3574 = vpop.f32.mrb[0].mxu0
          %v3575 = vpop.f32.mrb[0].mxu0
          %v3576 = vadd.f32 %v3337, %v3575
          %v3577 = vpop.f32.mrb[0].mxu0
          %3578 = vmatprep.mubr.bf16.mxu0 0
          %3579 = vmatmul.mubr.bf16.gmra.mrb[0].mxu0 %v3306
          %v3580 = vpop.f32.mrb[0].mxu0
          %v3581 = vadd.f32 %v3337, %v3580
          %v3582 = vpop.f32.mrb[0].mxu0
          %v3583 = vpop.f32.mrb[0].mxu0
          %v3584 = vadd.f32 %v3337, %v3583
          %v3585 = vpop.f32.mrb[0].mxu0
          %3586 = vmatprep.mubr.bf16.mxu0 0
          %3587 = vmatmul.mubr.bf16.gmra.mrb[0].mxu0 %v3307
          %v3588 = vpop.f32.mrb[0].mxu0
          %v3589 = vadd.f32 %v3337, %v3588
          %v3590 = vpop.f32.mrb[0].mxu0
          %v3591 = vpop.f32.mrb[0].mxu0
          %v3592 = vadd.f32 %v3337, %v3591
          %v3593 = vpop.f32.mrb[0].mxu0
          %3594 = vmatprep.mubr.bf16.mxu0 0
          %3595 = vmatmul.mubr.bf16.gmra.mrb[0].mxu0 %v3308
          %v3596 = vpop.f32.mrb[0].mxu0
          %v3597 = vadd.f32 %v3337, %v3596
          %v3598 = vpop.f32.mrb[0].mxu0
          %v3599 = vpop.f32.mrb[0].mxu0
          %v3600 = vadd.f32 %v3337, %v3599
          %v3601 = vpop.f32.mrb[0].mxu0
          %3602 = vmatprep.mubr.bf16.mxu0 0
          %3603 = vmatmul.mubr.bf16.gmra.mrb[0].mxu0 %v3309
          %v3604 = vpop.f32.mrb[0].mxu0
          %v3605 = vadd.f32 %v3337, %v3604
          %v3606 = vpop.f32.mrb[0].mxu0
          %v3607 = vpop.f32.mrb[0].mxu0
          %v3608 = vadd.f32 %v3337, %v3607
          %v3609 = vpop.f32.mrb[0].mxu0
          %3610 = vmatprep.mubr.bf16.mxu0 0
          %3611 = vmatmul.mubr.bf16.gmra.mrb[0].mxu0 %v3310
          %v3612 = vpop.f32.mrb[0].mxu0
          %v3613 = vadd.f32 %v3337, %v3612
          %v3614 = vpop.f32.mrb[0].mxu0
          %v3615 = vpop.f32.mrb[0].mxu0
          %v3616 = vadd.f32 %v3337, %v3615
          %v3617 = vpop.f32.mrb[0].mxu0
          %3618 = vmatprep.mubr.bf16.mxu0 0
          %3619 = vmatmul.mubr.bf16.gmra.mrb[0].mxu0 %v3311
          %v3620 = vpop.f32.mrb[0].mxu0
          %v3621 = vadd.f32 %v3337, %v3620
          %v3622 = vpop.f32.mrb[0].mxu0
          %v3623 = vpop.f32.mrb[0].mxu0
          %v3624 = vadd.f32 %v3337, %v3623
          %v3625 = vpop.f32.mrb[0].mxu0
          %3626 = vmatprep.mubr.bf16.mxu0 0
          %3627 = vmatmul.mubr.bf16.gmra.mrb[0].mxu0 %v3312
          %v3628 = vpop.f32.mrb[0].mxu0
          %v3629 = vadd.f32 %v3337, %v3628
          %v3630 = vpop.f32.mrb[0].mxu0
          %v3631 = vpop.f32.mrb[0].mxu0
          %v3632 = vadd.f32 %v3337, %v3631
          %v3633 = vpop.f32.mrb[0].mxu0
          %3634 = vmatprep.mubr.bf16.mxu0 0
          %3635 = vmatmul.mubr.bf16.gmra.mrb[0].mxu0 %v3313
          %v3636 = vpop.f32.mrb[0].mxu0
          %v3637 = vadd.f32 %v3337, %v3636
          %v3638 = vpop.f32.mrb[0].mxu0
          %v3639 = vpop.f32.mrb[0].mxu0
          %v3640 = vadd.f32 %v3337, %v3639
          %v3641 = vpop.f32.mrb[0].mxu0
          %3642 = vmatprep.mubr.bf16.mxu0 0
          %3643 = vmatmul.mubr.bf16.gmra.mrb[0].mxu0 %v3314
          %v3644 = vpop.f32.mrb[0].mxu0
          %v3645 = vadd.f32 %v3337, %v3644
          %v3646 = vpop.f32.mrb[0].mxu0
          %v3647 = vpop.f32.mrb[0].mxu0
          %v3648 = vadd.f32 %v3337, %v3647
          %v3649 = vpop.f32.mrb[0].mxu0
          %3650 = vmatprep.mubr.bf16.mxu0 0
          %3651 = vmatmul.mubr.bf16.gmra.mrb[0].mxu0 %v3315
          %v3652 = vpop.f32.mrb[0].mxu0
          %v3653 = vadd.f32 %v3337, %v3652
          %v3654 = vpop.f32.mrb[0].mxu0
          %v3655 = vpop.f32.mrb[0].mxu0
          %v3656 = vadd.f32 %v3337, %v3655
          %v3657 = vpop.f32.mrb[0].mxu0
          %3658 = vmatprep.mubr.bf16.mxu0 0
          %3659 = vmatmul.mubr.bf16.gmra.mrb[0].mxu0 %v3316
          %v3660 = vpop.f32.mrb[0].mxu0
          %v3661 = vadd.f32 %v3337, %v3660
          %v3662 = vpop.f32.mrb[0].mxu0
          %v3663 = vpop.f32.mrb[0].mxu0
          %v3664 = vadd.f32 %v3337, %v3663
          %v3665 = vpop.f32.mrb[0].mxu0
          %3666 = vmatprep.mubr.bf16.mxu0 0
          %3667 = vmatmul.mubr.bf16.gmra.mrb[0].mxu0 %v3317
          %v3668 = vpop.f32.mrb[0].mxu0
          %v3669 = vadd.f32 %v3337, %v3668
          %v3670 = vpop.f32.mrb[0].mxu0
          %v3671 = vpop.f32.mrb[0].mxu0
          %v3672 = vadd.f32 %v3337, %v3671
          %v3673 = vpop.f32.mrb[0].mxu0
          %3674 = vdwg.mxu0
          %v3675 = vmax.f32 %v3421, 0.0
          %v3676 = vmax.f32 %v3424, 0.0
          %v3677 = vmax.f32 %v3429, 0.0
          %v3678 = vmax.f32 %v3432, 0.0
          %v3679 = vmax.f32 %v3437, 0.0
          %v3680 = vmax.f32 %v3440, 0.0
          %v3681 = vmax.f32 %v3445, 0.0
          %v3682 = vmax.f32 %v3448, 0.0
          %v3683 = vmax.f32 %v3453, 0.0
          %v3684 = vmax.f32 %v3456, 0.0
          %v3685 = vmax.f32 %v3461, 0.0
          %v3686 = vmax.f32 %v3464, 0.0
          %v3687 = vmax.f32 %v3469, 0.0
          %v3688 = vmax.f32 %v3472, 0.0
          %v3689 = vmax.f32 %v3477, 0.0
          %v3690 = vmax.f32 %v3480, 0.0
          %v3691 = vmax.f32 %v3485, 0.0
          %v3692 = vmax.f32 %v3488, 0.0
          %v3693 = vmax.f32 %v3493, 0.0
          %v3694 = vmax.f32 %v3496, 0.0
          %v3695 = vmax.f32 %v3501, 0.0
          %v3696 = vmax.f32 %v3504, 0.0
          %v3697 = vmax.f32 %v3509, 0.0
          %v3698 = vmax.f32 %v3512, 0.0
          %v3699 = vmax.f32 %v3517, 0.0
          %v3700 = vmax.f32 %v3520, 0.0
          %v3701 = vmax.f32 %v3525, 0.0
          %v3702 = vmax.f32 %v3528, 0.0
          %v3703 = vmax.f32 %v3533, 0.0
          %v3704 = vmax.f32 %v3536, 0.0
          %v3705 = vmax.f32 %v3541, 0.0
          %v3706 = vmax.f32 %v3544, 0.0
          %v3707 = vmax.f32 %v3549, 0.0
          %v3708 = vmax.f32 %v3552, 0.0
          %v3709 = vmax.f32 %v3557, 0.0
          %v3710 = vmax.f32 %v3560, 0.0
          %v3711 = vmax.f32 %v3565, 0.0
          %v3712 = vmax.f32 %v3568, 0.0
          %v3713 = vmax.f32 %v3573, 0.0
          %v3714 = vmax.f32 %v3576, 0.0
          %v3715 = vmax.f32 %v3581, 0.0
          %v3716 = vmax.f32 %v3584, 0.0
          %v3717 = vmax.f32 %v3589, 0.0
          %v3718 = vmax.f32 %v3592, 0.0
          %v3719 = vmax.f32 %v3597, 0.0
          %v3720 = vmax.f32 %v3600, 0.0
          %v3721 = vmax.f32 %v3605, 0.0
          %v3722 = vmax.f32 %v3608, 0.0
          %v3723 = vmax.f32 %v3613, 0.0
          %v3724 = vmax.f32 %v3616, 0.0
          %v3725 = vmax.f32 %v3621, 0.0
          %v3726 = vmax.f32 %v3624, 0.0
          %v3727 = vmax.f32 %v3629, 0.0
          %v3728 = vmax.f32 %v3632, 0.0
          %v3729 = vmax.f32 %v3637, 0.0
          %v3730 = vmax.f32 %v3640, 0.0
          %v3731 = vmax.f32 %v3645, 0.0
          %v3732 = vmax.f32 %v3648, 0.0
          %v3733 = vmax.f32 %v3653, 0.0
          %v3734 = vmax.f32 %v3656, 0.0
          %v3735 = vmax.f32 %v3661, 0.0
          %v3736 = vmax.f32 %v3664, 0.0
          %v3737 = vmax.f32 %v3669, 0.0
          %v3738 = vmax.f32 %v3672, 0.0
          %v3739 = vand.u32 2147483647, %v3421
          %v3740 = vand.u32 2147483647, %v3424
          %v3741 = vand.u32 2147483647, %v3429
          %v3742 = vand.u32 2147483647, %v3432
          %v3743 = vand.u32 2147483647, %v3437
          %v3744 = vand.u32 2147483647, %v3440
          %v3745 = vand.u32 2147483647, %v3445
          %v3746 = vand.u32 2147483647, %v3448
          %v3747 = vand.u32 2147483647, %v3453
          %v3748 = vand.u32 2147483647, %v3456
          %v3749 = vand.u32 2147483647, %v3461
          %v3750 = vand.u32 2147483647, %v3464
          %v3751 = vand.u32 2147483647, %v3469
          %v3752 = vand.u32 2147483647, %v3472
          %v3753 = vand.u32 2147483647, %v3477
          %v3754 = vand.u32 2147483647, %v3480
          %v3755 = vand.u32 2147483647, %v3485
          %v3756 = vand.u32 2147483647, %v3488
          %v3757 = vand.u32 2147483647, %v3493
          %v3758 = vand.u32 2147483647, %v3496
          %v3759 = vand.u32 2147483647, %v3501
          %v3760 = vand.u32 2147483647, %v3504
          %v3761 = vand.u32 2147483647, %v3509
          %v3762 = vand.u32 2147483647, %v3512
          %v3763 = vand.u32 2147483647, %v3517
          %v3764 = vand.u32 2147483647, %v3520
          %v3765 = vand.u32 2147483647, %v3525
          %v3766 = vand.u32 2147483647, %v3528
          %v3767 = vand.u32 2147483647, %v3533
          %v3768 = vand.u32 2147483647, %v3536
          %v3769 = vand.u32 2147483647, %v3541
          %v3770 = vand.u32 2147483647, %v3544
          %v3771 = vand.u32 2147483647, %v3549
          %v3772 = vand.u32 2147483647, %v3552
          %v3773 = vand.u32 2147483647, %v3557
          %v3774 = vand.u32 2147483647, %v3560
          %v3775 = vand.u32 2147483647, %v3565
          %v3776 = vand.u32 2147483647, %v3568
          %v3777 = vand.u32 2147483647, %v3573
          %v3778 = vand.u32 2147483647, %v3576
          %v3779 = vand.u32 2147483647, %v3581
          %v3780 = vand.u32 2147483647, %v3584
          %v3781 = vand.u32 2147483647, %v3589
          %v3782 = vand.u32 2147483647, %v3592
          %v3783 = vand.u32 2147483647, %v3597
          %v3784 = vand.u32 2147483647, %v3600
          %v3785 = vand.u32 2147483647, %v3605
          %v3786 = vand.u32 2147483647, %v3608
          %v3787 = vand.u32 2147483647, %v3613
          %v3788 = vand.u32 2147483647, %v3616
          %v3789 = vand.u32 2147483647, %v3621
          %v3790 = vand.u32 2147483647, %v3624
          %v3791 = vand.u32 2147483647, %v3629
          %v3792 = vand.u32 2147483647, %v3632
          %v3793 = vand.u32 2147483647, %v3637
          %v3794 = vand.u32 2147483647, %v3640
          %v3795 = vand.u32 2147483647, %v3645
          %v3796 = vand.u32 2147483647, %v3648
          %v3797 = vand.u32 2147483647, %v3653
          %v3798 = vand.u32 2147483647, %v3656
          %v3799 = vand.u32 2147483647, %v3661
          %v3800 = vand.u32 2147483647, %v3664
          %v3801 = vand.u32 2147483647, %v3669
          %v3802 = vand.u32 2147483647, %v3672
          %v3803 = vsub.f32 0.0, %v3739
          %v3804 = vsub.f32 0.0, %v3740
          %v3805 = vsub.f32 0.0, %v3741
          %v3806 = vsub.f32 0.0, %v3742
          %v3807 = vsub.f32 0.0, %v3743
          %v3808 = vsub.f32 0.0, %v3744
          %v3809 = vsub.f32 0.0, %v3745
          %v3810 = vsub.f32 0.0, %v3746
          %v3811 = vsub.f32 0.0, %v3747
          %v3812 = vsub.f32 0.0, %v3748
          %v3813 = vsub.f32 0.0, %v3749
          %v3814 = vsub.f32 0.0, %v3750
          %v3815 = vsub.f32 0.0, %v3751
          %v3816 = vsub.f32 0.0, %v3752
          %v3817 = vsub.f32 0.0, %v3753
          %v3818 = vsub.f32 0.0, %v3754
          %v3819 = vsub.f32 0.0, %v3755
          %v3820 = vsub.f32 0.0, %v3756
          %v3821 = vsub.f32 0.0, %v3757
          %v3822 = vsub.f32 0.0, %v3758
          %v3823 = vsub.f32 0.0, %v3759
          %v3824 = vsub.f32 0.0, %v3760
          %v3825 = vsub.f32 0.0, %v3761
          %v3826 = vsub.f32 0.0, %v3762
          %v3827 = vsub.f32 0.0, %v3763
          %v3828 = vsub.f32 0.0, %v3764
          %v3829 = vsub.f32 0.0, %v3765
          %v3830 = vsub.f32 0.0, %v3766
          %v3831 = vsub.f32 0.0, %v3767
          %v3832 = vsub.f32 0.0, %v3768
          %v3833 = vsub.f32 0.0, %v3769
          %v3834 = vsub.f32 0.0, %v3770
          %v3835 = vsub.f32 0.0, %v3771
          %v3836 = vsub.f32 0.0, %v3772
          %v3837 = vsub.f32 0.0, %v3773
          %v3838 = vsub.f32 0.0, %v3774
          %v3839 = vsub.f32 0.0, %v3775
          %v3840 = vsub.f32 0.0, %v3776
          %v3841 = vsub.f32 0.0, %v3777
          %v3842 = vsub.f32 0.0, %v3778
          %v3843 = vsub.f32 0.0, %v3779
          %v3844 = vsub.f32 0.0, %v3780
          %v3845 = vsub.f32 0.0, %v3781
          %v3846 = vsub.f32 0.0, %v3782
          %v3847 = vsub.f32 0.0, %v3783
          %v3848 = vsub.f32 0.0, %v3784
          %v3849 = vsub.f32 0.0, %v3785
          %v3850 = vsub.f32 0.0, %v3786
          %v3851 = vsub.f32 0.0, %v3787
          %v3852 = vsub.f32 0.0, %v3788
          %v3853 = vsub.f32 0.0, %v3789
          %v3854 = vsub.f32 0.0, %v3790
          %v3855 = vsub.f32 0.0, %v3791
          %v3856 = vsub.f32 0.0, %v3792
          %v3857 = vsub.f32 0.0, %v3793
          %v3858 = vsub.f32 0.0, %v3794
          %v3859 = vsub.f32 0.0, %v3795
          %v3860 = vsub.f32 0.0, %v3796
          %v3861 = vsub.f32 0.0, %v3797
          %v3862 = vsub.f32 0.0, %v3798
          %v3863 = vsub.f32 0.0, %v3799
          %v3864 = vsub.f32 0.0, %v3800
          %v3865 = vsub.f32 0.0, %v3801
          %v3866 = vsub.f32 0.0, %v3802
          %v3867 = vmul.f32 %v3803, 1.442695
          %v3868 = vpow.pop %v3867
          %v3869 = vmul.f32 %v3804, 1.442695
          %v3870 = vpow.pop %v3869
          %v3871 = vmul.f32 %v3805, 1.442695
          %v3872 = vpow.pop %v3871
          %v3873 = vmul.f32 %v3806, 1.442695
          %v3874 = vpow.pop %v3873
          %v3875 = vmul.f32 %v3807, 1.442695
          %v3876 = vpow.pop %v3875
          %v3877 = vmul.f32 %v3808, 1.442695
          %v3878 = vpow.pop %v3877
          %v3879 = vmul.f32 %v3809, 1.442695
          %v3880 = vpow.pop %v3879
          %v3881 = vmul.f32 %v3810, 1.442695
          %v3882 = vpow.pop %v3881
          %v3883 = vmul.f32 %v3811, 1.442695
          %v3884 = vpow.pop %v3883
          %v3885 = vmul.f32 %v3812, 1.442695
          %v3886 = vpow.pop %v3885
          %v3887 = vmul.f32 %v3813, 1.442695
          %v3888 = vpow.pop %v3887
          %v3889 = vmul.f32 %v3814, 1.442695
          %v3890 = vpow.pop %v3889
          %v3891 = vmul.f32 %v3815, 1.442695
          %v3892 = vpow.pop %v3891
          %v3893 = vmul.f32 %v3816, 1.442695
          %v3894 = vpow.pop %v3893
          %v3895 = vmul.f32 %v3817, 1.442695
          %v3896 = vpow.pop %v3895
          %v3897 = vmul.f32 %v3818, 1.442695
          %v3898 = vpow.pop %v3897
          %v3899 = vmul.f32 %v3819, 1.442695
          %v3900 = vpow.pop %v3899
          %v3901 = vmul.f32 %v3820, 1.442695
          %v3902 = vpow.pop %v3901
          %v3903 = vmul.f32 %v3821, 1.442695
          %v3904 = vpow.pop %v3903
          %v3905 = vmul.f32 %v3822, 1.442695
          %v3906 = vpow.pop %v3905
          %v3907 = vmul.f32 %v3823, 1.442695
          %v3908 = vpow.pop %v3907
          %v3909 = vmul.f32 %v3824, 1.442695
          %v3910 = vpow.pop %v3909
          %v3911 = vmul.f32 %v3825, 1.442695
          %v3912 = vpow.pop %v3911
          %v3913 = vmul.f32 %v3826, 1.442695
          %v3914 = vpow.pop %v3913
          %v3915 = vmul.f32 %v3827, 1.442695
          %v3916 = vpow.pop %v3915
          %v3917 = vmul.f32 %v3828, 1.442695
          %v3918 = vpow.pop %v3917
          %v3919 = vmul.f32 %v3829, 1.442695
          %v3920 = vpow.pop %v3919
          %v3921 = vmul.f32 %v3830, 1.442695
          %v3922 = vpow.pop %v3921
          %v3923 = vmul.f32 %v3831, 1.442695
          %v3924 = vpow.pop %v3923
          %v3925 = vmul.f32 %v3832, 1.442695
          %v3926 = vpow.pop %v3925
          %v3927 = vmul.f32 %v3833, 1.442695
          %v3928 = vpow.pop %v3927
          %v3929 = vmul.f32 %v3834, 1.442695
          %v3930 = vpow.pop %v3929
          %v3931 = vmul.f32 %v3835, 1.442695
          %v3932 = vpow.pop %v3931
          %v3933 = vmul.f32 %v3836, 1.442695
          %v3934 = vpow.pop %v3933
          %v3935 = vmul.f32 %v3837, 1.442695
          %v3936 = vpow.pop %v3935
          %v3937 = vmul.f32 %v3838, 1.442695
          %v3938 = vpow.pop %v3937
          %v3939 = vmul.f32 %v3839, 1.442695
          %v3940 = vpow.pop %v3939
          %v3941 = vmul.f32 %v3840, 1.442695
          %v3942 = vpow.pop %v3941
          %v3943 = vmul.f32 %v3841, 1.442695
          %v3944 = vpow.pop %v3943
          %v3945 = vmul.f32 %v3842, 1.442695
          %v3946 = vpow.pop %v3945
          %v3947 = vmul.f32 %v3843, 1.442695
          %v3948 = vpow.pop %v3947
          %v3949 = vmul.f32 %v3844, 1.442695
          %v3950 = vpow.pop %v3949
          %v3951 = vmul.f32 %v3845, 1.442695
          %v3952 = vpow.pop %v3951
          %v3953 = vmul.f32 %v3846, 1.442695
          %v3954 = vpow.pop %v3953
          %v3955 = vmul.f32 %v3847, 1.442695
          %v3956 = vpow.pop %v3955
          %v3957 = vmul.f32 %v3848, 1.442695
          %v3958 = vpow.pop %v3957
          %v3959 = vmul.f32 %v3849, 1.442695
          %v3960 = vpow.pop %v3959
          %v3961 = vmul.f32 %v3850, 1.442695
          %v3962 = vpow.pop %v3961
          %v3963 = vmul.f32 %v3851, 1.442695
          %v3964 = vpow.pop %v3963
          %v3965 = vmul.f32 %v3852, 1.442695
          %v3966 = vpow.pop %v3965
          %v3967 = vmul.f32 %v3853, 1.442695
          %v3968 = vpow.pop %v3967
          %v3969 = vmul.f32 %v3854, 1.442695
          %v3970 = vpow.pop %v3969
          %v3971 = vmul.f32 %v3855, 1.442695
          %v3972 = vpow.pop %v3971
          %v3973 = vmul.f32 %v3856, 1.442695
          %v3974 = vpow.pop %v3973
          %v3975 = vmul.f32 %v3857, 1.442695
          %v3976 = vpow.pop %v3975
          %v3977 = vmul.f32 %v3858, 1.442695
          %v3978 = vpow.pop %v3977
          %v3979 = vmul.f32 %v3859, 1.442695
          %v3980 = vpow.pop %v3979
          %v3981 = vmul.f32 %v3860, 1.442695
          %v3982 = vpow.pop %v3981
          %v3983 = vmul.f32 %v3861, 1.442695
          %v3984 = vpow.pop %v3983
          %v3985 = vmul.f32 %v3862, 1.442695
          %v3986 = vpow.pop %v3985
          %v3987 = vmul.f32 %v3863, 1.442695
          %v3988 = vpow.pop %v3987
          %v3989 = vmul.f32 %v3864, 1.442695
          %v3990 = vpow.pop %v3989
          %v3991 = vmul.f32 %v3865, 1.442695
          %v3992 = vpow.pop %v3991
          %v3993 = vmul.f32 %v3866, 1.442695
          %v3994 = vpow.pop %v3993
          %v3995 = vadd.f32 %v3868, 1.0
          %v3996 = vadd.f32 %v3870, 1.0
          %v3997 = vadd.f32 %v3872, 1.0
          %v3998 = vadd.f32 %v3874, 1.0
          %v3999 = vadd.f32 %v3876, 1.0
          %v4000 = vadd.f32 %v3878, 1.0
          %v4001 = vadd.f32 %v3880, 1.0
          %v4002 = vadd.f32 %v3882, 1.0
          %v4003 = vadd.f32 %v3884, 1.0
          %v4004 = vadd.f32 %v3886, 1.0
          %v4005 = vadd.f32 %v3888, 1.0
          %v4006 = vadd.f32 %v3890, 1.0
          %v4007 = vadd.f32 %v3892, 1.0
          %v4008 = vadd.f32 %v3894, 1.0
          %v4009 = vadd.f32 %v3896, 1.0
          %v4010 = vadd.f32 %v3898, 1.0
          %v4011 = vadd.f32 %v3900, 1.0
          %v4012 = vadd.f32 %v3902, 1.0
          %v4013 = vadd.f32 %v3904, 1.0
          %v4014 = vadd.f32 %v3906, 1.0
          %v4015 = vadd.f32 %v3908, 1.0
          %v4016 = vadd.f32 %v3910, 1.0
          %v4017 = vadd.f32 %v3912, 1.0
          %v4018 = vadd.f32 %v3914, 1.0
          %v4019 = vadd.f32 %v3916, 1.0
          %v4020 = vadd.f32 %v3918, 1.0
          %v4021 = vadd.f32 %v3920, 1.0
          %v4022 = vadd.f32 %v3922, 1.0
          %v4023 = vadd.f32 %v3924, 1.0
          %v4024 = vadd.f32 %v3926, 1.0
          %v4025 = vadd.f32 %v3928, 1.0
          %v4026 = vadd.f32 %v3930, 1.0
          %v4027 = vadd.f32 %v3932, 1.0
          %v4028 = vadd.f32 %v3934, 1.0
          %v4029 = vadd.f32 %v3936, 1.0
          %v4030 = vadd.f32 %v3938, 1.0
          %v4031 = vadd.f32 %v3940, 1.0
          %v4032 = vadd.f32 %v3942, 1.0
          %v4033 = vadd.f32 %v3944, 1.0
          %v4034 = vadd.f32 %v3946, 1.0
          %v4035 = vadd.f32 %v3948, 1.0
          %v4036 = vadd.f32 %v3950, 1.0
          %v4037 = vadd.f32 %v3952, 1.0
          %v4038 = vadd.f32 %v3954, 1.0
          %v4039 = vadd.f32 %v3956, 1.0
          %v4040 = vadd.f32 %v3958, 1.0
          %v4041 = vadd.f32 %v3960, 1.0
          %v4042 = vadd.f32 %v3962, 1.0
          %v4043 = vadd.f32 %v3964, 1.0
          %v4044 = vadd.f32 %v3966, 1.0
          %v4045 = vadd.f32 %v3968, 1.0
          %v4046 = vadd.f32 %v3970, 1.0
          %v4047 = vadd.f32 %v3972, 1.0
          %v4048 = vadd.f32 %v3974, 1.0
          %v4049 = vadd.f32 %v3976, 1.0
          %v4050 = vadd.f32 %v3978, 1.0
          %v4051 = vadd.f32 %v3980, 1.0
          %v4052 = vadd.f32 %v3982, 1.0
          %v4053 = vadd.f32 %v3984, 1.0
          %v4054 = vadd.f32 %v3986, 1.0
          %v4055 = vadd.f32 %v3988, 1.0
          %v4056 = vadd.f32 %v3990, 1.0
          %v4057 = vadd.f32 %v3992, 1.0
          %v4058 = vadd.f32 %v3994, 1.0
          %v4059 = vlog2.pop %v3995
          %v4060 = vmul.f32 %v4059, 0.6931472
          %v4061 = vlog2.pop %v3996
          %v4062 = vmul.f32 %v4061, 0.6931472
          %v4063 = vlog2.pop %v3997
          %v4064 = vmul.f32 %v4063, 0.6931472
          %v4065 = vlog2.pop %v3998
          %v4066 = vmul.f32 %v4065, 0.6931472
          %v4067 = vlog2.pop %v3999
          %v4068 = vmul.f32 %v4067, 0.6931472
          %v4069 = vlog2.pop %v4000
          %v4070 = vmul.f32 %v4069, 0.6931472
          %v4071 = vlog2.pop %v4001
          %v4072 = vmul.f32 %v4071, 0.6931472
          %v4073 = vlog2.pop %v4002
          %v4074 = vmul.f32 %v4073, 0.6931472
          %v4075 = vlog2.pop %v4003
          %v4076 = vmul.f32 %v4075, 0.6931472
          %v4077 = vlog2.pop %v4004
          %v4078 = vmul.f32 %v4077, 0.6931472
          %v4079 = vlog2.pop %v4005
          %v4080 = vmul.f32 %v4079, 0.6931472
          %v4081 = vlog2.pop %v4006
          %v4082 = vmul.f32 %v4081, 0.6931472
          %v4083 = vlog2.pop %v4007
          %v4084 = vmul.f32 %v4083, 0.6931472
          %v4085 = vlog2.pop %v4008
          %v4086 = vmul.f32 %v4085, 0.6931472
          %v4087 = vlog2.pop %v4009
          %v4088 = vmul.f32 %v4087, 0.6931472
          %v4089 = vlog2.pop %v4010
          %v4090 = vmul.f32 %v4089, 0.6931472
          %v4091 = vlog2.pop %v4011
          %v4092 = vmul.f32 %v4091, 0.6931472
          %v4093 = vlog2.pop %v4012
          %v4094 = vmul.f32 %v4093, 0.6931472
          %v4095 = vlog2.pop %v4013
          %v4096 = vmul.f32 %v4095, 0.6931472
          %v4097 = vlog2.pop %v4014
          %v4098 = vmul.f32 %v4097, 0.6931472
          %v4099 = vlog2.pop %v4015
          %v4100 = vmul.f32 %v4099, 0.6931472
          %v4101 = vlog2.pop %v4016
          %v4102 = vmul.f32 %v4101, 0.6931472
          %v4103 = vlog2.pop %v4017
          %v4104 = vmul.f32 %v4103, 0.6931472
          %v4105 = vlog2.pop %v4018
          %v4106 = vmul.f32 %v4105, 0.6931472
          %v4107 = vlog2.pop %v4019
          %v4108 = vmul.f32 %v4107, 0.6931472
          %v4109 = vlog2.pop %v4020
          %v4110 = vmul.f32 %v4109, 0.6931472
          %v4111 = vlog2.pop %v4021
          %v4112 = vmul.f32 %v4111, 0.6931472
          %v4113 = vlog2.pop %v4022
          %v4114 = vmul.f32 %v4113, 0.6931472
          %v4115 = vlog2.pop %v4023
          %v4116 = vmul.f32 %v4115, 0.6931472
          %v4117 = vlog2.pop %v4024
          %v4118 = vmul.f32 %v4117, 0.6931472
          %v4119 = vlog2.pop %v4025
          %v4120 = vmul.f32 %v4119, 0.6931472
          %v4121 = vlog2.pop %v4026
          %v4122 = vmul.f32 %v4121, 0.6931472
          %v4123 = vlog2.pop %v4027
          %v4124 = vmul.f32 %v4123, 0.6931472
          %v4125 = vlog2.pop %v4028
          %v4126 = vmul.f32 %v4125, 0.6931472
          %v4127 = vlog2.pop %v4029
          %v4128 = vmul.f32 %v4127, 0.6931472
          %v4129 = vlog2.pop %v4030
          %v4130 = vmul.f32 %v4129, 0.6931472
          %v4131 = vlog2.pop %v4031
          %v4132 = vmul.f32 %v4131, 0.6931472
          %v4133 = vlog2.pop %v4032
          %v4134 = vmul.f32 %v4133, 0.6931472
          %v4135 = vlog2.pop %v4033
          %v4136 = vmul.f32 %v4135, 0.6931472
          %v4137 = vlog2.pop %v4034
          %v4138 = vmul.f32 %v4137, 0.6931472
          %v4139 = vlog2.pop %v4035
          %v4140 = vmul.f32 %v4139, 0.6931472
          %v4141 = vlog2.pop %v4036
          %v4142 = vmul.f32 %v4141, 0.6931472
          %v4143 = vlog2.pop %v4037
          %v4144 = vmul.f32 %v4143, 0.6931472
          %v4145 = vlog2.pop %v4038
          %v4146 = vmul.f32 %v4145, 0.6931472
          %v4147 = vlog2.pop %v4039
          %v4148 = vmul.f32 %v4147, 0.6931472
          %v4149 = vlog2.pop %v4040
          %v4150 = vmul.f32 %v4149, 0.6931472
          %v4151 = vlog2.pop %v4041
          %v4152 = vmul.f32 %v4151, 0.6931472
          %v4153 = vlog2.pop %v4042
          %v4154 = vmul.f32 %v4153, 0.6931472
          %v4155 = vlog2.pop %v4043
          %v4156 = vmul.f32 %v4155, 0.6931472
          %v4157 = vlog2.pop %v4044
          %v4158 = vmul.f32 %v4157, 0.6931472
          %v4159 = vlog2.pop %v4045
          %v4160 = vmul.f32 %v4159, 0.6931472
          %v4161 = vlog2.pop %v4046
          %v4162 = vmul.f32 %v4161, 0.6931472
          %v4163 = vlog2.pop %v4047
          %v4164 = vmul.f32 %v4163, 0.6931472
          %v4165 = vlog2.pop %v4048
          %v4166 = vmul.f32 %v4165, 0.6931472
          %v4167 = vlog2.pop %v4049
          %v4168 = vmul.f32 %v4167, 0.6931472
          %v4169 = vlog2.pop %v4050
          %v4170 = vmul.f32 %v4169, 0.6931472
          %v4171 = vlog2.pop %v4051
          %v4172 = vmul.f32 %v4171, 0.6931472
          %v4173 = vlog2.pop %v4052
          %v4174 = vmul.f32 %v4173, 0.6931472
          %v4175 = vlog2.pop %v4053
          %v4176 = vmul.f32 %v4175, 0.6931472
          %v4177 = vlog2.pop %v4054
          %v4178 = vmul.f32 %v4177, 0.6931472
          %v4179 = vlog2.pop %v4055
          %v4180 = vmul.f32 %v4179, 0.6931472
          %v4181 = vlog2.pop %v4056
          %v4182 = vmul.f32 %v4181, 0.6931472
          %v4183 = vlog2.pop %v4057
          %v4184 = vmul.f32 %v4183, 0.6931472
          %v4185 = vlog2.pop %v4058
          %v4186 = vmul.f32 %v4185, 0.6931472
          %v4187 = vadd.f32 %v3675, %v4060
          %v4188 = vadd.f32 %v3676, %v4062
          %v4189 = vadd.f32 %v3677, %v4064
          %v4190 = vadd.f32 %v3678, %v4066
          %v4191 = vadd.f32 %v3679, %v4068
          %v4192 = vadd.f32 %v3680, %v4070
          %v4193 = vadd.f32 %v3681, %v4072
          %v4194 = vadd.f32 %v3682, %v4074
          %v4195 = vadd.f32 %v3683, %v4076
          %v4196 = vadd.f32 %v3684, %v4078
          %v4197 = vadd.f32 %v3685, %v4080
          %v4198 = vadd.f32 %v3686, %v4082
          %v4199 = vadd.f32 %v3687, %v4084
          %v4200 = vadd.f32 %v3688, %v4086
          %v4201 = vadd.f32 %v3689, %v4088
          %v4202 = vadd.f32 %v3690, %v4090
          %v4203 = vadd.f32 %v3691, %v4092
          %v4204 = vadd.f32 %v3692, %v4094
          %v4205 = vadd.f32 %v3693, %v4096
          %v4206 = vadd.f32 %v3694, %v4098
          %v4207 = vadd.f32 %v3695, %v4100
          %v4208 = vadd.f32 %v3696, %v4102
          %v4209 = vadd.f32 %v3697, %v4104
          %v4210 = vadd.f32 %v3698, %v4106
          %v4211 = vadd.f32 %v3699, %v4108
          %v4212 = vadd.f32 %v3700, %v4110
          %v4213 = vadd.f32 %v3701, %v4112
          %v4214 = vadd.f32 %v3702, %v4114
          %v4215 = vadd.f32 %v3703, %v4116
          %v4216 = vadd.f32 %v3704, %v4118
          %v4217 = vadd.f32 %v3705, %v4120
          %v4218 = vadd.f32 %v3706, %v4122
          %v4219 = vadd.f32 %v3707, %v4124
          %v4220 = vadd.f32 %v3708, %v4126
          %v4221 = vadd.f32 %v3709, %v4128
          %v4222 = vadd.f32 %v3710, %v4130
          %v4223 = vadd.f32 %v3711, %v4132
          %v4224 = vadd.f32 %v3712, %v4134
          %v4225 = vadd.f32 %v3713, %v4136
          %v4226 = vadd.f32 %v3714, %v4138
          %v4227 = vadd.f32 %v3715, %v4140
          %v4228 = vadd.f32 %v3716, %v4142
          %v4229 = vadd.f32 %v3717, %v4144
          %v4230 = vadd.f32 %v3718, %v4146
          %v4231 = vadd.f32 %v3719, %v4148
          %v4232 = vadd.f32 %v3720, %v4150
          %v4233 = vadd.f32 %v3721, %v4152
          %v4234 = vadd.f32 %v3722, %v4154
          %v4235 = vadd.f32 %v3723, %v4156
          %v4236 = vadd.f32 %v3724, %v4158
          %v4237 = vadd.f32 %v3725, %v4160
          %v4238 = vadd.f32 %v3726, %v4162
          %v4239 = vadd.f32 %v3727, %v4164
          %v4240 = vadd.f32 %v3728, %v4166
          %v4241 = vadd.f32 %v3729, %v4168
          %v4242 = vadd.f32 %v3730, %v4170
          %v4243 = vadd.f32 %v3731, %v4172
          %v4244 = vadd.f32 %v3732, %v4174
          %v4245 = vadd.f32 %v3733, %v4176
          %v4246 = vadd.f32 %v3734, %v4178
          %v4247 = vadd.f32 %v3735, %v4180
          %v4248 = vadd.f32 %v3736, %v4182
          %v4249 = vadd.f32 %v3737, %v4184
          %v4250 = vadd.f32 %v3738, %v4186
          %v4251 = vsub.f32 %v4187, 0.6931472
          %v4252 = vsub.f32 %v4188, 0.6931472
          %v4253 = vsub.f32 %v4189, 0.6931472
          %v4254 = vsub.f32 %v4190, 0.6931472
          %v4255 = vsub.f32 %v4191, 0.6931472
          %v4256 = vsub.f32 %v4192, 0.6931472
          %v4257 = vsub.f32 %v4193, 0.6931472
          %v4258 = vsub.f32 %v4194, 0.6931472
          %v4259 = vsub.f32 %v4195, 0.6931472
          %v4260 = vsub.f32 %v4196, 0.6931472
          %v4261 = vsub.f32 %v4197, 0.6931472
          %v4262 = vsub.f32 %v4198, 0.6931472
          %v4263 = vsub.f32 %v4199, 0.6931472
          %v4264 = vsub.f32 %v4200, 0.6931472
          %v4265 = vsub.f32 %v4201, 0.6931472
          %v4266 = vsub.f32 %v4202, 0.6931472
          %v4267 = vsub.f32 %v4203, 0.6931472
          %v4268 = vsub.f32 %v4204, 0.6931472
          %v4269 = vsub.f32 %v4205, 0.6931472
          %v4270 = vsub.f32 %v4206, 0.6931472
          %v4271 = vsub.f32 %v4207, 0.6931472
          %v4272 = vsub.f32 %v4208, 0.6931472
          %v4273 = vsub.f32 %v4209, 0.6931472
          %v4274 = vsub.f32 %v4210, 0.6931472
          %v4275 = vsub.f32 %v4211, 0.6931472
          %v4276 = vsub.f32 %v4212, 0.6931472
          %v4277 = vsub.f32 %v4213, 0.6931472
          %v4278 = vsub.f32 %v4214, 0.6931472
          %v4279 = vsub.f32 %v4215, 0.6931472
          %v4280 = vsub.f32 %v4216, 0.6931472
          %v4281 = vsub.f32 %v4217, 0.6931472
          %v4282 = vsub.f32 %v4218, 0.6931472
          %v4283 = vsub.f32 %v4219, 0.6931472
          %v4284 = vsub.f32 %v4220, 0.6931472
          %v4285 = vsub.f32 %v4221, 0.6931472
          %v4286 = vsub.f32 %v4222, 0.6931472
          %v4287 = vsub.f32 %v4223, 0.6931472
          %v4288 = vsub.f32 %v4224, 0.6931472
          %v4289 = vsub.f32 %v4225, 0.6931472
          %v4290 = vsub.f32 %v4226, 0.6931472
          %v4291 = vsub.f32 %v4227, 0.6931472
          %v4292 = vsub.f32 %v4228, 0.6931472
          %v4293 = vsub.f32 %v4229, 0.6931472
          %v4294 = vsub.f32 %v4230, 0.6931472
          %v4295 = vsub.f32 %v4231, 0.6931472
          %v4296 = vsub.f32 %v4232, 0.6931472
          %v4297 = vsub.f32 %v4233, 0.6931472
          %v4298 = vsub.f32 %v4234, 0.6931472
          %v4299 = vsub.f32 %v4235, 0.6931472
          %v4300 = vsub.f32 %v4236, 0.6931472
          %v4301 = vsub.f32 %v4237, 0.6931472
          %v4302 = vsub.f32 %v4238, 0.6931472
          %v4303 = vsub.f32 %v4239, 0.6931472
          %v4304 = vsub.f32 %v4240, 0.6931472
          %v4305 = vsub.f32 %v4241, 0.6931472
          %v4306 = vsub.f32 %v4242, 0.6931472
          %v4307 = vsub.f32 %v4243, 0.6931472
          %v4308 = vsub.f32 %v4244, 0.6931472
          %v4309 = vsub.f32 %v4245, 0.6931472
          %v4310 = vsub.f32 %v4246, 0.6931472
          %v4311 = vsub.f32 %v4247, 0.6931472
          %v4312 = vsub.f32 %v4248, 0.6931472
          %v4313 = vsub.f32 %v4249, 0.6931472
          %v4314 = vsub.f32 %v4250, 0.6931472
          %v4315 = vpack.c.bf16 %v4252, %v4251
          %v4316 = vpack.c.bf16 %v4254, %v4253
          %v4317 = vpack.c.bf16 %v4256, %v4255
          %v4318 = vpack.c.bf16 %v4258, %v4257
          %v4319 = vpack.c.bf16 %v4260, %v4259
          %v4320 = vpack.c.bf16 %v4262, %v4261
          %v4321 = vpack.c.bf16 %v4264, %v4263
          %v4322 = vpack.c.bf16 %v4266, %v4265
          %v4323 = vpack.c.bf16 %v4268, %v4267
          %v4324 = vpack.c.bf16 %v4270, %v4269
          %v4325 = vpack.c.bf16 %v4272, %v4271
          %v4326 = vpack.c.bf16 %v4274, %v4273
          %v4327 = vpack.c.bf16 %v4276, %v4275
          %v4328 = vpack.c.bf16 %v4278, %v4277
          %v4329 = vpack.c.bf16 %v4280, %v4279
          %v4330 = vpack.c.bf16 %v4282, %v4281
          %v4331 = vpack.c.bf16 %v4284, %v4283
          %v4332 = vpack.c.bf16 %v4286, %v4285
          %v4333 = vpack.c.bf16 %v4288, %v4287
          %v4334 = vpack.c.bf16 %v4290, %v4289
          %v4335 = vpack.c.bf16 %v4292, %v4291
          %v4336 = vpack.c.bf16 %v4294, %v4293
          %v4337 = vpack.c.bf16 %v4296, %v4295
          %v4338 = vpack.c.bf16 %v4298, %v4297
          %v4339 = vpack.c.bf16 %v4300, %v4299
          %v4340 = vpack.c.bf16 %v4302, %v4301
          %v4341 = vpack.c.bf16 %v4304, %v4303
          %v4342 = vpack.c.bf16 %v4306, %v4305
          %v4343 = vpack.c.bf16 %v4308, %v4307
          %v4344 = vpack.c.bf16 %v4310, %v4309
          %v4345 = vpack.c.bf16 %v4312, %v4311
          %v4346 = vpack.c.bf16 %v4314, %v4313
          %v4347 = vld [vmem:[%s948] sm:$0xf]
          %v4348 = vld [vmem:[%s948 + $0x4] sm:$0xf]
          %v4349 = vld [vmem:[%s948 + $0x8] sm:$0xf]
          %v4350 = vld [vmem:[%s948 + $0xc] sm:$0xf]
          %v4351 = vld [vmem:[%s948 + $0x10] sm:$0xf]
          %v4352 = vld [vmem:[%s948 + $0x14] sm:$0xf]
          %v4353 = vld [vmem:[%s948 + $0x18] sm:$0xf]
          %v4354 = vld [vmem:[%s948 + $0x1c] sm:$0xf]
          %v4355 = vld [vmem:[%s948 + $0x20] sm:$0xf]
          %v4356 = vld [vmem:[%s948 + $0x24] sm:$0xf]
          %v4357 = vld [vmem:[%s948 + $0x28] sm:$0xf]
          %v4358 = vld [vmem:[%s948 + $0x2c] sm:$0xf]
          %v4359 = vld [vmem:[%s948 + $0x30] sm:$0xf]
          %v4360 = vld [vmem:[%s948 + $0x34] sm:$0xf]
          %v4361 = vld [vmem:[%s948 + $0x38] sm:$0xf]
          %v4362 = vld [vmem:[%s948 + $0x3c] sm:$0xf]
          %v4363 = vlaneseq
          %v4364 = vshrl.u32 %v4363, 7
          %v4365 = vsub.s32 1, %v4364
          %v4366 = vrot.slane %v1190, %v4365
          %v4383 = vunpack.c.l.b16 %v4347
          %v4384 = vunpack.c.l.b16 %v4348
          %v4385 = vunpack.c.l.b16 %v4349
          %v4386 = vunpack.c.l.b16 %v4350
          %v4387 = vunpack.c.l.b16 %v4351
          %v4388 = vunpack.c.l.b16 %v4352
          %v4389 = vunpack.c.l.b16 %v4353
          %v4390 = vunpack.c.l.b16 %v4354
          %v4391 = vunpack.c.l.b16 %v4355
          %v4392 = vunpack.c.l.b16 %v4356
          %v4393 = vunpack.c.l.b16 %v4357
          %v4394 = vunpack.c.l.b16 %v4358
          %v4395 = vunpack.c.l.b16 %v4359
          %v4396 = vunpack.c.l.b16 %v4360
          %v4397 = vunpack.c.l.b16 %v4361
          %v4398 = vunpack.c.l.b16 %v4362
          %v4399 = vpack.c.b16 %v4384, %v4383
          %v4400 = vpack.c.b16 %v4386, %v4385
          %v4401 = vpack.c.b16 %v4388, %v4387
          %v4402 = vpack.c.b16 %v4390, %v4389
          %v4403 = vpack.c.b16 %v4392, %v4391
          %v4404 = vpack.c.b16 %v4394, %v4393
          %v4405 = vpack.c.b16 %v4396, %v4395
          %v4406 = vpack.c.b16 %v4398, %v4397
          %4415 = vmatprep.subr.bf16.mxu0 0
          %4416 = vmatpush1.bf16.msra.mxu0 %v4399
          %4417 = vmatprep.subr.bf16.mxu0 0
          %4418 = vmatpush1.bf16.msra.mxu0 %v4400
          %4419 = vmatprep.subr.bf16.mxu0 0
          %4420 = vmatpush1.bf16.msra.mxu0 %v4401
          %4421 = vmatprep.subr.bf16.mxu0 0
          %4422 = vmatpush1.bf16.msra.mxu0 %v4402
          %4423 = vmatprep.subr.bf16.mxu0 0
          %4424 = vmatpush1.bf16.msra.mxu0 %v4403
          %4425 = vmatprep.subr.bf16.mxu0 0
          %4426 = vmatpush1.bf16.msra.mxu0 %v4404
          %4427 = vmatprep.subr.bf16.mxu0 0
          %4428 = vmatpush1.bf16.msra.mxu0 %v4405
          %4429 = vmatprep.subr.bf16.mxu0 0
          %4430 = vmatpush1.bf16.msra.mxu0 %v4406
          %4431 = vmatprep.subr.bf16.mxu0 0
          %4432 = vmatpush1.bf16.msra.mxu0 0
          %4433 = vmatprep.subr.bf16.mxu0 0
          %4434 = vmatpush1.bf16.msra.mxu0 0
          %4435 = vmatprep.subr.bf16.mxu0 0
          %4436 = vmatpush1.bf16.msra.mxu0 0
          %4437 = vmatprep.subr.bf16.mxu0 0
          %4438 = vmatpush1.bf16.msra.mxu0 0
          %4439 = vmatprep.subr.bf16.mxu0 0
          %4440 = vmatpush1.bf16.msra.mxu0 0
          %4441 = vmatprep.subr.bf16.mxu0 0
          %4442 = vmatpush1.bf16.msra.mxu0 0
          %4443 = vmatprep.subr.bf16.mxu0 0
          %4444 = vmatpush1.bf16.msra.mxu0 0
          %4445 = vmatprep.subr.bf16.mxu0 0
          %4446 = vmatpush1.bf16.msra.mxu0 0
          %4447 = vmatprep.mubr.bf16.mxu0 0
          %4448 = vmatmul.mubr.bf16.gmra.mrb[0].mxu0 %v4315
          %v4449 = vpop.f32.mrb[0].mxu0
          %v4450 = vadd.f32 %v4366, %v4449
          %v4451 = vpop.f32.mrb[0].mxu0
          %v4452 = vpop.f32.mrb[0].mxu0
          %v4453 = vadd.f32 %v4366, %v4452
          %v4454 = vpop.f32.mrb[0].mxu0
          %4455 = vmatprep.mubr.bf16.mxu0 0
          %4456 = vmatmul.mubr.bf16.gmra.mrb[0].mxu0 %v4316
          %v4457 = vpop.f32.mrb[0].mxu0
          %v4458 = vadd.f32 %v4366, %v4457
          %v4459 = vpop.f32.mrb[0].mxu0
          %v4460 = vpop.f32.mrb[0].mxu0
          %v4461 = vadd.f32 %v4366, %v4460
          %v4462 = vpop.f32.mrb[0].mxu0
          %4463 = vmatprep.mubr.bf16.mxu0 0
          %4464 = vmatmul.mubr.bf16.gmra.mrb[0].mxu0 %v4317
          %v4465 = vpop.f32.mrb[0].mxu0
          %v4466 = vadd.f32 %v4366, %v4465
          %v4467 = vpop.f32.mrb[0].mxu0
          %v4468 = vpop.f32.mrb[0].mxu0
          %v4469 = vadd.f32 %v4366, %v4468
          %v4470 = vpop.f32.mrb[0].mxu0
          %4471 = vmatprep.mubr.bf16.mxu0 0
          %4472 = vmatmul.mubr.bf16.gmra.mrb[0].mxu0 %v4318
          %v4473 = vpop.f32.mrb[0].mxu0
          %v4474 = vadd.f32 %v4366, %v4473
          %v4475 = vpop.f32.mrb[0].mxu0
          %v4476 = vpop.f32.mrb[0].mxu0
          %v4477 = vadd.f32 %v4366, %v4476
          %v4478 = vpop.f32.mrb[0].mxu0
          %4479 = vmatprep.mubr.bf16.mxu0 0
          %4480 = vmatmul.mubr.bf16.gmra.mrb[0].mxu0 %v4319
          %v4481 = vpop.f32.mrb[0].mxu0
          %v4482 = vadd.f32 %v4366, %v4481
          %v4483 = vpop.f32.mrb[0].mxu0
          %v4484 = vpop.f32.mrb[0].mxu0
          %v4485 = vadd.f32 %v4366, %v4484
          %v4486 = vpop.f32.mrb[0].mxu0
          %4487 = vmatprep.mubr.bf16.mxu0 0
          %4488 = vmatmul.mubr.bf16.gmra.mrb[0].mxu0 %v4320
          %v4489 = vpop.f32.mrb[0].mxu0
          %v4490 = vadd.f32 %v4366, %v4489
          %v4491 = vpop.f32.mrb[0].mxu0
          %v4492 = vpop.f32.mrb[0].mxu0
          %v4493 = vadd.f32 %v4366, %v4492
          %v4494 = vpop.f32.mrb[0].mxu0
          %4495 = vmatprep.mubr.bf16.mxu0 0
          %4496 = vmatmul.mubr.bf16.gmra.mrb[0].mxu0 %v4321
          %v4497 = vpop.f32.mrb[0].mxu0
          %v4498 = vadd.f32 %v4366, %v4497
          %v4499 = vpop.f32.mrb[0].mxu0
          %v4500 = vpop.f32.mrb[0].mxu0
          %v4501 = vadd.f32 %v4366, %v4500
          %v4502 = vpop.f32.mrb[0].mxu0
          %4503 = vmatprep.mubr.bf16.mxu0 0
          %4504 = vmatmul.mubr.bf16.gmra.mrb[0].mxu0 %v4322
          %v4505 = vpop.f32.mrb[0].mxu0
          %v4506 = vadd.f32 %v4366, %v4505
          %v4507 = vpop.f32.mrb[0].mxu0
          %v4508 = vpop.f32.mrb[0].mxu0
          %v4509 = vadd.f32 %v4366, %v4508
          %v4510 = vpop.f32.mrb[0].mxu0
          %4511 = vmatprep.mubr.bf16.mxu0 0
          %4512 = vmatmul.mubr.bf16.gmra.mrb[0].mxu0 %v4323
          %v4513 = vpop.f32.mrb[0].mxu0
          %v4514 = vadd.f32 %v4366, %v4513
          %v4515 = vpop.f32.mrb[0].mxu0
          %v4516 = vpop.f32.mrb[0].mxu0
          %v4517 = vadd.f32 %v4366, %v4516
          %v4518 = vpop.f32.mrb[0].mxu0
          %4519 = vmatprep.mubr.bf16.mxu0 0
          %4520 = vmatmul.mubr.bf16.gmra.mrb[0].mxu0 %v4324
          %v4521 = vpop.f32.mrb[0].mxu0
          %v4522 = vadd.f32 %v4366, %v4521
          %v4523 = vpop.f32.mrb[0].mxu0
          %v4524 = vpop.f32.mrb[0].mxu0
          %v4525 = vadd.f32 %v4366, %v4524
          %v4526 = vpop.f32.mrb[0].mxu0
          %4527 = vmatprep.mubr.bf16.mxu0 0
          %4528 = vmatmul.mubr.bf16.gmra.mrb[0].mxu0 %v4325
          %v4529 = vpop.f32.mrb[0].mxu0
          %v4530 = vadd.f32 %v4366, %v4529
          %v4531 = vpop.f32.mrb[0].mxu0
          %v4532 = vpop.f32.mrb[0].mxu0
          %v4533 = vadd.f32 %v4366, %v4532
          %v4534 = vpop.f32.mrb[0].mxu0
          %4535 = vmatprep.mubr.bf16.mxu0 0
          %4536 = vmatmul.mubr.bf16.gmra.mrb[0].mxu0 %v4326
          %v4537 = vpop.f32.mrb[0].mxu0
          %v4538 = vadd.f32 %v4366, %v4537
          %v4539 = vpop.f32.mrb[0].mxu0
          %v4540 = vpop.f32.mrb[0].mxu0
          %v4541 = vadd.f32 %v4366, %v4540
          %v4542 = vpop.f32.mrb[0].mxu0
          %4543 = vmatprep.mubr.bf16.mxu0 0
          %4544 = vmatmul.mubr.bf16.gmra.mrb[0].mxu0 %v4327
          %v4545 = vpop.f32.mrb[0].mxu0
          %v4546 = vadd.f32 %v4366, %v4545
          %v4547 = vpop.f32.mrb[0].mxu0
          %v4548 = vpop.f32.mrb[0].mxu0
          %v4549 = vadd.f32 %v4366, %v4548
          %v4550 = vpop.f32.mrb[0].mxu0
          %4551 = vmatprep.mubr.bf16.mxu0 0
          %4552 = vmatmul.mubr.bf16.gmra.mrb[0].mxu0 %v4328
          %v4553 = vpop.f32.mrb[0].mxu0
          %v4554 = vadd.f32 %v4366, %v4553
          %v4555 = vpop.f32.mrb[0].mxu0
          %v4556 = vpop.f32.mrb[0].mxu0
          %v4557 = vadd.f32 %v4366, %v4556
          %v4558 = vpop.f32.mrb[0].mxu0
          %4559 = vmatprep.mubr.bf16.mxu0 0
          %4560 = vmatmul.mubr.bf16.gmra.mrb[0].mxu0 %v4329
          %v4561 = vpop.f32.mrb[0].mxu0
          %v4562 = vadd.f32 %v4366, %v4561
          %v4563 = vpop.f32.mrb[0].mxu0
          %v4564 = vpop.f32.mrb[0].mxu0
          %v4565 = vadd.f32 %v4366, %v4564
          %v4566 = vpop.f32.mrb[0].mxu0
          %4567 = vmatprep.mubr.bf16.mxu0 0
          %4568 = vmatmul.mubr.bf16.gmra.mrb[0].mxu0 %v4330
          %v4569 = vpop.f32.mrb[0].mxu0
          %v4570 = vadd.f32 %v4366, %v4569
          %v4571 = vpop.f32.mrb[0].mxu0
          %v4572 = vpop.f32.mrb[0].mxu0
          %v4573 = vadd.f32 %v4366, %v4572
          %v4574 = vpop.f32.mrb[0].mxu0
          %4575 = vmatprep.mubr.bf16.mxu0 0
          %4576 = vmatmul.mubr.bf16.gmra.mrb[0].mxu0 %v4331
          %v4577 = vpop.f32.mrb[0].mxu0
          %v4578 = vadd.f32 %v4366, %v4577
          %v4579 = vpop.f32.mrb[0].mxu0
          %v4580 = vpop.f32.mrb[0].mxu0
          %v4581 = vadd.f32 %v4366, %v4580
          %v4582 = vpop.f32.mrb[0].mxu0
          %4583 = vmatprep.mubr.bf16.mxu0 0
          %4584 = vmatmul.mubr.bf16.gmra.mrb[0].mxu0 %v4332
          %v4585 = vpop.f32.mrb[0].mxu0
          %v4586 = vadd.f32 %v4366, %v4585
          %v4587 = vpop.f32.mrb[0].mxu0
          %v4588 = vpop.f32.mrb[0].mxu0
          %v4589 = vadd.f32 %v4366, %v4588
          %v4590 = vpop.f32.mrb[0].mxu0
          %4591 = vmatprep.mubr.bf16.mxu0 0
          %4592 = vmatmul.mubr.bf16.gmra.mrb[0].mxu0 %v4333
          %v4593 = vpop.f32.mrb[0].mxu0
          %v4594 = vadd.f32 %v4366, %v4593
          %v4595 = vpop.f32.mrb[0].mxu0
          %v4596 = vpop.f32.mrb[0].mxu0
          %v4597 = vadd.f32 %v4366, %v4596
          %v4598 = vpop.f32.mrb[0].mxu0
          %4599 = vmatprep.mubr.bf16.mxu0 0
          %4600 = vmatmul.mubr.bf16.gmra.mrb[0].mxu0 %v4334
          %v4601 = vpop.f32.mrb[0].mxu0
          %v4602 = vadd.f32 %v4366, %v4601
          %v4603 = vpop.f32.mrb[0].mxu0
          %v4604 = vpop.f32.mrb[0].mxu0
          %v4605 = vadd.f32 %v4366, %v4604
          %v4606 = vpop.f32.mrb[0].mxu0
          %4607 = vmatprep.mubr.bf16.mxu0 0
          %4608 = vmatmul.mubr.bf16.gmra.mrb[0].mxu0 %v4335
          %v4609 = vpop.f32.mrb[0].mxu0
          %v4610 = vadd.f32 %v4366, %v4609
          %v4611 = vpop.f32.mrb[0].mxu0
          %v4612 = vpop.f32.mrb[0].mxu0
          %v4613 = vadd.f32 %v4366, %v4612
          %v4614 = vpop.f32.mrb[0].mxu0
          %4615 = vmatprep.mubr.bf16.mxu0 0
          %4616 = vmatmul.mubr.bf16.gmra.mrb[0].mxu0 %v4336
          %v4617 = vpop.f32.mrb[0].mxu0
          %v4618 = vadd.f32 %v4366, %v4617
          %v4619 = vpop.f32.mrb[0].mxu0
          %v4620 = vpop.f32.mrb[0].mxu0
          %v4621 = vadd.f32 %v4366, %v4620
          %v4622 = vpop.f32.mrb[0].mxu0
          %4623 = vmatprep.mubr.bf16.mxu0 0
          %4624 = vmatmul.mubr.bf16.gmra.mrb[0].mxu0 %v4337
          %v4625 = vpop.f32.mrb[0].mxu0
          %v4626 = vadd.f32 %v4366, %v4625
          %v4627 = vpop.f32.mrb[0].mxu0
          %v4628 = vpop.f32.mrb[0].mxu0
          %v4629 = vadd.f32 %v4366, %v4628
          %v4630 = vpop.f32.mrb[0].mxu0
          %4631 = vmatprep.mubr.bf16.mxu0 0
          %4632 = vmatmul.mubr.bf16.gmra.mrb[0].mxu0 %v4338
          %v4633 = vpop.f32.mrb[0].mxu0
          %v4634 = vadd.f32 %v4366, %v4633
          %v4635 = vpop.f32.mrb[0].mxu0
          %v4636 = vpop.f32.mrb[0].mxu0
          %v4637 = vadd.f32 %v4366, %v4636
          %v4638 = vpop.f32.mrb[0].mxu0
          %4639 = vmatprep.mubr.bf16.mxu0 0
          %4640 = vmatmul.mubr.bf16.gmra.mrb[0].mxu0 %v4339
          %v4641 = vpop.f32.mrb[0].mxu0
          %v4642 = vadd.f32 %v4366, %v4641
          %v4643 = vpop.f32.mrb[0].mxu0
          %v4644 = vpop.f32.mrb[0].mxu0
          %v4645 = vadd.f32 %v4366, %v4644
          %v4646 = vpop.f32.mrb[0].mxu0
          %4647 = vmatprep.mubr.bf16.mxu0 0
          %4648 = vmatmul.mubr.bf16.gmra.mrb[0].mxu0 %v4340
          %v4649 = vpop.f32.mrb[0].mxu0
          %v4650 = vadd.f32 %v4366, %v4649
          %v4651 = vpop.f32.mrb[0].mxu0
          %v4652 = vpop.f32.mrb[0].mxu0
          %v4653 = vadd.f32 %v4366, %v4652
          %v4654 = vpop.f32.mrb[0].mxu0
          %4655 = vmatprep.mubr.bf16.mxu0 0
          %4656 = vmatmul.mubr.bf16.gmra.mrb[0].mxu0 %v4341
          %v4657 = vpop.f32.mrb[0].mxu0
          %v4658 = vadd.f32 %v4366, %v4657
          %v4659 = vpop.f32.mrb[0].mxu0
          %v4660 = vpop.f32.mrb[0].mxu0
          %v4661 = vadd.f32 %v4366, %v4660
          %v4662 = vpop.f32.mrb[0].mxu0
          %4663 = vmatprep.mubr.bf16.mxu0 0
          %4664 = vmatmul.mubr.bf16.gmra.mrb[0].mxu0 %v4342
          %v4665 = vpop.f32.mrb[0].mxu0
          %v4666 = vadd.f32 %v4366, %v4665
          %v4667 = vpop.f32.mrb[0].mxu0
          %v4668 = vpop.f32.mrb[0].mxu0
          %v4669 = vadd.f32 %v4366, %v4668
          %v4670 = vpop.f32.mrb[0].mxu0
          %4671 = vmatprep.mubr.bf16.mxu0 0
          %4672 = vmatmul.mubr.bf16.gmra.mrb[0].mxu0 %v4343
          %v4673 = vpop.f32.mrb[0].mxu0
          %v4674 = vadd.f32 %v4366, %v4673
          %v4675 = vpop.f32.mrb[0].mxu0
          %v4676 = vpop.f32.mrb[0].mxu0
          %v4677 = vadd.f32 %v4366, %v4676
          %v4678 = vpop.f32.mrb[0].mxu0
          %4679 = vmatprep.mubr.bf16.mxu0 0
          %4680 = vmatmul.mubr.bf16.gmra.mrb[0].mxu0 %v4344
          %v4681 = vpop.f32.mrb[0].mxu0
          %v4682 = vadd.f32 %v4366, %v4681
          %v4683 = vpop.f32.mrb[0].mxu0
          %v4684 = vpop.f32.mrb[0].mxu0
          %v4685 = vadd.f32 %v4366, %v4684
          %v4686 = vpop.f32.mrb[0].mxu0
          %4687 = vmatprep.mubr.bf16.mxu0 0
          %4688 = vmatmul.mubr.bf16.gmra.mrb[0].mxu0 %v4345
          %v4689 = vpop.f32.mrb[0].mxu0
          %v4690 = vadd.f32 %v4366, %v4689
          %v4691 = vpop.f32.mrb[0].mxu0
          %v4692 = vpop.f32.mrb[0].mxu0
          %v4693 = vadd.f32 %v4366, %v4692
          %v4694 = vpop.f32.mrb[0].mxu0
          %4695 = vmatprep.mubr.bf16.mxu0 0
          %4696 = vmatmul.mubr.bf16.gmra.mrb[0].mxu0 %v4346
          %v4697 = vpop.f32.mrb[0].mxu0
          %v4698 = vadd.f32 %v4366, %v4697
          %v4699 = vpop.f32.mrb[0].mxu0
          %v4700 = vpop.f32.mrb[0].mxu0
          %v4701 = vadd.f32 %v4366, %v4700
          %v4702 = vpop.f32.mrb[0].mxu0
          %4703 = vdwg.mxu0
          %v4704 = vld [vmem:[#allocation2] sm:$0xff]
          %v4705 = vld [vmem:[#allocation2 + $0x8] sm:$0xff]
          %vm4706 = vcmask 261120
          %v4708 = vsel %vm4706, %v2556, 0
          %v4711 = vsel %vm4706, %v2557, 0
          %v4714 = vsel %vm4706, %v2558, 0
          %v4717 = vsel %vm4706, %v2559, 0
          %v4720 = vsel %vm4706, %v2560, 0
          %v4723 = vsel %vm4706, %v2561, 0
          %v4726 = vsel %vm4706, %v2562, 0
          %v4729 = vsel %vm4706, %v2563, 0
          %v4732 = vsel %vm4706, %v2564, 0
          %v4735 = vsel %vm4706, %v2565, 0
          %v4738 = vsel %vm4706, %v2566, 0
          %v4741 = vsel %vm4706, %v2567, 0
          %v4744 = vsel %vm4706, %v2568, 0
          %v4747 = vsel %vm4706, %v2569, 0
          %v4750 = vsel %vm4706, %v2570, 0
          %v4753 = vsel %vm4706, %v2571, 0
          %v4756 = vsel %vm4706, %v2572, 0
          %v4759 = vsel %vm4706, %v2573, 0
          %v4762 = vsel %vm4706, %v2574, 0
          %v4765 = vsel %vm4706, %v2575, 0
          %v4768 = vsel %vm4706, %v2576, 0
          %v4771 = vsel %vm4706, %v2577, 0
          %v4774 = vsel %vm4706, %v2578, 0
          %v4777 = vsel %vm4706, %v2579, 0
          %v4780 = vsel %vm4706, %v2580, 0
          %v4783 = vsel %vm4706, %v2581, 0
          %v4786 = vsel %vm4706, %v2582, 0
          %v4789 = vsel %vm4706, %v2583, 0
          %v4792 = vsel %vm4706, %v2584, 0
          %v4795 = vsel %vm4706, %v2585, 0
          %v4798 = vsel %vm4706, %v2586, 0
          %v4801 = vsel %vm4706, %v2587, 0
          %v4804 = vsel %vm4706, %v2588, 0
          %v4807 = vsel %vm4706, %v2589, 0
          %v4810 = vsel %vm4706, %v2590, 0
          %v4813 = vsel %vm4706, %v2591, 0
          %v4816 = vsel %vm4706, %v2592, 0
          %v4819 = vsel %vm4706, %v2593, 0
          %v4822 = vsel %vm4706, %v2594, 0
          %v4825 = vsel %vm4706, %v2595, 0
          %v4828 = vsel %vm4706, %v2596, 0
          %v4831 = vsel %vm4706, %v2597, 0
          %v4834 = vsel %vm4706, %v2598, 0
          %v4837 = vsel %vm4706, %v2599, 0
          %v4840 = vsel %vm4706, %v2600, 0
          %v4843 = vsel %vm4706, %v2601, 0
          %v4846 = vsel %vm4706, %v2602, 0
          %v4849 = vsel %vm4706, %v2603, 0
          %v4852 = vsel %vm4706, %v2604, 0
          %v4855 = vsel %vm4706, %v2605, 0
          %v4858 = vsel %vm4706, %v2606, 0
          %v4861 = vsel %vm4706, %v2607, 0
          %v4864 = vsel %vm4706, %v2608, 0
          %v4867 = vsel %vm4706, %v2609, 0
          %v4870 = vsel %vm4706, %v2610, 0
          %v4873 = vsel %vm4706, %v2611, 0
          %v4876 = vsel %vm4706, %v2612, 0
          %v4879 = vsel %vm4706, %v2613, 0
          %v4882 = vsel %vm4706, %v2614, 0
          %v4885 = vsel %vm4706, %v2615, 0
          %v4888 = vsel %vm4706, %v2616, 0
          %v4891 = vsel %vm4706, %v2617, 0
          %v4894 = vsel %vm4706, %v2618, 0
          %v4897 = vsel %vm4706, %v2619, 0
          %4899 = vmatprep.subr.bf16.mxu0 0
          %4900 = vmatpush1.bf16.msra.mxu0 %v4704
          %4901 = vmatprep.subr.bf16.mxu0 0
          %4902 = vmatpush1.bf16.msra.mxu0 %v4705
          %4903 = vmatprep.subr.bf16.mxu0 0
          %4904 = vmatpush1.bf16.msra.mxu0 0
          %4905 = vmatprep.subr.bf16.mxu0 0
          %4906 = vmatpush1.bf16.msra.mxu0 0
          %4907 = vmatprep.subr.bf16.mxu0 0
          %4908 = vmatpush1.bf16.msra.mxu0 0
          %4909 = vmatprep.subr.bf16.mxu0 0
          %4910 = vmatpush1.bf16.msra.mxu0 0
          %4911 = vmatprep.subr.bf16.mxu0 0
          %4912 = vmatpush1.bf16.msra.mxu0 0
          %4913 = vmatprep.subr.bf16.mxu0 0
          %4914 = vmatpush1.bf16.msra.mxu0 0
          %4915 = vmatprep.subr.bf16.mxu0 0
          %4916 = vmatpush1.bf16.msra.mxu0 0
          %4917 = vmatprep.subr.bf16.mxu0 0
          %4918 = vmatpush1.bf16.msra.mxu0 0
          %4919 = vmatprep.subr.bf16.mxu0 0
          %4920 = vmatpush1.bf16.msra.mxu0 0
          %4921 = vmatprep.subr.bf16.mxu0 0
          %4922 = vmatpush1.bf16.msra.mxu0 0
          %4923 = vmatprep.subr.bf16.mxu0 0
          %4924 = vmatpush1.bf16.msra.mxu0 0
          %4925 = vmatprep.subr.bf16.mxu0 0
          %4926 = vmatpush1.bf16.msra.mxu0 0
          %4927 = vmatprep.subr.bf16.mxu0 0
          %4928 = vmatpush1.bf16.msra.mxu0 0
          %4929 = vmatprep.subr.bf16.mxu0 0
          %4930 = vmatpush1.bf16.msra.mxu0 0
          %4931 = vmatprep.mubr.bf16.mxu0 0
          %4932 = vmatmul.mubr.bf16.gmra.mrb[0].mxu0 %v4708
          %v4933 = vpop.f32.mrb[0].mxu0
          %v4934 = vadd.f32 0.0, %v4933
          %v4935 = vpop.f32.mrb[0].mxu0
          %v4936 = vpop.f32.mrb[0].mxu0
          %v4937 = vadd.f32 0.0, %v4936
          %v4938 = vpop.f32.mrb[0].mxu0
          %4939 = vmatprep.mubr.bf16.mxu0 0
          %4940 = vmatmul.mubr.bf16.gmra.mrb[0].mxu0 %v4711
          %v4941 = vpop.f32.mrb[0].mxu0
          %v4942 = vadd.f32 0.0, %v4941
          %v4943 = vpop.f32.mrb[0].mxu0
          %v4944 = vpop.f32.mrb[0].mxu0
          %v4945 = vadd.f32 0.0, %v4944
          %v4946 = vpop.f32.mrb[0].mxu0
          %4947 = vmatprep.mubr.bf16.mxu0 0
          %4948 = vmatmul.mubr.bf16.gmra.mrb[0].mxu0 %v4714
          %v4949 = vpop.f32.mrb[0].mxu0
          %v4950 = vadd.f32 0.0, %v4949
          %v4951 = vpop.f32.mrb[0].mxu0
          %v4952 = vpop.f32.mrb[0].mxu0
          %v4953 = vadd.f32 0.0, %v4952
          %v4954 = vpop.f32.mrb[0].mxu0
          %4955 = vmatprep.mubr.bf16.mxu0 0
          %4956 = vmatmul.mubr.bf16.gmra.mrb[0].mxu0 %v4717
          %v4957 = vpop.f32.mrb[0].mxu0
          %v4958 = vadd.f32 0.0, %v4957
          %v4959 = vpop.f32.mrb[0].mxu0
          %v4960 = vpop.f32.mrb[0].mxu0
          %v4961 = vadd.f32 0.0, %v4960
          %v4962 = vpop.f32.mrb[0].mxu0
          %4963 = vmatprep.mubr.bf16.mxu0 0
          %4964 = vmatmul.mubr.bf16.gmra.mrb[0].mxu0 %v4720
          %v4965 = vpop.f32.mrb[0].mxu0
          %v4966 = vadd.f32 0.0, %v4965
          %v4967 = vpop.f32.mrb[0].mxu0
          %v4968 = vpop.f32.mrb[0].mxu0
          %v4969 = vadd.f32 0.0, %v4968
          %v4970 = vpop.f32.mrb[0].mxu0
          %4971 = vmatprep.mubr.bf16.mxu0 0
          %4972 = vmatmul.mubr.bf16.gmra.mrb[0].mxu0 %v4723
          %v4973 = vpop.f32.mrb[0].mxu0
          %v4974 = vadd.f32 0.0, %v4973
          %v4975 = vpop.f32.mrb[0].mxu0
          %v4976 = vpop.f32.mrb[0].mxu0
          %v4977 = vadd.f32 0.0, %v4976
          %v4978 = vpop.f32.mrb[0].mxu0
          %4979 = vmatprep.mubr.bf16.mxu0 0
          %4980 = vmatmul.mubr.bf16.gmra.mrb[0].mxu0 %v4726
          %v4981 = vpop.f32.mrb[0].mxu0
          %v4982 = vadd.f32 0.0, %v4981
          %v4983 = vpop.f32.mrb[0].mxu0
          %v4984 = vpop.f32.mrb[0].mxu0
          %v4985 = vadd.f32 0.0, %v4984
          %v4986 = vpop.f32.mrb[0].mxu0
          %4987 = vmatprep.mubr.bf16.mxu0 0
          %4988 = vmatmul.mubr.bf16.gmra.mrb[0].mxu0 %v4729
          %v4989 = vpop.f32.mrb[0].mxu0
          %v4990 = vadd.f32 0.0, %v4989
          %v4991 = vpop.f32.mrb[0].mxu0
          %v4992 = vpop.f32.mrb[0].mxu0
          %v4993 = vadd.f32 0.0, %v4992
          %v4994 = vpop.f32.mrb[0].mxu0
          %4995 = vmatprep.mubr.bf16.mxu0 0
          %4996 = vmatmul.mubr.bf16.gmra.mrb[0].mxu0 %v4732
          %v4997 = vpop.f32.mrb[0].mxu0
          %v4998 = vadd.f32 0.0, %v4997
          %v4999 = vpop.f32.mrb[0].mxu0
          %v5000 = vpop.f32.mrb[0].mxu0
          %v5001 = vadd.f32 0.0, %v5000
          %v5002 = vpop.f32.mrb[0].mxu0
          %5003 = vmatprep.mubr.bf16.mxu0 0
          %5004 = vmatmul.mubr.bf16.gmra.mrb[0].mxu0 %v4735
          %v5005 = vpop.f32.mrb[0].mxu0
          %v5006 = vadd.f32 0.0, %v5005
          %v5007 = vpop.f32.mrb[0].mxu0
          %v5008 = vpop.f32.mrb[0].mxu0
          %v5009 = vadd.f32 0.0, %v5008
          %v5010 = vpop.f32.mrb[0].mxu0
          %5011 = vmatprep.mubr.bf16.mxu0 0
          %5012 = vmatmul.mubr.bf16.gmra.mrb[0].mxu0 %v4738
          %v5013 = vpop.f32.mrb[0].mxu0
          %v5014 = vadd.f32 0.0, %v5013
          %v5015 = vpop.f32.mrb[0].mxu0
          %v5016 = vpop.f32.mrb[0].mxu0
          %v5017 = vadd.f32 0.0, %v5016
          %v5018 = vpop.f32.mrb[0].mxu0
          %5019 = vmatprep.mubr.bf16.mxu0 0
          %5020 = vmatmul.mubr.bf16.gmra.mrb[0].mxu0 %v4741
          %v5021 = vpop.f32.mrb[0].mxu0
          %v5022 = vadd.f32 0.0, %v5021
          %v5023 = vpop.f32.mrb[0].mxu0
          %v5024 = vpop.f32.mrb[0].mxu0
          %v5025 = vadd.f32 0.0, %v5024
          %v5026 = vpop.f32.mrb[0].mxu0
          %5027 = vmatprep.mubr.bf16.mxu0 0
          %5028 = vmatmul.mubr.bf16.gmra.mrb[0].mxu0 %v4744
          %v5029 = vpop.f32.mrb[0].mxu0
          %v5030 = vadd.f32 0.0, %v5029
          %v5031 = vpop.f32.mrb[0].mxu0
          %v5032 = vpop.f32.mrb[0].mxu0
          %v5033 = vadd.f32 0.0, %v5032
          %v5034 = vpop.f32.mrb[0].mxu0
          %5035 = vmatprep.mubr.bf16.mxu0 0
          %5036 = vmatmul.mubr.bf16.gmra.mrb[0].mxu0 %v4747
          %v5037 = vpop.f32.mrb[0].mxu0
          %v5038 = vadd.f32 0.0, %v5037
          %v5039 = vpop.f32.mrb[0].mxu0
          %v5040 = vpop.f32.mrb[0].mxu0
          %v5041 = vadd.f32 0.0, %v5040
          %v5042 = vpop.f32.mrb[0].mxu0
          %5043 = vmatprep.mubr.bf16.mxu0 0
          %5044 = vmatmul.mubr.bf16.gmra.mrb[0].mxu0 %v4750
          %v5045 = vpop.f32.mrb[0].mxu0
          %v5046 = vadd.f32 0.0, %v5045
          %v5047 = vpop.f32.mrb[0].mxu0
          %v5048 = vpop.f32.mrb[0].mxu0
          %v5049 = vadd.f32 0.0, %v5048
          %v5050 = vpop.f32.mrb[0].mxu0
          %5051 = vmatprep.mubr.bf16.mxu0 0
          %5052 = vmatmul.mubr.bf16.gmra.mrb[0].mxu0 %v4753
          %v5053 = vpop.f32.mrb[0].mxu0
          %v5054 = vadd.f32 0.0, %v5053
          %v5055 = vpop.f32.mrb[0].mxu0
          %v5056 = vpop.f32.mrb[0].mxu0
          %v5057 = vadd.f32 0.0, %v5056
          %v5058 = vpop.f32.mrb[0].mxu0
          %5059 = vmatprep.mubr.bf16.mxu0 0
          %5060 = vmatmul.mubr.bf16.gmra.mrb[0].mxu0 %v4756
          %v5061 = vpop.f32.mrb[0].mxu0
          %v5062 = vadd.f32 0.0, %v5061
          %v5063 = vpop.f32.mrb[0].mxu0
          %v5064 = vpop.f32.mrb[0].mxu0
          %v5065 = vadd.f32 0.0, %v5064
          %v5066 = vpop.f32.mrb[0].mxu0
          %5067 = vmatprep.mubr.bf16.mxu0 0
          %5068 = vmatmul.mubr.bf16.gmra.mrb[0].mxu0 %v4759
          %v5069 = vpop.f32.mrb[0].mxu0
          %v5070 = vadd.f32 0.0, %v5069
          %v5071 = vpop.f32.mrb[0].mxu0
          %v5072 = vpop.f32.mrb[0].mxu0
          %v5073 = vadd.f32 0.0, %v5072
          %v5074 = vpop.f32.mrb[0].mxu0
          %5075 = vmatprep.mubr.bf16.mxu0 0
          %5076 = vmatmul.mubr.bf16.gmra.mrb[0].mxu0 %v4762
          %v5077 = vpop.f32.mrb[0].mxu0
          %v5078 = vadd.f32 0.0, %v5077
          %v5079 = vpop.f32.mrb[0].mxu0
          %v5080 = vpop.f32.mrb[0].mxu0
          %v5081 = vadd.f32 0.0, %v5080
          %v5082 = vpop.f32.mrb[0].mxu0
          %5083 = vmatprep.mubr.bf16.mxu0 0
          %5084 = vmatmul.mubr.bf16.gmra.mrb[0].mxu0 %v4765
          %v5085 = vpop.f32.mrb[0].mxu0
          %v5086 = vadd.f32 0.0, %v5085
          %v5087 = vpop.f32.mrb[0].mxu0
          %v5088 = vpop.f32.mrb[0].mxu0
          %v5089 = vadd.f32 0.0, %v5088
          %v5090 = vpop.f32.mrb[0].mxu0
          %5091 = vmatprep.mubr.bf16.mxu0 0
          %5092 = vmatmul.mubr.bf16.gmra.mrb[0].mxu0 %v4768
          %v5093 = vpop.f32.mrb[0].mxu0
          %v5094 = vadd.f32 0.0, %v5093
          %v5095 = vpop.f32.mrb[0].mxu0
          %v5096 = vpop.f32.mrb[0].mxu0
          %v5097 = vadd.f32 0.0, %v5096
          %v5098 = vpop.f32.mrb[0].mxu0
          %5099 = vmatprep.mubr.bf16.mxu0 0
          %5100 = vmatmul.mubr.bf16.gmra.mrb[0].mxu0 %v4771
          %v5101 = vpop.f32.mrb[0].mxu0
          %v5102 = vadd.f32 0.0, %v5101
          %v5103 = vpop.f32.mrb[0].mxu0
          %v5104 = vpop.f32.mrb[0].mxu0
          %v5105 = vadd.f32 0.0, %v5104
          %v5106 = vpop.f32.mrb[0].mxu0
          %5107 = vmatprep.mubr.bf16.mxu0 0
          %5108 = vmatmul.mubr.bf16.gmra.mrb[0].mxu0 %v4774
          %v5109 = vpop.f32.mrb[0].mxu0
          %v5110 = vadd.f32 0.0, %v5109
          %v5111 = vpop.f32.mrb[0].mxu0
          %v5112 = vpop.f32.mrb[0].mxu0
          %v5113 = vadd.f32 0.0, %v5112
          %v5114 = vpop.f32.mrb[0].mxu0
          %5115 = vmatprep.mubr.bf16.mxu0 0
          %5116 = vmatmul.mubr.bf16.gmra.mrb[0].mxu0 %v4777
          %v5117 = vpop.f32.mrb[0].mxu0
          %v5118 = vadd.f32 0.0, %v5117
          %v5119 = vpop.f32.mrb[0].mxu0
          %v5120 = vpop.f32.mrb[0].mxu0
          %v5121 = vadd.f32 0.0, %v5120
          %v5122 = vpop.f32.mrb[0].mxu0
          %5123 = vmatprep.mubr.bf16.mxu0 0
          %5124 = vmatmul.mubr.bf16.gmra.mrb[0].mxu0 %v4780
          %v5125 = vpop.f32.mrb[0].mxu0
          %v5126 = vadd.f32 0.0, %v5125
          %v5127 = vpop.f32.mrb[0].mxu0
          %v5128 = vpop.f32.mrb[0].mxu0
          %v5129 = vadd.f32 0.0, %v5128
          %v5130 = vpop.f32.mrb[0].mxu0
          %5131 = vmatprep.mubr.bf16.mxu0 0
          %5132 = vmatmul.mubr.bf16.gmra.mrb[0].mxu0 %v4783
          %v5133 = vpop.f32.mrb[0].mxu0
          %v5134 = vadd.f32 0.0, %v5133
          %v5135 = vpop.f32.mrb[0].mxu0
          %v5136 = vpop.f32.mrb[0].mxu0
          %v5137 = vadd.f32 0.0, %v5136
          %v5138 = vpop.f32.mrb[0].mxu0
          %5139 = vmatprep.mubr.bf16.mxu0 0
          %5140 = vmatmul.mubr.bf16.gmra.mrb[0].mxu0 %v4786
          %v5141 = vpop.f32.mrb[0].mxu0
          %v5142 = vadd.f32 0.0, %v5141
          %v5143 = vpop.f32.mrb[0].mxu0
          %v5144 = vpop.f32.mrb[0].mxu0
          %v5145 = vadd.f32 0.0, %v5144
          %v5146 = vpop.f32.mrb[0].mxu0
          %5147 = vmatprep.mubr.bf16.mxu0 0
          %5148 = vmatmul.mubr.bf16.gmra.mrb[0].mxu0 %v4789
          %v5149 = vpop.f32.mrb[0].mxu0
          %v5150 = vadd.f32 0.0, %v5149
          %v5151 = vpop.f32.mrb[0].mxu0
          %v5152 = vpop.f32.mrb[0].mxu0
          %v5153 = vadd.f32 0.0, %v5152
          %v5154 = vpop.f32.mrb[0].mxu0
          %5155 = vmatprep.mubr.bf16.mxu0 0
          %5156 = vmatmul.mubr.bf16.gmra.mrb[0].mxu0 %v4792
          %v5157 = vpop.f32.mrb[0].mxu0
          %v5158 = vadd.f32 0.0, %v5157
          %v5159 = vpop.f32.mrb[0].mxu0
          %v5160 = vpop.f32.mrb[0].mxu0
          %v5161 = vadd.f32 0.0, %v5160
          %v5162 = vpop.f32.mrb[0].mxu0
          %5163 = vmatprep.mubr.bf16.mxu0 0
          %5164 = vmatmul.mubr.bf16.gmra.mrb[0].mxu0 %v4795
          %v5165 = vpop.f32.mrb[0].mxu0
          %v5166 = vadd.f32 0.0, %v5165
          %v5167 = vpop.f32.mrb[0].mxu0
          %v5168 = vpop.f32.mrb[0].mxu0
          %v5169 = vadd.f32 0.0, %v5168
          %v5170 = vpop.f32.mrb[0].mxu0
          %5171 = vmatprep.mubr.bf16.mxu0 0
          %5172 = vmatmul.mubr.bf16.gmra.mrb[0].mxu0 %v4798
          %v5173 = vpop.f32.mrb[0].mxu0
          %v5174 = vadd.f32 0.0, %v5173
          %v5175 = vpop.f32.mrb[0].mxu0
          %v5176 = vpop.f32.mrb[0].mxu0
          %v5177 = vadd.f32 0.0, %v5176
          %v5178 = vpop.f32.mrb[0].mxu0
          %5179 = vmatprep.mubr.bf16.mxu0 0
          %5180 = vmatmul.mubr.bf16.gmra.mrb[0].mxu0 %v4801
          %v5181 = vpop.f32.mrb[0].mxu0
          %v5182 = vadd.f32 0.0, %v5181
          %v5183 = vpop.f32.mrb[0].mxu0
          %v5184 = vpop.f32.mrb[0].mxu0
          %v5185 = vadd.f32 0.0, %v5184
          %v5186 = vpop.f32.mrb[0].mxu0
          %5187 = vmatprep.mubr.bf16.mxu0 0
          %5188 = vmatmul.mubr.bf16.gmra.mrb[0].mxu0 %v4804
          %v5189 = vpop.f32.mrb[0].mxu0
          %v5190 = vadd.f32 0.0, %v5189
          %v5191 = vpop.f32.mrb[0].mxu0
          %v5192 = vpop.f32.mrb[0].mxu0
          %v5193 = vadd.f32 0.0, %v5192
          %v5194 = vpop.f32.mrb[0].mxu0
          %5195 = vmatprep.mubr.bf16.mxu0 0
          %5196 = vmatmul.mubr.bf16.gmra.mrb[0].mxu0 %v4807
          %v5197 = vpop.f32.mrb[0].mxu0
          %v5198 = vadd.f32 0.0, %v5197
          %v5199 = vpop.f32.mrb[0].mxu0
          %v5200 = vpop.f32.mrb[0].mxu0
          %v5201 = vadd.f32 0.0, %v5200
          %v5202 = vpop.f32.mrb[0].mxu0
          %5203 = vmatprep.mubr.bf16.mxu0 0
          %5204 = vmatmul.mubr.bf16.gmra.mrb[0].mxu0 %v4810
          %v5205 = vpop.f32.mrb[0].mxu0
          %v5206 = vadd.f32 0.0, %v5205
          %v5207 = vpop.f32.mrb[0].mxu0
          %v5208 = vpop.f32.mrb[0].mxu0
          %v5209 = vadd.f32 0.0, %v5208
          %v5210 = vpop.f32.mrb[0].mxu0
          %5211 = vmatprep.mubr.bf16.mxu0 0
          %5212 = vmatmul.mubr.bf16.gmra.mrb[0].mxu0 %v4813
          %v5213 = vpop.f32.mrb[0].mxu0
          %v5214 = vadd.f32 0.0, %v5213
          %v5215 = vpop.f32.mrb[0].mxu0
          %v5216 = vpop.f32.mrb[0].mxu0
          %v5217 = vadd.f32 0.0, %v5216
          %v5218 = vpop.f32.mrb[0].mxu0
          %5219 = vmatprep.mubr.bf16.mxu0 0
          %5220 = vmatmul.mubr.bf16.gmra.mrb[0].mxu0 %v4816
          %v5221 = vpop.f32.mrb[0].mxu0
          %v5222 = vadd.f32 0.0, %v5221
          %v5223 = vpop.f32.mrb[0].mxu0
          %v5224 = vpop.f32.mrb[0].mxu0
          %v5225 = vadd.f32 0.0, %v5224
          %v5226 = vpop.f32.mrb[0].mxu0
          %5227 = vmatprep.mubr.bf16.mxu0 0
          %5228 = vmatmul.mubr.bf16.gmra.mrb[0].mxu0 %v4819
          %v5229 = vpop.f32.mrb[0].mxu0
          %v5230 = vadd.f32 0.0, %v5229
          %v5231 = vpop.f32.mrb[0].mxu0
          %v5232 = vpop.f32.mrb[0].mxu0
          %v5233 = vadd.f32 0.0, %v5232
          %v5234 = vpop.f32.mrb[0].mxu0
          %5235 = vmatprep.mubr.bf16.mxu0 0
          %5236 = vmatmul.mubr.bf16.gmra.mrb[0].mxu0 %v4822
          %v5237 = vpop.f32.mrb[0].mxu0
          %v5238 = vadd.f32 0.0, %v5237
          %v5239 = vpop.f32.mrb[0].mxu0
          %v5240 = vpop.f32.mrb[0].mxu0
          %v5241 = vadd.f32 0.0, %v5240
          %v5242 = vpop.f32.mrb[0].mxu0
          %5243 = vmatprep.mubr.bf16.mxu0 0
          %5244 = vmatmul.mubr.bf16.gmra.mrb[0].mxu0 %v4825
          %v5245 = vpop.f32.mrb[0].mxu0
          %v5246 = vadd.f32 0.0, %v5245
          %v5247 = vpop.f32.mrb[0].mxu0
          %v5248 = vpop.f32.mrb[0].mxu0
          %v5249 = vadd.f32 0.0, %v5248
          %v5250 = vpop.f32.mrb[0].mxu0
          %5251 = vmatprep.mubr.bf16.mxu0 0
          %5252 = vmatmul.mubr.bf16.gmra.mrb[0].mxu0 %v4828
          %v5253 = vpop.f32.mrb[0].mxu0
          %v5254 = vadd.f32 0.0, %v5253
          %v5255 = vpop.f32.mrb[0].mxu0
          %v5256 = vpop.f32.mrb[0].mxu0
          %v5257 = vadd.f32 0.0, %v5256
          %v5258 = vpop.f32.mrb[0].mxu0
          %5259 = vmatprep.mubr.bf16.mxu0 0
          %5260 = vmatmul.mubr.bf16.gmra.mrb[0].mxu0 %v4831
          %v5261 = vpop.f32.mrb[0].mxu0
          %v5262 = vadd.f32 0.0, %v5261
          %v5263 = vpop.f32.mrb[0].mxu0
          %v5264 = vpop.f32.mrb[0].mxu0
          %v5265 = vadd.f32 0.0, %v5264
          %v5266 = vpop.f32.mrb[0].mxu0
          %5267 = vmatprep.mubr.bf16.mxu0 0
          %5268 = vmatmul.mubr.bf16.gmra.mrb[0].mxu0 %v4834
          %v5269 = vpop.f32.mrb[0].mxu0
          %v5270 = vadd.f32 0.0, %v5269
          %v5271 = vpop.f32.mrb[0].mxu0
          %v5272 = vpop.f32.mrb[0].mxu0
          %v5273 = vadd.f32 0.0, %v5272
          %v5274 = vpop.f32.mrb[0].mxu0
          %5275 = vmatprep.mubr.bf16.mxu0 0
          %5276 = vmatmul.mubr.bf16.gmra.mrb[0].mxu0 %v4837
          %v5277 = vpop.f32.mrb[0].mxu0
          %v5278 = vadd.f32 0.0, %v5277
          %v5279 = vpop.f32.mrb[0].mxu0
          %v5280 = vpop.f32.mrb[0].mxu0
          %v5281 = vadd.f32 0.0, %v5280
          %v5282 = vpop.f32.mrb[0].mxu0
          %5283 = vmatprep.mubr.bf16.mxu0 0
          %5284 = vmatmul.mubr.bf16.gmra.mrb[0].mxu0 %v4840
          %v5285 = vpop.f32.mrb[0].mxu0
          %v5286 = vadd.f32 0.0, %v5285
          %v5287 = vpop.f32.mrb[0].mxu0
          %v5288 = vpop.f32.mrb[0].mxu0
          %v5289 = vadd.f32 0.0, %v5288
          %v5290 = vpop.f32.mrb[0].mxu0
          %5291 = vmatprep.mubr.bf16.mxu0 0
          %5292 = vmatmul.mubr.bf16.gmra.mrb[0].mxu0 %v4843
          %v5293 = vpop.f32.mrb[0].mxu0
          %v5294 = vadd.f32 0.0, %v5293
          %v5295 = vpop.f32.mrb[0].mxu0
          %v5296 = vpop.f32.mrb[0].mxu0
          %v5297 = vadd.f32 0.0, %v5296
          %v5298 = vpop.f32.mrb[0].mxu0
          %5299 = vmatprep.mubr.bf16.mxu0 0
          %5300 = vmatmul.mubr.bf16.gmra.mrb[0].mxu0 %v4846
          %v5301 = vpop.f32.mrb[0].mxu0
          %v5302 = vadd.f32 0.0, %v5301
          %v5303 = vpop.f32.mrb[0].mxu0
          %v5304 = vpop.f32.mrb[0].mxu0
          %v5305 = vadd.f32 0.0, %v5304
          %v5306 = vpop.f32.mrb[0].mxu0
          %5307 = vmatprep.mubr.bf16.mxu0 0
          %5308 = vmatmul.mubr.bf16.gmra.mrb[0].mxu0 %v4849
          %v5309 = vpop.f32.mrb[0].mxu0
          %v5310 = vadd.f32 0.0, %v5309
          %v5311 = vpop.f32.mrb[0].mxu0
          %v5312 = vpop.f32.mrb[0].mxu0
          %v5313 = vadd.f32 0.0, %v5312
          %v5314 = vpop.f32.mrb[0].mxu0
          %5315 = vmatprep.mubr.bf16.mxu0 0
          %5316 = vmatmul.mubr.bf16.gmra.mrb[0].mxu0 %v4852
          %v5317 = vpop.f32.mrb[0].mxu0
          %v5318 = vadd.f32 0.0, %v5317
          %v5319 = vpop.f32.mrb[0].mxu0
          %v5320 = vpop.f32.mrb[0].mxu0
          %v5321 = vadd.f32 0.0, %v5320
          %v5322 = vpop.f32.mrb[0].mxu0
          %5323 = vmatprep.mubr.bf16.mxu0 0
          %5324 = vmatmul.mubr.bf16.gmra.mrb[0].mxu0 %v4855
          %v5325 = vpop.f32.mrb[0].mxu0
          %v5326 = vadd.f32 0.0, %v5325
          %v5327 = vpop.f32.mrb[0].mxu0
          %v5328 = vpop.f32.mrb[0].mxu0
          %v5329 = vadd.f32 0.0, %v5328
          %v5330 = vpop.f32.mrb[0].mxu0
          %5331 = vmatprep.mubr.bf16.mxu0 0
          %5332 = vmatmul.mubr.bf16.gmra.mrb[0].mxu0 %v4858
          %v5333 = vpop.f32.mrb[0].mxu0
          %v5334 = vadd.f32 0.0, %v5333
          %v5335 = vpop.f32.mrb[0].mxu0
          %v5336 = vpop.f32.mrb[0].mxu0
          %v5337 = vadd.f32 0.0, %v5336
          %v5338 = vpop.f32.mrb[0].mxu0
          %5339 = vmatprep.mubr.bf16.mxu0 0
          %5340 = vmatmul.mubr.bf16.gmra.mrb[0].mxu0 %v4861
          %v5341 = vpop.f32.mrb[0].mxu0
          %v5342 = vadd.f32 0.0, %v5341
          %v5343 = vpop.f32.mrb[0].mxu0
          %v5344 = vpop.f32.mrb[0].mxu0
          %v5345 = vadd.f32 0.0, %v5344
          %v5346 = vpop.f32.mrb[0].mxu0
          %5347 = vmatprep.mubr.bf16.mxu0 0
          %5348 = vmatmul.mubr.bf16.gmra.mrb[0].mxu0 %v4864
          %v5349 = vpop.f32.mrb[0].mxu0
          %v5350 = vadd.f32 0.0, %v5349
          %v5351 = vpop.f32.mrb[0].mxu0
          %v5352 = vpop.f32.mrb[0].mxu0
          %v5353 = vadd.f32 0.0, %v5352
          %v5354 = vpop.f32.mrb[0].mxu0
          %5355 = vmatprep.mubr.bf16.mxu0 0
          %5356 = vmatmul.mubr.bf16.gmra.mrb[0].mxu0 %v4867
          %v5357 = vpop.f32.mrb[0].mxu0
          %v5358 = vadd.f32 0.0, %v5357
          %v5359 = vpop.f32.mrb[0].mxu0
          %v5360 = vpop.f32.mrb[0].mxu0
          %v5361 = vadd.f32 0.0, %v5360
          %v5362 = vpop.f32.mrb[0].mxu0
          %5363 = vmatprep.mubr.bf16.mxu0 0
          %5364 = vmatmul.mubr.bf16.gmra.mrb[0].mxu0 %v4870
          %v5365 = vpop.f32.mrb[0].mxu0
          %v5366 = vadd.f32 0.0, %v5365
          %v5367 = vpop.f32.mrb[0].mxu0
          %v5368 = vpop.f32.mrb[0].mxu0
          %v5369 = vadd.f32 0.0, %v5368
          %v5370 = vpop.f32.mrb[0].mxu0
          %5371 = vmatprep.mubr.bf16.mxu0 0
          %5372 = vmatmul.mubr.bf16.gmra.mrb[0].mxu0 %v4873
          %v5373 = vpop.f32.mrb[0].mxu0
          %v5374 = vadd.f32 0.0, %v5373
          %v5375 = vpop.f32.mrb[0].mxu0
          %v5376 = vpop.f32.mrb[0].mxu0
          %v5377 = vadd.f32 0.0, %v5376
          %v5378 = vpop.f32.mrb[0].mxu0
          %5379 = vmatprep.mubr.bf16.mxu0 0
          %5380 = vmatmul.mubr.bf16.gmra.mrb[0].mxu0 %v4876
          %v5381 = vpop.f32.mrb[0].mxu0
          %v5382 = vadd.f32 0.0, %v5381
          %v5383 = vpop.f32.mrb[0].mxu0
          %v5384 = vpop.f32.mrb[0].mxu0
          %v5385 = vadd.f32 0.0, %v5384
          %v5386 = vpop.f32.mrb[0].mxu0
          %5387 = vmatprep.mubr.bf16.mxu0 0
          %5388 = vmatmul.mubr.bf16.gmra.mrb[0].mxu0 %v4879
          %v5389 = vpop.f32.mrb[0].mxu0
          %v5390 = vadd.f32 0.0, %v5389
          %v5391 = vpop.f32.mrb[0].mxu0
          %v5392 = vpop.f32.mrb[0].mxu0
          %v5393 = vadd.f32 0.0, %v5392
          %v5394 = vpop.f32.mrb[0].mxu0
          %5395 = vmatprep.mubr.bf16.mxu0 0
          %5396 = vmatmul.mubr.bf16.gmra.mrb[0].mxu0 %v4882
          %v5397 = vpop.f32.mrb[0].mxu0
          %v5398 = vadd.f32 0.0, %v5397
          %v5399 = vpop.f32.mrb[0].mxu0
          %v5400 = vpop.f32.mrb[0].mxu0
          %v5401 = vadd.f32 0.0, %v5400
          %v5402 = vpop.f32.mrb[0].mxu0
          %5403 = vmatprep.mubr.bf16.mxu0 0
          %5404 = vmatmul.mubr.bf16.gmra.mrb[0].mxu0 %v4885
          %v5405 = vpop.f32.mrb[0].mxu0
          %v5406 = vadd.f32 0.0, %v5405
          %v5407 = vpop.f32.mrb[0].mxu0
          %v5408 = vpop.f32.mrb[0].mxu0
          %v5409 = vadd.f32 0.0, %v5408
          %v5410 = vpop.f32.mrb[0].mxu0
          %5411 = vmatprep.mubr.bf16.mxu0 0
          %5412 = vmatmul.mubr.bf16.gmra.mrb[0].mxu0 %v4888
          %v5413 = vpop.f32.mrb[0].mxu0
          %v5414 = vadd.f32 0.0, %v5413
          %v5415 = vpop.f32.mrb[0].mxu0
          %v5416 = vpop.f32.mrb[0].mxu0
          %v5417 = vadd.f32 0.0, %v5416
          %v5418 = vpop.f32.mrb[0].mxu0
          %5419 = vmatprep.mubr.bf16.mxu0 0
          %5420 = vmatmul.mubr.bf16.gmra.mrb[0].mxu0 %v4891
          %v5421 = vpop.f32.mrb[0].mxu0
          %v5422 = vadd.f32 0.0, %v5421
          %v5423 = vpop.f32.mrb[0].mxu0
          %v5424 = vpop.f32.mrb[0].mxu0
          %v5425 = vadd.f32 0.0, %v5424
          %v5426 = vpop.f32.mrb[0].mxu0
          %5427 = vmatprep.mubr.bf16.mxu0 0
          %5428 = vmatmul.mubr.bf16.gmra.mrb[0].mxu0 %v4894
          %v5429 = vpop.f32.mrb[0].mxu0
          %v5430 = vadd.f32 0.0, %v5429
          %v5431 = vpop.f32.mrb[0].mxu0
          %v5432 = vpop.f32.mrb[0].mxu0
          %v5433 = vadd.f32 0.0, %v5432
          %v5434 = vpop.f32.mrb[0].mxu0
          %5435 = vmatprep.mubr.bf16.mxu0 0
          %5436 = vmatmul.mubr.bf16.gmra.mrb[0].mxu0 %v4897
          %v5437 = vpop.f32.mrb[0].mxu0
          %v5438 = vadd.f32 0.0, %v5437
          %v5439 = vpop.f32.mrb[0].mxu0
          %v5440 = vpop.f32.mrb[0].mxu0
          %v5441 = vadd.f32 0.0, %v5440
          %v5442 = vpop.f32.mrb[0].mxu0
          %5443 = vdwg.mxu0
          %v5444 = vmul.f32 %v4934, %v4450
          %v5445 = vmul.f32 %v4937, %v4453
          %v5446 = vmul.f32 %v4942, %v4458
          %v5447 = vmul.f32 %v4945, %v4461
          %v5448 = vmul.f32 %v4950, %v4466
          %v5449 = vmul.f32 %v4953, %v4469
          %v5450 = vmul.f32 %v4958, %v4474
          %v5451 = vmul.f32 %v4961, %v4477
          %v5452 = vmul.f32 %v4966, %v4482
          %v5453 = vmul.f32 %v4969, %v4485
          %v5454 = vmul.f32 %v4974, %v4490
          %v5455 = vmul.f32 %v4977, %v4493
          %v5456 = vmul.f32 %v4982, %v4498
          %v5457 = vmul.f32 %v4985, %v4501
          %v5458 = vmul.f32 %v4990, %v4506
          %v5459 = vmul.f32 %v4993, %v4509
          %v5460 = vmul.f32 %v4998, %v4514
          %v5461 = vmul.f32 %v5001, %v4517
          %v5462 = vmul.f32 %v5006, %v4522
          %v5463 = vmul.f32 %v5009, %v4525
          %v5464 = vmul.f32 %v5014, %v4530
          %v5465 = vmul.f32 %v5017, %v4533
          %v5466 = vmul.f32 %v5022, %v4538
          %v5467 = vmul.f32 %v5025, %v4541
          %v5468 = vmul.f32 %v5030, %v4546
          %v5469 = vmul.f32 %v5033, %v4549
          %v5470 = vmul.f32 %v5038, %v4554
          %v5471 = vmul.f32 %v5041, %v4557
          %v5472 = vmul.f32 %v5046, %v4562
          %v5473 = vmul.f32 %v5049, %v4565
          %v5474 = vmul.f32 %v5054, %v4570
          %v5475 = vmul.f32 %v5057, %v4573
          %v5476 = vmul.f32 %v5062, %v4578
          %v5477 = vmul.f32 %v5065, %v4581
          %v5478 = vmul.f32 %v5070, %v4586
          %v5479 = vmul.f32 %v5073, %v4589
          %v5480 = vmul.f32 %v5078, %v4594
          %v5481 = vmul.f32 %v5081, %v4597
          %v5482 = vmul.f32 %v5086, %v4602
          %v5483 = vmul.f32 %v5089, %v4605
          %v5484 = vmul.f32 %v5094, %v4610
          %v5485 = vmul.f32 %v5097, %v4613
          %v5486 = vmul.f32 %v5102, %v4618
          %v5487 = vmul.f32 %v5105, %v4621
          %v5488 = vmul.f32 %v5110, %v4626
          %v5489 = vmul.f32 %v5113, %v4629
          %v5490 = vmul.f32 %v5118, %v4634
          %v5491 = vmul.f32 %v5121, %v4637
          %v5492 = vmul.f32 %v5126, %v4642
          %v5493 = vmul.f32 %v5129, %v4645
          %v5494 = vmul.f32 %v5134, %v4650
          %v5495 = vmul.f32 %v5137, %v4653
          %v5496 = vmul.f32 %v5142, %v4658
          %v5497 = vmul.f32 %v5145, %v4661
          %v5498 = vmul.f32 %v5150, %v4666
          %v5499 = vmul.f32 %v5153, %v4669
          %v5500 = vmul.f32 %v5158, %v4674
          %v5501 = vmul.f32 %v5161, %v4677
          %v5502 = vmul.f32 %v5166, %v4682
          %v5503 = vmul.f32 %v5169, %v4685
          %v5504 = vmul.f32 %v5174, %v4690
          %v5505 = vmul.f32 %v5177, %v4693
          %v5506 = vmul.f32 %v5182, %v4698
          %v5507 = vmul.f32 %v5185, %v4701
          %v5508 = vmul.f32 %v5190, %v4450
          %v5509 = vmul.f32 %v5193, %v4453
          %v5510 = vmul.f32 %v5198, %v4458
          %v5511 = vmul.f32 %v5201, %v4461
          %v5512 = vmul.f32 %v5206, %v4466
          %v5513 = vmul.f32 %v5209, %v4469
          %v5514 = vmul.f32 %v5214, %v4474
          %v5515 = vmul.f32 %v5217, %v4477
          %v5516 = vmul.f32 %v5222, %v4482
          %v5517 = vmul.f32 %v5225, %v4485
          %v5518 = vmul.f32 %v5230, %v4490
          %v5519 = vmul.f32 %v5233, %v4493
          %v5520 = vmul.f32 %v5238, %v4498
          %v5521 = vmul.f32 %v5241, %v4501
          %v5522 = vmul.f32 %v5246, %v4506
          %v5523 = vmul.f32 %v5249, %v4509
          %v5524 = vmul.f32 %v5254, %v4514
          %v5525 = vmul.f32 %v5257, %v4517
          %v5526 = vmul.f32 %v5262, %v4522
          %v5527 = vmul.f32 %v5265, %v4525
          %v5528 = vmul.f32 %v5270, %v4530
          %v5529 = vmul.f32 %v5273, %v4533
          %v5530 = vmul.f32 %v5278, %v4538
          %v5531 = vmul.f32 %v5281, %v4541
          %v5532 = vmul.f32 %v5286, %v4546
          %v5533 = vmul.f32 %v5289, %v4549
          %v5534 = vmul.f32 %v5294, %v4554
          %v5535 = vmul.f32 %v5297, %v4557
          %v5536 = vmul.f32 %v5302, %v4562
          %v5537 = vmul.f32 %v5305, %v4565
          %v5538 = vmul.f32 %v5310, %v4570
          %v5539 = vmul.f32 %v5313, %v4573
          %v5540 = vmul.f32 %v5318, %v4578
          %v5541 = vmul.f32 %v5321, %v4581
          %v5542 = vmul.f32 %v5326, %v4586
          %v5543 = vmul.f32 %v5329, %v4589
          %v5544 = vmul.f32 %v5334, %v4594
          %v5545 = vmul.f32 %v5337, %v4597
          %v5546 = vmul.f32 %v5342, %v4602
          %v5547 = vmul.f32 %v5345, %v4605
          %v5548 = vmul.f32 %v5350, %v4610
          %v5549 = vmul.f32 %v5353, %v4613
          %v5550 = vmul.f32 %v5358, %v4618
          %v5551 = vmul.f32 %v5361, %v4621
          %v5552 = vmul.f32 %v5366, %v4626
          %v5553 = vmul.f32 %v5369, %v4629
          %v5554 = vmul.f32 %v5374, %v4634
          %v5555 = vmul.f32 %v5377, %v4637
          %v5556 = vmul.f32 %v5382, %v4642
          %v5557 = vmul.f32 %v5385, %v4645
          %v5558 = vmul.f32 %v5390, %v4650
          %v5559 = vmul.f32 %v5393, %v4653
          %v5560 = vmul.f32 %v5398, %v4658
          %v5561 = vmul.f32 %v5401, %v4661
          %v5562 = vmul.f32 %v5406, %v4666
          %v5563 = vmul.f32 %v5409, %v4669
          %v5564 = vmul.f32 %v5414, %v4674
          %v5565 = vmul.f32 %v5417, %v4677
          %v5566 = vmul.f32 %v5422, %v4682
          %v5567 = vmul.f32 %v5425, %v4685
          %v5568 = vmul.f32 %v5430, %v4690
          %v5569 = vmul.f32 %v5433, %v4693
          %v5570 = vmul.f32 %v5438, %v4698
          %v5571 = vmul.f32 %v5441, %v4701
          %v5572 = vpack.c.bf16 %v5445, %v5444
          %v5573 = vpack.c.bf16 %v5447, %v5446
          %v5574 = vpack.c.bf16 %v5449, %v5448
          %v5575 = vpack.c.bf16 %v5451, %v5450
          %v5576 = vpack.c.bf16 %v5453, %v5452
          %v5577 = vpack.c.bf16 %v5455, %v5454
          %v5578 = vpack.c.bf16 %v5457, %v5456
          %v5579 = vpack.c.bf16 %v5459, %v5458
          %v5580 = vpack.c.bf16 %v5461, %v5460
          %v5581 = vpack.c.bf16 %v5463, %v5462
          %v5582 = vpack.c.bf16 %v5465, %v5464
          %v5583 = vpack.c.bf16 %v5467, %v5466
          %v5584 = vpack.c.bf16 %v5469, %v5468
          %v5585 = vpack.c.bf16 %v5471, %v5470
          %v5586 = vpack.c.bf16 %v5473, %v5472
          %v5587 = vpack.c.bf16 %v5475, %v5474
          %v5588 = vpack.c.bf16 %v5477, %v5476
          %v5589 = vpack.c.bf16 %v5479, %v5478
          %v5590 = vpack.c.bf16 %v5481, %v5480
          %v5591 = vpack.c.bf16 %v5483, %v5482
          %v5592 = vpack.c.bf16 %v5485, %v5484
          %v5593 = vpack.c.bf16 %v5487, %v5486
          %v5594 = vpack.c.bf16 %v5489, %v5488
          %v5595 = vpack.c.bf16 %v5491, %v5490
          %v5596 = vpack.c.bf16 %v5493, %v5492
          %v5597 = vpack.c.bf16 %v5495, %v5494
          %v5598 = vpack.c.bf16 %v5497, %v5496
          %v5599 = vpack.c.bf16 %v5499, %v5498
          %v5600 = vpack.c.bf16 %v5501, %v5500
          %v5601 = vpack.c.bf16 %v5503, %v5502
          %v5602 = vpack.c.bf16 %v5505, %v5504
          %v5603 = vpack.c.bf16 %v5507, %v5506
          %v5604 = vpack.c.bf16 %v5509, %v5508
          %v5605 = vpack.c.bf16 %v5511, %v5510
          %v5606 = vpack.c.bf16 %v5513, %v5512
          %v5607 = vpack.c.bf16 %v5515, %v5514
          %v5608 = vpack.c.bf16 %v5517, %v5516
          %v5609 = vpack.c.bf16 %v5519, %v5518
          %v5610 = vpack.c.bf16 %v5521, %v5520
          %v5611 = vpack.c.bf16 %v5523, %v5522
          %v5612 = vpack.c.bf16 %v5525, %v5524
          %v5613 = vpack.c.bf16 %v5527, %v5526
          %v5614 = vpack.c.bf16 %v5529, %v5528
          %v5615 = vpack.c.bf16 %v5531, %v5530
          %v5616 = vpack.c.bf16 %v5533, %v5532
          %v5617 = vpack.c.bf16 %v5535, %v5534
          %v5618 = vpack.c.bf16 %v5537, %v5536
          %v5619 = vpack.c.bf16 %v5539, %v5538
          %v5620 = vpack.c.bf16 %v5541, %v5540
          %v5621 = vpack.c.bf16 %v5543, %v5542
          %v5622 = vpack.c.bf16 %v5545, %v5544
          %v5623 = vpack.c.bf16 %v5547, %v5546
          %v5624 = vpack.c.bf16 %v5549, %v5548
          %v5625 = vpack.c.bf16 %v5551, %v5550
          %v5626 = vpack.c.bf16 %v5553, %v5552
          %v5627 = vpack.c.bf16 %v5555, %v5554
          %v5628 = vpack.c.bf16 %v5557, %v5556
          %v5629 = vpack.c.bf16 %v5559, %v5558
          %v5630 = vpack.c.bf16 %v5561, %v5560
          %v5631 = vpack.c.bf16 %v5563, %v5562
          %v5632 = vpack.c.bf16 %v5565, %v5564
          %v5633 = vpack.c.bf16 %v5567, %v5566
          %v5634 = vpack.c.bf16 %v5569, %v5568
          %v5635 = vpack.c.bf16 %v5571, %v5570
          %v5636 = vld [vmem:[#allocation3] sm:$0xff]
          %v5637 = vld [vmem:[#allocation3 + $0x8] sm:$0xff]
          %v5638 = vld [vmem:[#allocation3 + $0x10] sm:$0xff]
          %v5639 = vld [vmem:[#allocation3 + $0x18] sm:$0xff]
          %5640 = vmatprep.subr.bf16.mxu0 0
          %5641 = vmatpush1.bf16.msra.mxu0 %v5572
          %5642 = vmatprep.subr.bf16.mxu0 0
          %5643 = vmatpush1.bf16.msra.mxu0 %v5573
          %5644 = vmatprep.subr.bf16.mxu0 0
          %5645 = vmatpush1.bf16.msra.mxu0 %v5574
          %5646 = vmatprep.subr.bf16.mxu0 0
          %5647 = vmatpush1.bf16.msra.mxu0 %v5575
          %5648 = vmatprep.subr.bf16.mxu0 0
          %5649 = vmatpush1.bf16.msra.mxu0 %v5576
          %5650 = vmatprep.subr.bf16.mxu0 0
          %5651 = vmatpush1.bf16.msra.mxu0 %v5577
          %5652 = vmatprep.subr.bf16.mxu0 0
          %5653 = vmatpush1.bf16.msra.mxu0 %v5578
          %5654 = vmatprep.subr.bf16.mxu0 0
          %5655 = vmatpush1.bf16.msra.mxu0 %v5579
          %5656 = vmatprep.subr.bf16.mxu0 0
          %5657 = vmatpush1.bf16.msra.mxu0 %v5580
          %5658 = vmatprep.subr.bf16.mxu0 0
          %5659 = vmatpush1.bf16.msra.mxu0 %v5581
          %5660 = vmatprep.subr.bf16.mxu0 0
          %5661 = vmatpush1.bf16.msra.mxu0 %v5582
          %5662 = vmatprep.subr.bf16.mxu0 0
          %5663 = vmatpush1.bf16.msra.mxu0 %v5583
          %5664 = vmatprep.subr.bf16.mxu0 0
          %5665 = vmatpush1.bf16.msra.mxu0 %v5584
          %5666 = vmatprep.subr.bf16.mxu0 0
          %5667 = vmatpush1.bf16.msra.mxu0 %v5585
          %5668 = vmatprep.subr.bf16.mxu0 0
          %5669 = vmatpush1.bf16.msra.mxu0 %v5586
          %5670 = vmatprep.subr.bf16.mxu0 0
          %5671 = vmatpush1.bf16.msra.mxu0 %v5587
          %5672 = vmatprep.mubr.bf16.mxu0 %v2624
          %5673 = vmatmul.mubr.bf16.gmra.mrb[0].mxu0 %v2623
          %v5674 = vpop.f32.mrb[0].mxu0
          %v5675 = vadd.f32 0.0, %v5674
          %v5676 = vpop.f32.mrb[0].mxu0
          %v5677 = vpop.f32.mrb[0].mxu0
          %v5678 = vadd.f32 0.0, %v5677
          %v5679 = vpop.f32.mrb[0].mxu0
          %5680 = vmatprep.mubr.bf16.mxu0 %v2632
          %5681 = vmatmul.mubr.bf16.gmra.mrb[0].mxu0 %v2631
          %v5682 = vpop.f32.mrb[0].mxu0
          %v5683 = vadd.f32 0.0, %v5682
          %v5684 = vpop.f32.mrb[0].mxu0
          %v5685 = vpop.f32.mrb[0].mxu0
          %v5686 = vadd.f32 0.0, %v5685
          %v5687 = vpop.f32.mrb[0].mxu0
          %5688 = vdwg.mxu0
          %5689 = vmatprep.subr.bf16.mxu0 0
          %5690 = vmatpush1.bf16.msra.mxu0 %v5588
          %5691 = vmatprep.subr.bf16.mxu0 0
          %5692 = vmatpush1.bf16.msra.mxu0 %v5589
          %5693 = vmatprep.subr.bf16.mxu0 0
          %5694 = vmatpush1.bf16.msra.mxu0 %v5590
          %5695 = vmatprep.subr.bf16.mxu0 0
          %5696 = vmatpush1.bf16.msra.mxu0 %v5591
          %5697 = vmatprep.subr.bf16.mxu0 0
          %5698 = vmatpush1.bf16.msra.mxu0 %v5592
          %5699 = vmatprep.subr.bf16.mxu0 0
          %5700 = vmatpush1.bf16.msra.mxu0 %v5593
          %5701 = vmatprep.subr.bf16.mxu0 0
          %5702 = vmatpush1.bf16.msra.mxu0 %v5594
          %5703 = vmatprep.subr.bf16.mxu0 0
          %5704 = vmatpush1.bf16.msra.mxu0 %v5595
          %5705 = vmatprep.subr.bf16.mxu0 0
          %5706 = vmatpush1.bf16.msra.mxu0 %v5596
          %5707 = vmatprep.subr.bf16.mxu0 0
          %5708 = vmatpush1.bf16.msra.mxu0 %v5597
          %5709 = vmatprep.subr.bf16.mxu0 0
          %5710 = vmatpush1.bf16.msra.mxu0 %v5598
          %5711 = vmatprep.subr.bf16.mxu0 0
          %5712 = vmatpush1.bf16.msra.mxu0 %v5599
          %5713 = vmatprep.subr.bf16.mxu0 0
          %5714 = vmatpush1.bf16.msra.mxu0 %v5600
          %5715 = vmatprep.subr.bf16.mxu0 0
          %5716 = vmatpush1.bf16.msra.mxu0 %v5601
          %5717 = vmatprep.subr.bf16.mxu0 0
          %5718 = vmatpush1.bf16.msra.mxu0 %v5602
          %5719 = vmatprep.subr.bf16.mxu0 0
          %5720 = vmatpush1.bf16.msra.mxu0 %v5603
          %5721 = vmatprep.mubr.bf16.mxu0 %v2626
          %5722 = vmatmul.mubr.bf16.gmra.mrb[0].mxu0 %v2625
          %v5723 = vpop.f32.mrb[0].mxu0
          %v5724 = vadd.f32 %v5675, %v5723
          %v5725 = vpop.f32.mrb[0].mxu0
          %v5726 = vpop.f32.mrb[0].mxu0
          %v5727 = vadd.f32 %v5678, %v5726
          %v5728 = vpop.f32.mrb[0].mxu0
          %5729 = vmatprep.mubr.bf16.mxu0 %v2634
          %5730 = vmatmul.mubr.bf16.gmra.mrb[0].mxu0 %v2633
          %v5731 = vpop.f32.mrb[0].mxu0
          %v5732 = vadd.f32 %v5683, %v5731
          %v5733 = vpop.f32.mrb[0].mxu0
          %v5734 = vpop.f32.mrb[0].mxu0
          %v5735 = vadd.f32 %v5686, %v5734
          %v5736 = vpop.f32.mrb[0].mxu0
          %5737 = vdwg.mxu0
          %5738 = vmatprep.subr.bf16.mxu0 0
          %5739 = vmatpush1.bf16.msra.mxu0 %v5604
          %5740 = vmatprep.subr.bf16.mxu0 0
          %5741 = vmatpush1.bf16.msra.mxu0 %v5605
          %5742 = vmatprep.subr.bf16.mxu0 0
          %5743 = vmatpush1.bf16.msra.mxu0 %v5606
          %5744 = vmatprep.subr.bf16.mxu0 0
          %5745 = vmatpush1.bf16.msra.mxu0 %v5607
          %5746 = vmatprep.subr.bf16.mxu0 0
          %5747 = vmatpush1.bf16.msra.mxu0 %v5608
          %5748 = vmatprep.subr.bf16.mxu0 0
          %5749 = vmatpush1.bf16.msra.mxu0 %v5609
          %5750 = vmatprep.subr.bf16.mxu0 0
          %5751 = vmatpush1.bf16.msra.mxu0 %v5610
          %5752 = vmatprep.subr.bf16.mxu0 0
          %5753 = vmatpush1.bf16.msra.mxu0 %v5611
          %5754 = vmatprep.subr.bf16.mxu0 0
          %5755 = vmatpush1.bf16.msra.mxu0 %v5612
          %5756 = vmatprep.subr.bf16.mxu0 0
          %5757 = vmatpush1.bf16.msra.mxu0 %v5613
          %5758 = vmatprep.subr.bf16.mxu0 0
          %5759 = vmatpush1.bf16.msra.mxu0 %v5614
          %5760 = vmatprep.subr.bf16.mxu0 0
          %5761 = vmatpush1.bf16.msra.mxu0 %v5615
          %5762 = vmatprep.subr.bf16.mxu0 0
          %5763 = vmatpush1.bf16.msra.mxu0 %v5616
          %5764 = vmatprep.subr.bf16.mxu0 0
          %5765 = vmatpush1.bf16.msra.mxu0 %v5617
          %5766 = vmatprep.subr.bf16.mxu0 0
          %5767 = vmatpush1.bf16.msra.mxu0 %v5618
          %5768 = vmatprep.subr.bf16.mxu0 0
          %5769 = vmatpush1.bf16.msra.mxu0 %v5619
          %5770 = vmatprep.mubr.bf16.mxu0 %v2628
          %5771 = vmatmul.mubr.bf16.gmra.mrb[0].mxu0 %v2627
          %v5772 = vpop.f32.mrb[0].mxu0
          %v5773 = vadd.f32 %v5724, %v5772
          %v5774 = vpop.f32.mrb[0].mxu0
          %v5775 = vpop.f32.mrb[0].mxu0
          %v5776 = vadd.f32 %v5727, %v5775
          %v5777 = vpop.f32.mrb[0].mxu0
          %5778 = vmatprep.mubr.bf16.mxu0 %v2636
          %5779 = vmatmul.mubr.bf16.gmra.mrb[0].mxu0 %v2635
          %v5780 = vpop.f32.mrb[0].mxu0
          %v5781 = vadd.f32 %v5732, %v5780
          %v5782 = vpop.f32.mrb[0].mxu0
          %v5783 = vpop.f32.mrb[0].mxu0
          %v5784 = vadd.f32 %v5735, %v5783
          %v5785 = vpop.f32.mrb[0].mxu0
          %5786 = vdwg.mxu0
          %5787 = vmatprep.subr.bf16.mxu0 0
          %5788 = vmatpush1.bf16.msra.mxu0 %v5620
          %5789 = vmatprep.subr.bf16.mxu0 0
          %5790 = vmatpush1.bf16.msra.mxu0 %v5621
          %5791 = vmatprep.subr.bf16.mxu0 0
          %5792 = vmatpush1.bf16.msra.mxu0 %v5622
          %5793 = vmatprep.subr.bf16.mxu0 0
          %5794 = vmatpush1.bf16.msra.mxu0 %v5623
          %5795 = vmatprep.subr.bf16.mxu0 0
          %5796 = vmatpush1.bf16.msra.mxu0 %v5624
          %5797 = vmatprep.subr.bf16.mxu0 0
          %5798 = vmatpush1.bf16.msra.mxu0 %v5625
          %5799 = vmatprep.subr.bf16.mxu0 0
          %5800 = vmatpush1.bf16.msra.mxu0 %v5626
          %5801 = vmatprep.subr.bf16.mxu0 0
          %5802 = vmatpush1.bf16.msra.mxu0 %v5627
          %5803 = vmatprep.subr.bf16.mxu0 0
          %5804 = vmatpush1.bf16.msra.mxu0 %v5628
          %5805 = vmatprep.subr.bf16.mxu0 0
          %5806 = vmatpush1.bf16.msra.mxu0 %v5629
          %5807 = vmatprep.subr.bf16.mxu0 0
          %5808 = vmatpush1.bf16.msra.mxu0 %v5630
          %5809 = vmatprep.subr.bf16.mxu0 0
          %5810 = vmatpush1.bf16.msra.mxu0 %v5631
          %5811 = vmatprep.subr.bf16.mxu0 0
          %5812 = vmatpush1.bf16.msra.mxu0 %v5632
          %5813 = vmatprep.subr.bf16.mxu0 0
          %5814 = vmatpush1.bf16.msra.mxu0 %v5633
          %5815 = vmatprep.subr.bf16.mxu0 0
          %5816 = vmatpush1.bf16.msra.mxu0 %v5634
          %5817 = vmatprep.subr.bf16.mxu0 0
          %5818 = vmatpush1.bf16.msra.mxu0 %v5635
          %5819 = vmatprep.mubr.bf16.mxu0 %v2630
          %5820 = vmatmul.mubr.bf16.gmra.mrb[0].mxu0 %v2629
          %v5821 = vpop.f32.mrb[0].mxu0
          %v5822 = vadd.f32 %v5773, %v5821
          %v5823 = vpop.f32.mrb[0].mxu0
          %v5824 = vpop.f32.mrb[0].mxu0
          %v5825 = vadd.f32 %v5776, %v5824
          %v5826 = vpop.f32.mrb[0].mxu0
          %5827 = vmatprep.mubr.bf16.mxu0 %v2638
          %5828 = vmatmul.mubr.bf16.gmra.mrb[0].mxu0 %v2637
          %v5829 = vpop.f32.mrb[0].mxu0
          %v5830 = vadd.f32 %v5781, %v5829
          %v5831 = vpop.f32.mrb[0].mxu0
          %v5832 = vpop.f32.mrb[0].mxu0
          %v5833 = vadd.f32 %v5784, %v5832
          %v5834 = vpop.f32.mrb[0].mxu0
          %5835 = vdwg.mxu0
          %v5836 = vadd.f32 %v5636, %v5822
          %v5837 = vadd.f32 %v5637, %v5825
          %v5838 = vadd.f32 %v5638, %v5830
          %v5839 = vadd.f32 %v5639, %v5833
          %5840 = vst [vmem:[#allocation3] sm:$0xff] %v5836
          %5841 = vst [vmem:[#allocation3 + $0x8] sm:$0xff] %v5837
          %5842 = vst [vmem:[#allocation3 + $0x10] sm:$0xff] %v5838
          %5843 = vst [vmem:[#allocation3 + $0x18] sm:$0xff] %v5839
        $region76: #{tpu_custom_call.1} parent=63 // pred_fallthru
          _
        // Predicated region
        $region81: #{tpu_custom_call.1} parent=63 // pred_check
          _
        $region82: #{tpu_custom_call.1} parent=63 // pred_check_branch
          %5845 = sbr.rel (%p1049) target = $region84
        $region83: #{tpu_custom_call.1} parent=63 // pred_region
          %v5846 = vld [vmem:[%s1023] sm:$0xff]
          %v5847 = vld [vmem:[#allocation3] sm:$0xff]
          %v5848 = vld [vmem:[#allocation3 + $0x8] sm:$0xff]
          %v5849 = vld [vmem:[#allocation3 + $0x10] sm:$0xff]
          %v5850 = vld [vmem:[#allocation3 + $0x18] sm:$0xff]
          %v5851 = vpack.c.bf16 %v5848, %v5847
          %v5852 = vpack.c.bf16 %v5850, %v5849
          %v5853 = vld [vmem:[%s986] sm:$0xf]
          %v5854 = vld [vmem:[%s986 + $0x4] sm:$0xf]
          %v5855 = vld [vmem:[%s986 + $0x8] sm:$0xf]
          %v5856 = vld [vmem:[%s986 + $0xc] sm:$0xf]
          %v5857 = vld [vmem:[%s986 + $0x10] sm:$0xf]
          %v5858 = vld [vmem:[%s986 + $0x14] sm:$0xf]
          %v5859 = vld [vmem:[%s986 + $0x18] sm:$0xf]
          %v5860 = vld [vmem:[%s986 + $0x1c] sm:$0xf]
          %v5861 = vld [vmem:[%s986 + $0x20] sm:$0xf]
          %v5862 = vld [vmem:[%s986 + $0x24] sm:$0xf]
          %v5863 = vld [vmem:[%s986 + $0x28] sm:$0xf]
          %v5864 = vld [vmem:[%s986 + $0x2c] sm:$0xf]
          %v5865 = vld [vmem:[%s986 + $0x30] sm:$0xf]
          %v5866 = vld [vmem:[%s986 + $0x34] sm:$0xf]
          %v5867 = vld [vmem:[%s986 + $0x38] sm:$0xf]
          %v5868 = vld [vmem:[%s986 + $0x3c] sm:$0xf]
          %v5869 = vlaneseq
          %v5870 = vshrl.u32 %v5869, 7
          %v5871 = vsub.s32 3, %v5870
          %v5872 = vrot.slane %v5846, %v5871
          %v5889 = vunpack.c.l.b16 %v5853
          %v5890 = vunpack.c.l.b16 %v5854
          %v5891 = vunpack.c.l.b16 %v5855
          %v5892 = vunpack.c.l.b16 %v5856
          %v5893 = vunpack.c.l.b16 %v5857
          %v5894 = vunpack.c.l.b16 %v5858
          %v5895 = vunpack.c.l.b16 %v5859
          %v5896 = vunpack.c.l.b16 %v5860
          %v5897 = vunpack.c.l.b16 %v5861
          %v5898 = vunpack.c.l.b16 %v5862
          %v5899 = vunpack.c.l.b16 %v5863
          %v5900 = vunpack.c.l.b16 %v5864
          %v5901 = vunpack.c.l.b16 %v5865
          %v5902 = vunpack.c.l.b16 %v5866
          %v5903 = vunpack.c.l.b16 %v5867
          %v5904 = vunpack.c.l.b16 %v5868
          %v5905 = vpack.c.b16 %v5890, %v5889
          %v5906 = vpack.c.b16 %v5892, %v5891
          %v5907 = vpack.c.b16 %v5894, %v5893
          %v5908 = vpack.c.b16 %v5896, %v5895
          %v5909 = vpack.c.b16 %v5898, %v5897
          %v5910 = vpack.c.b16 %v5900, %v5899
          %v5911 = vpack.c.b16 %v5902, %v5901
          %v5912 = vpack.c.b16 %v5904, %v5903
          %5921 = vmatprep.subr.bf16.mxu0 0
          %5922 = vmatpush1.bf16.msra.mxu0 %v5905
          %5923 = vmatprep.subr.bf16.mxu0 0
          %5924 = vmatpush1.bf16.msra.mxu0 %v5906
          %5925 = vmatprep.subr.bf16.mxu0 0
          %5926 = vmatpush1.bf16.msra.mxu0 %v5907
          %5927 = vmatprep.subr.bf16.mxu0 0
          %5928 = vmatpush1.bf16.msra.mxu0 %v5908
          %5929 = vmatprep.subr.bf16.mxu0 0
          %5930 = vmatpush1.bf16.msra.mxu0 %v5909
          %5931 = vmatprep.subr.bf16.mxu0 0
          %5932 = vmatpush1.bf16.msra.mxu0 %v5910
          %5933 = vmatprep.subr.bf16.mxu0 0
          %5934 = vmatpush1.bf16.msra.mxu0 %v5911
          %5935 = vmatprep.subr.bf16.mxu0 0
          %5936 = vmatpush1.bf16.msra.mxu0 %v5912
          %5937 = vmatprep.subr.bf16.mxu0 0
          %5938 = vmatpush1.bf16.msra.mxu0 0
          %5939 = vmatprep.subr.bf16.mxu0 0
          %5940 = vmatpush1.bf16.msra.mxu0 0
          %5941 = vmatprep.subr.bf16.mxu0 0
          %5942 = vmatpush1.bf16.msra.mxu0 0
          %5943 = vmatprep.subr.bf16.mxu0 0
          %5944 = vmatpush1.bf16.msra.mxu0 0
          %5945 = vmatprep.subr.bf16.mxu0 0
          %5946 = vmatpush1.bf16.msra.mxu0 0
          %5947 = vmatprep.subr.bf16.mxu0 0
          %5948 = vmatpush1.bf16.msra.mxu0 0
          %5949 = vmatprep.subr.bf16.mxu0 0
          %5950 = vmatpush1.bf16.msra.mxu0 0
          %5951 = vmatprep.subr.bf16.mxu0 0
          %5952 = vmatpush1.bf16.msra.mxu0 0
          %5953 = vmatprep.mubr.bf16.mxu0 0
          %5954 = vmatmul.mubr.bf16.gmra.mrb[0].mxu0 %v5851
          %v5955 = vpop.f32.mrb[0].mxu0
          %v5956 = vadd.f32 %v5872, %v5955
          %v5957 = vpop.f32.mrb[0].mxu0
          %v5958 = vpop.f32.mrb[0].mxu0
          %v5959 = vadd.f32 %v5872, %v5958
          %v5960 = vpop.f32.mrb[0].mxu0
          %5961 = vmatprep.mubr.bf16.mxu0 0
          %5962 = vmatmul.mubr.bf16.gmra.mrb[0].mxu0 %v5852
          %v5963 = vpop.f32.mrb[0].mxu0
          %v5964 = vadd.f32 %v5872, %v5963
          %v5965 = vpop.f32.mrb[0].mxu0
          %v5966 = vpop.f32.mrb[0].mxu0
          %v5967 = vadd.f32 %v5872, %v5966
          %v5968 = vpop.f32.mrb[0].mxu0
          %5969 = vdwg.mxu0
          %v5970 = vmax.f32 %v5956, 0.0
          %v5971 = vmax.f32 %v5959, 0.0
          %v5972 = vmax.f32 %v5964, 0.0
          %v5973 = vmax.f32 %v5967, 0.0
          %v5974 = vand.u32 2147483647, %v5956
          %v5975 = vand.u32 2147483647, %v5959
          %v5976 = vand.u32 2147483647, %v5964
          %v5977 = vand.u32 2147483647, %v5967
          %v5978 = vsub.f32 0.0, %v5974
          %v5979 = vsub.f32 0.0, %v5975
          %v5980 = vsub.f32 0.0, %v5976
          %v5981 = vsub.f32 0.0, %v5977
          %v5982 = vmul.f32 %v5978, 1.442695
          %v5983 = vpow.pop %v5982
          %v5984 = vmul.f32 %v5979, 1.442695
          %v5985 = vpow.pop %v5984
          %v5986 = vmul.f32 %v5980, 1.442695
          %v5987 = vpow.pop %v5986
          %v5988 = vmul.f32 %v5981, 1.442695
          %v5989 = vpow.pop %v5988
          %v5990 = vadd.f32 %v5983, 1.0
          %v5991 = vadd.f32 %v5985, 1.0
          %v5992 = vadd.f32 %v5987, 1.0
          %v5993 = vadd.f32 %v5989, 1.0
          %v5994 = vlog2.pop %v5990
          %v5995 = vmul.f32 %v5994, 0.6931472
          %v5996 = vlog2.pop %v5991
          %v5997 = vmul.f32 %v5996, 0.6931472
          %v5998 = vlog2.pop %v5992
          %v5999 = vmul.f32 %v5998, 0.6931472
          %v6000 = vlog2.pop %v5993
          %v6001 = vmul.f32 %v6000, 0.6931472
          %v6002 = vadd.f32 %v5970, %v5995
          %v6003 = vadd.f32 %v5971, %v5997
          %v6004 = vadd.f32 %v5972, %v5999
          %v6005 = vadd.f32 %v5973, %v6001
          %v6006 = vsub.f32 %v6002, 0.6931472
          %v6007 = vsub.f32 %v6003, 0.6931472
          %v6008 = vsub.f32 %v6004, 0.6931472
          %v6009 = vsub.f32 %v6005, 0.6931472
          %v6010 = vpack.c.bf16 %v6007, %v6006
          %v6011 = vpack.c.bf16 %v6009, %v6008
          %v6012 = vld [vmem:[%s1005] sm:$0xf]
          %v6013 = vld [vmem:[%s1005 + $0x4] sm:$0xf]
          %v6014 = vld [vmem:[%s1005 + $0x8] sm:$0xf]
          %v6015 = vld [vmem:[%s1005 + $0xc] sm:$0xf]
          %v6016 = vld [vmem:[%s1005 + $0x10] sm:$0xf]
          %v6017 = vld [vmem:[%s1005 + $0x14] sm:$0xf]
          %v6018 = vld [vmem:[%s1005 + $0x18] sm:$0xf]
          %v6019 = vld [vmem:[%s1005 + $0x1c] sm:$0xf]
          %v6020 = vld [vmem:[%s1005 + $0x20] sm:$0xf]
          %v6021 = vld [vmem:[%s1005 + $0x24] sm:$0xf]
          %v6022 = vld [vmem:[%s1005 + $0x28] sm:$0xf]
          %v6023 = vld [vmem:[%s1005 + $0x2c] sm:$0xf]
          %v6024 = vld [vmem:[%s1005 + $0x30] sm:$0xf]
          %v6025 = vld [vmem:[%s1005 + $0x34] sm:$0xf]
          %v6026 = vld [vmem:[%s1005 + $0x38] sm:$0xf]
          %v6027 = vld [vmem:[%s1005 + $0x3c] sm:$0xf]
          %v6028 = vlaneseq
          %v6029 = vshrl.u32 %v6028, 7
          %v6030 = vsub.s32 4, %v6029
          %v6031 = vrot.slane %v5846, %v6030
          %v6048 = vunpack.c.l.b16 %v6012
          %v6049 = vunpack.c.l.b16 %v6013
          %v6050 = vunpack.c.l.b16 %v6014
          %v6051 = vunpack.c.l.b16 %v6015
          %v6052 = vunpack.c.l.b16 %v6016
          %v6053 = vunpack.c.l.b16 %v6017
          %v6054 = vunpack.c.l.b16 %v6018
          %v6055 = vunpack.c.l.b16 %v6019
          %v6056 = vunpack.c.l.b16 %v6020
          %v6057 = vunpack.c.l.b16 %v6021
          %v6058 = vunpack.c.l.b16 %v6022
          %v6059 = vunpack.c.l.b16 %v6023
          %v6060 = vunpack.c.l.b16 %v6024
          %v6061 = vunpack.c.l.b16 %v6025
          %v6062 = vunpack.c.l.b16 %v6026
          %v6063 = vunpack.c.l.b16 %v6027
          %v6064 = vpack.c.b16 %v6049, %v6048
          %v6065 = vpack.c.b16 %v6051, %v6050
          %v6066 = vpack.c.b16 %v6053, %v6052
          %v6067 = vpack.c.b16 %v6055, %v6054
          %v6068 = vpack.c.b16 %v6057, %v6056
          %v6069 = vpack.c.b16 %v6059, %v6058
          %v6070 = vpack.c.b16 %v6061, %v6060
          %v6071 = vpack.c.b16 %v6063, %v6062
          %6080 = vmatprep.subr.bf16.mxu0 0
          %6081 = vmatpush1.bf16.msra.mxu0 %v6064
          %6082 = vmatprep.subr.bf16.mxu0 0
          %6083 = vmatpush1.bf16.msra.mxu0 %v6065
          %6084 = vmatprep.subr.bf16.mxu0 0
          %6085 = vmatpush1.bf16.msra.mxu0 %v6066
          %6086 = vmatprep.subr.bf16.mxu0 0
          %6087 = vmatpush1.bf16.msra.mxu0 %v6067
          %6088 = vmatprep.subr.bf16.mxu0 0
          %6089 = vmatpush1.bf16.msra.mxu0 %v6068
          %6090 = vmatprep.subr.bf16.mxu0 0
          %6091 = vmatpush1.bf16.msra.mxu0 %v6069
          %6092 = vmatprep.subr.bf16.mxu0 0
          %6093 = vmatpush1.bf16.msra.mxu0 %v6070
          %6094 = vmatprep.subr.bf16.mxu0 0
          %6095 = vmatpush1.bf16.msra.mxu0 %v6071
          %6096 = vmatprep.subr.bf16.mxu0 0
          %6097 = vmatpush1.bf16.msra.mxu0 0
          %6098 = vmatprep.subr.bf16.mxu0 0
          %6099 = vmatpush1.bf16.msra.mxu0 0
          %6100 = vmatprep.subr.bf16.mxu0 0
          %6101 = vmatpush1.bf16.msra.mxu0 0
          %6102 = vmatprep.subr.bf16.mxu0 0
          %6103 = vmatpush1.bf16.msra.mxu0 0
          %6104 = vmatprep.subr.bf16.mxu0 0
          %6105 = vmatpush1.bf16.msra.mxu0 0
          %6106 = vmatprep.subr.bf16.mxu0 0
          %6107 = vmatpush1.bf16.msra.mxu0 0
          %6108 = vmatprep.subr.bf16.mxu0 0
          %6109 = vmatpush1.bf16.msra.mxu0 0
          %6110 = vmatprep.subr.bf16.mxu0 0
          %6111 = vmatpush1.bf16.msra.mxu0 0
          %6112 = vmatprep.mubr.bf16.mxu0 0
          %6113 = vmatmul.mubr.bf16.gmra.mrb[0].mxu0 %v6010
          %v6114 = vpop.f32.mrb[0].mxu0
          %v6115 = vadd.f32 %v6031, %v6114
          %v6116 = vpop.f32.mrb[0].mxu0
          %v6117 = vpop.f32.mrb[0].mxu0
          %v6118 = vadd.f32 %v6031, %v6117
          %v6119 = vpop.f32.mrb[0].mxu0
          %6120 = vmatprep.mubr.bf16.mxu0 0
          %6121 = vmatmul.mubr.bf16.gmra.mrb[0].mxu0 %v6011
          %v6122 = vpop.f32.mrb[0].mxu0
          %v6123 = vadd.f32 %v6031, %v6122
          %v6124 = vpop.f32.mrb[0].mxu0
          %v6125 = vpop.f32.mrb[0].mxu0
          %v6126 = vadd.f32 %v6031, %v6125
          %v6127 = vpop.f32.mrb[0].mxu0
          %6128 = vdwg.mxu0
          %v6129 = vld [vmem:[%s852] sm:$0xff]
          %v6130 = vld [vmem:[%s852 + $0x8] sm:$0xff]
          %v6131 = vld [vmem:[%s852 + $0x10] sm:$0xff]
          %v6132 = vld [vmem:[%s852 + $0x18] sm:$0xff]
          %v6133 = vadd.f32 %v6129, %v6115
          %v6134 = vadd.f32 %v6130, %v6118
          %v6135 = vadd.f32 %v6131, %v6123
          %v6136 = vadd.f32 %v6132, %v6126
          %6137 = vst [vmem:[%s852] sm:$0xff] %v6133
          %6138 = vst [vmem:[%s852 + $0x8] sm:$0xff] %v6134
          %6139 = vst [vmem:[%s852 + $0x10] sm:$0xff] %v6135
          %6140 = vst [vmem:[%s852 + $0x18] sm:$0xff] %v6136
        $region84: #{tpu_custom_call.1} parent=63 // pred_fallthru
          _
        %s6141 = sand.u32 %s448, 1
        %s6142 = scalar_lea.sflag [#allocation9], %s6141
        %s6143 = sand.u32 %s448, 1
        %s6144 = smul.addr %s6143, 32
        %s6145 = scalar_lea.vmem [#allocation8], %s6144
        // Predicated region
        $region85: #{tpu_custom_call.1} parent=63 // pred_check
          %p6146 = pneg %p458
        $region86: #{tpu_custom_call.1} parent=63 // pred_check_branch
          %6148 = sbr.rel (%p6146) target = $region88
        $region87: #{tpu_custom_call.1} parent=63 // pred_region
          %s6150 = ssub.s32 512, 512
          %6151 = vsyncadd %s6142, %s6150
          %s6152 = smul.addr %s37, 4
          %s6153 = smul.addr %s6152, 128
          %s6154 = scalar_lea.hbm %s12, %s6153
          %s6155 = sshll.u32 %s6145, 4
          %s6156 = int_to_ptr.vmem [resolvable:$true] %s6155
          %6161 = dma.vmem_to_hbm [thread:$0]  %s6156, 512, %s6154, %s6142, 128, 128, 8
        $region88: #{tpu_custom_call.1} parent=63 // pred_fallthru
          _
      $region64: #{tpu_custom_call.1} parent=5 // pred_fallthru
        _
      %p6162 = scmp.le.s32.totalorder 2, %s27
      // Predicated region
      $region89: #{tpu_custom_call.1} parent=5 // pred_check
        %p6163 = pneg %p6162
      $region90: #{tpu_custom_call.1} parent=5 // pred_check_branch
        %6165 = sbr.rel (%p6163) target = $region92
      $region91: #{tpu_custom_call.1} parent=5 // pred_region
        %s6166 = ssub.s32 %s27, 2
        // Predicated region
        $region93: #{tpu_custom_call.1} parent=91 // pred_check
          %p6167 = pneg %p464
        $region94: #{tpu_custom_call.1} parent=91 // pred_check_branch
          %6169 = sbr.rel (%p6167) target = $region96
        $region95: #{tpu_custom_call.1} parent=91 // pred_region
          %s6170 = sand.u32 %s449, 1
          %s6171 = scalar_lea.sflag [#allocation9], %s6170
          %s6172 = sand.u32 %s449, 1
          %s6173 = smul.addr %s6172, 32
          %s6174 = scalar_lea.vmem [#allocation8], %s6173
          %6175 = dma.done %s6171, 512
        $region96: #{tpu_custom_call.1} parent=91 // pred_fallthru
          _
      $region92: #{tpu_custom_call.1} parent=5 // pred_fallthru
        _
    $region6: #{tpu_custom_call.1} parent=1 // loop_footer
      %s31 = sadd.s32 1, %s27
    $region7: #{tpu_custom_call.1} parent=1 // loop_footer_branch
      %26 = sbr.rel target = $region3
    $region8: #{tpu_custom_call.1} parent=1 // loop_exit
      _
    %6176 = vsyncpa [#allocation9], 1
    %s6177 = scalar_lea.sflag [#allocation9], 1
    %6178 = vsyncpa %s6177, 1

</llo_original>
